<compile_context>
chip_gen: v7x
topology: tpu7x:2x2x1
jax: 0.10.0
libtpu: 0.0.40
codegen_flags: <defaults>
</compile_context>

<pallas_src>
import functools

import jax
import jax.numpy as jnp
from jax.experimental import pallas as pl
from jax.experimental.pallas import tpu as pltpu


# ----------------------------------------------------------------------------
# helpers
# ----------------------------------------------------------------------------
def _round_up(x, m):
    return ((x + m - 1) // m) * m


_MAX_TM, _MAX_TN, _MAX_TK = 256, 512, 2048


def _tile_sizes(M, K, Cout):
    """MXU-friendly tile sizes. K is kept unpadded when it fits in one tile."""
    tm = min(_MAX_TM, _round_up(M, 16))        # 16: bf16 sublane packing granularity
    tn = min(_MAX_TN, _round_up(Cout, 128))    # lane-dense output tiles
    if K <= _MAX_TK and K % 8 == 0:
        tk = K                                 # full-K block (legal even if K % 128 != 0)
    else:
        tk = min(_MAX_TK, _round_up(K, 128))
    return tm, tn, tk


def _hw_tile(hw, c, target_bytes=1 << 20):
    """HW tile for the instance-norm kernels (~1 MB of f32 per block)."""
    cap = max(8, min(hw, target_bytes // (4 * c)))
    if hw <= cap:
        return hw
    cap -= cap % 8
    for t in range(cap, 7, -8):
        if hw % t == 0:
            return t
    return hw  # no aligned divisor found; fall back to one full block


# ----------------------------------------------------------------------------
# Pallas kernels
# ----------------------------------------------------------------------------
def _matmul_bias_kernel(a_ref, w_ref, b_ref, o_ref, *, leaky_slope, nk):
    """Tiled out = A @ W + b; optional fused LeakyReLU.

    nk == 1: single-shot (any output dtype).
    nk  > 1: f32 output block is the resident accumulator across the K grid axis.
    """
    def epilogue(acc):
        acc = acc + b_ref[...]                 # (1, tn) bias broadcasts over rows
        if leaky_slope is not None:
            acc = jnp.where(acc >= 0, acc, leaky_slope * acc)
        return acc

    if nk == 1:
        acc = jnp.dot(a_ref[...], w_ref[...], preferred_element_type=jnp.float32)
        o_ref[...] = epilogue(acc).astype(o_ref.dtype)
    else:
        k = pl.program_id(2)

        @pl.when(k == 0)
        def _():
            o_ref[...] = jnp.zeros_like(o_ref)

        o_ref[...] += jnp.dot(a_ref[...], w_ref[...],
                              preferred_element_type=jnp.float32)

        @pl.when(k == nk - 1)
        def _():
            o_ref[...] = epilogue(o_ref[...]).astype(o_ref.dtype)


def _instnorm_lrelu_fused_kernel(x_ref, o_ref, *, eps, slope, inv_hw):
    """One-pass InstanceNorm2d (no affine, biased var) + LeakyReLU. Block (1, HW, C)."""
    x = x_ref[...].astype(jnp.float32)
    s = jnp.sum(x, axis=1, keepdims=True)
    ss = jnp.sum(x * x, axis=1, keepdims=True)
    mean = s * inv_hw
    var = jnp.maximum(ss * inv_hw - mean * mean, 0.0)
    y = (x - mean) * jax.lax.rsqrt(var + eps)
    o_ref[...] = jnp.where(y >= 0, y, slope * y).astype(o_ref.dtype)


def _in_stats_kernel(x_ref, sum_ref, ssq_ref):
    """Accumulate per-(n, c) sum and sum-of-squares over HW tiles."""
    t = pl.program_id(1)

    @pl.when(t == 0)
    def _():
        sum_ref[...] = jnp.zeros_like(sum_ref)
        ssq_ref[...] = jnp.zeros_like(ssq_ref)

    x = x_ref[...].astype(jnp.float32)
    sum_ref[...] += jnp.sum(x, axis=1, keepdims=True)
    ssq_ref[...] += jnp.sum(x * x, axis=1, keepdims=True)


def _in_apply_kernel(x_ref, sum_ref, ssq_ref, o_ref, *, eps, slope, inv_hw):
    """Normalize an HW tile using precomputed stats, then LeakyReLU."""
    mean = sum_ref[...] * inv_hw
    var = jnp.maximum(ssq_ref[...] * inv_hw - mean * mean, 0.0)
    inv = jax.lax.rsqrt(var + eps)
    x = x_ref[...].astype(jnp.float32)
    y = (x - mean) * inv
    o_ref[...] = jnp.where(y >= 0, y, slope * y).astype(o_ref.dtype)


# ----------------------------------------------------------------------------
# Pallas wrappers
# ----------------------------------------------------------------------------
def matmul_bias_pallas(a, w, b, leaky_slope, tm, tn, tk, out_dtype):
    """a: (Mp, Kp) bf16, w: (Kp, Np) bf16, b: (1, Np) f32 -> (Mp, Np) out_dtype."""
    Mp, Kp = a.shape
    Kp2, Np = w.shape
    assert Kp == Kp2 and Mp % tm == 0 and Np % tn == 0 and Kp % tk == 0
    nk = Kp // tk
    if nk > 1:
        # output block doubles as the f32 accumulator across the K axis
        assert out_dtype == jnp.float32
    grid = (Mp // tm, Np // tn, nk)
    kern = functools.partial(_matmul_bias_kernel, leaky_slope=leaky_slope, nk=nk)

    out_bytes = jnp.dtype(out_dtype).itemsize
    flops = 2 * Mp * Kp * Np
    bytes_accessed = (Mp * Kp * 2 + Kp * Np * 2 + Mp * Np * out_bytes + Np * 4)

    return pl.pallas_call(
        kern,
        out_shape=jax.ShapeDtypeStruct((Mp, Np), out_dtype),
        grid_spec=pltpu.PrefetchScalarGridSpec(
            num_scalar_prefetch=0,
            grid=grid,
            in_specs=[
                pl.BlockSpec((tm, tk), lambda i, j, k: (i, k)),
                pl.BlockSpec((tk, tn), lambda i, j, k: (k, j)),
                pl.BlockSpec((1, tn), lambda i, j, k: (0, j)),   # bias resident over K
            ],
            out_specs=pl.BlockSpec((tm, tn), lambda i, j, k: (i, j)),
        ),
        compiler_params=pltpu.CompilerParams(
            dimension_semantics=("parallel", "parallel", "arbitrary"),
            vmem_limit_bytes=32 * 1024 * 1024,   # explicit headroom (v5e default is 16 MiB)
        ),
        cost_estimate=pl.CostEstimate(
            flops=flops, transcendentals=0, bytes_accessed=bytes_accessed),
    )(a, w, b)


def instnorm_lrelu_pallas(x, eps, slope, out_dtype):
    """x: (N, HW, C) -> InstanceNorm (no affine, biased var) + LeakyReLU."""
    N, HW, C = x.shape
    thw = _hw_tile(HW, C)

    if thw == HW:
        # whole sample fits comfortably: single fused one-pass kernel
        kern = functools.partial(_instnorm_lrelu_fused_kernel,
                                 eps=eps, slope=slope, inv_hw=1.0 / HW)
        return pl.pallas_call(
            kern,
            out_shape=jax.ShapeDtypeStruct((N, HW, C), out_dtype),
            grid=(N,),
            in_specs=[pl.BlockSpec((1, HW, C), lambda n: (n, 0, 0))],
            out_specs=pl.BlockSpec((1, HW, C), lambda n: (n, 0, 0)),
            compiler_params=pltpu.CompilerParams(dimension_semantics=("parallel",)),
        )(x)

    # Large resolutions: HW-tiled two-pass (stats accumulate, then normalize) so
    # VMEM use stays resolution independent (matters on v7x's smaller VMEM).
    T = HW // thw
    sums, ssqs = pl.pallas_call(
        _in_stats_kernel,
        out_shape=(jax.ShapeDtypeStruct((N, 1, C), jnp.float32),
                   jax.ShapeDtypeStruct((N, 1, C), jnp.float32)),
        grid=(N, T),
        in_specs=[pl.BlockSpec((1, thw, C), lambda n, t: (n, t, 0))],
        out_specs=(pl.BlockSpec((1, 1, C), lambda n, t: (n, 0, 0)),
                   pl.BlockSpec((1, 1, C), lambda n, t: (n, 0, 0))),
        compiler_params=pltpu.CompilerParams(
            dimension_semantics=("parallel", "arbitrary")),
    )(x)

    kern = functools.partial(_in_apply_kernel, eps=eps, slope=slope, inv_hw=1.0 / HW)
    return pl.pallas_call(
        kern,
        out_shape=jax.ShapeDtypeStruct((N, HW, C), out_dtype),
        grid=(N, T),
        in_specs=[pl.BlockSpec((1, thw, C), lambda n, t: (n, t, 0)),
                  pl.BlockSpec((1, 1, C), lambda n, t: (n, 0, 0)),
                  pl.BlockSpec((1, 1, C), lambda n, t: (n, 0, 0))],
        out_specs=pl.BlockSpec((1, thw, C), lambda n, t: (n, t, 0)),
        compiler_params=pltpu.CompilerParams(
            dimension_semantics=("parallel", "parallel")),
    )(x, sums, ssqs)


# ----------------------------------------------------------------------------
# Conv layer = (space-to-depth +) im2col glue + tiled Pallas matmul (+ norm/act)
# ----------------------------------------------------------------------------
def _space_to_depth2(xp):
    """(N, Hp, Wp, C) with even Hp, Wp -> (N, Hp/2, Wp/2, 4C); block order (dh, dw, c)."""
    N, Hp, Wp, C = xp.shape
    x = xp.reshape(N, Hp // 2, 2, Wp // 2, 2, C)
    x = jnp.transpose(x, (0, 1, 3, 2, 4, 5))
    return x.reshape(N, Hp // 2, Wp // 2, 4 * C)


def _im2col(x, kh, kw, stride, pad):
    """x: NHWC -> patches (N*OH*OW, kh*kw*C), column order (kh, kw, c)."""
    # TODO(synk): stride-window gathers are not expressible via BlockSpec index_maps,
    # so the patch extraction stays as plain-JAX glue feeding the Pallas matmul.
    N, H, W, C = x.shape
    xp = jnp.pad(x, ((0, 0), (pad, pad), (pad, pad), (0, 0)))
    OH = (H + 2 * pad - kh) // stride + 1
    OW = (W + 2 * pad - kw) // stride + 1
    cols = []
    for i in range(kh):
        for j in range(kw):
            cols.append(
                xp[:, i:i + (OH - 1) * stride + 1:stride,
                      j:j + (OW - 1) * stride + 1:stride, :]
            )  # each (N, OH, OW, C)
    patches = jnp.stack(cols, axis=3)                        # (N, OH, OW, kh*kw, C)
    patches = patches.reshape(N, OH, OW, kh * kw * C)
    return patches.reshape(N * OH * OW, kh * kw * C), OH, OW


def _use_s2d(kh, kw, stride):
    return kh == 4 and kw == 4 and stride == 2


def conv_block(x, w_p, b_p, Cout, KH, KW, stride, pad, leaky, norm, is_last):
    """x: NHWC bf16. w_p: (Kp, Np) bf16 prepadded. b_p: (1, Np) f32 prepadded."""
    N, H, W, _ = x.shape
    if _use_s2d(KH, KW, stride):
        # 4x4 stride-2 conv == pad + space-to-depth + 2x2 stride-1 conv
        # (im2col expansion 4x instead of 16x).
        assert (H + 2 * pad) % 2 == 0 and (W + 2 * pad) % 2 == 0
        xp = jnp.pad(x, ((0, 0), (pad, pad), (pad, pad), (0, 0)))
        patches, OH, OW = _im2col(_space_to_depth2(xp), 2, 2, 1, 0)
    else:
        patches, OH, OW = _im2col(x, KH, KW, stride, pad)    # (M, K) bf16
    M, K = patches.shape
    tm, tn, tk = _tile_sizes(M, K, Cout)
    Kp, Np = w_p.shape
    assert Kp == _round_up(K, tk) and Np == _round_up(Cout, tn)
    Mp = _round_up(M, tm)

    a_p = jnp.pad(patches, ((0, Mp - M), (0, Kp - K)))       # already bf16

    # bf16 intermediates except: final layer output, and multi-K-step layers where the
    # f32 output block is the accumulator.
    nk = Kp // tk
    out_dtype = jnp.float32 if (is_last or nk > 1) else jnp.bfloat16
    fuse_leaky = leaky if (leaky is not None and not norm) else None
    # TODO(synk): for tiny M and Cout (deep layers at small batch) the parallel grid
    # extent can be 1, leaving one v7x TensorCore idle; at real PatchGAN resolutions
    # the i axis has >= 2 tiles so both cores are used.
    out = matmul_bias_pallas(a_p, w_p, b_p, fuse_leaky, tm, tn, tk, out_dtype)
    out = out[:M, :Cout]

    if norm:
        out = instnorm_lrelu_pallas(
            out.reshape(N, OH * OW, Cout), eps=1e-5, slope=leaky,
            out_dtype=jnp.float32 if is_last else jnp.bfloat16)
    return out.reshape(N, OH, OW, Cout)


# ----------------------------------------------------------------------------
# Discriminator: params, weight prep, forward
# ----------------------------------------------------------------------------
# (Cin, Cout, KH, KW, stride, pad, leaky_slope, instance_norm)
_LAYERS = [
    (6,   64,  4, 4, 2, 1, 0.2,  False),
    (64,  128, 4, 4, 2, 1, 0.2,  True),
    (128, 256, 4, 4, 2, 1, 0.2,  True),
    (256, 512, 4, 4, 2, 1, 0.2,  True),
    (512, 1,   4, 4, 1, 1, None, False),
]


def init_params(key, in_channels=6):
    shapes = [
        (64, in_channels, 4, 4),
        (128, 64, 4, 4),
        (256, 128, 4, 4),
        (512, 256, 4, 4),
        (1, 512, 4, 4),
    ]
    params = {}
    for idx, s in enumerate(shapes, start=1):
        key, kw_, kb_ = jax.random.split(key, 3)
        params[f"w{idx}"] = (0.02 * jax.random.normal(kw_, s)).astype(jnp.float32)
        params[f"b{idx}"] = (0.02 * jax.random.normal(kb_, (s[0],))).astype(jnp.float32)
    return params


def prepare_params(params):
    """One-time weight prep: reorder to (K, Cout), pad to tile grid, cast to bf16."""
    prepped = {}
    for idx, (cin, cout, kh, kw, stride, _pad, _leaky, _norm) in enumerate(_LAYERS, 1):
        w = params[f"w{idx}"]                                # (Cout, Cin, KH, KW)
        b = params[f"b{idx}"]                                # (Cout,)
        K = kh * kw * cin
        _, tn, tk = _tile_sizes(16, K, cout)                 # tn/tk depend only on K, Cout
        Kp, Np = _round_up(K, tk), _round_up(cout, tn)
        if _use_s2d(kh, kw, stride):
            # space-to-depth patch order is (i, j, dh, dw, cin) with kh_idx = 2i+dh, kw_idx = 2j+dw
            w6 = w.reshape(cout, cin, 2, 2, 2, 2)            # (Cout, Cin, i, dh, j, dw)
            wm = jnp.transpose(w6, (2, 4, 3, 5, 1, 0)).reshape(K, cout)
        else:
            wm = jnp.transpose(w, (2, 3, 1, 0)).reshape(K, cout)   # (kh, kw, cin) rows
        prepped[f"w{idx}"] = jnp.pad(wm, ((0, Kp - K), (0, Np - cout))).astype(jnp.bfloat16)
        prepped[f"b{idx}"] = jnp.pad(b, (0, Np - cout)).reshape(1, Np).astype(jnp.float32)
    return prepped


def discriminator_forward(prepped, img_input, img_target):
    """img_input, img_target: NCHW float32 (N, 3, H, W). Returns NCHW f32 logits."""
    x = jnp.concatenate([img_input, img_target], axis=1)     # (N, 6, H, W)
    x = jnp.transpose(x, (0, 2, 3, 1)).astype(jnp.bfloat16)  # NHWC bf16 before im2col
    n_layers = len(_LAYERS)
    for idx, (_cin, cout, kh, kw, stride, pad, leaky, norm) in enumerate(_LAYERS, 1):
        x = conv_block(x, prepped[f"w{idx}"], prepped[f"b{idx}"],
                       cout, kh, kw, stride, pad, leaky, norm,
                       is_last=(idx == n_layers))
    return jnp.transpose(x, (0, 3, 1, 2)).astype(jnp.float32)   # back to NCHW


# ----------------------------------------------------------------------------
if __name__ == "__main__":
    key = jax.random.PRNGKey(0)
    k_p, k_a, k_b = jax.random.split(key, 3)

    params = init_params(k_p, in_channels=6)
    prepped = prepare_params(params)                          # weight prep off the hot path

    # small shapes: batch=2, 3-channel images, 32x32 spatial
    img_input = jax.random.normal(k_a, (2, 3, 32, 32), dtype=jnp.float32)
    img_target = jax.random.normal(k_b, (2, 3, 32, 32), dtype=jnp.float32)

    out = jax.jit(discriminator_forward)(prepped, img_input, img_target)
    out = jax.block_until_ready(out)
    assert out.shape == (2, 1, 1, 1), out.shape
    assert bool(jnp.all(jnp.isfinite(out)))
    print("KERNEL_OK")
</pallas_src>

<mosaic_0001>
module attributes {stable_mosaic.version = 11 : i64} {
  func.func @_matmul_bias_kernel(%arg0: i32, %arg1: i32, %arg2: i32, %arg3: memref<256x96xbf16, #tpu.memory_space<vmem>>, %arg4: memref<96x128xbf16, #tpu.memory_space<vmem>>, %arg5: memref<1x128xf32, #tpu.memory_space<vmem>>, %arg6: memref<256x128xbf16, #tpu.memory_space<vmem>>) attributes {dimension_semantics = [#tpu.dimension_semantics<parallel>, #tpu.dimension_semantics<parallel>, #tpu.dimension_semantics<arbitrary>], iteration_bounds = array<i64: 2, 1, 1>, scalar_prefetch = 0 : i64, scratch_operands = 0 : i64, tpu.core_type = #tpu.core_type<tc>, window_params = [{transform_indices = @transform_0, window_bounds = array<i64: 256, 96>}, {transform_indices = @transform_1, window_bounds = array<i64: 96, 128>}, {transform_indices = @transform_2, window_bounds = array<i64: 1, 128>}, {transform_indices = @transform_3, window_bounds = array<i64: 256, 128>}]} {
    %c0 = arith.constant 0 : index
    %c0_0 = arith.constant 0 : index
    %0 = vector.load %arg3[%c0, %c0_0] : memref<256x96xbf16, #tpu.memory_space<vmem>>, vector<256x96xbf16>
    %c0_1 = arith.constant 0 : index
    %c0_2 = arith.constant 0 : index
    %1 = vector.load %arg4[%c0_1, %c0_2] : memref<96x128xbf16, #tpu.memory_space<vmem>>, vector<96x128xbf16>
    %cst = arith.constant dense<0.000000e+00> : vector<256x128xf32>
    %2 = tpu.matmul %0, %1, %cst {dimension_numbers = #tpu.dot_dimension_numbers<[1], [0], [0], [1], [0, 0, 1, 1], [], []>} : vector<256x96xbf16>, vector<96x128xbf16>, vector<256x128xf32> -> vector<256x128xf32>
    %c0_3 = arith.constant 0 : index
    %c0_4 = arith.constant 0 : index
    %3 = vector.load %arg5[%c0_3, %c0_4] : memref<1x128xf32, #tpu.memory_space<vmem>>, vector<1x128xf32>
    %4 = vector.broadcast %3 : vector<1x128xf32> to vector<256x128xf32>
    %5 = arith.addf %2, %4 : vector<256x128xf32>
    %cst_5 = arith.constant 0.000000e+00 : f32
    %6 = vector.broadcast %cst_5 : f32 to vector<256x128xf32>
    %7 = arith.cmpf oge, %5, %6 : vector<256x128xf32>
    %cst_6 = arith.constant 2.000000e-01 : f32
    %8 = vector.broadcast %cst_6 : f32 to vector<256x128xf32>
    %9 = arith.mulf %8, %5 : vector<256x128xf32>
    %10 = arith.select %7, %5, %9 : vector<256x128xi1>, vector<256x128xf32>
    %11 = arith.truncf %10 : vector<256x128xf32> to vector<256x128xbf16>
    %c0_7 = arith.constant 0 : index
    %c0_8 = arith.constant 0 : index
    %12 = vector.load %arg6[%c0_7, %c0_8] : memref<256x128xbf16, #tpu.memory_space<vmem>>, vector<256x128xbf16>
    tpu.vector_store %arg6[%c0_7, %c0_8], %11 {strides = array<i32>} : memref<256x128xbf16, #tpu.memory_space<vmem>>, vector<256x128xbf16>,
    return
  }
  func.func @transform_0(%arg0: i32, %arg1: i32, %arg2: i32) -> (i32, i32) {
    %c0_i32 = arith.constant 0 : i32
    return %arg0, %arg2 : i32, i32
  }
  func.func @transform_1(%arg0: i32, %arg1: i32, %arg2: i32) -> (i32, i32) {
    %c0_i32 = arith.constant 0 : i32
    return %arg2, %arg1 : i32, i32
  }
  func.func @transform_2(%arg0: i32, %arg1: i32, %arg2: i32) -> (i32, i32) {
    %c0_i32 = arith.constant 0 : i32
    %c0_i32_0 = arith.constant 0 : i32
    return %c0_i32, %arg1 : i32, i32
  }
  func.func @transform_3(%arg0: i32, %arg1: i32, %arg2: i32) -> (i32, i32) {
    %c0_i32 = arith.constant 0 : i32
    return %arg0, %arg1 : i32, i32
  }
}

module attributes {stable_mosaic.version = 11 : i64} {
  func.func @_matmul_bias_kernel(%arg0: i32, %arg1: i32, %arg2: i32, %arg3: memref<128x1024xbf16, #tpu.memory_space<vmem>>, %arg4: memref<1024x128xbf16, #tpu.memory_space<vmem>>, %arg5: memref<1x128xf32, #tpu.memory_space<vmem>>, %arg6: memref<128x128xbf16, #tpu.memory_space<vmem>>) attributes {dimension_semantics = [#tpu.dimension_semantics<parallel>, #tpu.dimension_semantics<parallel>, #tpu.dimension_semantics<arbitrary>], iteration_bounds = array<i64: 1, 1, 1>, scalar_prefetch = 0 : i64, scratch_operands = 0 : i64, tpu.core_type = #tpu.core_type<tc>, window_params = [{transform_indices = @transform_0, window_bounds = array<i64: 128, 1024>}, {transform_indices = @transform_1, window_bounds = array<i64: 1024, 128>}, {transform_indices = @transform_2, window_bounds = array<i64: 1, 128>}, {transform_indices = @transform_3, window_bounds = array<i64: 128, 128>}]} {
    %c0 = arith.constant 0 : index
    %c0_0 = arith.constant 0 : index
    %0 = vector.load %arg3[%c0, %c0_0] : memref<128x1024xbf16, #tpu.memory_space<vmem>>, vector<128x1024xbf16>
    %c0_1 = arith.constant 0 : index
    %c0_2 = arith.constant 0 : index
    %1 = vector.load %arg4[%c0_1, %c0_2] : memref<1024x128xbf16, #tpu.memory_space<vmem>>, vector<1024x128xbf16>
    %cst = arith.constant dense<0.000000e+00> : vector<128x128xf32>
    %2 = tpu.matmul %0, %1, %cst {dimension_numbers = #tpu.dot_dimension_numbers<[1], [0], [0], [1], [0, 0, 1, 1], [], []>} : vector<128x1024xbf16>, vector<1024x128xbf16>, vector<128x128xf32> -> vector<128x128xf32>
    %c0_3 = arith.constant 0 : index
    %c0_4 = arith.constant 0 : index
    %3 = vector.load %arg5[%c0_3, %c0_4] : memref<1x128xf32, #tpu.memory_space<vmem>>, vector<1x128xf32>
    %4 = vector.broadcast %3 : vector<1x128xf32> to vector<128x128xf32>
    %5 = arith.addf %2, %4 : vector<128x128xf32>
    %6 = arith.truncf %5 : vector<128x128xf32> to vector<128x128xbf16>
    %c0_5 = arith.constant 0 : index
    %c0_6 = arith.constant 0 : index
    %7 = vector.load %arg6[%c0_5, %c0_6] : memref<128x128xbf16, #tpu.memory_space<vmem>>, vector<128x128xbf16>
    tpu.vector_store %arg6[%c0_5, %c0_6], %6 {strides = array<i32>} : memref<128x128xbf16, #tpu.memory_space<vmem>>, vector<128x128xbf16>,
    return
  }
  func.func @transform_0(%arg0: i32, %arg1: i32, %arg2: i32) -> (i32, i32) {
    %c0_i32 = arith.constant 0 : i32
    return %arg0, %arg2 : i32, i32
  }
  func.func @transform_1(%arg0: i32, %arg1: i32, %arg2: i32) -> (i32, i32) {
    %c0_i32 = arith.constant 0 : i32
    return %arg2, %arg1 : i32, i32
  }
  func.func @transform_2(%arg0: i32, %arg1: i32, %arg2: i32) -> (i32, i32) {
    %c0_i32 = arith.constant 0 : i32
    %c0_i32_0 = arith.constant 0 : i32
    return %c0_i32, %arg1 : i32, i32
  }
  func.func @transform_3(%arg0: i32, %arg1: i32, %arg2: i32) -> (i32, i32) {
    %c0_i32 = arith.constant 0 : i32
    return %arg0, %arg1 : i32, i32
  }
}

module attributes {stable_mosaic.version = 11 : i64} {
  func.func @_instnorm_lrelu_fused_kernel(%arg0: i32, %arg1: memref<1x64x128xbf16, #tpu.memory_space<vmem>>, %arg2: memref<1x64x128xbf16, #tpu.memory_space<vmem>>) attributes {dimension_semantics = [#tpu.dimension_semantics<parallel>], iteration_bounds = array<i64: 2>, scalar_prefetch = 0 : i64, scratch_operands = 0 : i64, tpu.core_type = #tpu.core_type<tc>, window_params = [{transform_indices = @transform_0, window_bounds = array<i64: 1, 64, 128>}, {transform_indices = @transform_1, window_bounds = array<i64: 1, 64, 128>}]} {
    %c0 = arith.constant 0 : index
    %c0_0 = arith.constant 0 : index
    %c0_1 = arith.constant 0 : index
    %0 = vector.load %arg1[%c0, %c0_0, %c0_1] : memref<1x64x128xbf16, #tpu.memory_space<vmem>>, vector<1x64x128xbf16>
    %1 = arith.extf %0 : vector<1x64x128xbf16> to vector<1x64x128xf32>
    %cst = arith.constant dense<0.000000e+00> : vector<1x128xf32>
    %2 = vector.multi_reduction <add>, %1, %cst [1] : vector<1x64x128xf32> to vector<1x128xf32>
    %3 = vector.shape_cast %2 : vector<1x128xf32> to vector<1x1x128xf32>
    %4 = arith.mulf %1, %1 : vector<1x64x128xf32>
    %cst_2 = arith.constant dense<0.000000e+00> : vector<1x128xf32>
    %5 = vector.multi_reduction <add>, %4, %cst_2 [1] : vector<1x64x128xf32> to vector<1x128xf32>
    %6 = vector.shape_cast %5 : vector<1x128xf32> to vector<1x1x128xf32>
    %cst_3 = arith.constant 1.562500e-02 : f32
    %7 = vector.broadcast %cst_3 : f32 to vector<1x1x128xf32>
    %8 = arith.mulf %3, %7 : vector<1x1x128xf32>
    %cst_4 = arith.constant 1.562500e-02 : f32
    %9 = vector.broadcast %cst_4 : f32 to vector<1x1x128xf32>
    %10 = arith.mulf %6, %9 : vector<1x1x128xf32>
    %11 = arith.mulf %8, %8 : vector<1x1x128xf32>
    %12 = arith.subf %10, %11 : vector<1x1x128xf32>
    %cst_5 = arith.constant 0.000000e+00 : f32
    %13 = vector.broadcast %cst_5 : f32 to vector<1x1x128xf32>
    %14 = arith.maximumf %12, %13 : vector<1x1x128xf32>
    %15 = vector.broadcast %8 : vector<1x1x128xf32> to vector<1x64x128xf32>
    %16 = arith.subf %1, %15 : vector<1x64x128xf32>
    %cst_6 = arith.constant 9.99999974E-6 : f32
    %17 = vector.broadcast %cst_6 : f32 to vector<1x1x128xf32>
    %18 = arith.addf %14, %17 : vector<1x1x128xf32>
    %19 = math.rsqrt %18 : vector<1x1x128xf32>
    %20 = vector.broadcast %19 : vector<1x1x128xf32> to vector<1x64x128xf32>
    %21 = arith.mulf %16, %20 : vector<1x64x128xf32>
    %cst_7 = arith.constant 0.000000e+00 : f32
    %22 = vector.broadcast %cst_7 : f32 to vector<1x64x128xf32>
    %23 = arith.cmpf oge, %21, %22 : vector<1x64x128xf32>
    %cst_8 = arith.constant 2.000000e-01 : f32
    %24 = vector.broadcast %cst_8 : f32 to vector<1x64x128xf32>
    %25 = arith.mulf %24, %21 : vector<1x64x128xf32>
    %26 = arith.select %23, %21, %25 : vector<1x64x128xi1>, vector<1x64x128xf32>
    %27 = arith.truncf %26 : vector<1x64x128xf32> to vector<1x64x128xbf16>
    %c0_9 = arith.constant 0 : index
    %c0_10 = arith.constant 0 : index
    %c0_11 = arith.constant 0 : index
    %28 = vector.load %arg2[%c0_9, %c0_10, %c0_11] : memref<1x64x128xbf16, #tpu.memory_space<vmem>>, vector<1x64x128xbf16>
    tpu.vector_store %arg2[%c0_9, %c0_10, %c0_11], %27 {strides = array<i32>} : memref<1x64x128xbf16, #tpu.memory_space<vmem>>, vector<1x64x128xbf16>,
    return
  }
  func.func @transform_0(%arg0: i32) -> (i32, i32, i32) {
    %c0_i32 = arith.constant 0 : i32
    %c0_i32_0 = arith.constant 0 : i32
    %c0_i32_1 = arith.constant 0 : i32
    return %arg0, %c0_i32, %c0_i32_0 : i32, i32, i32
  }
  func.func @transform_1(%arg0: i32) -> (i32, i32, i32) {
    %c0_i32 = arith.constant 0 : i32
    %c0_i32_0 = arith.constant 0 : i32
    %c0_i32_1 = arith.constant 0 : i32
    return %arg0, %c0_i32, %c0_i32_0 : i32, i32, i32
  }
}

module attributes {stable_mosaic.version = 11 : i64} {
  func.func @_matmul_bias_kernel(%arg0: i32, %arg1: i32, %arg2: i32, %arg3: memref<32x2048xbf16, #tpu.memory_space<vmem>>, %arg4: memref<2048x256xbf16, #tpu.memory_space<vmem>>, %arg5: memref<1x256xf32, #tpu.memory_space<vmem>>, %arg6: memref<32x256xbf16, #tpu.memory_space<vmem>>) attributes {dimension_semantics = [#tpu.dimension_semantics<parallel>, #tpu.dimension_semantics<parallel>, #tpu.dimension_semantics<arbitrary>], iteration_bounds = array<i64: 1, 1, 1>, scalar_prefetch = 0 : i64, scratch_operands = 0 : i64, tpu.core_type = #tpu.core_type<tc>, window_params = [{transform_indices = @transform_0, window_bounds = array<i64: 32, 2048>}, {transform_indices = @transform_1, window_bounds = array<i64: 2048, 256>}, {transform_indices = @transform_2, window_bounds = array<i64: 1, 256>}, {transform_indices = @transform_3, window_bounds = array<i64: 32, 256>}]} {
    %c0 = arith.constant 0 : index
    %c0_0 = arith.constant 0 : index
    %0 = vector.load %arg3[%c0, %c0_0] : memref<32x2048xbf16, #tpu.memory_space<vmem>>, vector<32x2048xbf16>
    %c0_1 = arith.constant 0 : index
    %c0_2 = arith.constant 0 : index
    %1 = vector.load %arg4[%c0_1, %c0_2] : memref<2048x256xbf16, #tpu.memory_space<vmem>>, vector<2048x256xbf16>
    %cst = arith.constant dense<0.000000e+00> : vector<32x256xf32>
    %2 = tpu.matmul %0, %1, %cst {dimension_numbers = #tpu.dot_dimension_numbers<[1], [0], [0], [1], [0, 0, 1, 1], [], []>} : vector<32x2048xbf16>, vector<2048x256xbf16>, vector<32x256xf32> -> vector<32x256xf32>
    %c0_3 = arith.constant 0 : index
    %c0_4 = arith.constant 0 : index
    %3 = vector.load %arg5[%c0_3, %c0_4] : memref<1x256xf32, #tpu.memory_space<vmem>>, vector<1x256xf32>
    %4 = vector.broadcast %3 : vector<1x256xf32> to vector<32x256xf32>
    %5 = arith.addf %2, %4 : vector<32x256xf32>
    %6 = arith.truncf %5 : vector<32x256xf32> to vector<32x256xbf16>
    %c0_5 = arith.constant 0 : index
    %c0_6 = arith.constant 0 : index
    %7 = vector.load %arg6[%c0_5, %c0_6] : memref<32x256xbf16, #tpu.memory_space<vmem>>, vector<32x256xbf16>
    tpu.vector_store %arg6[%c0_5, %c0_6], %6 {strides = array<i32>} : memref<32x256xbf16, #tpu.memory_space<vmem>>, vector<32x256xbf16>,
    return
  }
  func.func @transform_0(%arg0: i32, %arg1: i32, %arg2: i32) -> (i32, i32) {
    %c0_i32 = arith.constant 0 : i32
    return %arg0, %arg2 : i32, i32
  }
  func.func @transform_1(%arg0: i32, %arg1: i32, %arg2: i32) -> (i32, i32) {
    %c0_i32 = arith.constant 0 : i32
    return %arg2, %arg1 : i32, i32
  }
  func.func @transform_2(%arg0: i32, %arg1: i32, %arg2: i32) -> (i32, i32) {
    %c0_i32 = arith.constant 0 : i32
    %c0_i32_0 = arith.constant 0 : i32
    return %c0_i32, %arg1 : i32, i32
  }
  func.func @transform_3(%arg0: i32, %arg1: i32, %arg2: i32) -> (i32, i32) {
    %c0_i32 = arith.constant 0 : i32
    return %arg0, %arg1 : i32, i32
  }
}

module attributes {stable_mosaic.version = 11 : i64} {
  func.func @_instnorm_lrelu_fused_kernel(%arg0: i32, %arg1: memref<1x16x256xbf16, #tpu.memory_space<vmem>>, %arg2: memref<1x16x256xbf16, #tpu.memory_space<vmem>>) attributes {dimension_semantics = [#tpu.dimension_semantics<parallel>], iteration_bounds = array<i64: 2>, scalar_prefetch = 0 : i64, scratch_operands = 0 : i64, tpu.core_type = #tpu.core_type<tc>, window_params = [{transform_indices = @transform_0, window_bounds = array<i64: 1, 16, 256>}, {transform_indices = @transform_1, window_bounds = array<i64: 1, 16, 256>}]} {
    %c0 = arith.constant 0 : index
    %c0_0 = arith.constant 0 : index
    %c0_1 = arith.constant 0 : index
    %0 = vector.load %arg1[%c0, %c0_0, %c0_1] : memref<1x16x256xbf16, #tpu.memory_space<vmem>>, vector<1x16x256xbf16>
    %1 = arith.extf %0 : vector<1x16x256xbf16> to vector<1x16x256xf32>
    %cst = arith.constant dense<0.000000e+00> : vector<1x256xf32>
    %2 = vector.multi_reduction <add>, %1, %cst [1] : vector<1x16x256xf32> to vector<1x256xf32>
    %3 = vector.shape_cast %2 : vector<1x256xf32> to vector<1x1x256xf32>
    %4 = arith.mulf %1, %1 : vector<1x16x256xf32>
    %cst_2 = arith.constant dense<0.000000e+00> : vector<1x256xf32>
    %5 = vector.multi_reduction <add>, %4, %cst_2 [1] : vector<1x16x256xf32> to vector<1x256xf32>
    %6 = vector.shape_cast %5 : vector<1x256xf32> to vector<1x1x256xf32>
    %cst_3 = arith.constant 6.250000e-02 : f32
    %7 = vector.broadcast %cst_3 : f32 to vector<1x1x256xf32>
    %8 = arith.mulf %3, %7 : vector<1x1x256xf32>
    %cst_4 = arith.constant 6.250000e-02 : f32
    %9 = vector.broadcast %cst_4 : f32 to vector<1x1x256xf32>
    %10 = arith.mulf %6, %9 : vector<1x1x256xf32>
    %11 = arith.mulf %8, %8 : vector<1x1x256xf32>
    %12 = arith.subf %10, %11 : vector<1x1x256xf32>
    %cst_5 = arith.constant 0.000000e+00 : f32
    %13 = vector.broadcast %cst_5 : f32 to vector<1x1x256xf32>
    %14 = arith.maximumf %12, %13 : vector<1x1x256xf32>
    %15 = vector.broadcast %8 : vector<1x1x256xf32> to vector<1x16x256xf32>
    %16 = arith.subf %1, %15 : vector<1x16x256xf32>
    %cst_6 = arith.constant 9.99999974E-6 : f32
    %17 = vector.broadcast %cst_6 : f32 to vector<1x1x256xf32>
    %18 = arith.addf %14, %17 : vector<1x1x256xf32>
    %19 = math.rsqrt %18 : vector<1x1x256xf32>
    %20 = vector.broadcast %19 : vector<1x1x256xf32> to vector<1x16x256xf32>
    %21 = arith.mulf %16, %20 : vector<1x16x256xf32>
    %cst_7 = arith.constant 0.000000e+00 : f32
    %22 = vector.broadcast %cst_7 : f32 to vector<1x16x256xf32>
    %23 = arith.cmpf oge, %21, %22 : vector<1x16x256xf32>
    %cst_8 = arith.constant 2.000000e-01 : f32
    %24 = vector.broadcast %cst_8 : f32 to vector<1x16x256xf32>
    %25 = arith.mulf %24, %21 : vector<1x16x256xf32>
    %26 = arith.select %23, %21, %25 : vector<1x16x256xi1>, vector<1x16x256xf32>
    %27 = arith.truncf %26 : vector<1x16x256xf32> to vector<1x16x256xbf16>
    %c0_9 = arith.constant 0 : index
    %c0_10 = arith.constant 0 : index
    %c0_11 = arith.constant 0 : index
    %28 = vector.load %arg2[%c0_9, %c0_10, %c0_11] : memref<1x16x256xbf16, #tpu.memory_space<vmem>>, vector<1x16x256xbf16>
    tpu.vector_store %arg2[%c0_9, %c0_10, %c0_11], %27 {strides = array<i32>} : memref<1x16x256xbf16, #tpu.memory_space<vmem>>, vector<1x16x256xbf16>,
    return
  }
  func.func @transform_0(%arg0: i32) -> (i32, i32, i32) {
    %c0_i32 = arith.constant 0 : i32
    %c0_i32_0 = arith.constant 0 : i32
    %c0_i32_1 = arith.constant 0 : i32
    return %arg0, %c0_i32, %c0_i32_0 : i32, i32, i32
  }
  func.func @transform_1(%arg0: i32) -> (i32, i32, i32) {
    %c0_i32 = arith.constant 0 : i32
    %c0_i32_0 = arith.constant 0 : i32
    %c0_i32_1 = arith.constant 0 : i32
    return %arg0, %c0_i32, %c0_i32_0 : i32, i32, i32
  }
}

module attributes {stable_mosaic.version = 11 : i64} {
  func.func @_matmul_bias_kernel(%arg0: i32, %arg1: i32, %arg2: i32, %arg3: memref<16x2048xbf16, #tpu.memory_space<vmem>>, %arg4: memref<2048x512xbf16, #tpu.memory_space<vmem>>, %arg5: memref<1x512xf32, #tpu.memory_space<vmem>>, %arg6: memref<16x512xf32, #tpu.memory_space<vmem>>) attributes {dimension_semantics = [#tpu.dimension_semantics<parallel>, #tpu.dimension_semantics<parallel>, #tpu.dimension_semantics<arbitrary>], iteration_bounds = array<i64: 1, 1, 2>, scalar_prefetch = 0 : i64, scratch_operands = 0 : i64, tpu.core_type = #tpu.core_type<tc>, window_params = [{transform_indices = @transform_0, window_bounds = array<i64: 16, 2048>}, {transform_indices = @transform_1, window_bounds = array<i64: 2048, 512>}, {transform_indices = @transform_2, window_bounds = array<i64: 1, 512>}, {transform_indices = @transform_3, window_bounds = array<i64: 16, 512>}]} {
    %c0_i32 = arith.constant 0 : i32
    %0 = arith.cmpi eq, %arg2, %c0_i32 : i32
    %1 = arith.extui %0 : i1 to i32
    %c0_i32_0 = arith.constant 0 : i32
    %2 = arith.cmpi ne, %1, %c0_i32_0 : i32
    scf.if %2 {
      %cst_9 = arith.constant 0.000000e+00 : f32
      %12 = vector.broadcast %cst_9 : f32 to vector<16x512xf32>
      %c0_10 = arith.constant 0 : index
      %c0_11 = arith.constant 0 : index
      %13 = vector.load %arg6[%c0_10, %c0_11] : memref<16x512xf32, #tpu.memory_space<vmem>>, vector<16x512xf32>
      tpu.vector_store %arg6[%c0_10, %c0_11], %12 {strides = array<i32>} : memref<16x512xf32, #tpu.memory_space<vmem>>, vector<16x512xf32>,
    } else {
    }
    %c0 = arith.constant 0 : index
    %c0_1 = arith.constant 0 : index
    %3 = vector.load %arg6[%c0, %c0_1] : memref<16x512xf32, #tpu.memory_space<vmem>>, vector<16x512xf32>
    %c0_2 = arith.constant 0 : index
    %c0_3 = arith.constant 0 : index
    %4 = vector.load %arg3[%c0_2, %c0_3] : memref<16x2048xbf16, #tpu.memory_space<vmem>>, vector<16x2048xbf16>
    %c0_4 = arith.constant 0 : index
    %c0_5 = arith.constant 0 : index
    %5 = vector.load %arg4[%c0_4, %c0_5] : memref<2048x512xbf16, #tpu.memory_space<vmem>>, vector<2048x512xbf16>
    %cst = arith.constant dense<0.000000e+00> : vector<16x512xf32>
    %6 = tpu.matmul %4, %5, %cst {dimension_numbers = #tpu.dot_dimension_numbers<[1], [0], [0], [1], [0, 0, 1, 1], [], []>} : vector<16x2048xbf16>, vector<2048x512xbf16>, vector<16x512xf32> -> vector<16x512xf32>
    %7 = arith.addf %3, %6 : vector<16x512xf32>
    %c0_6 = arith.constant 0 : index
    %c0_7 = arith.constant 0 : index
    %8 = vector.load %arg6[%c0_6, %c0_7] : memref<16x512xf32, #tpu.memory_space<vmem>>, vector<16x512xf32>
    tpu.vector_store %arg6[%c0_6, %c0_7], %7 {strides = array<i32>} : memref<16x512xf32, #tpu.memory_space<vmem>>, vector<16x512xf32>,
    %c1_i32 = arith.constant 1 : i32
    %9 = arith.cmpi eq, %arg2, %c1_i32 : i32
    %10 = arith.extui %9 : i1 to i32
    %c0_i32_8 = arith.constant 0 : i32
    %11 = arith.cmpi ne, %10, %c0_i32_8 : i32
    scf.if %11 {
      %c0_9 = arith.constant 0 : index
      %c0_10 = arith.constant 0 : index
      %12 = vector.load %arg6[%c0_9, %c0_10] : memref<16x512xf32, #tpu.memory_space<vmem>>, vector<16x512xf32>
      %c0_11 = arith.constant 0 : index
      %c0_12 = arith.constant 0 : index
      %13 = vector.load %arg5[%c0_11, %c0_12] : memref<1x512xf32, #tpu.memory_space<vmem>>, vector<1x512xf32>
      %14 = vector.broadcast %13 : vector<1x512xf32> to vector<16x512xf32>
      %15 = arith.addf %12, %14 : vector<16x512xf32>
      %c0_13 = arith.constant 0 : index
      %c0_14 = arith.constant 0 : index
      %16 = vector.load %arg6[%c0_13, %c0_14] : memref<16x512xf32, #tpu.memory_space<vmem>>, vector<16x512xf32>
      tpu.vector_store %arg6[%c0_13, %c0_14], %15 {strides = array<i32>} : memref<16x512xf32, #tpu.memory_space<vmem>>, vector<16x512xf32>,
    } else {
    }
    return
  }
  func.func @transform_0(%arg0: i32, %arg1: i32, %arg2: i32) -> (i32, i32) {
    %c0_i32 = arith.constant 0 : i32
    return %arg0, %arg2 : i32, i32
  }
  func.func @transform_1(%arg0: i32, %arg1: i32, %arg2: i32) -> (i32, i32) {
    %c0_i32 = arith.constant 0 : i32
    return %arg2, %arg1 : i32, i32
  }
  func.func @transform_2(%arg0: i32, %arg1: i32, %arg2: i32) -> (i32, i32) {
    %c0_i32 = arith.constant 0 : i32
    %c0_i32_0 = arith.constant 0 : i32
    return %c0_i32, %arg1 : i32, i32
  }
  func.func @transform_3(%arg0: i32, %arg1: i32, %arg2: i32) -> (i32, i32) {
    %c0_i32 = arith.constant 0 : i32
    return %arg0, %arg1 : i32, i32
  }
}

module attributes {stable_mosaic.version = 11 : i64} {
  func.func @_instnorm_lrelu_fused_kernel(%arg0: i32, %arg1: memref<1x4x512xf32, #tpu.memory_space<vmem>>, %arg2: memref<1x4x512xbf16, #tpu.memory_space<vmem>>) attributes {dimension_semantics = [#tpu.dimension_semantics<parallel>], iteration_bounds = array<i64: 2>, scalar_prefetch = 0 : i64, scratch_operands = 0 : i64, tpu.core_type = #tpu.core_type<tc>, window_params = [{transform_indices = @transform_0, window_bounds = array<i64: 1, 4, 512>}, {transform_indices = @transform_1, window_bounds = array<i64: 1, 4, 512>}]} {
    %c0 = arith.constant 0 : index
    %c0_0 = arith.constant 0 : index
    %c0_1 = arith.constant 0 : index
    %0 = vector.load %arg1[%c0, %c0_0, %c0_1] : memref<1x4x512xf32, #tpu.memory_space<vmem>>, vector<1x4x512xf32>
    %cst = arith.constant dense<0.000000e+00> : vector<1x512xf32>
    %1 = vector.multi_reduction <add>, %0, %cst [1] : vector<1x4x512xf32> to vector<1x512xf32>
    %2 = vector.shape_cast %1 : vector<1x512xf32> to vector<1x1x512xf32>
    %3 = arith.mulf %0, %0 : vector<1x4x512xf32>
    %cst_2 = arith.constant dense<0.000000e+00> : vector<1x512xf32>
    %4 = vector.multi_reduction <add>, %3, %cst_2 [1] : vector<1x4x512xf32> to vector<1x512xf32>
    %5 = vector.shape_cast %4 : vector<1x512xf32> to vector<1x1x512xf32>
    %cst_3 = arith.constant 2.500000e-01 : f32
    %6 = vector.broadcast %cst_3 : f32 to vector<1x1x512xf32>
    %7 = arith.mulf %2, %6 : vector<1x1x512xf32>
    %cst_4 = arith.constant 2.500000e-01 : f32
    %8 = vector.broadcast %cst_4 : f32 to vector<1x1x512xf32>
    %9 = arith.mulf %5, %8 : vector<1x1x512xf32>
    %10 = arith.mulf %7, %7 : vector<1x1x512xf32>
    %11 = arith.subf %9, %10 : vector<1x1x512xf32>
    %cst_5 = arith.constant 0.000000e+00 : f32
    %12 = vector.broadcast %cst_5 : f32 to vector<1x1x512xf32>
    %13 = arith.maximumf %11, %12 : vector<1x1x512xf32>
    %14 = vector.broadcast %7 : vector<1x1x512xf32> to vector<1x4x512xf32>
    %15 = arith.subf %0, %14 : vector<1x4x512xf32>
    %cst_6 = arith.constant 9.99999974E-6 : f32
    %16 = vector.broadcast %cst_6 : f32 to vector<1x1x512xf32>
    %17 = arith.addf %13, %16 : vector<1x1x512xf32>
    %18 = math.rsqrt %17 : vector<1x1x512xf32>
    %19 = vector.broadcast %18 : vector<1x1x512xf32> to vector<1x4x512xf32>
    %20 = arith.mulf %15, %19 : vector<1x4x512xf32>
    %cst_7 = arith.constant 0.000000e+00 : f32
    %21 = vector.broadcast %cst_7 : f32 to vector<1x4x512xf32>
    %22 = arith.cmpf oge, %20, %21 : vector<1x4x512xf32>
    %cst_8 = arith.constant 2.000000e-01 : f32
    %23 = vector.broadcast %cst_8 : f32 to vector<1x4x512xf32>
    %24 = arith.mulf %23, %20 : vector<1x4x512xf32>
    %25 = arith.select %22, %20, %24 : vector<1x4x512xi1>, vector<1x4x512xf32>
    %26 = arith.truncf %25 : vector<1x4x512xf32> to vector<1x4x512xbf16>
    %c0_9 = arith.constant 0 : index
    %c0_10 = arith.constant 0 : index
    %c0_11 = arith.constant 0 : index
    %27 = vector.load %arg2[%c0_9, %c0_10, %c0_11] : memref<1x4x512xbf16, #tpu.memory_space<vmem>>, vector<1x4x512xbf16>
    tpu.vector_store %arg2[%c0_9, %c0_10, %c0_11], %26 {strides = array<i32>} : memref<1x4x512xbf16, #tpu.memory_space<vmem>>, vector<1x4x512xbf16>,
    return
  }
  func.func @transform_0(%arg0: i32) -> (i32, i32, i32) {
    %c0_i32 = arith.constant 0 : i32
    %c0_i32_0 = arith.constant 0 : i32
    %c0_i32_1 = arith.constant 0 : i32
    return %arg0, %c0_i32, %c0_i32_0 : i32, i32, i32
  }
  func.func @transform_1(%arg0: i32) -> (i32, i32, i32) {
    %c0_i32 = arith.constant 0 : i32
    %c0_i32_0 = arith.constant 0 : i32
    %c0_i32_1 = arith.constant 0 : i32
    return %arg0, %c0_i32, %c0_i32_0 : i32, i32, i32
  }
}

module attributes {stable_mosaic.version = 11 : i64} {
  func.func @_matmul_bias_kernel(%arg0: i32, %arg1: i32, %arg2: i32, %arg3: memref<16x2048xbf16, #tpu.memory_space<vmem>>, %arg4: memref<2048x128xbf16, #tpu.memory_space<vmem>>, %arg5: memref<1x128xf32, #tpu.memory_space<vmem>>, %arg6: memref<16x128xf32, #tpu.memory_space<vmem>>) attributes {dimension_semantics = [#tpu.dimension_semantics<parallel>, #tpu.dimension_semantics<parallel>, #tpu.dimension_semantics<arbitrary>], iteration_bounds = array<i64: 1, 1, 4>, scalar_prefetch = 0 : i64, scratch_operands = 0 : i64, tpu.core_type = #tpu.core_type<tc>, window_params = [{transform_indices = @transform_0, window_bounds = array<i64: 16, 2048>}, {transform_indices = @transform_1, window_bounds = array<i64: 2048, 128>}, {transform_indices = @transform_2, window_bounds = array<i64: 1, 128>}, {transform_indices = @transform_3, window_bounds = array<i64: 16, 128>}]} {
    %c0_i32 = arith.constant 0 : i32
    %0 = arith.cmpi eq, %arg2, %c0_i32 : i32
    %1 = arith.extui %0 : i1 to i32
    %c0_i32_0 = arith.constant 0 : i32
    %2 = arith.cmpi ne, %1, %c0_i32_0 : i32
    scf.if %2 {
      %cst_9 = arith.constant 0.000000e+00 : f32
      %12 = vector.broadcast %cst_9 : f32 to vector<16x128xf32>
      %c0_10 = arith.constant 0 : index
      %c0_11 = arith.constant 0 : index
      %13 = vector.load %arg6[%c0_10, %c0_11] : memref<16x128xf32, #tpu.memory_space<vmem>>, vector<16x128xf32>
      tpu.vector_store %arg6[%c0_10, %c0_11], %12 {strides = array<i32>} : memref<16x128xf32, #tpu.memory_space<vmem>>, vector<16x128xf32>,
    } else {
    }
    %c0 = arith.constant 0 : index
    %c0_1 = arith.constant 0 : index
    %3 = vector.load %arg6[%c0, %c0_1] : memref<16x128xf32, #tpu.memory_space<vmem>>, vector<16x128xf32>
    %c0_2 = arith.constant 0 : index
    %c0_3 = arith.constant 0 : index
    %4 = vector.load %arg3[%c0_2, %c0_3] : memref<16x2048xbf16, #tpu.memory_space<vmem>>, vector<16x2048xbf16>
    %c0_4 = arith.constant 0 : index
    %c0_5 = arith.constant 0 : index
    %5 = vector.load %arg4[%c0_4, %c0_5] : memref<2048x128xbf16, #tpu.memory_space<vmem>>, vector<2048x128xbf16>
    %cst = arith.constant dense<0.000000e+00> : vector<16x128xf32>
    %6 = tpu.matmul %4, %5, %cst {dimension_numbers = #tpu.dot_dimension_numbers<[1], [0], [0], [1], [0, 0, 1, 1], [], []>} : vector<16x2048xbf16>, vector<2048x128xbf16>, vector<16x128xf32> -> vector<16x128xf32>
    %7 = arith.addf %3, %6 : vector<16x128xf32>
    %c0_6 = arith.constant 0 : index
    %c0_7 = arith.constant 0 : index
    %8 = vector.load %arg6[%c0_6, %c0_7] : memref<16x128xf32, #tpu.memory_space<vmem>>, vector<16x128xf32>
    tpu.vector_store %arg6[%c0_6, %c0_7], %7 {strides = array<i32>} : memref<16x128xf32, #tpu.memory_space<vmem>>, vector<16x128xf32>,
    %c3_i32 = arith.constant 3 : i32
    %9 = arith.cmpi eq, %arg2, %c3_i32 : i32
    %10 = arith.extui %9 : i1 to i32
    %c0_i32_8 = arith.constant 0 : i32
    %11 = arith.cmpi ne, %10, %c0_i32_8 : i32
    scf.if %11 {
      %c0_9 = arith.constant 0 : index
      %c0_10 = arith.constant 0 : index
      %12 = vector.load %arg6[%c0_9, %c0_10] : memref<16x128xf32, #tpu.memory_space<vmem>>, vector<16x128xf32>
      %c0_11 = arith.constant 0 : index
      %c0_12 = arith.constant 0 : index
      %13 = vector.load %arg5[%c0_11, %c0_12] : memref<1x128xf32, #tpu.memory_space<vmem>>, vector<1x128xf32>
      %14 = vector.broadcast %13 : vector<1x128xf32> to vector<16x128xf32>
      %15 = arith.addf %12, %14 : vector<16x128xf32>
      %c0_13 = arith.constant 0 : index
      %c0_14 = arith.constant 0 : index
      %16 = vector.load %arg6[%c0_13, %c0_14] : memref<16x128xf32, #tpu.memory_space<vmem>>, vector<16x128xf32>
      tpu.vector_store %arg6[%c0_13, %c0_14], %15 {strides = array<i32>} : memref<16x128xf32, #tpu.memory_space<vmem>>, vector<16x128xf32>,
    } else {
    }
    return
  }
  func.func @transform_0(%arg0: i32, %arg1: i32, %arg2: i32) -> (i32, i32) {
    %c0_i32 = arith.constant 0 : i32
    return %arg0, %arg2 : i32, i32
  }
  func.func @transform_1(%arg0: i32, %arg1: i32, %arg2: i32) -> (i32, i32) {
    %c0_i32 = arith.constant 0 : i32
    return %arg2, %arg1 : i32, i32
  }
  func.func @transform_2(%arg0: i32, %arg1: i32, %arg2: i32) -> (i32, i32) {
    %c0_i32 = arith.constant 0 : i32
    %c0_i32_0 = arith.constant 0 : i32
    return %c0_i32, %arg1 : i32, i32
  }
  func.func @transform_3(%arg0: i32, %arg1: i32, %arg2: i32) -> (i32, i32) {
    %c0_i32 = arith.constant 0 : i32
    return %arg0, %arg1 : i32, i32
  }
}

</mosaic_0001>

<llo_original>
// kernel: discriminator_forward.8
$region0: #{discriminator_forward.8}
  #allocation0 [shape = 'u32[]', space=smem, size = 0x4, offset = 0x4, fixed_abs, tag = 'smem constant byte address 0x4 - core index']
  #allocation1 [shape = 'u32[144,128]{1,0:T(1,128)}', space=vmem, size = 0x12000, scoped, tag = 'internal scratch']
  %s0 = inlined_call_operand.vmem [shape: bf16[512,96], index: 0, kind: input, shape index: {}]
  %s1 = inlined_call_operand.vmem [shape: bf16[96,128], index: 1, kind: input, shape index: {}]
  %s2 = inlined_call_operand.vmem [shape: f32[1,128], index: 2, kind: input, shape index: {}]
  %s3 = inlined_call_operand.vmem [shape: bf16[512,128], index: 3, kind: output, shape index: {}]
  %s4 = sld [smem:[#allocation0]]
  $region45: #{discriminator_forward.8} parent=0
    _
  %s6 = ssub.s32 1, %s4
  %s7 = scalar_select 0, %s6, %s4
  loop: start=0, step=1, limit=4
  $region2: #{discriminator_forward.8} parent=0 // loop_pre_header
    _
  $region3: #{discriminator_forward.8} parent=0 // loop_header
    %s9 = sphi 0, %s13
    %p10 = scmp.ge.s32.totalorder %s9, 4
    %s16 = sphi 0, %s35
    %s17 = sphi 0, %s31
    %s18 = sphi 0, %s27
    %s19 = sphi 0, %s16
    %s20 = sphi 0, %s17
    %s21 = sphi 0, %s18
    %s22 = sphi 0, %s19
    %s23 = sphi 0, %s20
    %s24 = sphi 0, %s21
    %s40 = sphi 0, %s42
    %s43 = sphi 0, %s40
    %s44 = sphi 0, %s43
    %s60 = sphi 0, %s44
    %s68 = sphi 0, %s70
    %s71 = sphi 0, %s68
    %s72 = sphi 0, %s71
    %s88 = sphi 0, %s72
    %s94 = sphi 0, %s96
    %s97 = sphi 0, %s94
    %s98 = sphi 0, %s97
    %s114 = sphi 0, %s98
    %s122 = sphi 0, %s124
    %s125 = sphi 0, %s122
    %s126 = sphi 0, %s125
    %s142 = sphi 0, %s126
  $region4: #{discriminator_forward.8} parent=0 // loop_header_branch
    %12 = sbr.rel (%p10) target = $region8
  $region5: #{discriminator_forward.8} parent=0 // loop_body
    %s14 = ssub.s32 %s9, 1
    %s15 = ssub.s32 %s9, 2
    %s25 = sadd.s32 1, %s18
    %p26 = scmp.ge.s32.totalorder %s25, 1
    %s27 = scalar_select %p26, 0, %s25
    %s28 = sadd.s32 1, %s17
    %s29 = scalar_select %p26, %s28, %s17
    %p30 = scmp.ge.s32.totalorder %s29, 1
    %s31 = scalar_select %p30, 0, %s29
    %s32 = sadd.s32 1, %s16
    %s33 = scalar_select %p30, %s32, %s16
    %p34 = scmp.ge.s32.totalorder %s33, 2
    %s35 = scalar_select %p34, 0, %s33
    %s36 = ssub.s32 %s16, %s35
    %s37 = ssub.s32 %s18, %s27
    %s38 = sor.u32 %s36, %s37
    %p39 = scmp.eq.s32.totalorder %s38, 0
    %s41 = sadd.s32 %s40, 1
    %s42 = scalar_select %p39, %s40, %s41
    %p45 = pneg %p39
    %p46 = scmp.eq.s32.totalorder %s9, 1
    %p47 = por %p45, %p46
    %p48 = scmp.ne.s32.totalorder %s40, %s43
    %p49 = scmp.eq.s32.totalorder %s9, 0
    %p50 = por %p48, %p49
    %p51 = scmp.ne.s32.totalorder %s40, %s43
    %p52 = scmp.eq.s32.totalorder %s14, 1
    %p53 = por %p51, %p52
    %p54 = scmp.ne.s32.totalorder %s43, %s44
    %p55 = scmp.eq.s32.totalorder %s14, 0
    %p56 = por %p54, %p55
    %p57 = scmp.ne.s32.totalorder %s43, %s44
    %p58 = scmp.eq.s32.totalorder %s15, 1
    %p59 = por %p57, %p58
    %p61 = scmp.ne.s32.totalorder %s44, %s60
    %p62 = scmp.eq.s32.totalorder %s15, 0
    %p63 = por %p61, %p62
    %s64 = ssub.s32 %s18, %s27
    %s65 = ssub.s32 %s17, %s31
    %s66 = sor.u32 %s64, %s65
    %p67 = scmp.eq.s32.totalorder %s66, 0
    %s69 = sadd.s32 %s68, 1
    %s70 = scalar_select %p67, %s68, %s69
    %p73 = pneg %p67
    %p74 = scmp.eq.s32.totalorder %s9, 1
    %p75 = por %p73, %p74
    %p76 = scmp.ne.s32.totalorder %s68, %s71
    %p77 = scmp.eq.s32.totalorder %s9, 0
    %p78 = por %p76, %p77
    %p79 = scmp.ne.s32.totalorder %s68, %s71
    %p80 = scmp.eq.s32.totalorder %s14, 1
    %p81 = por %p79, %p80
    %p82 = scmp.ne.s32.totalorder %s71, %s72
    %p83 = scmp.eq.s32.totalorder %s14, 0
    %p84 = por %p82, %p83
    %p85 = scmp.ne.s32.totalorder %s71, %s72
    %p86 = scmp.eq.s32.totalorder %s15, 1
    %p87 = por %p85, %p86
    %p89 = scmp.ne.s32.totalorder %s72, %s88
    %p90 = scmp.eq.s32.totalorder %s15, 0
    %p91 = por %p89, %p90
    %s92 = ssub.s32 %s17, %s31
    %p93 = scmp.eq.s32.totalorder %s92, 0
    %s95 = sadd.s32 %s94, 1
    %s96 = scalar_select %p93, %s94, %s95
    %p99 = pneg %p93
    %p100 = scmp.eq.s32.totalorder %s9, 1
    %p101 = por %p99, %p100
    %p102 = scmp.ne.s32.totalorder %s94, %s97
    %p103 = scmp.eq.s32.totalorder %s9, 0
    %p104 = por %p102, %p103
    %p105 = scmp.ne.s32.totalorder %s94, %s97
    %p106 = scmp.eq.s32.totalorder %s14, 1
    %p107 = por %p105, %p106
    %p108 = scmp.ne.s32.totalorder %s97, %s98
    %p109 = scmp.eq.s32.totalorder %s14, 0
    %p110 = por %p108, %p109
    %p111 = scmp.ne.s32.totalorder %s97, %s98
    %p112 = scmp.eq.s32.totalorder %s15, 1
    %p113 = por %p111, %p112
    %p115 = scmp.ne.s32.totalorder %s98, %s114
    %p116 = scmp.eq.s32.totalorder %s15, 0
    %p117 = por %p115, %p116
    %s118 = ssub.s32 %s16, %s35
    %s119 = ssub.s32 %s17, %s31
    %s120 = sor.u32 %s118, %s119
    %p121 = scmp.eq.s32.totalorder %s120, 0
    %s123 = sadd.s32 %s122, 1
    %s124 = scalar_select %p121, %s122, %s123
    %p127 = pneg %p121
    %p128 = scmp.eq.s32.totalorder %s9, 1
    %p129 = por %p127, %p128
    %p130 = scmp.ne.s32.totalorder %s122, %s125
    %p131 = scmp.eq.s32.totalorder %s9, 0
    %p132 = por %p130, %p131
    %p133 = scmp.ne.s32.totalorder %s122, %s125
    %p134 = scmp.eq.s32.totalorder %s14, 1
    %p135 = por %p133, %p134
    %p136 = scmp.ne.s32.totalorder %s125, %s126
    %p137 = scmp.eq.s32.totalorder %s14, 0
    %p138 = por %p136, %p137
    %p139 = scmp.ne.s32.totalorder %s125, %s126
    %p140 = scmp.eq.s32.totalorder %s15, 1
    %p141 = por %p139, %p140
    %p143 = scmp.ne.s32.totalorder %s126, %s142
    %p144 = scmp.eq.s32.totalorder %s15, 0
    %p145 = por %p143, %p144
    %p146 = scmp.le.s32.totalorder 1, %s9
    %p147 = scmp.lt.s32.totalorder %s9, 3
    %p148 = pnand %p146, %p147
    %p149 = pneg %p148
    // Predicated region
    $region9: #{discriminator_forward.8} parent=5 // pred_check
      _
    $region10: #{discriminator_forward.8} parent=5 // pred_check_branch
      %151 = sbr.rel (%p148) target = $region12
    $region11: #{discriminator_forward.8} parent=5 // pred_region
      %s152 = ssub.s32 %s9, 1
      // Predicated region
      $region13: #{discriminator_forward.8} parent=11 // pred_check
        %p153 = pneg %p84
      $region14: #{discriminator_forward.8} parent=11 // pred_check_branch
        %155 = sbr.rel (%p153) target = $region16
      $region15: #{discriminator_forward.8} parent=11 // pred_region
        %s156 = smul.u32 12, %s21
        %p157 = scmp.lt.s32.totalorder %s156, 11
        %s158 = scalar_select %p157, %s156, 11
        %p159 = scmp.lt.s32.totalorder %s20, 0
        %s160 = scalar_select %p159, %s20, 0
        %s161 = sadd.s32 %s160, %s158
        %s162 = smul.addr %s161, 4
        %s163 = scalar_lea.vmem %s1, %s162
        %s164 = smul.u32 12, %s21
      $region16: #{discriminator_forward.8} parent=11 // pred_fallthru
        _
      // Predicated region
      $region17: #{discriminator_forward.8} parent=11 // pred_check
        %p165 = pneg %p110
      $region18: #{discriminator_forward.8} parent=11 // pred_check_branch
        %167 = sbr.rel (%p165) target = $region20
      $region19: #{discriminator_forward.8} parent=11 // pred_region
        %p168 = scmp.lt.s32.totalorder %s20, 0
        %s169 = scalar_select %p168, %s20, 0
        %s170 = scalar_lea.vmem %s2, %s169
      $region20: #{discriminator_forward.8} parent=11 // pred_fallthru
        _
    $region12: #{discriminator_forward.8} parent=5 // pred_fallthru
      _
    %p171 = scmp.lt.s32.totalorder %s9, 2
    // Predicated region
    $region21: #{discriminator_forward.8} parent=5 // pred_check
      %p172 = pneg %p171
    $region22: #{discriminator_forward.8} parent=5 // pred_check_branch
      %174 = sbr.rel (%p172) target = $region24
    $region23: #{discriminator_forward.8} parent=5 // pred_region
      // Predicated region
      $region25: #{discriminator_forward.8} parent=23 // pred_check
        %p175 = pneg %p50
      $region26: #{discriminator_forward.8} parent=23 // pred_check_branch
        %177 = sbr.rel (%p175) target = $region28
      $region27: #{discriminator_forward.8} parent=23 // pred_region
        %s178 = smul.u32 32, %s16
        %p179 = scmp.lt.s32.totalorder %s178, 63
        %s180 = scalar_select %p179, %s178, 63
        %p181 = scmp.lt.s32.totalorder %s18, 0
        %s182 = scalar_select %p181, %s18, 0
        %s183 = sadd.s32 %s182, %s180
        %s184 = smul.addr %s183, 4
        %s185 = scalar_lea.vmem %s0, %s184
        %s186 = smul.u32 32, %s16
      $region28: #{discriminator_forward.8} parent=23 // pred_fallthru
        _
    $region24: #{discriminator_forward.8} parent=5 // pred_fallthru
      _
    %p187 = scmp.le.s32.totalorder 1, %s9
    %p188 = scmp.lt.s32.totalorder %s9, 3
    %p189 = pnand %p187, %p188
    %p190 = pneg %p189
    // Predicated region
    $region29: #{discriminator_forward.8} parent=5 // pred_check
      _
    $region30: #{discriminator_forward.8} parent=5 // pred_check_branch
      %192 = sbr.rel (%p189) target = $region32
    $region31: #{discriminator_forward.8} parent=5 // pred_region
      %s193 = ssub.s32 %s9, 1
      %s194 = smul.u32 32, %s19
      %p195 = scmp.lt.s32.totalorder %s194, 63
      %s196 = scalar_select %p195, %s194, 63
      %p197 = scmp.lt.s32.totalorder %s21, 0
      %s198 = scalar_select %p197, %s21, 0
      %s199 = sadd.s32 %s198, %s196
      %s200 = smul.addr %s199, 4
      %s201 = scalar_lea.vmem %s0, %s200
      %p202 = pneg %p56
      %p203 = pneg %p53
      %s204 = smul.u32 12, %s21
      %p205 = scmp.lt.s32.totalorder %s204, 11
      %s206 = scalar_select %p205, %s204, 11
      %p207 = scmp.lt.s32.totalorder %s20, 0
      %s208 = scalar_select %p207, %s20, 0
      %s209 = sadd.s32 %s208, %s206
      %s210 = smul.addr %s209, 4
      %s211 = scalar_lea.vmem %s1, %s210
      %p212 = pneg %p84
      %p213 = pneg %p81
      %p214 = scmp.lt.s32.totalorder %s20, 0
      %s215 = scalar_select %p214, %s20, 0
      %s216 = scalar_lea.vmem %s2, %s215
      %p217 = pneg %p110
      %p218 = pneg %p107
      %p219 = pneg %p138
      %p220 = pneg %p135
      %s221 = smul.u32 32, %s19
      %p222 = scmp.lt.s32.totalorder %s221, 63
      %s223 = scalar_select %p222, %s221, 63
      %p224 = scmp.lt.s32.totalorder %s20, 0
      %s225 = scalar_select %p224, %s20, 0
      %s226 = sadd.s32 %s225, %s223
      %s227 = smul.addr %s226, 4
      %s228 = scalar_lea.vmem %s3, %s227
      %s229 = smul.u32 32, %s19
      %p230 = scmp.lt.s32.totalorder %s229, 63
      %s231 = scalar_select %p230, %s229, 63
      %p232 = scmp.lt.s32.totalorder %s21, 0
      %s233 = scalar_select %p232, %s21, 0
      %s234 = sadd.s32 %s233, %s231
      %s235 = smul.addr %s234, 4
      %s236 = scalar_lea.vmem %s0, %s235
      %s237 = smul.u32 32, %s19
      %s238 = smul.u32 12, %s21
      %p239 = scmp.lt.s32.totalorder %s238, 11
      %s240 = scalar_select %p239, %s238, 11
      %p241 = scmp.lt.s32.totalorder %s20, 0
      %s242 = scalar_select %p241, %s20, 0
      %s243 = sadd.s32 %s242, %s240
      %s244 = smul.addr %s243, 4
      %s245 = scalar_lea.vmem %s1, %s244
      %s246 = smul.u32 12, %s21
      %p247 = scmp.lt.s32.totalorder %s20, 0
      %s248 = scalar_select %p247, %s20, 0
      %s249 = scalar_lea.vmem %s2, %s248
      %s250 = smul.u32 32, %s19
      %p251 = scmp.lt.s32.totalorder %s250, 63
      %s252 = scalar_select %p251, %s250, 63
      %p253 = scmp.lt.s32.totalorder %s20, 0
      %s254 = scalar_select %p253, %s20, 0
      %s255 = sadd.s32 %s254, %s252
      %s256 = smul.addr %s255, 4
      %s257 = scalar_lea.vmem %s3, %s256
      %s258 = smul.u32 32, %s19
      %v260 = vld [vmem:[%s236] sm:$0xf]
      %v261 = vld [vmem:[%s236 + $0x4] sm:$0xf]
      %v262 = vld [vmem:[%s236 + $0x8] sm:$0xf]
      %v263 = vld [vmem:[%s236 + $0xc] sm:$0xf]
      %v264 = vld [vmem:[%s236 + $0x10] sm:$0xf]
      %v265 = vld [vmem:[%s236 + $0x14] sm:$0xf]
      %v266 = vld [vmem:[%s236 + $0x18] sm:$0xf]
      %v267 = vld [vmem:[%s236 + $0x1c] sm:$0xf]
      %v268 = vld [vmem:[%s236 + $0x20] sm:$0xf]
      %v269 = vld [vmem:[%s236 + $0x24] sm:$0xf]
      %v270 = vld [vmem:[%s236 + $0x28] sm:$0xf]
      %v271 = vld [vmem:[%s236 + $0x2c] sm:$0xf]
      %v272 = vld [vmem:[%s236 + $0x30] sm:$0xf]
      %v273 = vld [vmem:[%s236 + $0x34] sm:$0xf]
      %v274 = vld [vmem:[%s236 + $0x38] sm:$0xf]
      %v275 = vld [vmem:[%s236 + $0x3c] sm:$0xf]
      %v276 = vld [vmem:[%s236 + $0x40] sm:$0xf]
      %v277 = vld [vmem:[%s236 + $0x44] sm:$0xf]
      %v278 = vld [vmem:[%s236 + $0x48] sm:$0xf]
      %v279 = vld [vmem:[%s236 + $0x4c] sm:$0xf]
      %v280 = vld [vmem:[%s236 + $0x50] sm:$0xf]
      %v281 = vld [vmem:[%s236 + $0x54] sm:$0xf]
      %v282 = vld [vmem:[%s236 + $0x58] sm:$0xf]
      %v283 = vld [vmem:[%s236 + $0x5c] sm:$0xf]
      %v284 = vld [vmem:[%s236 + $0x60] sm:$0xf]
      %v285 = vld [vmem:[%s236 + $0x64] sm:$0xf]
      %v286 = vld [vmem:[%s236 + $0x68] sm:$0xf]
      %v287 = vld [vmem:[%s236 + $0x6c] sm:$0xf]
      %v288 = vld [vmem:[%s236 + $0x70] sm:$0xf]
      %v289 = vld [vmem:[%s236 + $0x74] sm:$0xf]
      %v290 = vld [vmem:[%s236 + $0x78] sm:$0xf]
      %v291 = vld [vmem:[%s236 + $0x7c] sm:$0xf]
      %v292 = vld [vmem:[%s245] sm:$0xf]
      %v293 = vld [vmem:[%s245 + $0x4] sm:$0xf]
      %v294 = vld [vmem:[%s245 + $0x8] sm:$0xf]
      %v295 = vld [vmem:[%s245 + $0xc] sm:$0xf]
      %v296 = vld [vmem:[%s245 + $0x10] sm:$0xf]
      %v297 = vld [vmem:[%s245 + $0x14] sm:$0xf]
      %v298 = vld [vmem:[%s245 + $0x18] sm:$0xf]
      %v299 = vld [vmem:[%s245 + $0x1c] sm:$0xf]
      %v300 = vld [vmem:[%s245 + $0x20] sm:$0xf]
      %v301 = vld [vmem:[%s245 + $0x24] sm:$0xf]
      %v302 = vld [vmem:[%s245 + $0x28] sm:$0xf]
      %v303 = vld [vmem:[%s245 + $0x2c] sm:$0xf]
      %v304 = vld [vmem:[%s249] sm:$0x1]
      %v306 = vlaneseq
      %v307 = vshrl.u32 %v306, 7
      %v308 = vsub.s32 0, %v307
      %v309 = vrot.slane %v304, %v308
      %v343 = vunpack.c.l.b16 %v260
      %v344 = vunpack.c.l.b16 %v261
      %v345 = vunpack.c.l.b16 %v262
      %v346 = vunpack.c.l.b16 %v263
      %v347 = vunpack.c.l.b16 %v264
      %v348 = vunpack.c.l.b16 %v265
      %v349 = vunpack.c.l.b16 %v266
      %v350 = vunpack.c.l.b16 %v267
      %v351 = vunpack.c.l.b16 %v268
      %v352 = vunpack.c.l.b16 %v269
      %v353 = vunpack.c.l.b16 %v270
      %v354 = vunpack.c.l.b16 %v271
      %v355 = vunpack.c.l.b16 %v272
      %v356 = vunpack.c.l.b16 %v273
      %v357 = vunpack.c.l.b16 %v274
      %v358 = vunpack.c.l.b16 %v275
      %v359 = vunpack.c.l.b16 %v276
      %v360 = vunpack.c.l.b16 %v277
      %v361 = vunpack.c.l.b16 %v278
      %v362 = vunpack.c.l.b16 %v279
      %v363 = vunpack.c.l.b16 %v280
      %v364 = vunpack.c.l.b16 %v281
      %v365 = vunpack.c.l.b16 %v282
      %v366 = vunpack.c.l.b16 %v283
      %v367 = vunpack.c.l.b16 %v284
      %v368 = vunpack.c.l.b16 %v285
      %v369 = vunpack.c.l.b16 %v286
      %v370 = vunpack.c.l.b16 %v287
      %v371 = vunpack.c.l.b16 %v288
      %v372 = vunpack.c.l.b16 %v289
      %v373 = vunpack.c.l.b16 %v290
      %v374 = vunpack.c.l.b16 %v291
      %v375 = vpack.c.b16 %v344, %v343
      %v376 = vpack.c.b16 %v346, %v345
      %v377 = vpack.c.b16 %v348, %v347
      %v378 = vpack.c.b16 %v350, %v349
      %v379 = vpack.c.b16 %v352, %v351
      %v380 = vpack.c.b16 %v354, %v353
      %v381 = vpack.c.b16 %v356, %v355
      %v382 = vpack.c.b16 %v358, %v357
      %v383 = vpack.c.b16 %v360, %v359
      %v384 = vpack.c.b16 %v362, %v361
      %v385 = vpack.c.b16 %v364, %v363
      %v386 = vpack.c.b16 %v366, %v365
      %v387 = vpack.c.b16 %v368, %v367
      %v388 = vpack.c.b16 %v370, %v369
      %v389 = vpack.c.b16 %v372, %v371
      %v390 = vpack.c.b16 %v374, %v373
      %v403 = vunpack.c.l.b16 %v292
      %v404 = vunpack.c.l.b16 %v293
      %v405 = vunpack.c.l.b16 %v294
      %v406 = vunpack.c.l.b16 %v295
      %v407 = vunpack.c.l.b16 %v296
      %v408 = vunpack.c.l.b16 %v297
      %v409 = vunpack.c.l.b16 %v298
      %v410 = vunpack.c.l.b16 %v299
      %v411 = vunpack.c.l.b16 %v300
      %v412 = vunpack.c.l.b16 %v301
      %v413 = vunpack.c.l.b16 %v302
      %v414 = vunpack.c.l.b16 %v303
      %v415 = vpack.c.b16 %v404, %v403
      %v416 = vpack.c.b16 %v406, %v405
      %v417 = vpack.c.b16 %v408, %v407
      %v418 = vpack.c.b16 %v410, %v409
      %v419 = vpack.c.b16 %v412, %v411
      %v420 = vpack.c.b16 %v414, %v413
      %vm427 = vcmask 785408
      %v429 = vsel %vm427, %v375, 0
      %v432 = vsel %vm427, %v376, 0
      %v435 = vsel %vm427, %v377, 0
      %v438 = vsel %vm427, %v378, 0
      %v441 = vsel %vm427, %v379, 0
      %v444 = vsel %vm427, %v380, 0
      %v447 = vsel %vm427, %v381, 0
      %v450 = vsel %vm427, %v382, 0
      %v453 = vsel %vm427, %v383, 0
      %v456 = vsel %vm427, %v384, 0
      %v459 = vsel %vm427, %v385, 0
      %v462 = vsel %vm427, %v386, 0
      %v465 = vsel %vm427, %v387, 0
      %v468 = vsel %vm427, %v388, 0
      %v471 = vsel %vm427, %v389, 0
      %v474 = vsel %vm427, %v390, 0
      %476 = vmatprep.subr.bf16.mxu0 0
      %477 = vmatpush1.bf16.msra.mxu0 %v415
      %478 = vmatprep.subr.bf16.mxu0 0
      %479 = vmatpush1.bf16.msra.mxu0 %v416
      %480 = vmatprep.subr.bf16.mxu0 0
      %481 = vmatpush1.bf16.msra.mxu0 %v417
      %482 = vmatprep.subr.bf16.mxu0 0
      %483 = vmatpush1.bf16.msra.mxu0 %v418
      %484 = vmatprep.subr.bf16.mxu0 0
      %485 = vmatpush1.bf16.msra.mxu0 %v419
      %486 = vmatprep.subr.bf16.mxu0 0
      %487 = vmatpush1.bf16.msra.mxu0 %v420
      %488 = vmatprep.subr.bf16.mxu0 0
      %489 = vmatpush1.bf16.msra.mxu0 0
      %490 = vmatprep.subr.bf16.mxu0 0
      %491 = vmatpush1.bf16.msra.mxu0 0
      %492 = vmatprep.subr.bf16.mxu0 0
      %493 = vmatpush1.bf16.msra.mxu0 0
      %494 = vmatprep.subr.bf16.mxu0 0
      %495 = vmatpush1.bf16.msra.mxu0 0
      %496 = vmatprep.subr.bf16.mxu0 0
      %497 = vmatpush1.bf16.msra.mxu0 0
      %498 = vmatprep.subr.bf16.mxu0 0
      %499 = vmatpush1.bf16.msra.mxu0 0
      %500 = vmatprep.subr.bf16.mxu0 0
      %501 = vmatpush1.bf16.msra.mxu0 0
      %502 = vmatprep.subr.bf16.mxu0 0
      %503 = vmatpush1.bf16.msra.mxu0 0
      %504 = vmatprep.subr.bf16.mxu0 0
      %505 = vmatpush1.bf16.msra.mxu0 0
      %506 = vmatprep.subr.bf16.mxu0 0
      %507 = vmatpush1.bf16.msra.mxu0 0
      %508 = vmatprep.mubr.bf16.mxu0 0
      %509 = vmatmul.mubr.bf16.gmra.mrb[0].mxu0 %v429
      %v510 = vpop.f32.mrb[0].mxu0
      %v511 = vadd.f32 %v309, %v510
      %v512 = vpop.f32.mrb[0].mxu0
      %v513 = vpop.f32.mrb[0].mxu0
      %v514 = vadd.f32 %v309, %v513
      %v515 = vpop.f32.mrb[0].mxu0
      %516 = vmatprep.mubr.bf16.mxu0 0
      %517 = vmatmul.mubr.bf16.gmra.mrb[0].mxu0 %v432
      %v518 = vpop.f32.mrb[0].mxu0
      %v519 = vadd.f32 %v309, %v518
      %v520 = vpop.f32.mrb[0].mxu0
      %v521 = vpop.f32.mrb[0].mxu0
      %v522 = vadd.f32 %v309, %v521
      %v523 = vpop.f32.mrb[0].mxu0
      %524 = vmatprep.mubr.bf16.mxu0 0
      %525 = vmatmul.mubr.bf16.gmra.mrb[0].mxu0 %v435
      %v526 = vpop.f32.mrb[0].mxu0
      %v527 = vadd.f32 %v309, %v526
      %v528 = vpop.f32.mrb[0].mxu0
      %v529 = vpop.f32.mrb[0].mxu0
      %v530 = vadd.f32 %v309, %v529
      %v531 = vpop.f32.mrb[0].mxu0
      %532 = vmatprep.mubr.bf16.mxu0 0
      %533 = vmatmul.mubr.bf16.gmra.mrb[0].mxu0 %v438
      %v534 = vpop.f32.mrb[0].mxu0
      %v535 = vadd.f32 %v309, %v534
      %v536 = vpop.f32.mrb[0].mxu0
      %v537 = vpop.f32.mrb[0].mxu0
      %v538 = vadd.f32 %v309, %v537
      %v539 = vpop.f32.mrb[0].mxu0
      %540 = vmatprep.mubr.bf16.mxu0 0
      %541 = vmatmul.mubr.bf16.gmra.mrb[0].mxu0 %v441
      %v542 = vpop.f32.mrb[0].mxu0
      %v543 = vadd.f32 %v309, %v542
      %v544 = vpop.f32.mrb[0].mxu0
      %v545 = vpop.f32.mrb[0].mxu0
      %v546 = vadd.f32 %v309, %v545
      %v547 = vpop.f32.mrb[0].mxu0
      %548 = vmatprep.mubr.bf16.mxu0 0
      %549 = vmatmul.mubr.bf16.gmra.mrb[0].mxu0 %v444
      %v550 = vpop.f32.mrb[0].mxu0
      %v551 = vadd.f32 %v309, %v550
      %v552 = vpop.f32.mrb[0].mxu0
      %v553 = vpop.f32.mrb[0].mxu0
      %v554 = vadd.f32 %v309, %v553
      %v555 = vpop.f32.mrb[0].mxu0
      %556 = vmatprep.mubr.bf16.mxu0 0
      %557 = vmatmul.mubr.bf16.gmra.mrb[0].mxu0 %v447
      %v558 = vpop.f32.mrb[0].mxu0
      %v559 = vadd.f32 %v309, %v558
      %v560 = vpop.f32.mrb[0].mxu0
      %v561 = vpop.f32.mrb[0].mxu0
      %v562 = vadd.f32 %v309, %v561
      %v563 = vpop.f32.mrb[0].mxu0
      %564 = vmatprep.mubr.bf16.mxu0 0
      %565 = vmatmul.mubr.bf16.gmra.mrb[0].mxu0 %v450
      %v566 = vpop.f32.mrb[0].mxu0
      %v567 = vadd.f32 %v309, %v566
      %v568 = vpop.f32.mrb[0].mxu0
      %v569 = vpop.f32.mrb[0].mxu0
      %v570 = vadd.f32 %v309, %v569
      %v571 = vpop.f32.mrb[0].mxu0
      %572 = vmatprep.mubr.bf16.mxu0 0
      %573 = vmatmul.mubr.bf16.gmra.mrb[0].mxu0 %v453
      %v574 = vpop.f32.mrb[0].mxu0
      %v575 = vadd.f32 %v309, %v574
      %v576 = vpop.f32.mrb[0].mxu0
      %v577 = vpop.f32.mrb[0].mxu0
      %v578 = vadd.f32 %v309, %v577
      %v579 = vpop.f32.mrb[0].mxu0
      %580 = vmatprep.mubr.bf16.mxu0 0
      %581 = vmatmul.mubr.bf16.gmra.mrb[0].mxu0 %v456
      %v582 = vpop.f32.mrb[0].mxu0
      %v583 = vadd.f32 %v309, %v582
      %v584 = vpop.f32.mrb[0].mxu0
      %v585 = vpop.f32.mrb[0].mxu0
      %v586 = vadd.f32 %v309, %v585
      %v587 = vpop.f32.mrb[0].mxu0
      %588 = vmatprep.mubr.bf16.mxu0 0
      %589 = vmatmul.mubr.bf16.gmra.mrb[0].mxu0 %v459
      %v590 = vpop.f32.mrb[0].mxu0
      %v591 = vadd.f32 %v309, %v590
      %v592 = vpop.f32.mrb[0].mxu0
      %v593 = vpop.f32.mrb[0].mxu0
      %v594 = vadd.f32 %v309, %v593
      %v595 = vpop.f32.mrb[0].mxu0
      %596 = vmatprep.mubr.bf16.mxu0 0
      %597 = vmatmul.mubr.bf16.gmra.mrb[0].mxu0 %v462
      %v598 = vpop.f32.mrb[0].mxu0
      %v599 = vadd.f32 %v309, %v598
      %v600 = vpop.f32.mrb[0].mxu0
      %v601 = vpop.f32.mrb[0].mxu0
      %v602 = vadd.f32 %v309, %v601
      %v603 = vpop.f32.mrb[0].mxu0
      %604 = vmatprep.mubr.bf16.mxu0 0
      %605 = vmatmul.mubr.bf16.gmra.mrb[0].mxu0 %v465
      %v606 = vpop.f32.mrb[0].mxu0
      %v607 = vadd.f32 %v309, %v606
      %v608 = vpop.f32.mrb[0].mxu0
      %v609 = vpop.f32.mrb[0].mxu0
      %v610 = vadd.f32 %v309, %v609
      %v611 = vpop.f32.mrb[0].mxu0
      %612 = vmatprep.mubr.bf16.mxu0 0
      %613 = vmatmul.mubr.bf16.gmra.mrb[0].mxu0 %v468
      %v614 = vpop.f32.mrb[0].mxu0
      %v615 = vadd.f32 %v309, %v614
      %v616 = vpop.f32.mrb[0].mxu0
      %v617 = vpop.f32.mrb[0].mxu0
      %v618 = vadd.f32 %v309, %v617
      %v619 = vpop.f32.mrb[0].mxu0
      %620 = vmatprep.mubr.bf16.mxu0 0
      %621 = vmatmul.mubr.bf16.gmra.mrb[0].mxu0 %v471
      %v622 = vpop.f32.mrb[0].mxu0
      %v623 = vadd.f32 %v309, %v622
      %v624 = vpop.f32.mrb[0].mxu0
      %v625 = vpop.f32.mrb[0].mxu0
      %v626 = vadd.f32 %v309, %v625
      %v627 = vpop.f32.mrb[0].mxu0
      %628 = vmatprep.mubr.bf16.mxu0 0
      %629 = vmatmul.mubr.bf16.gmra.mrb[0].mxu0 %v474
      %v630 = vpop.f32.mrb[0].mxu0
      %v631 = vadd.f32 %v309, %v630
      %v632 = vpop.f32.mrb[0].mxu0
      %v633 = vpop.f32.mrb[0].mxu0
      %v634 = vadd.f32 %v309, %v633
      %v635 = vpop.f32.mrb[0].mxu0
      %636 = vdwg.mxu0
      %vm637 = vcmp.ge.f32.partialorder %v511, 0.0
      %vm638 = vcmp.ge.f32.partialorder %v514, 0.0
      %vm639 = vcmp.ge.f32.partialorder %v519, 0.0
      %vm640 = vcmp.ge.f32.partialorder %v522, 0.0
      %vm641 = vcmp.ge.f32.partialorder %v527, 0.0
      %vm642 = vcmp.ge.f32.partialorder %v530, 0.0
      %vm643 = vcmp.ge.f32.partialorder %v535, 0.0
      %vm644 = vcmp.ge.f32.partialorder %v538, 0.0
      %vm645 = vcmp.ge.f32.partialorder %v543, 0.0
      %vm646 = vcmp.ge.f32.partialorder %v546, 0.0
      %vm647 = vcmp.ge.f32.partialorder %v551, 0.0
      %vm648 = vcmp.ge.f32.partialorder %v554, 0.0
      %vm649 = vcmp.ge.f32.partialorder %v559, 0.0
      %vm650 = vcmp.ge.f32.partialorder %v562, 0.0
      %vm651 = vcmp.ge.f32.partialorder %v567, 0.0
      %vm652 = vcmp.ge.f32.partialorder %v570, 0.0
      %vm653 = vcmp.ge.f32.partialorder %v575, 0.0
      %vm654 = vcmp.ge.f32.partialorder %v578, 0.0
      %vm655 = vcmp.ge.f32.partialorder %v583, 0.0
      %vm656 = vcmp.ge.f32.partialorder %v586, 0.0
      %vm657 = vcmp.ge.f32.partialorder %v591, 0.0
      %vm658 = vcmp.ge.f32.partialorder %v594, 0.0
      %vm659 = vcmp.ge.f32.partialorder %v599, 0.0
      %vm660 = vcmp.ge.f32.partialorder %v602, 0.0
      %vm661 = vcmp.ge.f32.partialorder %v607, 0.0
      %vm662 = vcmp.ge.f32.partialorder %v610, 0.0
      %vm663 = vcmp.ge.f32.partialorder %v615, 0.0
      %vm664 = vcmp.ge.f32.partialorder %v618, 0.0
      %vm665 = vcmp.ge.f32.partialorder %v623, 0.0
      %vm666 = vcmp.ge.f32.partialorder %v626, 0.0
      %vm667 = vcmp.ge.f32.partialorder %v631, 0.0
      %vm668 = vcmp.ge.f32.partialorder %v634, 0.0
      %v669 = vmul.f32 %v511, 0.2
      %v670 = vmul.f32 %v514, 0.2
      %v671 = vmul.f32 %v519, 0.2
      %v672 = vmul.f32 %v522, 0.2
      %v673 = vmul.f32 %v527, 0.2
      %v674 = vmul.f32 %v530, 0.2
      %v675 = vmul.f32 %v535, 0.2
      %v676 = vmul.f32 %v538, 0.2
      %v677 = vmul.f32 %v543, 0.2
      %v678 = vmul.f32 %v546, 0.2
      %v679 = vmul.f32 %v551, 0.2
      %v680 = vmul.f32 %v554, 0.2
      %v681 = vmul.f32 %v559, 0.2
      %v682 = vmul.f32 %v562, 0.2
      %v683 = vmul.f32 %v567, 0.2
      %v684 = vmul.f32 %v570, 0.2
      %v685 = vmul.f32 %v575, 0.2
      %v686 = vmul.f32 %v578, 0.2
      %v687 = vmul.f32 %v583, 0.2
      %v688 = vmul.f32 %v586, 0.2
      %v689 = vmul.f32 %v591, 0.2
      %v690 = vmul.f32 %v594, 0.2
      %v691 = vmul.f32 %v599, 0.2
      %v692 = vmul.f32 %v602, 0.2
      %v693 = vmul.f32 %v607, 0.2
      %v694 = vmul.f32 %v610, 0.2
      %v695 = vmul.f32 %v615, 0.2
      %v696 = vmul.f32 %v618, 0.2
      %v697 = vmul.f32 %v623, 0.2
      %v698 = vmul.f32 %v626, 0.2
      %v699 = vmul.f32 %v631, 0.2
      %v700 = vmul.f32 %v634, 0.2
      %v701 = vsel %vm637, %v511, %v669
      %v702 = vsel %vm638, %v514, %v670
      %v703 = vsel %vm639, %v519, %v671
      %v704 = vsel %vm640, %v522, %v672
      %v705 = vsel %vm641, %v527, %v673
      %v706 = vsel %vm642, %v530, %v674
      %v707 = vsel %vm643, %v535, %v675
      %v708 = vsel %vm644, %v538, %v676
      %v709 = vsel %vm645, %v543, %v677
      %v710 = vsel %vm646, %v546, %v678
      %v711 = vsel %vm647, %v551, %v679
      %v712 = vsel %vm648, %v554, %v680
      %v713 = vsel %vm649, %v559, %v681
      %v714 = vsel %vm650, %v562, %v682
      %v715 = vsel %vm651, %v567, %v683
      %v716 = vsel %vm652, %v570, %v684
      %v717 = vsel %vm653, %v575, %v685
      %v718 = vsel %vm654, %v578, %v686
      %v719 = vsel %vm655, %v583, %v687
      %v720 = vsel %vm656, %v586, %v688
      %v721 = vsel %vm657, %v591, %v689
      %v722 = vsel %vm658, %v594, %v690
      %v723 = vsel %vm659, %v599, %v691
      %v724 = vsel %vm660, %v602, %v692
      %v725 = vsel %vm661, %v607, %v693
      %v726 = vsel %vm662, %v610, %v694
      %v727 = vsel %vm663, %v615, %v695
      %v728 = vsel %vm664, %v618, %v696
      %v729 = vsel %vm665, %v623, %v697
      %v730 = vsel %vm666, %v626, %v698
      %v731 = vsel %vm667, %v631, %v699
      %v732 = vsel %vm668, %v634, %v700
      %v733 = vpack.c.bf16 %v702, %v701
      %v734 = vpack.c.bf16 %v704, %v703
      %v735 = vpack.c.bf16 %v706, %v705
      %v736 = vpack.c.bf16 %v708, %v707
      %v737 = vpack.c.bf16 %v710, %v709
      %v738 = vpack.c.bf16 %v712, %v711
      %v739 = vpack.c.bf16 %v714, %v713
      %v740 = vpack.c.bf16 %v716, %v715
      %v741 = vpack.c.bf16 %v718, %v717
      %v742 = vpack.c.bf16 %v720, %v719
      %v743 = vpack.c.bf16 %v722, %v721
      %v744 = vpack.c.bf16 %v724, %v723
      %v745 = vpack.c.bf16 %v726, %v725
      %v746 = vpack.c.bf16 %v728, %v727
      %v747 = vpack.c.bf16 %v730, %v729
      %v748 = vpack.c.bf16 %v732, %v731
      %v765 = vunpack.c.l.b16 %v733
      %v766 = vunpack.c.h.b16 %v733
      %v767 = vunpack.c.l.b16 %v734
      %v768 = vunpack.c.h.b16 %v734
      %v769 = vunpack.c.l.b16 %v735
      %v770 = vunpack.c.h.b16 %v735
      %v771 = vunpack.c.l.b16 %v736
      %v772 = vunpack.c.h.b16 %v736
      %v773 = vunpack.c.l.b16 %v737
      %v774 = vunpack.c.h.b16 %v737
      %v775 = vunpack.c.l.b16 %v738
      %v776 = vunpack.c.h.b16 %v738
      %v777 = vunpack.c.l.b16 %v739
      %v778 = vunpack.c.h.b16 %v739
      %v779 = vunpack.c.l.b16 %v740
      %v780 = vunpack.c.h.b16 %v740
      %v781 = vunpack.c.l.b16 %v741
      %v782 = vunpack.c.h.b16 %v741
      %v783 = vunpack.c.l.b16 %v742
      %v784 = vunpack.c.h.b16 %v742
      %v785 = vunpack.c.l.b16 %v743
      %v786 = vunpack.c.h.b16 %v743
      %v787 = vunpack.c.l.b16 %v744
      %v788 = vunpack.c.h.b16 %v744
      %v789 = vunpack.c.l.b16 %v745
      %v790 = vunpack.c.h.b16 %v745
      %v791 = vunpack.c.l.b16 %v746
      %v792 = vunpack.c.h.b16 %v746
      %v793 = vunpack.c.l.b16 %v747
      %v794 = vunpack.c.h.b16 %v747
      %v795 = vunpack.c.l.b16 %v748
      %v796 = vunpack.c.h.b16 %v748
      %v797 = vpack.c.b16 %v765, %v765
      %v798 = vpack.c.b16 %v766, %v766
      %v799 = vpack.c.b16 %v767, %v767
      %v800 = vpack.c.b16 %v768, %v768
      %v801 = vpack.c.b16 %v769, %v769
      %v802 = vpack.c.b16 %v770, %v770
      %v803 = vpack.c.b16 %v771, %v771
      %v804 = vpack.c.b16 %v772, %v772
      %v805 = vpack.c.b16 %v773, %v773
      %v806 = vpack.c.b16 %v774, %v774
      %v807 = vpack.c.b16 %v775, %v775
      %v808 = vpack.c.b16 %v776, %v776
      %v809 = vpack.c.b16 %v777, %v777
      %v810 = vpack.c.b16 %v778, %v778
      %v811 = vpack.c.b16 %v779, %v779
      %v812 = vpack.c.b16 %v780, %v780
      %v813 = vpack.c.b16 %v781, %v781
      %v814 = vpack.c.b16 %v782, %v782
      %v815 = vpack.c.b16 %v783, %v783
      %v816 = vpack.c.b16 %v784, %v784
      %v817 = vpack.c.b16 %v785, %v785
      %v818 = vpack.c.b16 %v786, %v786
      %v819 = vpack.c.b16 %v787, %v787
      %v820 = vpack.c.b16 %v788, %v788
      %v821 = vpack.c.b16 %v789, %v789
      %v822 = vpack.c.b16 %v790, %v790
      %v823 = vpack.c.b16 %v791, %v791
      %v824 = vpack.c.b16 %v792, %v792
      %v825 = vpack.c.b16 %v793, %v793
      %v826 = vpack.c.b16 %v794, %v794
      %v827 = vpack.c.b16 %v795, %v795
      %v828 = vpack.c.b16 %v796, %v796
      %861 = vst [vmem:[%s257] sm:$0xf] %v797
      %862 = vst [vmem:[%s257 + $0x4] sm:$0xf] %v798
      %863 = vst [vmem:[%s257 + $0x8] sm:$0xf] %v799
      %864 = vst [vmem:[%s257 + $0xc] sm:$0xf] %v800
      %865 = vst [vmem:[%s257 + $0x10] sm:$0xf] %v801
      %866 = vst [vmem:[%s257 + $0x14] sm:$0xf] %v802
      %867 = vst [vmem:[%s257 + $0x18] sm:$0xf] %v803
      %868 = vst [vmem:[%s257 + $0x1c] sm:$0xf] %v804
      %869 = vst [vmem:[%s257 + $0x20] sm:$0xf] %v805
      %870 = vst [vmem:[%s257 + $0x24] sm:$0xf] %v806
      %871 = vst [vmem:[%s257 + $0x28] sm:$0xf] %v807
      %872 = vst [vmem:[%s257 + $0x2c] sm:$0xf] %v808
      %873 = vst [vmem:[%s257 + $0x30] sm:$0xf] %v809
      %874 = vst [vmem:[%s257 + $0x34] sm:$0xf] %v810
      %875 = vst [vmem:[%s257 + $0x38] sm:$0xf] %v811
      %876 = vst [vmem:[%s257 + $0x3c] sm:$0xf] %v812
      %877 = vst [vmem:[%s257 + $0x40] sm:$0xf] %v813
      %878 = vst [vmem:[%s257 + $0x44] sm:$0xf] %v814
      %879 = vst [vmem:[%s257 + $0x48] sm:$0xf] %v815
      %880 = vst [vmem:[%s257 + $0x4c] sm:$0xf] %v816
      %881 = vst [vmem:[%s257 + $0x50] sm:$0xf] %v817
      %882 = vst [vmem:[%s257 + $0x54] sm:$0xf] %v818
      %883 = vst [vmem:[%s257 + $0x58] sm:$0xf] %v819
      %884 = vst [vmem:[%s257 + $0x5c] sm:$0xf] %v820
      %885 = vst [vmem:[%s257 + $0x60] sm:$0xf] %v821
      %886 = vst [vmem:[%s257 + $0x64] sm:$0xf] %v822
      %887 = vst [vmem:[%s257 + $0x68] sm:$0xf] %v823
      %888 = vst [vmem:[%s257 + $0x6c] sm:$0xf] %v824
      %889 = vst [vmem:[%s257 + $0x70] sm:$0xf] %v825
      %890 = vst [vmem:[%s257 + $0x74] sm:$0xf] %v826
      %891 = vst [vmem:[%s257 + $0x78] sm:$0xf] %v827
      %892 = vst [vmem:[%s257 + $0x7c] sm:$0xf] %v828
      %s893 = smul.u32 32, %s19
      %p894 = scmp.lt.s32.totalorder %s893, 63
      %s895 = scalar_select %p894, %s893, 63
      %p896 = scmp.lt.s32.totalorder %s20, 0
      %s897 = scalar_select %p896, %s20, 0
      %s898 = sadd.s32 %s897, %s895
      %s899 = smul.addr %s898, 4
      %s900 = scalar_lea.vmem %s3, %s899
      // Predicated region
      $region33: #{discriminator_forward.8} parent=31 // pred_check
        %p901 = pneg %p135
      $region34: #{discriminator_forward.8} parent=31 // pred_check_branch
        %903 = sbr.rel (%p901) target = $region36
      $region35: #{discriminator_forward.8} parent=31 // pred_region
        %s904 = smul.u32 32, %s19
      $region36: #{discriminator_forward.8} parent=31 // pred_fallthru
        _
    $region32: #{discriminator_forward.8} parent=5 // pred_fallthru
      _
    %p905 = scmp.le.s32.totalorder 2, %s9
    // Predicated region
    $region37: #{discriminator_forward.8} parent=5 // pred_check
      %p906 = pneg %p905
    $region38: #{discriminator_forward.8} parent=5 // pred_check_branch
      %908 = sbr.rel (%p906) target = $region40
    $region39: #{discriminator_forward.8} parent=5 // pred_region
      %s909 = ssub.s32 %s9, 2
      // Predicated region
      $region41: #{discriminator_forward.8} parent=39 // pred_check
        %p910 = pneg %p141
      $region42: #{discriminator_forward.8} parent=39 // pred_check_branch
        %912 = sbr.rel (%p910) target = $region44
      $region43: #{discriminator_forward.8} parent=39 // pred_region
        %s913 = smul.u32 32, %s22
        %p914 = scmp.lt.s32.totalorder %s913, 63
        %s915 = scalar_select %p914, %s913, 63
        %p916 = scmp.lt.s32.totalorder %s23, 0
        %s917 = scalar_select %p916, %s23, 0
        %s918 = sadd.s32 %s917, %s915
        %s919 = smul.addr %s918, 4
        %s920 = scalar_lea.vmem %s3, %s919
      $region44: #{discriminator_forward.8} parent=39 // pred_fallthru
        _
    $region40: #{discriminator_forward.8} parent=5 // pred_fallthru
      _
  $region6: #{discriminator_forward.8} parent=0 // loop_footer
    %s13 = sadd.s32 1, %s9
  $region7: #{discriminator_forward.8} parent=0 // loop_footer_branch
    %8 = sbr.rel target = $region3
  $region8: #{discriminator_forward.8} parent=0 // loop_exit
    _

// kernel: discriminator_forward.10
$region0: #{discriminator_forward.10}
  #allocation0 [shape = 'u32[]', space=smem, size = 0x4, offset = 0x4, fixed_abs, tag = 'smem constant byte address 0x4 - core index']
  #allocation1 [shape = 'u32[144,128]{1,0:T(1,128)}', space=vmem, size = 0x12000, scoped, tag = 'internal scratch']
  %s0 = inlined_call_operand.vmem [shape: bf16[2,64,128], index: 0, kind: input, shape index: {}]
  %s1 = inlined_call_operand.vmem [shape: bf16[2,64,128], index: 1, kind: output, shape index: {}]
  %s2 = sld [smem:[#allocation0]]
  $region37: #{discriminator_forward.10} parent=0
    _
  %s4 = ssub.s32 1, %s2
  %s5 = scalar_select 0, %s4, %s2
  loop: start=0, step=1, limit=4
  $region2: #{discriminator_forward.10} parent=0 // loop_pre_header
    _
  $region3: #{discriminator_forward.10} parent=0 // loop_header
    %s7 = sphi 0, %s11
    %p8 = scmp.ge.s32.totalorder %s7, 4
    %s17 = sphi 0, %s19
    %s20 = sphi 0, %s17
    %s21 = sphi 0, %s20
    %s37 = sphi 0, %s21
    %s43 = sphi 0, %s45
    %s46 = sphi 0, %s43
    %s47 = sphi 0, %s46
    %s63 = sphi 0, %s47
  $region4: #{discriminator_forward.10} parent=0 // loop_header_branch
    %10 = sbr.rel (%p8) target = $region8
  $region5: #{discriminator_forward.10} parent=0 // loop_body
    %s12 = ssub.s32 %s7, 1
    %s13 = ssub.s32 %s7, 2
    %s14 = sadd.s32 %s7, 1
    %s15 = ssub.s32 %s7, %s14
    %p16 = scmp.eq.s32.totalorder %s15, 0
    %s18 = sadd.s32 %s17, 1
    %s19 = scalar_select %p16, %s17, %s18
    %p22 = pneg %p16
    %p23 = scmp.eq.s32.totalorder %s7, 1
    %p24 = por %p22, %p23
    %p25 = scmp.ne.s32.totalorder %s17, %s20
    %p26 = scmp.eq.s32.totalorder %s7, 0
    %p27 = por %p25, %p26
    %p28 = scmp.ne.s32.totalorder %s17, %s20
    %p29 = scmp.eq.s32.totalorder %s12, 1
    %p30 = por %p28, %p29
    %p31 = scmp.ne.s32.totalorder %s20, %s21
    %p32 = scmp.eq.s32.totalorder %s12, 0
    %p33 = por %p31, %p32
    %p34 = scmp.ne.s32.totalorder %s20, %s21
    %p35 = scmp.eq.s32.totalorder %s13, 1
    %p36 = por %p34, %p35
    %p38 = scmp.ne.s32.totalorder %s21, %s37
    %p39 = scmp.eq.s32.totalorder %s13, 0
    %p40 = por %p38, %p39
    %s41 = ssub.s32 %s7, %s14
    %p42 = scmp.eq.s32.totalorder %s41, 0
    %s44 = sadd.s32 %s43, 1
    %s45 = scalar_select %p42, %s43, %s44
    %p48 = pneg %p42
    %p49 = scmp.eq.s32.totalorder %s7, 1
    %p50 = por %p48, %p49
    %p51 = scmp.ne.s32.totalorder %s43, %s46
    %p52 = scmp.eq.s32.totalorder %s7, 0
    %p53 = por %p51, %p52
    %p54 = scmp.ne.s32.totalorder %s43, %s46
    %p55 = scmp.eq.s32.totalorder %s12, 1
    %p56 = por %p54, %p55
    %p57 = scmp.ne.s32.totalorder %s46, %s47
    %p58 = scmp.eq.s32.totalorder %s12, 0
    %p59 = por %p57, %p58
    %p60 = scmp.ne.s32.totalorder %s46, %s47
    %p61 = scmp.eq.s32.totalorder %s13, 1
    %p62 = por %p60, %p61
    %p64 = scmp.ne.s32.totalorder %s47, %s63
    %p65 = scmp.eq.s32.totalorder %s13, 0
    %p66 = por %p64, %p65
    %p67 = scmp.le.s32.totalorder 1, %s7
    %p68 = scmp.lt.s32.totalorder %s7, 3
    %p69 = pnand %p67, %p68
    %p70 = pneg %p69
    // Predicated region
    $region9: #{discriminator_forward.10} parent=5 // pred_check
      _
    $region10: #{discriminator_forward.10} parent=5 // pred_check_branch
      %72 = sbr.rel (%p69) target = $region12
    $region11: #{discriminator_forward.10} parent=5 // pred_region
      %s73 = ssub.s32 %s7, 1
    $region12: #{discriminator_forward.10} parent=5 // pred_fallthru
      _
    %p74 = scmp.lt.s32.totalorder %s7, 2
    // Predicated region
    $region13: #{discriminator_forward.10} parent=5 // pred_check
      %p75 = pneg %p74
    $region14: #{discriminator_forward.10} parent=5 // pred_check_branch
      %77 = sbr.rel (%p75) target = $region16
    $region15: #{discriminator_forward.10} parent=5 // pred_region
      // Predicated region
      $region17: #{discriminator_forward.10} parent=15 // pred_check
        %p78 = pneg %p27
      $region18: #{discriminator_forward.10} parent=15 // pred_check_branch
        %80 = sbr.rel (%p78) target = $region20
      $region19: #{discriminator_forward.10} parent=15 // pred_region
        %p81 = scmp.lt.s32.totalorder %s7, 1
        %s82 = scalar_select %p81, %s7, 1
        %s83 = smul.addr %s82, 8
        %s84 = smul.addr %s83, 4
        %s85 = scalar_lea.vmem %s0, %s84
      $region20: #{discriminator_forward.10} parent=15 // pred_fallthru
        _
    $region16: #{discriminator_forward.10} parent=5 // pred_fallthru
      _
    %p86 = scmp.le.s32.totalorder 1, %s7
    %p87 = scmp.lt.s32.totalorder %s7, 3
    %p88 = pnand %p86, %p87
    %p89 = pneg %p88
    // Predicated region
    $region21: #{discriminator_forward.10} parent=5 // pred_check
      _
    $region22: #{discriminator_forward.10} parent=5 // pred_check_branch
      %91 = sbr.rel (%p88) target = $region24
    $region23: #{discriminator_forward.10} parent=5 // pred_region
      %s92 = ssub.s32 %s7, 1
      %p93 = scmp.lt.s32.totalorder %s12, 1
      %s94 = scalar_select %p93, %s12, 1
      %s95 = smul.addr %s94, 8
      %s96 = smul.addr %s95, 4
      %s97 = scalar_lea.vmem %s0, %s96
      %p98 = pneg %p33
      %p99 = pneg %p30
      %p100 = pneg %p59
      %p101 = pneg %p56
      %p102 = scmp.lt.s32.totalorder %s12, 1
      %s103 = scalar_select %p102, %s12, 1
      %s104 = smul.addr %s103, 8
      %s105 = smul.addr %s104, 4
      %s106 = scalar_lea.vmem %s1, %s105
      %p107 = scmp.lt.s32.totalorder %s12, 1
      %s108 = scalar_select %p107, %s12, 1
      %s109 = smul.addr %s108, 8
      %s110 = smul.addr %s109, 4
      %s111 = scalar_lea.vmem %s0, %s110
      %p112 = scmp.lt.s32.totalorder %s12, 1
      %s113 = scalar_select %p112, %s12, 1
      %s114 = smul.addr %s113, 8
      %s115 = smul.addr %s114, 4
      %s116 = scalar_lea.vmem %s1, %s115
      %v117 = vld [vmem:[%s111] sm:$0xf]
      %v118 = vld [vmem:[%s111 + $0x4] sm:$0xf]
      %v119 = vld [vmem:[%s111 + $0x8] sm:$0xf]
      %v120 = vld [vmem:[%s111 + $0xc] sm:$0xf]
      %v121 = vld [vmem:[%s111 + $0x10] sm:$0xf]
      %v122 = vld [vmem:[%s111 + $0x14] sm:$0xf]
      %v123 = vld [vmem:[%s111 + $0x18] sm:$0xf]
      %v124 = vld [vmem:[%s111 + $0x1c] sm:$0xf]
      %v125 = vunpack.c.l.bf16 %v117
      %v126 = vunpack.c.l.bf16 %v118
      %v127 = vunpack.c.l.bf16 %v119
      %v128 = vunpack.c.l.bf16 %v120
      %v129 = vunpack.c.l.bf16 %v121
      %v130 = vunpack.c.l.bf16 %v122
      %v131 = vunpack.c.l.bf16 %v123
      %v132 = vunpack.c.l.bf16 %v124
      %v133 = vadd.f32 %v125, %v126
      %v134 = vadd.f32 %v133, %v127
      %v135 = vadd.f32 %v134, %v128
      %v136 = vadd.f32 %v135, %v129
      %v137 = vadd.f32 %v136, %v130
      %v138 = vadd.f32 %v137, %v131
      %v139 = vadd.f32 %v138, %v132
      %v140 = vrot.slane %v139, 4
      %v141 = vadd.f32 %v139, %v140
      %v142 = vrot.slane %v141, 2
      %v143 = vadd.f32 %v141, %v142
      %v144 = vrot.slane %v143, 1
      %v145 = vadd.f32 %v143, %v144
      %v146 = vmul.f32 %v125, %v125
      %v147 = vmul.f32 %v126, %v126
      %v148 = vmul.f32 %v127, %v127
      %v149 = vmul.f32 %v128, %v128
      %v150 = vmul.f32 %v129, %v129
      %v151 = vmul.f32 %v130, %v130
      %v152 = vmul.f32 %v131, %v131
      %v153 = vmul.f32 %v132, %v132
      %v154 = vadd.f32 %v146, %v147
      %v155 = vadd.f32 %v154, %v148
      %v156 = vadd.f32 %v155, %v149
      %v157 = vadd.f32 %v156, %v150
      %v158 = vadd.f32 %v157, %v151
      %v159 = vadd.f32 %v158, %v152
      %v160 = vadd.f32 %v159, %v153
      %v161 = vrot.slane %v160, 4
      %v162 = vadd.f32 %v160, %v161
      %v163 = vrot.slane %v162, 2
      %v164 = vadd.f32 %v162, %v163
      %v165 = vrot.slane %v164, 1
      %v166 = vadd.f32 %v164, %v165
      %v167 = vmul.f32 %v145, 0.015625
      %v168 = vmul.f32 %v166, 0.015625
      %v169 = vmul.f32 %v167, %v167
      %v170 = vsub.f32 %v168, %v169
      %v171 = vmax.f32 %v170, 0.0
      %v172 = vsub.f32 %v125, %v167
      %v173 = vsub.f32 %v126, %v167
      %v174 = vsub.f32 %v127, %v167
      %v175 = vsub.f32 %v128, %v167
      %v176 = vsub.f32 %v129, %v167
      %v177 = vsub.f32 %v130, %v167
      %v178 = vsub.f32 %v131, %v167
      %v179 = vsub.f32 %v132, %v167
      %v180 = vadd.f32 %v171, 1e-05
      %v181 = vrsqrt.pop %v180
      %v182 = vmul.f32 %v172, %v181
      %v183 = vmul.f32 %v173, %v181
      %v184 = vmul.f32 %v174, %v181
      %v185 = vmul.f32 %v175, %v181
      %v186 = vmul.f32 %v176, %v181
      %v187 = vmul.f32 %v177, %v181
      %v188 = vmul.f32 %v178, %v181
      %v189 = vmul.f32 %v179, %v181
      %vm190 = vcmp.ge.f32.partialorder %v182, 0.0
      %vm191 = vcmp.ge.f32.partialorder %v183, 0.0
      %vm192 = vcmp.ge.f32.partialorder %v184, 0.0
      %vm193 = vcmp.ge.f32.partialorder %v185, 0.0
      %vm194 = vcmp.ge.f32.partialorder %v186, 0.0
      %vm195 = vcmp.ge.f32.partialorder %v187, 0.0
      %vm196 = vcmp.ge.f32.partialorder %v188, 0.0
      %vm197 = vcmp.ge.f32.partialorder %v189, 0.0
      %v198 = vmul.f32 %v182, 0.2
      %v199 = vmul.f32 %v183, 0.2
      %v200 = vmul.f32 %v184, 0.2
      %v201 = vmul.f32 %v185, 0.2
      %v202 = vmul.f32 %v186, 0.2
      %v203 = vmul.f32 %v187, 0.2
      %v204 = vmul.f32 %v188, 0.2
      %v205 = vmul.f32 %v189, 0.2
      %v206 = vsel %vm190, %v182, %v198
      %v207 = vsel %vm191, %v183, %v199
      %v208 = vsel %vm192, %v184, %v200
      %v209 = vsel %vm193, %v185, %v201
      %v210 = vsel %vm194, %v186, %v202
      %v211 = vsel %vm195, %v187, %v203
      %v212 = vsel %vm196, %v188, %v204
      %v213 = vsel %vm197, %v189, %v205
      %v214 = vpack.c.bf16 %v207, %v206
      %v215 = vpack.c.bf16 %v209, %v208
      %v216 = vpack.c.bf16 %v211, %v210
      %v217 = vpack.c.bf16 %v213, %v212
      %v222 = vunpack.c.l.b16 %v214
      %v223 = vunpack.c.h.b16 %v214
      %v224 = vunpack.c.l.b16 %v215
      %v225 = vunpack.c.h.b16 %v215
      %v226 = vunpack.c.l.b16 %v216
      %v227 = vunpack.c.h.b16 %v216
      %v228 = vunpack.c.l.b16 %v217
      %v229 = vunpack.c.h.b16 %v217
      %v230 = vpack.c.b16 %v222, %v222
      %v231 = vpack.c.b16 %v223, %v223
      %v232 = vpack.c.b16 %v224, %v224
      %v233 = vpack.c.b16 %v225, %v225
      %v234 = vpack.c.b16 %v226, %v226
      %v235 = vpack.c.b16 %v227, %v227
      %v236 = vpack.c.b16 %v228, %v228
      %v237 = vpack.c.b16 %v229, %v229
      %246 = vst [vmem:[%s116] sm:$0xf] %v230
      %247 = vst [vmem:[%s116 + $0x4] sm:$0xf] %v231
      %248 = vst [vmem:[%s116 + $0x8] sm:$0xf] %v232
      %249 = vst [vmem:[%s116 + $0xc] sm:$0xf] %v233
      %250 = vst [vmem:[%s116 + $0x10] sm:$0xf] %v234
      %251 = vst [vmem:[%s116 + $0x14] sm:$0xf] %v235
      %252 = vst [vmem:[%s116 + $0x18] sm:$0xf] %v236
      %253 = vst [vmem:[%s116 + $0x1c] sm:$0xf] %v237
      %p254 = scmp.lt.s32.totalorder %s12, 1
      %s255 = scalar_select %p254, %s12, 1
      %s256 = smul.addr %s255, 8
      %s257 = smul.addr %s256, 4
      %s258 = scalar_lea.vmem %s1, %s257
      // Predicated region
      $region25: #{discriminator_forward.10} parent=23 // pred_check
        %p259 = pneg %p56
      $region26: #{discriminator_forward.10} parent=23 // pred_check_branch
        %261 = sbr.rel (%p259) target = $region28
      $region27: #{discriminator_forward.10} parent=23 // pred_region
        _
      $region28: #{discriminator_forward.10} parent=23 // pred_fallthru
        _
    $region24: #{discriminator_forward.10} parent=5 // pred_fallthru
      _
    %p262 = scmp.le.s32.totalorder 2, %s7
    // Predicated region
    $region29: #{discriminator_forward.10} parent=5 // pred_check
      %p263 = pneg %p262
    $region30: #{discriminator_forward.10} parent=5 // pred_check_branch
      %265 = sbr.rel (%p263) target = $region32
    $region31: #{discriminator_forward.10} parent=5 // pred_region
      %s266 = ssub.s32 %s7, 2
      // Predicated region
      $region33: #{discriminator_forward.10} parent=31 // pred_check
        %p267 = pneg %p62
      $region34: #{discriminator_forward.10} parent=31 // pred_check_branch
        %269 = sbr.rel (%p267) target = $region36
      $region35: #{discriminator_forward.10} parent=31 // pred_region
        %p270 = scmp.lt.s32.totalorder %s13, 1
        %s271 = scalar_select %p270, %s13, 1
        %s272 = smul.addr %s271, 8
        %s273 = smul.addr %s272, 4
        %s274 = scalar_lea.vmem %s1, %s273
      $region36: #{discriminator_forward.10} parent=31 // pred_fallthru
        _
    $region32: #{discriminator_forward.10} parent=5 // pred_fallthru
      _
  $region6: #{discriminator_forward.10} parent=0 // loop_footer
    %s11 = sadd.s32 1, %s7
  $region7: #{discriminator_forward.10} parent=0 // loop_footer_branch
    %6 = sbr.rel target = $region3
  $region8: #{discriminator_forward.10} parent=0 // loop_exit
    _

// kernel: discriminator_forward.9
$region0: #{discriminator_forward.9}
  #allocation0 [shape = 'u32[]', space=smem, size = 0x4, offset = 0x4, fixed_abs, tag = 'smem constant byte address 0x4 - core index']
  #allocation1 [shape = 'u32[144,128]{1,0:T(1,128)}', space=vmem, size = 0x12000, scoped, tag = 'internal scratch']
  %s0 = inlined_call_operand.vmem [shape: bf16[128,1024], index: 0, kind: input, shape index: {}]
  %s1 = inlined_call_operand.vmem [shape: bf16[1024,128], index: 1, kind: input, shape index: {}]
  %s2 = inlined_call_operand.vmem [shape: f32[1,128], index: 2, kind: input, shape index: {}]
  %s3 = inlined_call_operand.vmem [shape: bf16[128,128], index: 3, kind: output, shape index: {}]
  %s4 = sld [smem:[#allocation0]]
  $region22: #{discriminator_forward.9} parent=0
    _
  %s6 = ssub.s32 1, %s4
  %s7 = scalar_select 0, %s6, %s4
  // Predicated region
  $region2: #{discriminator_forward.9} parent=0 // pred_check
    _
  $region3: #{discriminator_forward.9} parent=0 // pred_check_branch
    %9 = sbr.rel (0) target = $region5
  $region4: #{discriminator_forward.9} parent=0 // pred_region
    _
  $region5: #{discriminator_forward.9} parent=0 // pred_fallthru
    _
  // Predicated region
  $region6: #{discriminator_forward.9} parent=0 // pred_check
    _
  $region7: #{discriminator_forward.9} parent=0 // pred_check_branch
    %11 = sbr.rel (0) target = $region9
  $region8: #{discriminator_forward.9} parent=0 // pred_region
    _
  $region9: #{discriminator_forward.9} parent=0 // pred_fallthru
    _
  // Predicated region
  $region10: #{discriminator_forward.9} parent=0 // pred_check
    _
  $region11: #{discriminator_forward.9} parent=0 // pred_check_branch
    %13 = sbr.rel (0) target = $region13
  $region12: #{discriminator_forward.9} parent=0 // pred_region
    _
  $region13: #{discriminator_forward.9} parent=0 // pred_fallthru
    _
  %v15 = vld [vmem:[%s0] sm:$0xff]
  %v16 = vld [vmem:[%s0 + $0x8] sm:$0xff]
  %v17 = vld [vmem:[%s0 + $0x10] sm:$0xff]
  %v18 = vld [vmem:[%s0 + $0x18] sm:$0xff]
  %v19 = vld [vmem:[%s0 + $0x20] sm:$0xff]
  %v20 = vld [vmem:[%s0 + $0x28] sm:$0xff]
  %v21 = vld [vmem:[%s0 + $0x30] sm:$0xff]
  %v22 = vld [vmem:[%s0 + $0x38] sm:$0xff]
  %v23 = vld [vmem:[%s0 + $0x40] sm:$0xff]
  %v24 = vld [vmem:[%s0 + $0x48] sm:$0xff]
  %v25 = vld [vmem:[%s0 + $0x50] sm:$0xff]
  %v26 = vld [vmem:[%s0 + $0x58] sm:$0xff]
  %v27 = vld [vmem:[%s0 + $0x60] sm:$0xff]
  %v28 = vld [vmem:[%s0 + $0x68] sm:$0xff]
  %v29 = vld [vmem:[%s0 + $0x70] sm:$0xff]
  %v30 = vld [vmem:[%s0 + $0x78] sm:$0xff]
  %v31 = vld [vmem:[%s0 + $0x80] sm:$0xff]
  %v32 = vld [vmem:[%s0 + $0x88] sm:$0xff]
  %v33 = vld [vmem:[%s0 + $0x90] sm:$0xff]
  %v34 = vld [vmem:[%s0 + $0x98] sm:$0xff]
  %v35 = vld [vmem:[%s0 + $0xa0] sm:$0xff]
  %v36 = vld [vmem:[%s0 + $0xa8] sm:$0xff]
  %v37 = vld [vmem:[%s0 + $0xb0] sm:$0xff]
  %v38 = vld [vmem:[%s0 + $0xb8] sm:$0xff]
  %v39 = vld [vmem:[%s0 + $0xc0] sm:$0xff]
  %v40 = vld [vmem:[%s0 + $0xc8] sm:$0xff]
  %v41 = vld [vmem:[%s0 + $0xd0] sm:$0xff]
  %v42 = vld [vmem:[%s0 + $0xd8] sm:$0xff]
  %v43 = vld [vmem:[%s0 + $0xe0] sm:$0xff]
  %v44 = vld [vmem:[%s0 + $0xe8] sm:$0xff]
  %v45 = vld [vmem:[%s0 + $0xf0] sm:$0xff]
  %v46 = vld [vmem:[%s0 + $0xf8] sm:$0xff]
  %v47 = vld [vmem:[%s0 + $0x100] sm:$0xff]
  %v48 = vld [vmem:[%s0 + $0x108] sm:$0xff]
  %v49 = vld [vmem:[%s0 + $0x110] sm:$0xff]
  %v50 = vld [vmem:[%s0 + $0x118] sm:$0xff]
  %v51 = vld [vmem:[%s0 + $0x120] sm:$0xff]
  %v52 = vld [vmem:[%s0 + $0x128] sm:$0xff]
  %v53 = vld [vmem:[%s0 + $0x130] sm:$0xff]
  %v54 = vld [vmem:[%s0 + $0x138] sm:$0xff]
  %v55 = vld [vmem:[%s0 + $0x140] sm:$0xff]
  %v56 = vld [vmem:[%s0 + $0x148] sm:$0xff]
  %v57 = vld [vmem:[%s0 + $0x150] sm:$0xff]
  %v58 = vld [vmem:[%s0 + $0x158] sm:$0xff]
  %v59 = vld [vmem:[%s0 + $0x160] sm:$0xff]
  %v60 = vld [vmem:[%s0 + $0x168] sm:$0xff]
  %v61 = vld [vmem:[%s0 + $0x170] sm:$0xff]
  %v62 = vld [vmem:[%s0 + $0x178] sm:$0xff]
  %v63 = vld [vmem:[%s0 + $0x180] sm:$0xff]
  %v64 = vld [vmem:[%s0 + $0x188] sm:$0xff]
  %v65 = vld [vmem:[%s0 + $0x190] sm:$0xff]
  %v66 = vld [vmem:[%s0 + $0x198] sm:$0xff]
  %v67 = vld [vmem:[%s0 + $0x1a0] sm:$0xff]
  %v68 = vld [vmem:[%s0 + $0x1a8] sm:$0xff]
  %v69 = vld [vmem:[%s0 + $0x1b0] sm:$0xff]
  %v70 = vld [vmem:[%s0 + $0x1b8] sm:$0xff]
  %v71 = vld [vmem:[%s0 + $0x1c0] sm:$0xff]
  %v72 = vld [vmem:[%s0 + $0x1c8] sm:$0xff]
  %v73 = vld [vmem:[%s0 + $0x1d0] sm:$0xff]
  %v74 = vld [vmem:[%s0 + $0x1d8] sm:$0xff]
  %v75 = vld [vmem:[%s0 + $0x1e0] sm:$0xff]
  %v76 = vld [vmem:[%s0 + $0x1e8] sm:$0xff]
  %v77 = vld [vmem:[%s0 + $0x1f0] sm:$0xff]
  %v78 = vld [vmem:[%s0 + $0x1f8] sm:$0xff]
  %v79 = vld [vmem:[%s1] sm:$0xf]
  %v80 = vld [vmem:[%s1 + $0x4] sm:$0xf]
  %v81 = vld [vmem:[%s1 + $0x8] sm:$0xf]
  %v82 = vld [vmem:[%s1 + $0xc] sm:$0xf]
  %v83 = vld [vmem:[%s1 + $0x10] sm:$0xf]
  %v84 = vld [vmem:[%s1 + $0x14] sm:$0xf]
  %v85 = vld [vmem:[%s1 + $0x18] sm:$0xf]
  %v86 = vld [vmem:[%s1 + $0x1c] sm:$0xf]
  %v87 = vld [vmem:[%s1 + $0x20] sm:$0xf]
  %v88 = vld [vmem:[%s1 + $0x24] sm:$0xf]
  %v89 = vld [vmem:[%s1 + $0x28] sm:$0xf]
  %v90 = vld [vmem:[%s1 + $0x2c] sm:$0xf]
  %v91 = vld [vmem:[%s1 + $0x30] sm:$0xf]
  %v92 = vld [vmem:[%s1 + $0x34] sm:$0xf]
  %v93 = vld [vmem:[%s1 + $0x38] sm:$0xf]
  %v94 = vld [vmem:[%s1 + $0x3c] sm:$0xf]
  %v95 = vld [vmem:[%s1 + $0x40] sm:$0xf]
  %v96 = vld [vmem:[%s1 + $0x44] sm:$0xf]
  %v97 = vld [vmem:[%s1 + $0x48] sm:$0xf]
  %v98 = vld [vmem:[%s1 + $0x4c] sm:$0xf]
  %v99 = vld [vmem:[%s1 + $0x50] sm:$0xf]
  %v100 = vld [vmem:[%s1 + $0x54] sm:$0xf]
  %v101 = vld [vmem:[%s1 + $0x58] sm:$0xf]
  %v102 = vld [vmem:[%s1 + $0x5c] sm:$0xf]
  %v103 = vld [vmem:[%s1 + $0x60] sm:$0xf]
  %v104 = vld [vmem:[%s1 + $0x64] sm:$0xf]
  %v105 = vld [vmem:[%s1 + $0x68] sm:$0xf]
  %v106 = vld [vmem:[%s1 + $0x6c] sm:$0xf]
  %v107 = vld [vmem:[%s1 + $0x70] sm:$0xf]
  %v108 = vld [vmem:[%s1 + $0x74] sm:$0xf]
  %v109 = vld [vmem:[%s1 + $0x78] sm:$0xf]
  %v110 = vld [vmem:[%s1 + $0x7c] sm:$0xf]
  %v111 = vld [vmem:[%s1 + $0x80] sm:$0xf]
  %v112 = vld [vmem:[%s1 + $0x84] sm:$0xf]
  %v113 = vld [vmem:[%s1 + $0x88] sm:$0xf]
  %v114 = vld [vmem:[%s1 + $0x8c] sm:$0xf]
  %v115 = vld [vmem:[%s1 + $0x90] sm:$0xf]
  %v116 = vld [vmem:[%s1 + $0x94] sm:$0xf]
  %v117 = vld [vmem:[%s1 + $0x98] sm:$0xf]
  %v118 = vld [vmem:[%s1 + $0x9c] sm:$0xf]
  %v119 = vld [vmem:[%s1 + $0xa0] sm:$0xf]
  %v120 = vld [vmem:[%s1 + $0xa4] sm:$0xf]
  %v121 = vld [vmem:[%s1 + $0xa8] sm:$0xf]
  %v122 = vld [vmem:[%s1 + $0xac] sm:$0xf]
  %v123 = vld [vmem:[%s1 + $0xb0] sm:$0xf]
  %v124 = vld [vmem:[%s1 + $0xb4] sm:$0xf]
  %v125 = vld [vmem:[%s1 + $0xb8] sm:$0xf]
  %v126 = vld [vmem:[%s1 + $0xbc] sm:$0xf]
  %v127 = vld [vmem:[%s1 + $0xc0] sm:$0xf]
  %v128 = vld [vmem:[%s1 + $0xc4] sm:$0xf]
  %v129 = vld [vmem:[%s1 + $0xc8] sm:$0xf]
  %v130 = vld [vmem:[%s1 + $0xcc] sm:$0xf]
  %v131 = vld [vmem:[%s1 + $0xd0] sm:$0xf]
  %v132 = vld [vmem:[%s1 + $0xd4] sm:$0xf]
  %v133 = vld [vmem:[%s1 + $0xd8] sm:$0xf]
  %v134 = vld [vmem:[%s1 + $0xdc] sm:$0xf]
  %v135 = vld [vmem:[%s1 + $0xe0] sm:$0xf]
  %v136 = vld [vmem:[%s1 + $0xe4] sm:$0xf]
  %v137 = vld [vmem:[%s1 + $0xe8] sm:$0xf]
  %v138 = vld [vmem:[%s1 + $0xec] sm:$0xf]
  %v139 = vld [vmem:[%s1 + $0xf0] sm:$0xf]
  %v140 = vld [vmem:[%s1 + $0xf4] sm:$0xf]
  %v141 = vld [vmem:[%s1 + $0xf8] sm:$0xf]
  %v142 = vld [vmem:[%s1 + $0xfc] sm:$0xf]
  %v143 = vld [vmem:[%s1 + $0x100] sm:$0xf]
  %v144 = vld [vmem:[%s1 + $0x104] sm:$0xf]
  %v145 = vld [vmem:[%s1 + $0x108] sm:$0xf]
  %v146 = vld [vmem:[%s1 + $0x10c] sm:$0xf]
  %v147 = vld [vmem:[%s1 + $0x110] sm:$0xf]
  %v148 = vld [vmem:[%s1 + $0x114] sm:$0xf]
  %v149 = vld [vmem:[%s1 + $0x118] sm:$0xf]
  %v150 = vld [vmem:[%s1 + $0x11c] sm:$0xf]
  %v151 = vld [vmem:[%s1 + $0x120] sm:$0xf]
  %v152 = vld [vmem:[%s1 + $0x124] sm:$0xf]
  %v153 = vld [vmem:[%s1 + $0x128] sm:$0xf]
  %v154 = vld [vmem:[%s1 + $0x12c] sm:$0xf]
  %v155 = vld [vmem:[%s1 + $0x130] sm:$0xf]
  %v156 = vld [vmem:[%s1 + $0x134] sm:$0xf]
  %v157 = vld [vmem:[%s1 + $0x138] sm:$0xf]
  %v158 = vld [vmem:[%s1 + $0x13c] sm:$0xf]
  %v159 = vld [vmem:[%s1 + $0x140] sm:$0xf]
  %v160 = vld [vmem:[%s1 + $0x144] sm:$0xf]
  %v161 = vld [vmem:[%s1 + $0x148] sm:$0xf]
  %v162 = vld [vmem:[%s1 + $0x14c] sm:$0xf]
  %v163 = vld [vmem:[%s1 + $0x150] sm:$0xf]
  %v164 = vld [vmem:[%s1 + $0x154] sm:$0xf]
  %v165 = vld [vmem:[%s1 + $0x158] sm:$0xf]
  %v166 = vld [vmem:[%s1 + $0x15c] sm:$0xf]
  %v167 = vld [vmem:[%s1 + $0x160] sm:$0xf]
  %v168 = vld [vmem:[%s1 + $0x164] sm:$0xf]
  %v169 = vld [vmem:[%s1 + $0x168] sm:$0xf]
  %v170 = vld [vmem:[%s1 + $0x16c] sm:$0xf]
  %v171 = vld [vmem:[%s1 + $0x170] sm:$0xf]
  %v172 = vld [vmem:[%s1 + $0x174] sm:$0xf]
  %v173 = vld [vmem:[%s1 + $0x178] sm:$0xf]
  %v174 = vld [vmem:[%s1 + $0x17c] sm:$0xf]
  %v175 = vld [vmem:[%s1 + $0x180] sm:$0xf]
  %v176 = vld [vmem:[%s1 + $0x184] sm:$0xf]
  %v177 = vld [vmem:[%s1 + $0x188] sm:$0xf]
  %v178 = vld [vmem:[%s1 + $0x18c] sm:$0xf]
  %v179 = vld [vmem:[%s1 + $0x190] sm:$0xf]
  %v180 = vld [vmem:[%s1 + $0x194] sm:$0xf]
  %v181 = vld [vmem:[%s1 + $0x198] sm:$0xf]
  %v182 = vld [vmem:[%s1 + $0x19c] sm:$0xf]
  %v183 = vld [vmem:[%s1 + $0x1a0] sm:$0xf]
  %v184 = vld [vmem:[%s1 + $0x1a4] sm:$0xf]
  %v185 = vld [vmem:[%s1 + $0x1a8] sm:$0xf]
  %v186 = vld [vmem:[%s1 + $0x1ac] sm:$0xf]
  %v187 = vld [vmem:[%s1 + $0x1b0] sm:$0xf]
  %v188 = vld [vmem:[%s1 + $0x1b4] sm:$0xf]
  %v189 = vld [vmem:[%s1 + $0x1b8] sm:$0xf]
  %v190 = vld [vmem:[%s1 + $0x1bc] sm:$0xf]
  %v191 = vld [vmem:[%s1 + $0x1c0] sm:$0xf]
  %v192 = vld [vmem:[%s1 + $0x1c4] sm:$0xf]
  %v193 = vld [vmem:[%s1 + $0x1c8] sm:$0xf]
  %v194 = vld [vmem:[%s1 + $0x1cc] sm:$0xf]
  %v195 = vld [vmem:[%s1 + $0x1d0] sm:$0xf]
  %v196 = vld [vmem:[%s1 + $0x1d4] sm:$0xf]
  %v197 = vld [vmem:[%s1 + $0x1d8] sm:$0xf]
  %v198 = vld [vmem:[%s1 + $0x1dc] sm:$0xf]
  %v199 = vld [vmem:[%s1 + $0x1e0] sm:$0xf]
  %v200 = vld [vmem:[%s1 + $0x1e4] sm:$0xf]
  %v201 = vld [vmem:[%s1 + $0x1e8] sm:$0xf]
  %v202 = vld [vmem:[%s1 + $0x1ec] sm:$0xf]
  %v203 = vld [vmem:[%s1 + $0x1f0] sm:$0xf]
  %v204 = vld [vmem:[%s1 + $0x1f4] sm:$0xf]
  %v205 = vld [vmem:[%s1 + $0x1f8] sm:$0xf]
  %v206 = vld [vmem:[%s1 + $0x1fc] sm:$0xf]
  %v207 = vld [vmem:[%s2] sm:$0x1]
  %v209 = vlaneseq
  %v210 = vshrl.u32 %v209, 7
  %v211 = vsub.s32 0, %v210
  %v212 = vrot.slane %v207, %v211
  %v278 = vunpack.c.l.b16 %v15
  %v279 = vunpack.c.h.b16 %v15
  %v280 = vunpack.c.l.b16 %v16
  %v281 = vunpack.c.h.b16 %v16
  %v282 = vunpack.c.l.b16 %v17
  %v283 = vunpack.c.h.b16 %v17
  %v284 = vunpack.c.l.b16 %v18
  %v285 = vunpack.c.h.b16 %v18
  %v286 = vunpack.c.l.b16 %v19
  %v287 = vunpack.c.h.b16 %v19
  %v288 = vunpack.c.l.b16 %v20
  %v289 = vunpack.c.h.b16 %v20
  %v290 = vunpack.c.l.b16 %v21
  %v291 = vunpack.c.h.b16 %v21
  %v292 = vunpack.c.l.b16 %v22
  %v293 = vunpack.c.h.b16 %v22
  %v294 = vunpack.c.l.b16 %v23
  %v295 = vunpack.c.h.b16 %v23
  %v296 = vunpack.c.l.b16 %v24
  %v297 = vunpack.c.h.b16 %v24
  %v298 = vunpack.c.l.b16 %v25
  %v299 = vunpack.c.h.b16 %v25
  %v300 = vunpack.c.l.b16 %v26
  %v301 = vunpack.c.h.b16 %v26
  %v302 = vunpack.c.l.b16 %v27
  %v303 = vunpack.c.h.b16 %v27
  %v304 = vunpack.c.l.b16 %v28
  %v305 = vunpack.c.h.b16 %v28
  %v306 = vunpack.c.l.b16 %v29
  %v307 = vunpack.c.h.b16 %v29
  %v308 = vunpack.c.l.b16 %v30
  %v309 = vunpack.c.h.b16 %v30
  %v310 = vunpack.c.l.b16 %v31
  %v311 = vunpack.c.h.b16 %v31
  %v312 = vunpack.c.l.b16 %v32
  %v313 = vunpack.c.h.b16 %v32
  %v314 = vunpack.c.l.b16 %v33
  %v315 = vunpack.c.h.b16 %v33
  %v316 = vunpack.c.l.b16 %v34
  %v317 = vunpack.c.h.b16 %v34
  %v318 = vunpack.c.l.b16 %v35
  %v319 = vunpack.c.h.b16 %v35
  %v320 = vunpack.c.l.b16 %v36
  %v321 = vunpack.c.h.b16 %v36
  %v322 = vunpack.c.l.b16 %v37
  %v323 = vunpack.c.h.b16 %v37
  %v324 = vunpack.c.l.b16 %v38
  %v325 = vunpack.c.h.b16 %v38
  %v326 = vunpack.c.l.b16 %v39
  %v327 = vunpack.c.h.b16 %v39
  %v328 = vunpack.c.l.b16 %v40
  %v329 = vunpack.c.h.b16 %v40
  %v330 = vunpack.c.l.b16 %v41
  %v331 = vunpack.c.h.b16 %v41
  %v332 = vunpack.c.l.b16 %v42
  %v333 = vunpack.c.h.b16 %v42
  %v334 = vunpack.c.l.b16 %v43
  %v335 = vunpack.c.h.b16 %v43
  %v336 = vunpack.c.l.b16 %v44
  %v337 = vunpack.c.h.b16 %v44
  %v338 = vunpack.c.l.b16 %v45
  %v339 = vunpack.c.h.b16 %v45
  %v340 = vunpack.c.l.b16 %v46
  %v341 = vunpack.c.h.b16 %v46
  %v342 = vunpack.c.l.b16 %v47
  %v343 = vunpack.c.h.b16 %v47
  %v344 = vunpack.c.l.b16 %v48
  %v345 = vunpack.c.h.b16 %v48
  %v346 = vunpack.c.l.b16 %v49
  %v347 = vunpack.c.h.b16 %v49
  %v348 = vunpack.c.l.b16 %v50
  %v349 = vunpack.c.h.b16 %v50
  %v350 = vunpack.c.l.b16 %v51
  %v351 = vunpack.c.h.b16 %v51
  %v352 = vunpack.c.l.b16 %v52
  %v353 = vunpack.c.h.b16 %v52
  %v354 = vunpack.c.l.b16 %v53
  %v355 = vunpack.c.h.b16 %v53
  %v356 = vunpack.c.l.b16 %v54
  %v357 = vunpack.c.h.b16 %v54
  %v358 = vunpack.c.l.b16 %v55
  %v359 = vunpack.c.h.b16 %v55
  %v360 = vunpack.c.l.b16 %v56
  %v361 = vunpack.c.h.b16 %v56
  %v362 = vunpack.c.l.b16 %v57
  %v363 = vunpack.c.h.b16 %v57
  %v364 = vunpack.c.l.b16 %v58
  %v365 = vunpack.c.h.b16 %v58
  %v366 = vunpack.c.l.b16 %v59
  %v367 = vunpack.c.h.b16 %v59
  %v368 = vunpack.c.l.b16 %v60
  %v369 = vunpack.c.h.b16 %v60
  %v370 = vunpack.c.l.b16 %v61
  %v371 = vunpack.c.h.b16 %v61
  %v372 = vunpack.c.l.b16 %v62
  %v373 = vunpack.c.h.b16 %v62
  %v374 = vunpack.c.l.b16 %v63
  %v375 = vunpack.c.h.b16 %v63
  %v376 = vunpack.c.l.b16 %v64
  %v377 = vunpack.c.h.b16 %v64
  %v378 = vunpack.c.l.b16 %v65
  %v379 = vunpack.c.h.b16 %v65
  %v380 = vunpack.c.l.b16 %v66
  %v381 = vunpack.c.h.b16 %v66
  %v382 = vunpack.c.l.b16 %v67
  %v383 = vunpack.c.h.b16 %v67
  %v384 = vunpack.c.l.b16 %v68
  %v385 = vunpack.c.h.b16 %v68
  %v386 = vunpack.c.l.b16 %v69
  %v387 = vunpack.c.h.b16 %v69
  %v388 = vunpack.c.l.b16 %v70
  %v389 = vunpack.c.h.b16 %v70
  %v390 = vunpack.c.l.b16 %v71
  %v391 = vunpack.c.h.b16 %v71
  %v392 = vunpack.c.l.b16 %v72
  %v393 = vunpack.c.h.b16 %v72
  %v394 = vunpack.c.l.b16 %v73
  %v395 = vunpack.c.h.b16 %v73
  %v396 = vunpack.c.l.b16 %v74
  %v397 = vunpack.c.h.b16 %v74
  %v398 = vunpack.c.l.b16 %v75
  %v399 = vunpack.c.h.b16 %v75
  %v400 = vunpack.c.l.b16 %v76
  %v401 = vunpack.c.h.b16 %v76
  %v402 = vunpack.c.l.b16 %v77
  %v403 = vunpack.c.h.b16 %v77
  %v404 = vunpack.c.l.b16 %v78
  %v405 = vunpack.c.h.b16 %v78
  %v406 = vpack.c.b16 %v286, %v278
  %v407 = vpack.c.b16 %v287, %v279
  %v408 = vpack.c.b16 %v288, %v280
  %v409 = vpack.c.b16 %v289, %v281
  %v410 = vpack.c.b16 %v290, %v282
  %v411 = vpack.c.b16 %v291, %v283
  %v412 = vpack.c.b16 %v292, %v284
  %v413 = vpack.c.b16 %v293, %v285
  %v414 = vpack.c.b16 %v302, %v294
  %v415 = vpack.c.b16 %v303, %v295
  %v416 = vpack.c.b16 %v304, %v296
  %v417 = vpack.c.b16 %v305, %v297
  %v418 = vpack.c.b16 %v306, %v298
  %v419 = vpack.c.b16 %v307, %v299
  %v420 = vpack.c.b16 %v308, %v300
  %v421 = vpack.c.b16 %v309, %v301
  %v422 = vpack.c.b16 %v318, %v310
  %v423 = vpack.c.b16 %v319, %v311
  %v424 = vpack.c.b16 %v320, %v312
  %v425 = vpack.c.b16 %v321, %v313
  %v426 = vpack.c.b16 %v322, %v314
  %v427 = vpack.c.b16 %v323, %v315
  %v428 = vpack.c.b16 %v324, %v316
  %v429 = vpack.c.b16 %v325, %v317
  %v430 = vpack.c.b16 %v334, %v326
  %v431 = vpack.c.b16 %v335, %v327
  %v432 = vpack.c.b16 %v336, %v328
  %v433 = vpack.c.b16 %v337, %v329
  %v434 = vpack.c.b16 %v338, %v330
  %v435 = vpack.c.b16 %v339, %v331
  %v436 = vpack.c.b16 %v340, %v332
  %v437 = vpack.c.b16 %v341, %v333
  %v438 = vpack.c.b16 %v350, %v342
  %v439 = vpack.c.b16 %v351, %v343
  %v440 = vpack.c.b16 %v352, %v344
  %v441 = vpack.c.b16 %v353, %v345
  %v442 = vpack.c.b16 %v354, %v346
  %v443 = vpack.c.b16 %v355, %v347
  %v444 = vpack.c.b16 %v356, %v348
  %v445 = vpack.c.b16 %v357, %v349
  %v446 = vpack.c.b16 %v366, %v358
  %v447 = vpack.c.b16 %v367, %v359
  %v448 = vpack.c.b16 %v368, %v360
  %v449 = vpack.c.b16 %v369, %v361
  %v450 = vpack.c.b16 %v370, %v362
  %v451 = vpack.c.b16 %v371, %v363
  %v452 = vpack.c.b16 %v372, %v364
  %v453 = vpack.c.b16 %v373, %v365
  %v454 = vpack.c.b16 %v382, %v374
  %v455 = vpack.c.b16 %v383, %v375
  %v456 = vpack.c.b16 %v384, %v376
  %v457 = vpack.c.b16 %v385, %v377
  %v458 = vpack.c.b16 %v386, %v378
  %v459 = vpack.c.b16 %v387, %v379
  %v460 = vpack.c.b16 %v388, %v380
  %v461 = vpack.c.b16 %v389, %v381
  %v462 = vpack.c.b16 %v398, %v390
  %v463 = vpack.c.b16 %v399, %v391
  %v464 = vpack.c.b16 %v400, %v392
  %v465 = vpack.c.b16 %v401, %v393
  %v466 = vpack.c.b16 %v402, %v394
  %v467 = vpack.c.b16 %v403, %v395
  %v468 = vpack.c.b16 %v404, %v396
  %v469 = vpack.c.b16 %v405, %v397
  %v662 = vunpack.c.l.b16 %v79
  %v663 = vunpack.c.l.b16 %v80
  %v664 = vunpack.c.l.b16 %v81
  %v665 = vunpack.c.l.b16 %v82
  %v666 = vunpack.c.l.b16 %v83
  %v667 = vunpack.c.l.b16 %v84
  %v668 = vunpack.c.l.b16 %v85
  %v669 = vunpack.c.l.b16 %v86
  %v670 = vunpack.c.l.b16 %v87
  %v671 = vunpack.c.l.b16 %v88
  %v672 = vunpack.c.l.b16 %v89
  %v673 = vunpack.c.l.b16 %v90
  %v674 = vunpack.c.l.b16 %v91
  %v675 = vunpack.c.l.b16 %v92
  %v676 = vunpack.c.l.b16 %v93
  %v677 = vunpack.c.l.b16 %v94
  %v678 = vunpack.c.l.b16 %v95
  %v679 = vunpack.c.l.b16 %v96
  %v680 = vunpack.c.l.b16 %v97
  %v681 = vunpack.c.l.b16 %v98
  %v682 = vunpack.c.l.b16 %v99
  %v683 = vunpack.c.l.b16 %v100
  %v684 = vunpack.c.l.b16 %v101
  %v685 = vunpack.c.l.b16 %v102
  %v686 = vunpack.c.l.b16 %v103
  %v687 = vunpack.c.l.b16 %v104
  %v688 = vunpack.c.l.b16 %v105
  %v689 = vunpack.c.l.b16 %v106
  %v690 = vunpack.c.l.b16 %v107
  %v691 = vunpack.c.l.b16 %v108
  %v692 = vunpack.c.l.b16 %v109
  %v693 = vunpack.c.l.b16 %v110
  %v694 = vunpack.c.l.b16 %v111
  %v695 = vunpack.c.l.b16 %v112
  %v696 = vunpack.c.l.b16 %v113
  %v697 = vunpack.c.l.b16 %v114
  %v698 = vunpack.c.l.b16 %v115
  %v699 = vunpack.c.l.b16 %v116
  %v700 = vunpack.c.l.b16 %v117
  %v701 = vunpack.c.l.b16 %v118
  %v702 = vunpack.c.l.b16 %v119
  %v703 = vunpack.c.l.b16 %v120
  %v704 = vunpack.c.l.b16 %v121
  %v705 = vunpack.c.l.b16 %v122
  %v706 = vunpack.c.l.b16 %v123
  %v707 = vunpack.c.l.b16 %v124
  %v708 = vunpack.c.l.b16 %v125
  %v709 = vunpack.c.l.b16 %v126
  %v710 = vunpack.c.l.b16 %v127
  %v711 = vunpack.c.l.b16 %v128
  %v712 = vunpack.c.l.b16 %v129
  %v713 = vunpack.c.l.b16 %v130
  %v714 = vunpack.c.l.b16 %v131
  %v715 = vunpack.c.l.b16 %v132
  %v716 = vunpack.c.l.b16 %v133
  %v717 = vunpack.c.l.b16 %v134
  %v718 = vunpack.c.l.b16 %v135
  %v719 = vunpack.c.l.b16 %v136
  %v720 = vunpack.c.l.b16 %v137
  %v721 = vunpack.c.l.b16 %v138
  %v722 = vunpack.c.l.b16 %v139
  %v723 = vunpack.c.l.b16 %v140
  %v724 = vunpack.c.l.b16 %v141
  %v725 = vunpack.c.l.b16 %v142
  %v726 = vunpack.c.l.b16 %v143
  %v727 = vunpack.c.l.b16 %v144
  %v728 = vunpack.c.l.b16 %v145
  %v729 = vunpack.c.l.b16 %v146
  %v730 = vunpack.c.l.b16 %v147
  %v731 = vunpack.c.l.b16 %v148
  %v732 = vunpack.c.l.b16 %v149
  %v733 = vunpack.c.l.b16 %v150
  %v734 = vunpack.c.l.b16 %v151
  %v735 = vunpack.c.l.b16 %v152
  %v736 = vunpack.c.l.b16 %v153
  %v737 = vunpack.c.l.b16 %v154
  %v738 = vunpack.c.l.b16 %v155
  %v739 = vunpack.c.l.b16 %v156
  %v740 = vunpack.c.l.b16 %v157
  %v741 = vunpack.c.l.b16 %v158
  %v742 = vunpack.c.l.b16 %v159
  %v743 = vunpack.c.l.b16 %v160
  %v744 = vunpack.c.l.b16 %v161
  %v745 = vunpack.c.l.b16 %v162
  %v746 = vunpack.c.l.b16 %v163
  %v747 = vunpack.c.l.b16 %v164
  %v748 = vunpack.c.l.b16 %v165
  %v749 = vunpack.c.l.b16 %v166
  %v750 = vunpack.c.l.b16 %v167
  %v751 = vunpack.c.l.b16 %v168
  %v752 = vunpack.c.l.b16 %v169
  %v753 = vunpack.c.l.b16 %v170
  %v754 = vunpack.c.l.b16 %v171
  %v755 = vunpack.c.l.b16 %v172
  %v756 = vunpack.c.l.b16 %v173
  %v757 = vunpack.c.l.b16 %v174
  %v758 = vunpack.c.l.b16 %v175
  %v759 = vunpack.c.l.b16 %v176
  %v760 = vunpack.c.l.b16 %v177
  %v761 = vunpack.c.l.b16 %v178
  %v762 = vunpack.c.l.b16 %v179
  %v763 = vunpack.c.l.b16 %v180
  %v764 = vunpack.c.l.b16 %v181
  %v765 = vunpack.c.l.b16 %v182
  %v766 = vunpack.c.l.b16 %v183
  %v767 = vunpack.c.l.b16 %v184
  %v768 = vunpack.c.l.b16 %v185
  %v769 = vunpack.c.l.b16 %v186
  %v770 = vunpack.c.l.b16 %v187
  %v771 = vunpack.c.l.b16 %v188
  %v772 = vunpack.c.l.b16 %v189
  %v773 = vunpack.c.l.b16 %v190
  %v774 = vunpack.c.l.b16 %v191
  %v775 = vunpack.c.l.b16 %v192
  %v776 = vunpack.c.l.b16 %v193
  %v777 = vunpack.c.l.b16 %v194
  %v778 = vunpack.c.l.b16 %v195
  %v779 = vunpack.c.l.b16 %v196
  %v780 = vunpack.c.l.b16 %v197
  %v781 = vunpack.c.l.b16 %v198
  %v782 = vunpack.c.l.b16 %v199
  %v783 = vunpack.c.l.b16 %v200
  %v784 = vunpack.c.l.b16 %v201
  %v785 = vunpack.c.l.b16 %v202
  %v786 = vunpack.c.l.b16 %v203
  %v787 = vunpack.c.l.b16 %v204
  %v788 = vunpack.c.l.b16 %v205
  %v789 = vunpack.c.l.b16 %v206
  %v790 = vpack.c.b16 %v663, %v662
  %v791 = vpack.c.b16 %v665, %v664
  %v792 = vpack.c.b16 %v667, %v666
  %v793 = vpack.c.b16 %v669, %v668
  %v794 = vpack.c.b16 %v671, %v670
  %v795 = vpack.c.b16 %v673, %v672
  %v796 = vpack.c.b16 %v675, %v674
  %v797 = vpack.c.b16 %v677, %v676
  %v798 = vpack.c.b16 %v679, %v678
  %v799 = vpack.c.b16 %v681, %v680
  %v800 = vpack.c.b16 %v683, %v682
  %v801 = vpack.c.b16 %v685, %v684
  %v802 = vpack.c.b16 %v687, %v686
  %v803 = vpack.c.b16 %v689, %v688
  %v804 = vpack.c.b16 %v691, %v690
  %v805 = vpack.c.b16 %v693, %v692
  %v806 = vpack.c.b16 %v695, %v694
  %v807 = vpack.c.b16 %v697, %v696
  %v808 = vpack.c.b16 %v699, %v698
  %v809 = vpack.c.b16 %v701, %v700
  %v810 = vpack.c.b16 %v703, %v702
  %v811 = vpack.c.b16 %v705, %v704
  %v812 = vpack.c.b16 %v707, %v706
  %v813 = vpack.c.b16 %v709, %v708
  %v814 = vpack.c.b16 %v711, %v710
  %v815 = vpack.c.b16 %v713, %v712
  %v816 = vpack.c.b16 %v715, %v714
  %v817 = vpack.c.b16 %v717, %v716
  %v818 = vpack.c.b16 %v719, %v718
  %v819 = vpack.c.b16 %v721, %v720
  %v820 = vpack.c.b16 %v723, %v722
  %v821 = vpack.c.b16 %v725, %v724
  %v822 = vpack.c.b16 %v727, %v726
  %v823 = vpack.c.b16 %v729, %v728
  %v824 = vpack.c.b16 %v731, %v730
  %v825 = vpack.c.b16 %v733, %v732
  %v826 = vpack.c.b16 %v735, %v734
  %v827 = vpack.c.b16 %v737, %v736
  %v828 = vpack.c.b16 %v739, %v738
  %v829 = vpack.c.b16 %v741, %v740
  %v830 = vpack.c.b16 %v743, %v742
  %v831 = vpack.c.b16 %v745, %v744
  %v832 = vpack.c.b16 %v747, %v746
  %v833 = vpack.c.b16 %v749, %v748
  %v834 = vpack.c.b16 %v751, %v750
  %v835 = vpack.c.b16 %v753, %v752
  %v836 = vpack.c.b16 %v755, %v754
  %v837 = vpack.c.b16 %v757, %v756
  %v838 = vpack.c.b16 %v759, %v758
  %v839 = vpack.c.b16 %v761, %v760
  %v840 = vpack.c.b16 %v763, %v762
  %v841 = vpack.c.b16 %v765, %v764
  %v842 = vpack.c.b16 %v767, %v766
  %v843 = vpack.c.b16 %v769, %v768
  %v844 = vpack.c.b16 %v771, %v770
  %v845 = vpack.c.b16 %v773, %v772
  %v846 = vpack.c.b16 %v775, %v774
  %v847 = vpack.c.b16 %v777, %v776
  %v848 = vpack.c.b16 %v779, %v778
  %v849 = vpack.c.b16 %v781, %v780
  %v850 = vpack.c.b16 %v783, %v782
  %v851 = vpack.c.b16 %v785, %v784
  %v852 = vpack.c.b16 %v787, %v786
  %v853 = vpack.c.b16 %v789, %v788
  %918 = vmatprep.subr.bf16.mxu0 0
  %919 = vmatpush1.bf16.msra.mxu0 %v790
  %920 = vmatprep.subr.bf16.mxu0 0
  %921 = vmatpush1.bf16.msra.mxu0 %v791
  %922 = vmatprep.subr.bf16.mxu0 0
  %923 = vmatpush1.bf16.msra.mxu0 %v792
  %924 = vmatprep.subr.bf16.mxu0 0
  %925 = vmatpush1.bf16.msra.mxu0 %v793
  %926 = vmatprep.subr.bf16.mxu0 0
  %927 = vmatpush1.bf16.msra.mxu0 %v794
  %928 = vmatprep.subr.bf16.mxu0 0
  %929 = vmatpush1.bf16.msra.mxu0 %v795
  %930 = vmatprep.subr.bf16.mxu0 0
  %931 = vmatpush1.bf16.msra.mxu0 %v796
  %932 = vmatprep.subr.bf16.mxu0 0
  %933 = vmatpush1.bf16.msra.mxu0 %v797
  %934 = vmatprep.subr.bf16.mxu0 0
  %935 = vmatpush1.bf16.msra.mxu0 %v798
  %936 = vmatprep.subr.bf16.mxu0 0
  %937 = vmatpush1.bf16.msra.mxu0 %v799
  %938 = vmatprep.subr.bf16.mxu0 0
  %939 = vmatpush1.bf16.msra.mxu0 %v800
  %940 = vmatprep.subr.bf16.mxu0 0
  %941 = vmatpush1.bf16.msra.mxu0 %v801
  %942 = vmatprep.subr.bf16.mxu0 0
  %943 = vmatpush1.bf16.msra.mxu0 %v802
  %944 = vmatprep.subr.bf16.mxu0 0
  %945 = vmatpush1.bf16.msra.mxu0 %v803
  %946 = vmatprep.subr.bf16.mxu0 0
  %947 = vmatpush1.bf16.msra.mxu0 %v804
  %948 = vmatprep.subr.bf16.mxu0 0
  %949 = vmatpush1.bf16.msra.mxu0 %v805
  %950 = vmatprep.mubr.bf16.mxu0 %v407
  %951 = vmatmul.mubr.bf16.gmra.mrb[0].mxu0 %v406
  %v952 = vpop.f32.mrb[0].mxu0
  %v953 = vadd.f32 %v212, %v952
  %v954 = vpop.f32.mrb[0].mxu0
  %v955 = vpop.f32.mrb[0].mxu0
  %v956 = vadd.f32 %v212, %v955
  %v957 = vpop.f32.mrb[0].mxu0
  %958 = vmatprep.mubr.bf16.mxu0 %v415
  %959 = vmatmul.mubr.bf16.gmra.mrb[0].mxu0 %v414
  %v960 = vpop.f32.mrb[0].mxu0
  %v961 = vadd.f32 %v212, %v960
  %v962 = vpop.f32.mrb[0].mxu0
  %v963 = vpop.f32.mrb[0].mxu0
  %v964 = vadd.f32 %v212, %v963
  %v965 = vpop.f32.mrb[0].mxu0
  %966 = vmatprep.mubr.bf16.mxu0 %v423
  %967 = vmatmul.mubr.bf16.gmra.mrb[0].mxu0 %v422
  %v968 = vpop.f32.mrb[0].mxu0
  %v969 = vadd.f32 %v212, %v968
  %v970 = vpop.f32.mrb[0].mxu0
  %v971 = vpop.f32.mrb[0].mxu0
  %v972 = vadd.f32 %v212, %v971
  %v973 = vpop.f32.mrb[0].mxu0
  %974 = vmatprep.mubr.bf16.mxu0 %v431
  %975 = vmatmul.mubr.bf16.gmra.mrb[0].mxu0 %v430
  %v976 = vpop.f32.mrb[0].mxu0
  %v977 = vadd.f32 %v212, %v976
  %v978 = vpop.f32.mrb[0].mxu0
  %v979 = vpop.f32.mrb[0].mxu0
  %v980 = vadd.f32 %v212, %v979
  %v981 = vpop.f32.mrb[0].mxu0
  %982 = vmatprep.mubr.bf16.mxu0 %v439
  %983 = vmatmul.mubr.bf16.gmra.mrb[0].mxu0 %v438
  %v984 = vpop.f32.mrb[0].mxu0
  %v985 = vadd.f32 %v212, %v984
  %v986 = vpop.f32.mrb[0].mxu0
  %v987 = vpop.f32.mrb[0].mxu0
  %v988 = vadd.f32 %v212, %v987
  %v989 = vpop.f32.mrb[0].mxu0
  %990 = vmatprep.mubr.bf16.mxu0 %v447
  %991 = vmatmul.mubr.bf16.gmra.mrb[0].mxu0 %v446
  %v992 = vpop.f32.mrb[0].mxu0
  %v993 = vadd.f32 %v212, %v992
  %v994 = vpop.f32.mrb[0].mxu0
  %v995 = vpop.f32.mrb[0].mxu0
  %v996 = vadd.f32 %v212, %v995
  %v997 = vpop.f32.mrb[0].mxu0
  %998 = vmatprep.mubr.bf16.mxu0 %v455
  %999 = vmatmul.mubr.bf16.gmra.mrb[0].mxu0 %v454
  %v1000 = vpop.f32.mrb[0].mxu0
  %v1001 = vadd.f32 %v212, %v1000
  %v1002 = vpop.f32.mrb[0].mxu0
  %v1003 = vpop.f32.mrb[0].mxu0
  %v1004 = vadd.f32 %v212, %v1003
  %v1005 = vpop.f32.mrb[0].mxu0
  %1006 = vmatprep.mubr.bf16.mxu0 %v463
  %1007 = vmatmul.mubr.bf16.gmra.mrb[0].mxu0 %v462
  %v1008 = vpop.f32.mrb[0].mxu0
  %v1009 = vadd.f32 %v212, %v1008
  %v1010 = vpop.f32.mrb[0].mxu0
  %v1011 = vpop.f32.mrb[0].mxu0
  %v1012 = vadd.f32 %v212, %v1011
  %v1013 = vpop.f32.mrb[0].mxu0
  %1014 = vdwg.mxu0
  %1015 = vmatprep.subr.bf16.mxu0 0
  %1016 = vmatpush1.bf16.msra.mxu0 %v806
  %1017 = vmatprep.subr.bf16.mxu0 0
  %1018 = vmatpush1.bf16.msra.mxu0 %v807
  %1019 = vmatprep.subr.bf16.mxu0 0
  %1020 = vmatpush1.bf16.msra.mxu0 %v808
  %1021 = vmatprep.subr.bf16.mxu0 0
  %1022 = vmatpush1.bf16.msra.mxu0 %v809
  %1023 = vmatprep.subr.bf16.mxu0 0
  %1024 = vmatpush1.bf16.msra.mxu0 %v810
  %1025 = vmatprep.subr.bf16.mxu0 0
  %1026 = vmatpush1.bf16.msra.mxu0 %v811
  %1027 = vmatprep.subr.bf16.mxu0 0
  %1028 = vmatpush1.bf16.msra.mxu0 %v812
  %1029 = vmatprep.subr.bf16.mxu0 0
  %1030 = vmatpush1.bf16.msra.mxu0 %v813
  %1031 = vmatprep.subr.bf16.mxu0 0
  %1032 = vmatpush1.bf16.msra.mxu0 %v814
  %1033 = vmatprep.subr.bf16.mxu0 0
  %1034 = vmatpush1.bf16.msra.mxu0 %v815
  %1035 = vmatprep.subr.bf16.mxu0 0
  %1036 = vmatpush1.bf16.msra.mxu0 %v816
  %1037 = vmatprep.subr.bf16.mxu0 0
  %1038 = vmatpush1.bf16.msra.mxu0 %v817
  %1039 = vmatprep.subr.bf16.mxu0 0
  %1040 = vmatpush1.bf16.msra.mxu0 %v818
  %1041 = vmatprep.subr.bf16.mxu0 0
  %1042 = vmatpush1.bf16.msra.mxu0 %v819
  %1043 = vmatprep.subr.bf16.mxu0 0
  %1044 = vmatpush1.bf16.msra.mxu0 %v820
  %1045 = vmatprep.subr.bf16.mxu0 0
  %1046 = vmatpush1.bf16.msra.mxu0 %v821
  %1047 = vmatprep.mubr.bf16.mxu0 %v409
  %1048 = vmatmul.mubr.bf16.gmra.mrb[0].mxu0 %v408
  %v1049 = vpop.f32.mrb[0].mxu0
  %v1050 = vadd.f32 %v953, %v1049
  %v1051 = vpop.f32.mrb[0].mxu0
  %v1052 = vpop.f32.mrb[0].mxu0
  %v1053 = vadd.f32 %v956, %v1052
  %v1054 = vpop.f32.mrb[0].mxu0
  %1055 = vmatprep.mubr.bf16.mxu0 %v417
  %1056 = vmatmul.mubr.bf16.gmra.mrb[0].mxu0 %v416
  %v1057 = vpop.f32.mrb[0].mxu0
  %v1058 = vadd.f32 %v961, %v1057
  %v1059 = vpop.f32.mrb[0].mxu0
  %v1060 = vpop.f32.mrb[0].mxu0
  %v1061 = vadd.f32 %v964, %v1060
  %v1062 = vpop.f32.mrb[0].mxu0
  %1063 = vmatprep.mubr.bf16.mxu0 %v425
  %1064 = vmatmul.mubr.bf16.gmra.mrb[0].mxu0 %v424
  %v1065 = vpop.f32.mrb[0].mxu0
  %v1066 = vadd.f32 %v969, %v1065
  %v1067 = vpop.f32.mrb[0].mxu0
  %v1068 = vpop.f32.mrb[0].mxu0
  %v1069 = vadd.f32 %v972, %v1068
  %v1070 = vpop.f32.mrb[0].mxu0
  %1071 = vmatprep.mubr.bf16.mxu0 %v433
  %1072 = vmatmul.mubr.bf16.gmra.mrb[0].mxu0 %v432
  %v1073 = vpop.f32.mrb[0].mxu0
  %v1074 = vadd.f32 %v977, %v1073
  %v1075 = vpop.f32.mrb[0].mxu0
  %v1076 = vpop.f32.mrb[0].mxu0
  %v1077 = vadd.f32 %v980, %v1076
  %v1078 = vpop.f32.mrb[0].mxu0
  %1079 = vmatprep.mubr.bf16.mxu0 %v441
  %1080 = vmatmul.mubr.bf16.gmra.mrb[0].mxu0 %v440
  %v1081 = vpop.f32.mrb[0].mxu0
  %v1082 = vadd.f32 %v985, %v1081
  %v1083 = vpop.f32.mrb[0].mxu0
  %v1084 = vpop.f32.mrb[0].mxu0
  %v1085 = vadd.f32 %v988, %v1084
  %v1086 = vpop.f32.mrb[0].mxu0
  %1087 = vmatprep.mubr.bf16.mxu0 %v449
  %1088 = vmatmul.mubr.bf16.gmra.mrb[0].mxu0 %v448
  %v1089 = vpop.f32.mrb[0].mxu0
  %v1090 = vadd.f32 %v993, %v1089
  %v1091 = vpop.f32.mrb[0].mxu0
  %v1092 = vpop.f32.mrb[0].mxu0
  %v1093 = vadd.f32 %v996, %v1092
  %v1094 = vpop.f32.mrb[0].mxu0
  %1095 = vmatprep.mubr.bf16.mxu0 %v457
  %1096 = vmatmul.mubr.bf16.gmra.mrb[0].mxu0 %v456
  %v1097 = vpop.f32.mrb[0].mxu0
  %v1098 = vadd.f32 %v1001, %v1097
  %v1099 = vpop.f32.mrb[0].mxu0
  %v1100 = vpop.f32.mrb[0].mxu0
  %v1101 = vadd.f32 %v1004, %v1100
  %v1102 = vpop.f32.mrb[0].mxu0
  %1103 = vmatprep.mubr.bf16.mxu0 %v465
  %1104 = vmatmul.mubr.bf16.gmra.mrb[0].mxu0 %v464
  %v1105 = vpop.f32.mrb[0].mxu0
  %v1106 = vadd.f32 %v1009, %v1105
  %v1107 = vpop.f32.mrb[0].mxu0
  %v1108 = vpop.f32.mrb[0].mxu0
  %v1109 = vadd.f32 %v1012, %v1108
  %v1110 = vpop.f32.mrb[0].mxu0
  %1111 = vdwg.mxu0
  %1112 = vmatprep.subr.bf16.mxu0 0
  %1113 = vmatpush1.bf16.msra.mxu0 %v822
  %1114 = vmatprep.subr.bf16.mxu0 0
  %1115 = vmatpush1.bf16.msra.mxu0 %v823
  %1116 = vmatprep.subr.bf16.mxu0 0
  %1117 = vmatpush1.bf16.msra.mxu0 %v824
  %1118 = vmatprep.subr.bf16.mxu0 0
  %1119 = vmatpush1.bf16.msra.mxu0 %v825
  %1120 = vmatprep.subr.bf16.mxu0 0
  %1121 = vmatpush1.bf16.msra.mxu0 %v826
  %1122 = vmatprep.subr.bf16.mxu0 0
  %1123 = vmatpush1.bf16.msra.mxu0 %v827
  %1124 = vmatprep.subr.bf16.mxu0 0
  %1125 = vmatpush1.bf16.msra.mxu0 %v828
  %1126 = vmatprep.subr.bf16.mxu0 0
  %1127 = vmatpush1.bf16.msra.mxu0 %v829
  %1128 = vmatprep.subr.bf16.mxu0 0
  %1129 = vmatpush1.bf16.msra.mxu0 %v830
  %1130 = vmatprep.subr.bf16.mxu0 0
  %1131 = vmatpush1.bf16.msra.mxu0 %v831
  %1132 = vmatprep.subr.bf16.mxu0 0
  %1133 = vmatpush1.bf16.msra.mxu0 %v832
  %1134 = vmatprep.subr.bf16.mxu0 0
  %1135 = vmatpush1.bf16.msra.mxu0 %v833
  %1136 = vmatprep.subr.bf16.mxu0 0
  %1137 = vmatpush1.bf16.msra.mxu0 %v834
  %1138 = vmatprep.subr.bf16.mxu0 0
  %1139 = vmatpush1.bf16.msra.mxu0 %v835
  %1140 = vmatprep.subr.bf16.mxu0 0
  %1141 = vmatpush1.bf16.msra.mxu0 %v836
  %1142 = vmatprep.subr.bf16.mxu0 0
  %1143 = vmatpush1.bf16.msra.mxu0 %v837
  %1144 = vmatprep.mubr.bf16.mxu0 %v411
  %1145 = vmatmul.mubr.bf16.gmra.mrb[0].mxu0 %v410
  %v1146 = vpop.f32.mrb[0].mxu0
  %v1147 = vadd.f32 %v1050, %v1146
  %v1148 = vpop.f32.mrb[0].mxu0
  %v1149 = vpop.f32.mrb[0].mxu0
  %v1150 = vadd.f32 %v1053, %v1149
  %v1151 = vpop.f32.mrb[0].mxu0
  %1152 = vmatprep.mubr.bf16.mxu0 %v419
  %1153 = vmatmul.mubr.bf16.gmra.mrb[0].mxu0 %v418
  %v1154 = vpop.f32.mrb[0].mxu0
  %v1155 = vadd.f32 %v1058, %v1154
  %v1156 = vpop.f32.mrb[0].mxu0
  %v1157 = vpop.f32.mrb[0].mxu0
  %v1158 = vadd.f32 %v1061, %v1157
  %v1159 = vpop.f32.mrb[0].mxu0
  %1160 = vmatprep.mubr.bf16.mxu0 %v427
  %1161 = vmatmul.mubr.bf16.gmra.mrb[0].mxu0 %v426
  %v1162 = vpop.f32.mrb[0].mxu0
  %v1163 = vadd.f32 %v1066, %v1162
  %v1164 = vpop.f32.mrb[0].mxu0
  %v1165 = vpop.f32.mrb[0].mxu0
  %v1166 = vadd.f32 %v1069, %v1165
  %v1167 = vpop.f32.mrb[0].mxu0
  %1168 = vmatprep.mubr.bf16.mxu0 %v435
  %1169 = vmatmul.mubr.bf16.gmra.mrb[0].mxu0 %v434
  %v1170 = vpop.f32.mrb[0].mxu0
  %v1171 = vadd.f32 %v1074, %v1170
  %v1172 = vpop.f32.mrb[0].mxu0
  %v1173 = vpop.f32.mrb[0].mxu0
  %v1174 = vadd.f32 %v1077, %v1173
  %v1175 = vpop.f32.mrb[0].mxu0
  %1176 = vmatprep.mubr.bf16.mxu0 %v443
  %1177 = vmatmul.mubr.bf16.gmra.mrb[0].mxu0 %v442
  %v1178 = vpop.f32.mrb[0].mxu0
  %v1179 = vadd.f32 %v1082, %v1178
  %v1180 = vpop.f32.mrb[0].mxu0
  %v1181 = vpop.f32.mrb[0].mxu0
  %v1182 = vadd.f32 %v1085, %v1181
  %v1183 = vpop.f32.mrb[0].mxu0
  %1184 = vmatprep.mubr.bf16.mxu0 %v451
  %1185 = vmatmul.mubr.bf16.gmra.mrb[0].mxu0 %v450
  %v1186 = vpop.f32.mrb[0].mxu0
  %v1187 = vadd.f32 %v1090, %v1186
  %v1188 = vpop.f32.mrb[0].mxu0
  %v1189 = vpop.f32.mrb[0].mxu0
  %v1190 = vadd.f32 %v1093, %v1189
  %v1191 = vpop.f32.mrb[0].mxu0
  %1192 = vmatprep.mubr.bf16.mxu0 %v459
  %1193 = vmatmul.mubr.bf16.gmra.mrb[0].mxu0 %v458
  %v1194 = vpop.f32.mrb[0].mxu0
  %v1195 = vadd.f32 %v1098, %v1194
  %v1196 = vpop.f32.mrb[0].mxu0
  %v1197 = vpop.f32.mrb[0].mxu0
  %v1198 = vadd.f32 %v1101, %v1197
  %v1199 = vpop.f32.mrb[0].mxu0
  %1200 = vmatprep.mubr.bf16.mxu0 %v467
  %1201 = vmatmul.mubr.bf16.gmra.mrb[0].mxu0 %v466
  %v1202 = vpop.f32.mrb[0].mxu0
  %v1203 = vadd.f32 %v1106, %v1202
  %v1204 = vpop.f32.mrb[0].mxu0
  %v1205 = vpop.f32.mrb[0].mxu0
  %v1206 = vadd.f32 %v1109, %v1205
  %v1207 = vpop.f32.mrb[0].mxu0
  %1208 = vdwg.mxu0
  %1209 = vmatprep.subr.bf16.mxu0 0
  %1210 = vmatpush1.bf16.msra.mxu0 %v838
  %1211 = vmatprep.subr.bf16.mxu0 0
  %1212 = vmatpush1.bf16.msra.mxu0 %v839
  %1213 = vmatprep.subr.bf16.mxu0 0
  %1214 = vmatpush1.bf16.msra.mxu0 %v840
  %1215 = vmatprep.subr.bf16.mxu0 0
  %1216 = vmatpush1.bf16.msra.mxu0 %v841
  %1217 = vmatprep.subr.bf16.mxu0 0
  %1218 = vmatpush1.bf16.msra.mxu0 %v842
  %1219 = vmatprep.subr.bf16.mxu0 0
  %1220 = vmatpush1.bf16.msra.mxu0 %v843
  %1221 = vmatprep.subr.bf16.mxu0 0
  %1222 = vmatpush1.bf16.msra.mxu0 %v844
  %1223 = vmatprep.subr.bf16.mxu0 0
  %1224 = vmatpush1.bf16.msra.mxu0 %v845
  %1225 = vmatprep.subr.bf16.mxu0 0
  %1226 = vmatpush1.bf16.msra.mxu0 %v846
  %1227 = vmatprep.subr.bf16.mxu0 0
  %1228 = vmatpush1.bf16.msra.mxu0 %v847
  %1229 = vmatprep.subr.bf16.mxu0 0
  %1230 = vmatpush1.bf16.msra.mxu0 %v848
  %1231 = vmatprep.subr.bf16.mxu0 0
  %1232 = vmatpush1.bf16.msra.mxu0 %v849
  %1233 = vmatprep.subr.bf16.mxu0 0
  %1234 = vmatpush1.bf16.msra.mxu0 %v850
  %1235 = vmatprep.subr.bf16.mxu0 0
  %1236 = vmatpush1.bf16.msra.mxu0 %v851
  %1237 = vmatprep.subr.bf16.mxu0 0
  %1238 = vmatpush1.bf16.msra.mxu0 %v852
  %1239 = vmatprep.subr.bf16.mxu0 0
  %1240 = vmatpush1.bf16.msra.mxu0 %v853
  %1241 = vmatprep.mubr.bf16.mxu0 %v413
  %1242 = vmatmul.mubr.bf16.gmra.mrb[0].mxu0 %v412
  %v1243 = vpop.f32.mrb[0].mxu0
  %v1244 = vadd.f32 %v1147, %v1243
  %v1245 = vpop.f32.mrb[0].mxu0
  %v1246 = vpop.f32.mrb[0].mxu0
  %v1247 = vadd.f32 %v1150, %v1246
  %v1248 = vpop.f32.mrb[0].mxu0
  %1249 = vmatprep.mubr.bf16.mxu0 %v421
  %1250 = vmatmul.mubr.bf16.gmra.mrb[0].mxu0 %v420
  %v1251 = vpop.f32.mrb[0].mxu0
  %v1252 = vadd.f32 %v1155, %v1251
  %v1253 = vpop.f32.mrb[0].mxu0
  %v1254 = vpop.f32.mrb[0].mxu0
  %v1255 = vadd.f32 %v1158, %v1254
  %v1256 = vpop.f32.mrb[0].mxu0
  %1257 = vmatprep.mubr.bf16.mxu0 %v429
  %1258 = vmatmul.mubr.bf16.gmra.mrb[0].mxu0 %v428
  %v1259 = vpop.f32.mrb[0].mxu0
  %v1260 = vadd.f32 %v1163, %v1259
  %v1261 = vpop.f32.mrb[0].mxu0
  %v1262 = vpop.f32.mrb[0].mxu0
  %v1263 = vadd.f32 %v1166, %v1262
  %v1264 = vpop.f32.mrb[0].mxu0
  %1265 = vmatprep.mubr.bf16.mxu0 %v437
  %1266 = vmatmul.mubr.bf16.gmra.mrb[0].mxu0 %v436
  %v1267 = vpop.f32.mrb[0].mxu0
  %v1268 = vadd.f32 %v1171, %v1267
  %v1269 = vpop.f32.mrb[0].mxu0
  %v1270 = vpop.f32.mrb[0].mxu0
  %v1271 = vadd.f32 %v1174, %v1270
  %v1272 = vpop.f32.mrb[0].mxu0
  %1273 = vmatprep.mubr.bf16.mxu0 %v445
  %1274 = vmatmul.mubr.bf16.gmra.mrb[0].mxu0 %v444
  %v1275 = vpop.f32.mrb[0].mxu0
  %v1276 = vadd.f32 %v1179, %v1275
  %v1277 = vpop.f32.mrb[0].mxu0
  %v1278 = vpop.f32.mrb[0].mxu0
  %v1279 = vadd.f32 %v1182, %v1278
  %v1280 = vpop.f32.mrb[0].mxu0
  %1281 = vmatprep.mubr.bf16.mxu0 %v453
  %1282 = vmatmul.mubr.bf16.gmra.mrb[0].mxu0 %v452
  %v1283 = vpop.f32.mrb[0].mxu0
  %v1284 = vadd.f32 %v1187, %v1283
  %v1285 = vpop.f32.mrb[0].mxu0
  %v1286 = vpop.f32.mrb[0].mxu0
  %v1287 = vadd.f32 %v1190, %v1286
  %v1288 = vpop.f32.mrb[0].mxu0
  %1289 = vmatprep.mubr.bf16.mxu0 %v461
  %1290 = vmatmul.mubr.bf16.gmra.mrb[0].mxu0 %v460
  %v1291 = vpop.f32.mrb[0].mxu0
  %v1292 = vadd.f32 %v1195, %v1291
  %v1293 = vpop.f32.mrb[0].mxu0
  %v1294 = vpop.f32.mrb[0].mxu0
  %v1295 = vadd.f32 %v1198, %v1294
  %v1296 = vpop.f32.mrb[0].mxu0
  %1297 = vmatprep.mubr.bf16.mxu0 %v469
  %1298 = vmatmul.mubr.bf16.gmra.mrb[0].mxu0 %v468
  %v1299 = vpop.f32.mrb[0].mxu0
  %v1300 = vadd.f32 %v1203, %v1299
  %v1301 = vpop.f32.mrb[0].mxu0
  %v1302 = vpop.f32.mrb[0].mxu0
  %v1303 = vadd.f32 %v1206, %v1302
  %v1304 = vpop.f32.mrb[0].mxu0
  %1305 = vdwg.mxu0
  %v1306 = vpack.c.bf16 %v1247, %v1244
  %v1307 = vpack.c.bf16 %v1255, %v1252
  %v1308 = vpack.c.bf16 %v1263, %v1260
  %v1309 = vpack.c.bf16 %v1271, %v1268
  %v1310 = vpack.c.bf16 %v1279, %v1276
  %v1311 = vpack.c.bf16 %v1287, %v1284
  %v1312 = vpack.c.bf16 %v1295, %v1292
  %v1313 = vpack.c.bf16 %v1303, %v1300
  %v1322 = vunpack.c.l.b16 %v1306
  %v1323 = vunpack.c.h.b16 %v1306
  %v1324 = vunpack.c.l.b16 %v1307
  %v1325 = vunpack.c.h.b16 %v1307
  %v1326 = vunpack.c.l.b16 %v1308
  %v1327 = vunpack.c.h.b16 %v1308
  %v1328 = vunpack.c.l.b16 %v1309
  %v1329 = vunpack.c.h.b16 %v1309
  %v1330 = vunpack.c.l.b16 %v1310
  %v1331 = vunpack.c.h.b16 %v1310
  %v1332 = vunpack.c.l.b16 %v1311
  %v1333 = vunpack.c.h.b16 %v1311
  %v1334 = vunpack.c.l.b16 %v1312
  %v1335 = vunpack.c.h.b16 %v1312
  %v1336 = vunpack.c.l.b16 %v1313
  %v1337 = vunpack.c.h.b16 %v1313
  %v1338 = vpack.c.b16 %v1322, %v1322
  %v1339 = vpack.c.b16 %v1323, %v1323
  %v1340 = vpack.c.b16 %v1324, %v1324
  %v1341 = vpack.c.b16 %v1325, %v1325
  %v1342 = vpack.c.b16 %v1326, %v1326
  %v1343 = vpack.c.b16 %v1327, %v1327
  %v1344 = vpack.c.b16 %v1328, %v1328
  %v1345 = vpack.c.b16 %v1329, %v1329
  %v1346 = vpack.c.b16 %v1330, %v1330
  %v1347 = vpack.c.b16 %v1331, %v1331
  %v1348 = vpack.c.b16 %v1332, %v1332
  %v1349 = vpack.c.b16 %v1333, %v1333
  %v1350 = vpack.c.b16 %v1334, %v1334
  %v1351 = vpack.c.b16 %v1335, %v1335
  %v1352 = vpack.c.b16 %v1336, %v1336
  %v1353 = vpack.c.b16 %v1337, %v1337
  %1370 = vst [vmem:[%s3] sm:$0xf] %v1338
  %1371 = vst [vmem:[%s3 + $0x4] sm:$0xf] %v1339
  %1372 = vst [vmem:[%s3 + $0x8] sm:$0xf] %v1340
  %1373 = vst [vmem:[%s3 + $0xc] sm:$0xf] %v1341
  %1374 = vst [vmem:[%s3 + $0x10] sm:$0xf] %v1342
  %1375 = vst [vmem:[%s3 + $0x14] sm:$0xf] %v1343
  %1376 = vst [vmem:[%s3 + $0x18] sm:$0xf] %v1344
  %1377 = vst [vmem:[%s3 + $0x1c] sm:$0xf] %v1345
  %1378 = vst [vmem:[%s3 + $0x20] sm:$0xf] %v1346
  %1379 = vst [vmem:[%s3 + $0x24] sm:$0xf] %v1347
  %1380 = vst [vmem:[%s3 + $0x28] sm:$0xf] %v1348
  %1381 = vst [vmem:[%s3 + $0x2c] sm:$0xf] %v1349
  %1382 = vst [vmem:[%s3 + $0x30] sm:$0xf] %v1350
  %1383 = vst [vmem:[%s3 + $0x34] sm:$0xf] %v1351
  %1384 = vst [vmem:[%s3 + $0x38] sm:$0xf] %v1352
  %1385 = vst [vmem:[%s3 + $0x3c] sm:$0xf] %v1353
  // Predicated region
  $region14: #{discriminator_forward.9} parent=0 // pred_check
    _
  $region15: #{discriminator_forward.9} parent=0 // pred_check_branch
    %1387 = sbr.rel (0) target = $region17
  $region16: #{discriminator_forward.9} parent=0 // pred_region
    _
  $region17: #{discriminator_forward.9} parent=0 // pred_fallthru
    _
  // Predicated region
  $region18: #{discriminator_forward.9} parent=0 // pred_check
    _
  $region19: #{discriminator_forward.9} parent=0 // pred_check_branch
    %1389 = sbr.rel (0) target = $region21
  $region20: #{discriminator_forward.9} parent=0 // pred_region
    _
  $region21: #{discriminator_forward.9} parent=0 // pred_fallthru
    _

// kernel: discriminator_forward.12
$region0: #{discriminator_forward.12}
  #allocation0 [shape = 'u32[]', space=smem, size = 0x4, offset = 0x4, fixed_abs, tag = 'smem constant byte address 0x4 - core index']
  #allocation1 [shape = 'u32[144,128]{1,0:T(1,128)}', space=vmem, size = 0x12000, scoped, tag = 'internal scratch']
  %s0 = inlined_call_operand.vmem [shape: bf16[2,16,256], index: 0, kind: input, shape index: {}]
  %s1 = inlined_call_operand.vmem [shape: bf16[2,16,256], index: 1, kind: output, shape index: {}]
  %s2 = sld [smem:[#allocation0]]
  $region37: #{discriminator_forward.12} parent=0
    _
  %s4 = ssub.s32 1, %s2
  %s5 = scalar_select 0, %s4, %s2
  loop: start=0, step=1, limit=4
  $region2: #{discriminator_forward.12} parent=0 // loop_pre_header
    _
  $region3: #{discriminator_forward.12} parent=0 // loop_header
    %s7 = sphi 0, %s11
    %p8 = scmp.ge.s32.totalorder %s7, 4
    %s17 = sphi 0, %s19
    %s20 = sphi 0, %s17
    %s21 = sphi 0, %s20
    %s37 = sphi 0, %s21
    %s43 = sphi 0, %s45
    %s46 = sphi 0, %s43
    %s47 = sphi 0, %s46
    %s63 = sphi 0, %s47
  $region4: #{discriminator_forward.12} parent=0 // loop_header_branch
    %10 = sbr.rel (%p8) target = $region8
  $region5: #{discriminator_forward.12} parent=0 // loop_body
    %s12 = ssub.s32 %s7, 1
    %s13 = ssub.s32 %s7, 2
    %s14 = sadd.s32 %s7, 1
    %s15 = ssub.s32 %s7, %s14
    %p16 = scmp.eq.s32.totalorder %s15, 0
    %s18 = sadd.s32 %s17, 1
    %s19 = scalar_select %p16, %s17, %s18
    %p22 = pneg %p16
    %p23 = scmp.eq.s32.totalorder %s7, 1
    %p24 = por %p22, %p23
    %p25 = scmp.ne.s32.totalorder %s17, %s20
    %p26 = scmp.eq.s32.totalorder %s7, 0
    %p27 = por %p25, %p26
    %p28 = scmp.ne.s32.totalorder %s17, %s20
    %p29 = scmp.eq.s32.totalorder %s12, 1
    %p30 = por %p28, %p29
    %p31 = scmp.ne.s32.totalorder %s20, %s21
    %p32 = scmp.eq.s32.totalorder %s12, 0
    %p33 = por %p31, %p32
    %p34 = scmp.ne.s32.totalorder %s20, %s21
    %p35 = scmp.eq.s32.totalorder %s13, 1
    %p36 = por %p34, %p35
    %p38 = scmp.ne.s32.totalorder %s21, %s37
    %p39 = scmp.eq.s32.totalorder %s13, 0
    %p40 = por %p38, %p39
    %s41 = ssub.s32 %s7, %s14
    %p42 = scmp.eq.s32.totalorder %s41, 0
    %s44 = sadd.s32 %s43, 1
    %s45 = scalar_select %p42, %s43, %s44
    %p48 = pneg %p42
    %p49 = scmp.eq.s32.totalorder %s7, 1
    %p50 = por %p48, %p49
    %p51 = scmp.ne.s32.totalorder %s43, %s46
    %p52 = scmp.eq.s32.totalorder %s7, 0
    %p53 = por %p51, %p52
    %p54 = scmp.ne.s32.totalorder %s43, %s46
    %p55 = scmp.eq.s32.totalorder %s12, 1
    %p56 = por %p54, %p55
    %p57 = scmp.ne.s32.totalorder %s46, %s47
    %p58 = scmp.eq.s32.totalorder %s12, 0
    %p59 = por %p57, %p58
    %p60 = scmp.ne.s32.totalorder %s46, %s47
    %p61 = scmp.eq.s32.totalorder %s13, 1
    %p62 = por %p60, %p61
    %p64 = scmp.ne.s32.totalorder %s47, %s63
    %p65 = scmp.eq.s32.totalorder %s13, 0
    %p66 = por %p64, %p65
    %p67 = scmp.le.s32.totalorder 1, %s7
    %p68 = scmp.lt.s32.totalorder %s7, 3
    %p69 = pnand %p67, %p68
    %p70 = pneg %p69
    // Predicated region
    $region9: #{discriminator_forward.12} parent=5 // pred_check
      _
    $region10: #{discriminator_forward.12} parent=5 // pred_check_branch
      %72 = sbr.rel (%p69) target = $region12
    $region11: #{discriminator_forward.12} parent=5 // pred_region
      %s73 = ssub.s32 %s7, 1
    $region12: #{discriminator_forward.12} parent=5 // pred_fallthru
      _
    %p74 = scmp.lt.s32.totalorder %s7, 2
    // Predicated region
    $region13: #{discriminator_forward.12} parent=5 // pred_check
      %p75 = pneg %p74
    $region14: #{discriminator_forward.12} parent=5 // pred_check_branch
      %77 = sbr.rel (%p75) target = $region16
    $region15: #{discriminator_forward.12} parent=5 // pred_region
      // Predicated region
      $region17: #{discriminator_forward.12} parent=15 // pred_check
        %p78 = pneg %p27
      $region18: #{discriminator_forward.12} parent=15 // pred_check_branch
        %80 = sbr.rel (%p78) target = $region20
      $region19: #{discriminator_forward.12} parent=15 // pred_region
        %p81 = scmp.lt.s32.totalorder %s7, 1
        %s82 = scalar_select %p81, %s7, 1
        %s83 = smul.addr %s82, 4
        %s84 = smul.addr %s83, 4
        %s85 = scalar_lea.vmem %s0, %s84
      $region20: #{discriminator_forward.12} parent=15 // pred_fallthru
        _
    $region16: #{discriminator_forward.12} parent=5 // pred_fallthru
      _
    %p86 = scmp.le.s32.totalorder 1, %s7
    %p87 = scmp.lt.s32.totalorder %s7, 3
    %p88 = pnand %p86, %p87
    %p89 = pneg %p88
    // Predicated region
    $region21: #{discriminator_forward.12} parent=5 // pred_check
      _
    $region22: #{discriminator_forward.12} parent=5 // pred_check_branch
      %91 = sbr.rel (%p88) target = $region24
    $region23: #{discriminator_forward.12} parent=5 // pred_region
      %s92 = ssub.s32 %s7, 1
      %p93 = scmp.lt.s32.totalorder %s12, 1
      %s94 = scalar_select %p93, %s12, 1
      %s95 = smul.addr %s94, 4
      %s96 = smul.addr %s95, 4
      %s97 = scalar_lea.vmem %s0, %s96
      %p98 = pneg %p33
      %p99 = pneg %p30
      %p100 = pneg %p59
      %p101 = pneg %p56
      %p102 = scmp.lt.s32.totalorder %s12, 1
      %s103 = scalar_select %p102, %s12, 1
      %s104 = smul.addr %s103, 4
      %s105 = smul.addr %s104, 4
      %s106 = scalar_lea.vmem %s1, %s105
      %p107 = scmp.lt.s32.totalorder %s12, 1
      %s108 = scalar_select %p107, %s12, 1
      %s109 = smul.addr %s108, 4
      %s110 = smul.addr %s109, 4
      %s111 = scalar_lea.vmem %s0, %s110
      %p112 = scmp.lt.s32.totalorder %s12, 1
      %s113 = scalar_select %p112, %s12, 1
      %s114 = smul.addr %s113, 4
      %s115 = smul.addr %s114, 4
      %s116 = scalar_lea.vmem %s1, %s115
      %v117 = vld [vmem:[%s111] sm:$0xff]
      %v118 = vld [vmem:[%s111 + $0x8] sm:$0xff]
      %v119 = vunpack.c.l.bf16 %v117
      %v120 = vunpack.c.h.bf16 %v117
      %v121 = vunpack.c.l.bf16 %v118
      %v122 = vunpack.c.h.bf16 %v118
      %v123 = vadd.f32 %v119, %v121
      %v124 = vrot.slane %v123, 4
      %v125 = vadd.f32 %v123, %v124
      %v126 = vrot.slane %v125, 2
      %v127 = vadd.f32 %v125, %v126
      %v128 = vrot.slane %v127, 1
      %v129 = vadd.f32 %v127, %v128
      %v130 = vadd.f32 %v120, %v122
      %v131 = vrot.slane %v130, 4
      %v132 = vadd.f32 %v130, %v131
      %v133 = vrot.slane %v132, 2
      %v134 = vadd.f32 %v132, %v133
      %v135 = vrot.slane %v134, 1
      %v136 = vadd.f32 %v134, %v135
      %v137 = vmul.f32 %v119, %v119
      %v138 = vmul.f32 %v120, %v120
      %v139 = vmul.f32 %v121, %v121
      %v140 = vmul.f32 %v122, %v122
      %v141 = vadd.f32 %v137, %v139
      %v142 = vrot.slane %v141, 4
      %v143 = vadd.f32 %v141, %v142
      %v144 = vrot.slane %v143, 2
      %v145 = vadd.f32 %v143, %v144
      %v146 = vrot.slane %v145, 1
      %v147 = vadd.f32 %v145, %v146
      %v148 = vadd.f32 %v138, %v140
      %v149 = vrot.slane %v148, 4
      %v150 = vadd.f32 %v148, %v149
      %v151 = vrot.slane %v150, 2
      %v152 = vadd.f32 %v150, %v151
      %v153 = vrot.slane %v152, 1
      %v154 = vadd.f32 %v152, %v153
      %v155 = vmul.f32 %v129, 0.0625
      %v156 = vmul.f32 %v136, 0.0625
      %v157 = vmul.f32 %v147, 0.0625
      %v158 = vmul.f32 %v154, 0.0625
      %v159 = vmul.f32 %v155, %v155
      %v160 = vmul.f32 %v156, %v156
      %v161 = vsub.f32 %v157, %v159
      %v162 = vsub.f32 %v158, %v160
      %v163 = vmax.f32 %v161, 0.0
      %v164 = vmax.f32 %v162, 0.0
      %v165 = vsub.f32 %v119, %v155
      %v166 = vsub.f32 %v120, %v156
      %v167 = vsub.f32 %v121, %v155
      %v168 = vsub.f32 %v122, %v156
      %v169 = vadd.f32 %v163, 1e-05
      %v170 = vadd.f32 %v164, 1e-05
      %v171 = vrsqrt.pop %v169
      %v172 = vrsqrt.pop %v170
      %v173 = vmul.f32 %v165, %v171
      %v174 = vmul.f32 %v166, %v172
      %v175 = vmul.f32 %v167, %v171
      %v176 = vmul.f32 %v168, %v172
      %vm177 = vcmp.ge.f32.partialorder %v173, 0.0
      %vm178 = vcmp.ge.f32.partialorder %v174, 0.0
      %vm179 = vcmp.ge.f32.partialorder %v175, 0.0
      %vm180 = vcmp.ge.f32.partialorder %v176, 0.0
      %v181 = vmul.f32 %v173, 0.2
      %v182 = vmul.f32 %v174, 0.2
      %v183 = vmul.f32 %v175, 0.2
      %v184 = vmul.f32 %v176, 0.2
      %v185 = vsel %vm177, %v173, %v181
      %v186 = vsel %vm178, %v174, %v182
      %v187 = vsel %vm179, %v175, %v183
      %v188 = vsel %vm180, %v176, %v184
      %v189 = vpack.c.bf16 %v187, %v185
      %v190 = vpack.c.bf16 %v188, %v186
      %v193 = vunpack.c.l.b16 %v189
      %v194 = vunpack.c.l.b16 %v190
      %v195 = vunpack.c.h.b16 %v189
      %v196 = vunpack.c.h.b16 %v190
      %v197 = vpack.c.b16 %v194, %v193
      %v198 = vpack.c.b16 %v196, %v195
      %201 = vst [vmem:[%s116] sm:$0xff] %v197
      %202 = vst [vmem:[%s116 + $0x8] sm:$0xff] %v198
      %p203 = scmp.lt.s32.totalorder %s12, 1
      %s204 = scalar_select %p203, %s12, 1
      %s205 = smul.addr %s204, 4
      %s206 = smul.addr %s205, 4
      %s207 = scalar_lea.vmem %s1, %s206
      // Predicated region
      $region25: #{discriminator_forward.12} parent=23 // pred_check
        %p208 = pneg %p56
      $region26: #{discriminator_forward.12} parent=23 // pred_check_branch
        %210 = sbr.rel (%p208) target = $region28
      $region27: #{discriminator_forward.12} parent=23 // pred_region
        _
      $region28: #{discriminator_forward.12} parent=23 // pred_fallthru
        _
    $region24: #{discriminator_forward.12} parent=5 // pred_fallthru
      _
    %p211 = scmp.le.s32.totalorder 2, %s7
    // Predicated region
    $region29: #{discriminator_forward.12} parent=5 // pred_check
      %p212 = pneg %p211
    $region30: #{discriminator_forward.12} parent=5 // pred_check_branch
      %214 = sbr.rel (%p212) target = $region32
    $region31: #{discriminator_forward.12} parent=5 // pred_region
      %s215 = ssub.s32 %s7, 2
      // Predicated region
      $region33: #{discriminator_forward.12} parent=31 // pred_check
        %p216 = pneg %p62
      $region34: #{discriminator_forward.12} parent=31 // pred_check_branch
        %218 = sbr.rel (%p216) target = $region36
      $region35: #{discriminator_forward.12} parent=31 // pred_region
        %p219 = scmp.lt.s32.totalorder %s13, 1
        %s220 = scalar_select %p219, %s13, 1
        %s221 = smul.addr %s220, 4
        %s222 = smul.addr %s221, 4
        %s223 = scalar_lea.vmem %s1, %s222
      $region36: #{discriminator_forward.12} parent=31 // pred_fallthru
        _
    $region32: #{discriminator_forward.12} parent=5 // pred_fallthru
      _
  $region6: #{discriminator_forward.12} parent=0 // loop_footer
    %s11 = sadd.s32 1, %s7
  $region7: #{discriminator_forward.12} parent=0 // loop_footer_branch
    %6 = sbr.rel target = $region3
  $region8: #{discriminator_forward.12} parent=0 // loop_exit
    _

// kernel: discriminator_forward.11
$region0: #{discriminator_forward.11}
  #allocation0 [shape = 'u32[]', space=smem, size = 0x4, offset = 0x4, fixed_abs, tag = 'smem constant byte address 0x4 - core index']
  #allocation1 [shape = 'u32[144,128]{1,0:T(1,128)}', space=vmem, size = 0x12000, scoped, tag = 'internal scratch']
  %s0 = inlined_call_operand.vmem [shape: bf16[32,2048], index: 0, kind: input, shape index: {}]
  %s1 = inlined_call_operand.vmem [shape: bf16[2048,256], index: 1, kind: input, shape index: {}]
  %s2 = inlined_call_operand.vmem [shape: f32[1,256], index: 2, kind: input, shape index: {}]
  %s3 = inlined_call_operand.vmem [shape: bf16[32,256], index: 3, kind: output, shape index: {}]
  %s4 = sld [smem:[#allocation0]]
  $region22: #{discriminator_forward.11} parent=0
    _
  %s6 = ssub.s32 1, %s4
  %s7 = scalar_select 0, %s6, %s4
  // Predicated region
  $region2: #{discriminator_forward.11} parent=0 // pred_check
    _
  $region3: #{discriminator_forward.11} parent=0 // pred_check_branch
    %9 = sbr.rel (0) target = $region5
  $region4: #{discriminator_forward.11} parent=0 // pred_region
    _
  $region5: #{discriminator_forward.11} parent=0 // pred_fallthru
    _
  // Predicated region
  $region6: #{discriminator_forward.11} parent=0 // pred_check
    _
  $region7: #{discriminator_forward.11} parent=0 // pred_check_branch
    %11 = sbr.rel (0) target = $region9
  $region8: #{discriminator_forward.11} parent=0 // pred_region
    _
  $region9: #{discriminator_forward.11} parent=0 // pred_fallthru
    _
  // Predicated region
  $region10: #{discriminator_forward.11} parent=0 // pred_check
    _
  $region11: #{discriminator_forward.11} parent=0 // pred_check_branch
    %13 = sbr.rel (0) target = $region13
  $region12: #{discriminator_forward.11} parent=0 // pred_region
    _
  $region13: #{discriminator_forward.11} parent=0 // pred_fallthru
    _
  %v14 = vld [vmem:[%s0] sm:$0xff]
  %v15 = vld [vmem:[%s0 + $0x8] sm:$0xff]
  %v16 = vld [vmem:[%s0 + $0x10] sm:$0xff]
  %v17 = vld [vmem:[%s0 + $0x18] sm:$0xff]
  %v18 = vld [vmem:[%s0 + $0x20] sm:$0xff]
  %v19 = vld [vmem:[%s0 + $0x28] sm:$0xff]
  %v20 = vld [vmem:[%s0 + $0x30] sm:$0xff]
  %v21 = vld [vmem:[%s0 + $0x38] sm:$0xff]
  %v22 = vld [vmem:[%s0 + $0x40] sm:$0xff]
  %v23 = vld [vmem:[%s0 + $0x48] sm:$0xff]
  %v24 = vld [vmem:[%s0 + $0x50] sm:$0xff]
  %v25 = vld [vmem:[%s0 + $0x58] sm:$0xff]
  %v26 = vld [vmem:[%s0 + $0x60] sm:$0xff]
  %v27 = vld [vmem:[%s0 + $0x68] sm:$0xff]
  %v28 = vld [vmem:[%s0 + $0x70] sm:$0xff]
  %v29 = vld [vmem:[%s0 + $0x78] sm:$0xff]
  %v30 = vld [vmem:[%s0 + $0x80] sm:$0xff]
  %v31 = vld [vmem:[%s0 + $0x88] sm:$0xff]
  %v32 = vld [vmem:[%s0 + $0x90] sm:$0xff]
  %v33 = vld [vmem:[%s0 + $0x98] sm:$0xff]
  %v34 = vld [vmem:[%s0 + $0xa0] sm:$0xff]
  %v35 = vld [vmem:[%s0 + $0xa8] sm:$0xff]
  %v36 = vld [vmem:[%s0 + $0xb0] sm:$0xff]
  %v37 = vld [vmem:[%s0 + $0xb8] sm:$0xff]
  %v38 = vld [vmem:[%s0 + $0xc0] sm:$0xff]
  %v39 = vld [vmem:[%s0 + $0xc8] sm:$0xff]
  %v40 = vld [vmem:[%s0 + $0xd0] sm:$0xff]
  %v41 = vld [vmem:[%s0 + $0xd8] sm:$0xff]
  %v42 = vld [vmem:[%s0 + $0xe0] sm:$0xff]
  %v43 = vld [vmem:[%s0 + $0xe8] sm:$0xff]
  %v44 = vld [vmem:[%s0 + $0xf0] sm:$0xff]
  %v45 = vld [vmem:[%s0 + $0xf8] sm:$0xff]
  %v46 = vld [vmem:[%s1] sm:$0xff]
  %v47 = vld [vmem:[%s1 + $0x8] sm:$0xff]
  %v48 = vld [vmem:[%s1 + $0x10] sm:$0xff]
  %v49 = vld [vmem:[%s1 + $0x18] sm:$0xff]
  %v50 = vld [vmem:[%s1 + $0x20] sm:$0xff]
  %v51 = vld [vmem:[%s1 + $0x28] sm:$0xff]
  %v52 = vld [vmem:[%s1 + $0x30] sm:$0xff]
  %v53 = vld [vmem:[%s1 + $0x38] sm:$0xff]
  %v54 = vld [vmem:[%s1 + $0x40] sm:$0xff]
  %v55 = vld [vmem:[%s1 + $0x48] sm:$0xff]
  %v56 = vld [vmem:[%s1 + $0x50] sm:$0xff]
  %v57 = vld [vmem:[%s1 + $0x58] sm:$0xff]
  %v58 = vld [vmem:[%s1 + $0x60] sm:$0xff]
  %v59 = vld [vmem:[%s1 + $0x68] sm:$0xff]
  %v60 = vld [vmem:[%s1 + $0x70] sm:$0xff]
  %v61 = vld [vmem:[%s1 + $0x78] sm:$0xff]
  %v62 = vld [vmem:[%s1 + $0x80] sm:$0xff]
  %v63 = vld [vmem:[%s1 + $0x88] sm:$0xff]
  %v64 = vld [vmem:[%s1 + $0x90] sm:$0xff]
  %v65 = vld [vmem:[%s1 + $0x98] sm:$0xff]
  %v66 = vld [vmem:[%s1 + $0xa0] sm:$0xff]
  %v67 = vld [vmem:[%s1 + $0xa8] sm:$0xff]
  %v68 = vld [vmem:[%s1 + $0xb0] sm:$0xff]
  %v69 = vld [vmem:[%s1 + $0xb8] sm:$0xff]
  %v70 = vld [vmem:[%s1 + $0xc0] sm:$0xff]
  %v71 = vld [vmem:[%s1 + $0xc8] sm:$0xff]
  %v72 = vld [vmem:[%s1 + $0xd0] sm:$0xff]
  %v73 = vld [vmem:[%s1 + $0xd8] sm:$0xff]
  %v74 = vld [vmem:[%s1 + $0xe0] sm:$0xff]
  %v75 = vld [vmem:[%s1 + $0xe8] sm:$0xff]
  %v76 = vld [vmem:[%s1 + $0xf0] sm:$0xff]
  %v77 = vld [vmem:[%s1 + $0xf8] sm:$0xff]
  %v78 = vld [vmem:[%s1 + $0x100] sm:$0xff]
  %v79 = vld [vmem:[%s1 + $0x108] sm:$0xff]
  %v80 = vld [vmem:[%s1 + $0x110] sm:$0xff]
  %v81 = vld [vmem:[%s1 + $0x118] sm:$0xff]
  %v82 = vld [vmem:[%s1 + $0x120] sm:$0xff]
  %v83 = vld [vmem:[%s1 + $0x128] sm:$0xff]
  %v84 = vld [vmem:[%s1 + $0x130] sm:$0xff]
  %v85 = vld [vmem:[%s1 + $0x138] sm:$0xff]
  %v86 = vld [vmem:[%s1 + $0x140] sm:$0xff]
  %v87 = vld [vmem:[%s1 + $0x148] sm:$0xff]
  %v88 = vld [vmem:[%s1 + $0x150] sm:$0xff]
  %v89 = vld [vmem:[%s1 + $0x158] sm:$0xff]
  %v90 = vld [vmem:[%s1 + $0x160] sm:$0xff]
  %v91 = vld [vmem:[%s1 + $0x168] sm:$0xff]
  %v92 = vld [vmem:[%s1 + $0x170] sm:$0xff]
  %v93 = vld [vmem:[%s1 + $0x178] sm:$0xff]
  %v94 = vld [vmem:[%s1 + $0x180] sm:$0xff]
  %v95 = vld [vmem:[%s1 + $0x188] sm:$0xff]
  %v96 = vld [vmem:[%s1 + $0x190] sm:$0xff]
  %v97 = vld [vmem:[%s1 + $0x198] sm:$0xff]
  %v98 = vld [vmem:[%s1 + $0x1a0] sm:$0xff]
  %v99 = vld [vmem:[%s1 + $0x1a8] sm:$0xff]
  %v100 = vld [vmem:[%s1 + $0x1b0] sm:$0xff]
  %v101 = vld [vmem:[%s1 + $0x1b8] sm:$0xff]
  %v102 = vld [vmem:[%s1 + $0x1c0] sm:$0xff]
  %v103 = vld [vmem:[%s1 + $0x1c8] sm:$0xff]
  %v104 = vld [vmem:[%s1 + $0x1d0] sm:$0xff]
  %v105 = vld [vmem:[%s1 + $0x1d8] sm:$0xff]
  %v106 = vld [vmem:[%s1 + $0x1e0] sm:$0xff]
  %v107 = vld [vmem:[%s1 + $0x1e8] sm:$0xff]
  %v108 = vld [vmem:[%s1 + $0x1f0] sm:$0xff]
  %v109 = vld [vmem:[%s1 + $0x1f8] sm:$0xff]
  %v110 = vld [vmem:[%s1 + $0x200] sm:$0xff]
  %v111 = vld [vmem:[%s1 + $0x208] sm:$0xff]
  %v112 = vld [vmem:[%s1 + $0x210] sm:$0xff]
  %v113 = vld [vmem:[%s1 + $0x218] sm:$0xff]
  %v114 = vld [vmem:[%s1 + $0x220] sm:$0xff]
  %v115 = vld [vmem:[%s1 + $0x228] sm:$0xff]
  %v116 = vld [vmem:[%s1 + $0x230] sm:$0xff]
  %v117 = vld [vmem:[%s1 + $0x238] sm:$0xff]
  %v118 = vld [vmem:[%s1 + $0x240] sm:$0xff]
  %v119 = vld [vmem:[%s1 + $0x248] sm:$0xff]
  %v120 = vld [vmem:[%s1 + $0x250] sm:$0xff]
  %v121 = vld [vmem:[%s1 + $0x258] sm:$0xff]
  %v122 = vld [vmem:[%s1 + $0x260] sm:$0xff]
  %v123 = vld [vmem:[%s1 + $0x268] sm:$0xff]
  %v124 = vld [vmem:[%s1 + $0x270] sm:$0xff]
  %v125 = vld [vmem:[%s1 + $0x278] sm:$0xff]
  %v126 = vld [vmem:[%s1 + $0x280] sm:$0xff]
  %v127 = vld [vmem:[%s1 + $0x288] sm:$0xff]
  %v128 = vld [vmem:[%s1 + $0x290] sm:$0xff]
  %v129 = vld [vmem:[%s1 + $0x298] sm:$0xff]
  %v130 = vld [vmem:[%s1 + $0x2a0] sm:$0xff]
  %v131 = vld [vmem:[%s1 + $0x2a8] sm:$0xff]
  %v132 = vld [vmem:[%s1 + $0x2b0] sm:$0xff]
  %v133 = vld [vmem:[%s1 + $0x2b8] sm:$0xff]
  %v134 = vld [vmem:[%s1 + $0x2c0] sm:$0xff]
  %v135 = vld [vmem:[%s1 + $0x2c8] sm:$0xff]
  %v136 = vld [vmem:[%s1 + $0x2d0] sm:$0xff]
  %v137 = vld [vmem:[%s1 + $0x2d8] sm:$0xff]
  %v138 = vld [vmem:[%s1 + $0x2e0] sm:$0xff]
  %v139 = vld [vmem:[%s1 + $0x2e8] sm:$0xff]
  %v140 = vld [vmem:[%s1 + $0x2f0] sm:$0xff]
  %v141 = vld [vmem:[%s1 + $0x2f8] sm:$0xff]
  %v142 = vld [vmem:[%s1 + $0x300] sm:$0xff]
  %v143 = vld [vmem:[%s1 + $0x308] sm:$0xff]
  %v144 = vld [vmem:[%s1 + $0x310] sm:$0xff]
  %v145 = vld [vmem:[%s1 + $0x318] sm:$0xff]
  %v146 = vld [vmem:[%s1 + $0x320] sm:$0xff]
  %v147 = vld [vmem:[%s1 + $0x328] sm:$0xff]
  %v148 = vld [vmem:[%s1 + $0x330] sm:$0xff]
  %v149 = vld [vmem:[%s1 + $0x338] sm:$0xff]
  %v150 = vld [vmem:[%s1 + $0x340] sm:$0xff]
  %v151 = vld [vmem:[%s1 + $0x348] sm:$0xff]
  %v152 = vld [vmem:[%s1 + $0x350] sm:$0xff]
  %v153 = vld [vmem:[%s1 + $0x358] sm:$0xff]
  %v154 = vld [vmem:[%s1 + $0x360] sm:$0xff]
  %v155 = vld [vmem:[%s1 + $0x368] sm:$0xff]
  %v156 = vld [vmem:[%s1 + $0x370] sm:$0xff]
  %v157 = vld [vmem:[%s1 + $0x378] sm:$0xff]
  %v158 = vld [vmem:[%s1 + $0x380] sm:$0xff]
  %v159 = vld [vmem:[%s1 + $0x388] sm:$0xff]
  %v160 = vld [vmem:[%s1 + $0x390] sm:$0xff]
  %v161 = vld [vmem:[%s1 + $0x398] sm:$0xff]
  %v162 = vld [vmem:[%s1 + $0x3a0] sm:$0xff]
  %v163 = vld [vmem:[%s1 + $0x3a8] sm:$0xff]
  %v164 = vld [vmem:[%s1 + $0x3b0] sm:$0xff]
  %v165 = vld [vmem:[%s1 + $0x3b8] sm:$0xff]
  %v166 = vld [vmem:[%s1 + $0x3c0] sm:$0xff]
  %v167 = vld [vmem:[%s1 + $0x3c8] sm:$0xff]
  %v168 = vld [vmem:[%s1 + $0x3d0] sm:$0xff]
  %v169 = vld [vmem:[%s1 + $0x3d8] sm:$0xff]
  %v170 = vld [vmem:[%s1 + $0x3e0] sm:$0xff]
  %v171 = vld [vmem:[%s1 + $0x3e8] sm:$0xff]
  %v172 = vld [vmem:[%s1 + $0x3f0] sm:$0xff]
  %v173 = vld [vmem:[%s1 + $0x3f8] sm:$0xff]
  %v174 = vld [vmem:[%s1 + $0x400] sm:$0xff]
  %v175 = vld [vmem:[%s1 + $0x408] sm:$0xff]
  %v176 = vld [vmem:[%s1 + $0x410] sm:$0xff]
  %v177 = vld [vmem:[%s1 + $0x418] sm:$0xff]
  %v178 = vld [vmem:[%s1 + $0x420] sm:$0xff]
  %v179 = vld [vmem:[%s1 + $0x428] sm:$0xff]
  %v180 = vld [vmem:[%s1 + $0x430] sm:$0xff]
  %v181 = vld [vmem:[%s1 + $0x438] sm:$0xff]
  %v182 = vld [vmem:[%s1 + $0x440] sm:$0xff]
  %v183 = vld [vmem:[%s1 + $0x448] sm:$0xff]
  %v184 = vld [vmem:[%s1 + $0x450] sm:$0xff]
  %v185 = vld [vmem:[%s1 + $0x458] sm:$0xff]
  %v186 = vld [vmem:[%s1 + $0x460] sm:$0xff]
  %v187 = vld [vmem:[%s1 + $0x468] sm:$0xff]
  %v188 = vld [vmem:[%s1 + $0x470] sm:$0xff]
  %v189 = vld [vmem:[%s1 + $0x478] sm:$0xff]
  %v190 = vld [vmem:[%s1 + $0x480] sm:$0xff]
  %v191 = vld [vmem:[%s1 + $0x488] sm:$0xff]
  %v192 = vld [vmem:[%s1 + $0x490] sm:$0xff]
  %v193 = vld [vmem:[%s1 + $0x498] sm:$0xff]
  %v194 = vld [vmem:[%s1 + $0x4a0] sm:$0xff]
  %v195 = vld [vmem:[%s1 + $0x4a8] sm:$0xff]
  %v196 = vld [vmem:[%s1 + $0x4b0] sm:$0xff]
  %v197 = vld [vmem:[%s1 + $0x4b8] sm:$0xff]
  %v198 = vld [vmem:[%s1 + $0x4c0] sm:$0xff]
  %v199 = vld [vmem:[%s1 + $0x4c8] sm:$0xff]
  %v200 = vld [vmem:[%s1 + $0x4d0] sm:$0xff]
  %v201 = vld [vmem:[%s1 + $0x4d8] sm:$0xff]
  %v202 = vld [vmem:[%s1 + $0x4e0] sm:$0xff]
  %v203 = vld [vmem:[%s1 + $0x4e8] sm:$0xff]
  %v204 = vld [vmem:[%s1 + $0x4f0] sm:$0xff]
  %v205 = vld [vmem:[%s1 + $0x4f8] sm:$0xff]
  %v206 = vld [vmem:[%s1 + $0x500] sm:$0xff]
  %v207 = vld [vmem:[%s1 + $0x508] sm:$0xff]
  %v208 = vld [vmem:[%s1 + $0x510] sm:$0xff]
  %v209 = vld [vmem:[%s1 + $0x518] sm:$0xff]
  %v210 = vld [vmem:[%s1 + $0x520] sm:$0xff]
  %v211 = vld [vmem:[%s1 + $0x528] sm:$0xff]
  %v212 = vld [vmem:[%s1 + $0x530] sm:$0xff]
  %v213 = vld [vmem:[%s1 + $0x538] sm:$0xff]
  %v214 = vld [vmem:[%s1 + $0x540] sm:$0xff]
  %v215 = vld [vmem:[%s1 + $0x548] sm:$0xff]
  %v216 = vld [vmem:[%s1 + $0x550] sm:$0xff]
  %v217 = vld [vmem:[%s1 + $0x558] sm:$0xff]
  %v218 = vld [vmem:[%s1 + $0x560] sm:$0xff]
  %v219 = vld [vmem:[%s1 + $0x568] sm:$0xff]
  %v220 = vld [vmem:[%s1 + $0x570] sm:$0xff]
  %v221 = vld [vmem:[%s1 + $0x578] sm:$0xff]
  %v222 = vld [vmem:[%s1 + $0x580] sm:$0xff]
  %v223 = vld [vmem:[%s1 + $0x588] sm:$0xff]
  %v224 = vld [vmem:[%s1 + $0x590] sm:$0xff]
  %v225 = vld [vmem:[%s1 + $0x598] sm:$0xff]
  %v226 = vld [vmem:[%s1 + $0x5a0] sm:$0xff]
  %v227 = vld [vmem:[%s1 + $0x5a8] sm:$0xff]
  %v228 = vld [vmem:[%s1 + $0x5b0] sm:$0xff]
  %v229 = vld [vmem:[%s1 + $0x5b8] sm:$0xff]
  %v230 = vld [vmem:[%s1 + $0x5c0] sm:$0xff]
  %v231 = vld [vmem:[%s1 + $0x5c8] sm:$0xff]
  %v232 = vld [vmem:[%s1 + $0x5d0] sm:$0xff]
  %v233 = vld [vmem:[%s1 + $0x5d8] sm:$0xff]
  %v234 = vld [vmem:[%s1 + $0x5e0] sm:$0xff]
  %v235 = vld [vmem:[%s1 + $0x5e8] sm:$0xff]
  %v236 = vld [vmem:[%s1 + $0x5f0] sm:$0xff]
  %v237 = vld [vmem:[%s1 + $0x5f8] sm:$0xff]
  %v238 = vld [vmem:[%s1 + $0x600] sm:$0xff]
  %v239 = vld [vmem:[%s1 + $0x608] sm:$0xff]
  %v240 = vld [vmem:[%s1 + $0x610] sm:$0xff]
  %v241 = vld [vmem:[%s1 + $0x618] sm:$0xff]
  %v242 = vld [vmem:[%s1 + $0x620] sm:$0xff]
  %v243 = vld [vmem:[%s1 + $0x628] sm:$0xff]
  %v244 = vld [vmem:[%s1 + $0x630] sm:$0xff]
  %v245 = vld [vmem:[%s1 + $0x638] sm:$0xff]
  %v246 = vld [vmem:[%s1 + $0x640] sm:$0xff]
  %v247 = vld [vmem:[%s1 + $0x648] sm:$0xff]
  %v248 = vld [vmem:[%s1 + $0x650] sm:$0xff]
  %v249 = vld [vmem:[%s1 + $0x658] sm:$0xff]
  %v250 = vld [vmem:[%s1 + $0x660] sm:$0xff]
  %v251 = vld [vmem:[%s1 + $0x668] sm:$0xff]
  %v252 = vld [vmem:[%s1 + $0x670] sm:$0xff]
  %v253 = vld [vmem:[%s1 + $0x678] sm:$0xff]
  %v254 = vld [vmem:[%s1 + $0x680] sm:$0xff]
  %v255 = vld [vmem:[%s1 + $0x688] sm:$0xff]
  %v256 = vld [vmem:[%s1 + $0x690] sm:$0xff]
  %v257 = vld [vmem:[%s1 + $0x698] sm:$0xff]
  %v258 = vld [vmem:[%s1 + $0x6a0] sm:$0xff]
  %v259 = vld [vmem:[%s1 + $0x6a8] sm:$0xff]
  %v260 = vld [vmem:[%s1 + $0x6b0] sm:$0xff]
  %v261 = vld [vmem:[%s1 + $0x6b8] sm:$0xff]
  %v262 = vld [vmem:[%s1 + $0x6c0] sm:$0xff]
  %v263 = vld [vmem:[%s1 + $0x6c8] sm:$0xff]
  %v264 = vld [vmem:[%s1 + $0x6d0] sm:$0xff]
  %v265 = vld [vmem:[%s1 + $0x6d8] sm:$0xff]
  %v266 = vld [vmem:[%s1 + $0x6e0] sm:$0xff]
  %v267 = vld [vmem:[%s1 + $0x6e8] sm:$0xff]
  %v268 = vld [vmem:[%s1 + $0x6f0] sm:$0xff]
  %v269 = vld [vmem:[%s1 + $0x6f8] sm:$0xff]
  %v270 = vld [vmem:[%s1 + $0x700] sm:$0xff]
  %v271 = vld [vmem:[%s1 + $0x708] sm:$0xff]
  %v272 = vld [vmem:[%s1 + $0x710] sm:$0xff]
  %v273 = vld [vmem:[%s1 + $0x718] sm:$0xff]
  %v274 = vld [vmem:[%s1 + $0x720] sm:$0xff]
  %v275 = vld [vmem:[%s1 + $0x728] sm:$0xff]
  %v276 = vld [vmem:[%s1 + $0x730] sm:$0xff]
  %v277 = vld [vmem:[%s1 + $0x738] sm:$0xff]
  %v278 = vld [vmem:[%s1 + $0x740] sm:$0xff]
  %v279 = vld [vmem:[%s1 + $0x748] sm:$0xff]
  %v280 = vld [vmem:[%s1 + $0x750] sm:$0xff]
  %v281 = vld [vmem:[%s1 + $0x758] sm:$0xff]
  %v282 = vld [vmem:[%s1 + $0x760] sm:$0xff]
  %v283 = vld [vmem:[%s1 + $0x768] sm:$0xff]
  %v284 = vld [vmem:[%s1 + $0x770] sm:$0xff]
  %v285 = vld [vmem:[%s1 + $0x778] sm:$0xff]
  %v286 = vld [vmem:[%s1 + $0x780] sm:$0xff]
  %v287 = vld [vmem:[%s1 + $0x788] sm:$0xff]
  %v288 = vld [vmem:[%s1 + $0x790] sm:$0xff]
  %v289 = vld [vmem:[%s1 + $0x798] sm:$0xff]
  %v290 = vld [vmem:[%s1 + $0x7a0] sm:$0xff]
  %v291 = vld [vmem:[%s1 + $0x7a8] sm:$0xff]
  %v292 = vld [vmem:[%s1 + $0x7b0] sm:$0xff]
  %v293 = vld [vmem:[%s1 + $0x7b8] sm:$0xff]
  %v294 = vld [vmem:[%s1 + $0x7c0] sm:$0xff]
  %v295 = vld [vmem:[%s1 + $0x7c8] sm:$0xff]
  %v296 = vld [vmem:[%s1 + $0x7d0] sm:$0xff]
  %v297 = vld [vmem:[%s1 + $0x7d8] sm:$0xff]
  %v298 = vld [vmem:[%s1 + $0x7e0] sm:$0xff]
  %v299 = vld [vmem:[%s1 + $0x7e8] sm:$0xff]
  %v300 = vld [vmem:[%s1 + $0x7f0] sm:$0xff]
  %v301 = vld [vmem:[%s1 + $0x7f8] sm:$0xff]
  %v302 = vld [vmem:[%s2] sm:$0x3]
  %v304 = vlaneseq
  %v305 = vshrl.u32 %v304, 7
  %v306 = vsub.s32 0, %v305
  %v307 = vrot.slane %v302, %v306
  %v308 = vlaneseq
  %v309 = vshrl.u32 %v308, 7
  %v310 = vsub.s32 1, %v309
  %v311 = vrot.slane %v302, %v310
  %v346 = vunpack.c.l.b16 %v14
  %v347 = vunpack.c.h.b16 %v14
  %v348 = vunpack.c.l.b16 %v15
  %v349 = vunpack.c.h.b16 %v15
  %v350 = vunpack.c.l.b16 %v16
  %v351 = vunpack.c.h.b16 %v16
  %v352 = vunpack.c.l.b16 %v17
  %v353 = vunpack.c.h.b16 %v17
  %v354 = vunpack.c.l.b16 %v18
  %v355 = vunpack.c.h.b16 %v18
  %v356 = vunpack.c.l.b16 %v19
  %v357 = vunpack.c.h.b16 %v19
  %v358 = vunpack.c.l.b16 %v20
  %v359 = vunpack.c.h.b16 %v20
  %v360 = vunpack.c.l.b16 %v21
  %v361 = vunpack.c.h.b16 %v21
  %v362 = vunpack.c.l.b16 %v22
  %v363 = vunpack.c.h.b16 %v22
  %v364 = vunpack.c.l.b16 %v23
  %v365 = vunpack.c.h.b16 %v23
  %v366 = vunpack.c.l.b16 %v24
  %v367 = vunpack.c.h.b16 %v24
  %v368 = vunpack.c.l.b16 %v25
  %v369 = vunpack.c.h.b16 %v25
  %v370 = vunpack.c.l.b16 %v26
  %v371 = vunpack.c.h.b16 %v26
  %v372 = vunpack.c.l.b16 %v27
  %v373 = vunpack.c.h.b16 %v27
  %v374 = vunpack.c.l.b16 %v28
  %v375 = vunpack.c.h.b16 %v28
  %v376 = vunpack.c.l.b16 %v29
  %v377 = vunpack.c.h.b16 %v29
  %v378 = vunpack.c.l.b16 %v30
  %v379 = vunpack.c.h.b16 %v30
  %v380 = vunpack.c.l.b16 %v31
  %v381 = vunpack.c.h.b16 %v31
  %v382 = vunpack.c.l.b16 %v32
  %v383 = vunpack.c.h.b16 %v32
  %v384 = vunpack.c.l.b16 %v33
  %v385 = vunpack.c.h.b16 %v33
  %v386 = vunpack.c.l.b16 %v34
  %v387 = vunpack.c.h.b16 %v34
  %v388 = vunpack.c.l.b16 %v35
  %v389 = vunpack.c.h.b16 %v35
  %v390 = vunpack.c.l.b16 %v36
  %v391 = vunpack.c.h.b16 %v36
  %v392 = vunpack.c.l.b16 %v37
  %v393 = vunpack.c.h.b16 %v37
  %v394 = vunpack.c.l.b16 %v38
  %v395 = vunpack.c.h.b16 %v38
  %v396 = vunpack.c.l.b16 %v39
  %v397 = vunpack.c.h.b16 %v39
  %v398 = vunpack.c.l.b16 %v40
  %v399 = vunpack.c.h.b16 %v40
  %v400 = vunpack.c.l.b16 %v41
  %v401 = vunpack.c.h.b16 %v41
  %v402 = vunpack.c.l.b16 %v42
  %v403 = vunpack.c.h.b16 %v42
  %v404 = vunpack.c.l.b16 %v43
  %v405 = vunpack.c.h.b16 %v43
  %v406 = vunpack.c.l.b16 %v44
  %v407 = vunpack.c.h.b16 %v44
  %v408 = vunpack.c.l.b16 %v45
  %v409 = vunpack.c.h.b16 %v45
  %v410 = vpack.c.b16 %v362, %v346
  %v411 = vpack.c.b16 %v363, %v347
  %v412 = vpack.c.b16 %v364, %v348
  %v413 = vpack.c.b16 %v365, %v349
  %v414 = vpack.c.b16 %v366, %v350
  %v415 = vpack.c.b16 %v367, %v351
  %v416 = vpack.c.b16 %v368, %v352
  %v417 = vpack.c.b16 %v369, %v353
  %v418 = vpack.c.b16 %v370, %v354
  %v419 = vpack.c.b16 %v371, %v355
  %v420 = vpack.c.b16 %v372, %v356
  %v421 = vpack.c.b16 %v373, %v357
  %v422 = vpack.c.b16 %v374, %v358
  %v423 = vpack.c.b16 %v375, %v359
  %v424 = vpack.c.b16 %v376, %v360
  %v425 = vpack.c.b16 %v377, %v361
  %v426 = vpack.c.b16 %v394, %v378
  %v427 = vpack.c.b16 %v395, %v379
  %v428 = vpack.c.b16 %v396, %v380
  %v429 = vpack.c.b16 %v397, %v381
  %v430 = vpack.c.b16 %v398, %v382
  %v431 = vpack.c.b16 %v399, %v383
  %v432 = vpack.c.b16 %v400, %v384
  %v433 = vpack.c.b16 %v401, %v385
  %v434 = vpack.c.b16 %v402, %v386
  %v435 = vpack.c.b16 %v403, %v387
  %v436 = vpack.c.b16 %v404, %v388
  %v437 = vpack.c.b16 %v405, %v389
  %v438 = vpack.c.b16 %v406, %v390
  %v439 = vpack.c.b16 %v407, %v391
  %v440 = vpack.c.b16 %v408, %v392
  %v441 = vpack.c.b16 %v409, %v393
  %v730 = vunpack.c.l.b16 %v46
  %v731 = vunpack.c.h.b16 %v46
  %v732 = vunpack.c.l.b16 %v47
  %v733 = vunpack.c.h.b16 %v47
  %v734 = vunpack.c.l.b16 %v48
  %v735 = vunpack.c.h.b16 %v48
  %v736 = vunpack.c.l.b16 %v49
  %v737 = vunpack.c.h.b16 %v49
  %v738 = vunpack.c.l.b16 %v50
  %v739 = vunpack.c.h.b16 %v50
  %v740 = vunpack.c.l.b16 %v51
  %v741 = vunpack.c.h.b16 %v51
  %v742 = vunpack.c.l.b16 %v52
  %v743 = vunpack.c.h.b16 %v52
  %v744 = vunpack.c.l.b16 %v53
  %v745 = vunpack.c.h.b16 %v53
  %v746 = vunpack.c.l.b16 %v54
  %v747 = vunpack.c.h.b16 %v54
  %v748 = vunpack.c.l.b16 %v55
  %v749 = vunpack.c.h.b16 %v55
  %v750 = vunpack.c.l.b16 %v56
  %v751 = vunpack.c.h.b16 %v56
  %v752 = vunpack.c.l.b16 %v57
  %v753 = vunpack.c.h.b16 %v57
  %v754 = vunpack.c.l.b16 %v58
  %v755 = vunpack.c.h.b16 %v58
  %v756 = vunpack.c.l.b16 %v59
  %v757 = vunpack.c.h.b16 %v59
  %v758 = vunpack.c.l.b16 %v60
  %v759 = vunpack.c.h.b16 %v60
  %v760 = vunpack.c.l.b16 %v61
  %v761 = vunpack.c.h.b16 %v61
  %v762 = vunpack.c.l.b16 %v62
  %v763 = vunpack.c.h.b16 %v62
  %v764 = vunpack.c.l.b16 %v63
  %v765 = vunpack.c.h.b16 %v63
  %v766 = vunpack.c.l.b16 %v64
  %v767 = vunpack.c.h.b16 %v64
  %v768 = vunpack.c.l.b16 %v65
  %v769 = vunpack.c.h.b16 %v65
  %v770 = vunpack.c.l.b16 %v66
  %v771 = vunpack.c.h.b16 %v66
  %v772 = vunpack.c.l.b16 %v67
  %v773 = vunpack.c.h.b16 %v67
  %v774 = vunpack.c.l.b16 %v68
  %v775 = vunpack.c.h.b16 %v68
  %v776 = vunpack.c.l.b16 %v69
  %v777 = vunpack.c.h.b16 %v69
  %v778 = vunpack.c.l.b16 %v70
  %v779 = vunpack.c.h.b16 %v70
  %v780 = vunpack.c.l.b16 %v71
  %v781 = vunpack.c.h.b16 %v71
  %v782 = vunpack.c.l.b16 %v72
  %v783 = vunpack.c.h.b16 %v72
  %v784 = vunpack.c.l.b16 %v73
  %v785 = vunpack.c.h.b16 %v73
  %v786 = vunpack.c.l.b16 %v74
  %v787 = vunpack.c.h.b16 %v74
  %v788 = vunpack.c.l.b16 %v75
  %v789 = vunpack.c.h.b16 %v75
  %v790 = vunpack.c.l.b16 %v76
  %v791 = vunpack.c.h.b16 %v76
  %v792 = vunpack.c.l.b16 %v77
  %v793 = vunpack.c.h.b16 %v77
  %v794 = vunpack.c.l.b16 %v78
  %v795 = vunpack.c.h.b16 %v78
  %v796 = vunpack.c.l.b16 %v79
  %v797 = vunpack.c.h.b16 %v79
  %v798 = vunpack.c.l.b16 %v80
  %v799 = vunpack.c.h.b16 %v80
  %v800 = vunpack.c.l.b16 %v81
  %v801 = vunpack.c.h.b16 %v81
  %v802 = vunpack.c.l.b16 %v82
  %v803 = vunpack.c.h.b16 %v82
  %v804 = vunpack.c.l.b16 %v83
  %v805 = vunpack.c.h.b16 %v83
  %v806 = vunpack.c.l.b16 %v84
  %v807 = vunpack.c.h.b16 %v84
  %v808 = vunpack.c.l.b16 %v85
  %v809 = vunpack.c.h.b16 %v85
  %v810 = vunpack.c.l.b16 %v86
  %v811 = vunpack.c.h.b16 %v86
  %v812 = vunpack.c.l.b16 %v87
  %v813 = vunpack.c.h.b16 %v87
  %v814 = vunpack.c.l.b16 %v88
  %v815 = vunpack.c.h.b16 %v88
  %v816 = vunpack.c.l.b16 %v89
  %v817 = vunpack.c.h.b16 %v89
  %v818 = vunpack.c.l.b16 %v90
  %v819 = vunpack.c.h.b16 %v90
  %v820 = vunpack.c.l.b16 %v91
  %v821 = vunpack.c.h.b16 %v91
  %v822 = vunpack.c.l.b16 %v92
  %v823 = vunpack.c.h.b16 %v92
  %v824 = vunpack.c.l.b16 %v93
  %v825 = vunpack.c.h.b16 %v93
  %v826 = vunpack.c.l.b16 %v94
  %v827 = vunpack.c.h.b16 %v94
  %v828 = vunpack.c.l.b16 %v95
  %v829 = vunpack.c.h.b16 %v95
  %v830 = vunpack.c.l.b16 %v96
  %v831 = vunpack.c.h.b16 %v96
  %v832 = vunpack.c.l.b16 %v97
  %v833 = vunpack.c.h.b16 %v97
  %v834 = vunpack.c.l.b16 %v98
  %v835 = vunpack.c.h.b16 %v98
  %v836 = vunpack.c.l.b16 %v99
  %v837 = vunpack.c.h.b16 %v99
  %v838 = vunpack.c.l.b16 %v100
  %v839 = vunpack.c.h.b16 %v100
  %v840 = vunpack.c.l.b16 %v101
  %v841 = vunpack.c.h.b16 %v101
  %v842 = vunpack.c.l.b16 %v102
  %v843 = vunpack.c.h.b16 %v102
  %v844 = vunpack.c.l.b16 %v103
  %v845 = vunpack.c.h.b16 %v103
  %v846 = vunpack.c.l.b16 %v104
  %v847 = vunpack.c.h.b16 %v104
  %v848 = vunpack.c.l.b16 %v105
  %v849 = vunpack.c.h.b16 %v105
  %v850 = vunpack.c.l.b16 %v106
  %v851 = vunpack.c.h.b16 %v106
  %v852 = vunpack.c.l.b16 %v107
  %v853 = vunpack.c.h.b16 %v107
  %v854 = vunpack.c.l.b16 %v108
  %v855 = vunpack.c.h.b16 %v108
  %v856 = vunpack.c.l.b16 %v109
  %v857 = vunpack.c.h.b16 %v109
  %v858 = vunpack.c.l.b16 %v110
  %v859 = vunpack.c.h.b16 %v110
  %v860 = vunpack.c.l.b16 %v111
  %v861 = vunpack.c.h.b16 %v111
  %v862 = vunpack.c.l.b16 %v112
  %v863 = vunpack.c.h.b16 %v112
  %v864 = vunpack.c.l.b16 %v113
  %v865 = vunpack.c.h.b16 %v113
  %v866 = vunpack.c.l.b16 %v114
  %v867 = vunpack.c.h.b16 %v114
  %v868 = vunpack.c.l.b16 %v115
  %v869 = vunpack.c.h.b16 %v115
  %v870 = vunpack.c.l.b16 %v116
  %v871 = vunpack.c.h.b16 %v116
  %v872 = vunpack.c.l.b16 %v117
  %v873 = vunpack.c.h.b16 %v117
  %v874 = vunpack.c.l.b16 %v118
  %v875 = vunpack.c.h.b16 %v118
  %v876 = vunpack.c.l.b16 %v119
  %v877 = vunpack.c.h.b16 %v119
  %v878 = vunpack.c.l.b16 %v120
  %v879 = vunpack.c.h.b16 %v120
  %v880 = vunpack.c.l.b16 %v121
  %v881 = vunpack.c.h.b16 %v121
  %v882 = vunpack.c.l.b16 %v122
  %v883 = vunpack.c.h.b16 %v122
  %v884 = vunpack.c.l.b16 %v123
  %v885 = vunpack.c.h.b16 %v123
  %v886 = vunpack.c.l.b16 %v124
  %v887 = vunpack.c.h.b16 %v124
  %v888 = vunpack.c.l.b16 %v125
  %v889 = vunpack.c.h.b16 %v125
  %v890 = vunpack.c.l.b16 %v126
  %v891 = vunpack.c.h.b16 %v126
  %v892 = vunpack.c.l.b16 %v127
  %v893 = vunpack.c.h.b16 %v127
  %v894 = vunpack.c.l.b16 %v128
  %v895 = vunpack.c.h.b16 %v128
  %v896 = vunpack.c.l.b16 %v129
  %v897 = vunpack.c.h.b16 %v129
  %v898 = vunpack.c.l.b16 %v130
  %v899 = vunpack.c.h.b16 %v130
  %v900 = vunpack.c.l.b16 %v131
  %v901 = vunpack.c.h.b16 %v131
  %v902 = vunpack.c.l.b16 %v132
  %v903 = vunpack.c.h.b16 %v132
  %v904 = vunpack.c.l.b16 %v133
  %v905 = vunpack.c.h.b16 %v133
  %v906 = vunpack.c.l.b16 %v134
  %v907 = vunpack.c.h.b16 %v134
  %v908 = vunpack.c.l.b16 %v135
  %v909 = vunpack.c.h.b16 %v135
  %v910 = vunpack.c.l.b16 %v136
  %v911 = vunpack.c.h.b16 %v136
  %v912 = vunpack.c.l.b16 %v137
  %v913 = vunpack.c.h.b16 %v137
  %v914 = vunpack.c.l.b16 %v138
  %v915 = vunpack.c.h.b16 %v138
  %v916 = vunpack.c.l.b16 %v139
  %v917 = vunpack.c.h.b16 %v139
  %v918 = vunpack.c.l.b16 %v140
  %v919 = vunpack.c.h.b16 %v140
  %v920 = vunpack.c.l.b16 %v141
  %v921 = vunpack.c.h.b16 %v141
  %v922 = vunpack.c.l.b16 %v142
  %v923 = vunpack.c.h.b16 %v142
  %v924 = vunpack.c.l.b16 %v143
  %v925 = vunpack.c.h.b16 %v143
  %v926 = vunpack.c.l.b16 %v144
  %v927 = vunpack.c.h.b16 %v144
  %v928 = vunpack.c.l.b16 %v145
  %v929 = vunpack.c.h.b16 %v145
  %v930 = vunpack.c.l.b16 %v146
  %v931 = vunpack.c.h.b16 %v146
  %v932 = vunpack.c.l.b16 %v147
  %v933 = vunpack.c.h.b16 %v147
  %v934 = vunpack.c.l.b16 %v148
  %v935 = vunpack.c.h.b16 %v148
  %v936 = vunpack.c.l.b16 %v149
  %v937 = vunpack.c.h.b16 %v149
  %v938 = vunpack.c.l.b16 %v150
  %v939 = vunpack.c.h.b16 %v150
  %v940 = vunpack.c.l.b16 %v151
  %v941 = vunpack.c.h.b16 %v151
  %v942 = vunpack.c.l.b16 %v152
  %v943 = vunpack.c.h.b16 %v152
  %v944 = vunpack.c.l.b16 %v153
  %v945 = vunpack.c.h.b16 %v153
  %v946 = vunpack.c.l.b16 %v154
  %v947 = vunpack.c.h.b16 %v154
  %v948 = vunpack.c.l.b16 %v155
  %v949 = vunpack.c.h.b16 %v155
  %v950 = vunpack.c.l.b16 %v156
  %v951 = vunpack.c.h.b16 %v156
  %v952 = vunpack.c.l.b16 %v157
  %v953 = vunpack.c.h.b16 %v157
  %v954 = vunpack.c.l.b16 %v158
  %v955 = vunpack.c.h.b16 %v158
  %v956 = vunpack.c.l.b16 %v159
  %v957 = vunpack.c.h.b16 %v159
  %v958 = vunpack.c.l.b16 %v160
  %v959 = vunpack.c.h.b16 %v160
  %v960 = vunpack.c.l.b16 %v161
  %v961 = vunpack.c.h.b16 %v161
  %v962 = vunpack.c.l.b16 %v162
  %v963 = vunpack.c.h.b16 %v162
  %v964 = vunpack.c.l.b16 %v163
  %v965 = vunpack.c.h.b16 %v163
  %v966 = vunpack.c.l.b16 %v164
  %v967 = vunpack.c.h.b16 %v164
  %v968 = vunpack.c.l.b16 %v165
  %v969 = vunpack.c.h.b16 %v165
  %v970 = vunpack.c.l.b16 %v166
  %v971 = vunpack.c.h.b16 %v166
  %v972 = vunpack.c.l.b16 %v167
  %v973 = vunpack.c.h.b16 %v167
  %v974 = vunpack.c.l.b16 %v168
  %v975 = vunpack.c.h.b16 %v168
  %v976 = vunpack.c.l.b16 %v169
  %v977 = vunpack.c.h.b16 %v169
  %v978 = vunpack.c.l.b16 %v170
  %v979 = vunpack.c.h.b16 %v170
  %v980 = vunpack.c.l.b16 %v171
  %v981 = vunpack.c.h.b16 %v171
  %v982 = vunpack.c.l.b16 %v172
  %v983 = vunpack.c.h.b16 %v172
  %v984 = vunpack.c.l.b16 %v173
  %v985 = vunpack.c.h.b16 %v173
  %v986 = vunpack.c.l.b16 %v174
  %v987 = vunpack.c.h.b16 %v174
  %v988 = vunpack.c.l.b16 %v175
  %v989 = vunpack.c.h.b16 %v175
  %v990 = vunpack.c.l.b16 %v176
  %v991 = vunpack.c.h.b16 %v176
  %v992 = vunpack.c.l.b16 %v177
  %v993 = vunpack.c.h.b16 %v177
  %v994 = vunpack.c.l.b16 %v178
  %v995 = vunpack.c.h.b16 %v178
  %v996 = vunpack.c.l.b16 %v179
  %v997 = vunpack.c.h.b16 %v179
  %v998 = vunpack.c.l.b16 %v180
  %v999 = vunpack.c.h.b16 %v180
  %v1000 = vunpack.c.l.b16 %v181
  %v1001 = vunpack.c.h.b16 %v181
  %v1002 = vunpack.c.l.b16 %v182
  %v1003 = vunpack.c.h.b16 %v182
  %v1004 = vunpack.c.l.b16 %v183
  %v1005 = vunpack.c.h.b16 %v183
  %v1006 = vunpack.c.l.b16 %v184
  %v1007 = vunpack.c.h.b16 %v184
  %v1008 = vunpack.c.l.b16 %v185
  %v1009 = vunpack.c.h.b16 %v185
  %v1010 = vunpack.c.l.b16 %v186
  %v1011 = vunpack.c.h.b16 %v186
  %v1012 = vunpack.c.l.b16 %v187
  %v1013 = vunpack.c.h.b16 %v187
  %v1014 = vunpack.c.l.b16 %v188
  %v1015 = vunpack.c.h.b16 %v188
  %v1016 = vunpack.c.l.b16 %v189
  %v1017 = vunpack.c.h.b16 %v189
  %v1018 = vunpack.c.l.b16 %v190
  %v1019 = vunpack.c.h.b16 %v190
  %v1020 = vunpack.c.l.b16 %v191
  %v1021 = vunpack.c.h.b16 %v191
  %v1022 = vunpack.c.l.b16 %v192
  %v1023 = vunpack.c.h.b16 %v192
  %v1024 = vunpack.c.l.b16 %v193
  %v1025 = vunpack.c.h.b16 %v193
  %v1026 = vunpack.c.l.b16 %v194
  %v1027 = vunpack.c.h.b16 %v194
  %v1028 = vunpack.c.l.b16 %v195
  %v1029 = vunpack.c.h.b16 %v195
  %v1030 = vunpack.c.l.b16 %v196
  %v1031 = vunpack.c.h.b16 %v196
  %v1032 = vunpack.c.l.b16 %v197
  %v1033 = vunpack.c.h.b16 %v197
  %v1034 = vunpack.c.l.b16 %v198
  %v1035 = vunpack.c.h.b16 %v198
  %v1036 = vunpack.c.l.b16 %v199
  %v1037 = vunpack.c.h.b16 %v199
  %v1038 = vunpack.c.l.b16 %v200
  %v1039 = vunpack.c.h.b16 %v200
  %v1040 = vunpack.c.l.b16 %v201
  %v1041 = vunpack.c.h.b16 %v201
  %v1042 = vunpack.c.l.b16 %v202
  %v1043 = vunpack.c.h.b16 %v202
  %v1044 = vunpack.c.l.b16 %v203
  %v1045 = vunpack.c.h.b16 %v203
  %v1046 = vunpack.c.l.b16 %v204
  %v1047 = vunpack.c.h.b16 %v204
  %v1048 = vunpack.c.l.b16 %v205
  %v1049 = vunpack.c.h.b16 %v205
  %v1050 = vunpack.c.l.b16 %v206
  %v1051 = vunpack.c.h.b16 %v206
  %v1052 = vunpack.c.l.b16 %v207
  %v1053 = vunpack.c.h.b16 %v207
  %v1054 = vunpack.c.l.b16 %v208
  %v1055 = vunpack.c.h.b16 %v208
  %v1056 = vunpack.c.l.b16 %v209
  %v1057 = vunpack.c.h.b16 %v209
  %v1058 = vunpack.c.l.b16 %v210
  %v1059 = vunpack.c.h.b16 %v210
  %v1060 = vunpack.c.l.b16 %v211
  %v1061 = vunpack.c.h.b16 %v211
  %v1062 = vunpack.c.l.b16 %v212
  %v1063 = vunpack.c.h.b16 %v212
  %v1064 = vunpack.c.l.b16 %v213
  %v1065 = vunpack.c.h.b16 %v213
  %v1066 = vunpack.c.l.b16 %v214
  %v1067 = vunpack.c.h.b16 %v214
  %v1068 = vunpack.c.l.b16 %v215
  %v1069 = vunpack.c.h.b16 %v215
  %v1070 = vunpack.c.l.b16 %v216
  %v1071 = vunpack.c.h.b16 %v216
  %v1072 = vunpack.c.l.b16 %v217
  %v1073 = vunpack.c.h.b16 %v217
  %v1074 = vunpack.c.l.b16 %v218
  %v1075 = vunpack.c.h.b16 %v218
  %v1076 = vunpack.c.l.b16 %v219
  %v1077 = vunpack.c.h.b16 %v219
  %v1078 = vunpack.c.l.b16 %v220
  %v1079 = vunpack.c.h.b16 %v220
  %v1080 = vunpack.c.l.b16 %v221
  %v1081 = vunpack.c.h.b16 %v221
  %v1082 = vunpack.c.l.b16 %v222
  %v1083 = vunpack.c.h.b16 %v222
  %v1084 = vunpack.c.l.b16 %v223
  %v1085 = vunpack.c.h.b16 %v223
  %v1086 = vunpack.c.l.b16 %v224
  %v1087 = vunpack.c.h.b16 %v224
  %v1088 = vunpack.c.l.b16 %v225
  %v1089 = vunpack.c.h.b16 %v225
  %v1090 = vunpack.c.l.b16 %v226
  %v1091 = vunpack.c.h.b16 %v226
  %v1092 = vunpack.c.l.b16 %v227
  %v1093 = vunpack.c.h.b16 %v227
  %v1094 = vunpack.c.l.b16 %v228
  %v1095 = vunpack.c.h.b16 %v228
  %v1096 = vunpack.c.l.b16 %v229
  %v1097 = vunpack.c.h.b16 %v229
  %v1098 = vunpack.c.l.b16 %v230
  %v1099 = vunpack.c.h.b16 %v230
  %v1100 = vunpack.c.l.b16 %v231
  %v1101 = vunpack.c.h.b16 %v231
  %v1102 = vunpack.c.l.b16 %v232
  %v1103 = vunpack.c.h.b16 %v232
  %v1104 = vunpack.c.l.b16 %v233
  %v1105 = vunpack.c.h.b16 %v233
  %v1106 = vunpack.c.l.b16 %v234
  %v1107 = vunpack.c.h.b16 %v234
  %v1108 = vunpack.c.l.b16 %v235
  %v1109 = vunpack.c.h.b16 %v235
  %v1110 = vunpack.c.l.b16 %v236
  %v1111 = vunpack.c.h.b16 %v236
  %v1112 = vunpack.c.l.b16 %v237
  %v1113 = vunpack.c.h.b16 %v237
  %v1114 = vunpack.c.l.b16 %v238
  %v1115 = vunpack.c.h.b16 %v238
  %v1116 = vunpack.c.l.b16 %v239
  %v1117 = vunpack.c.h.b16 %v239
  %v1118 = vunpack.c.l.b16 %v240
  %v1119 = vunpack.c.h.b16 %v240
  %v1120 = vunpack.c.l.b16 %v241
  %v1121 = vunpack.c.h.b16 %v241
  %v1122 = vunpack.c.l.b16 %v242
  %v1123 = vunpack.c.h.b16 %v242
  %v1124 = vunpack.c.l.b16 %v243
  %v1125 = vunpack.c.h.b16 %v243
  %v1126 = vunpack.c.l.b16 %v244
  %v1127 = vunpack.c.h.b16 %v244
  %v1128 = vunpack.c.l.b16 %v245
  %v1129 = vunpack.c.h.b16 %v245
  %v1130 = vunpack.c.l.b16 %v246
  %v1131 = vunpack.c.h.b16 %v246
  %v1132 = vunpack.c.l.b16 %v247
  %v1133 = vunpack.c.h.b16 %v247
  %v1134 = vunpack.c.l.b16 %v248
  %v1135 = vunpack.c.h.b16 %v248
  %v1136 = vunpack.c.l.b16 %v249
  %v1137 = vunpack.c.h.b16 %v249
  %v1138 = vunpack.c.l.b16 %v250
  %v1139 = vunpack.c.h.b16 %v250
  %v1140 = vunpack.c.l.b16 %v251
  %v1141 = vunpack.c.h.b16 %v251
  %v1142 = vunpack.c.l.b16 %v252
  %v1143 = vunpack.c.h.b16 %v252
  %v1144 = vunpack.c.l.b16 %v253
  %v1145 = vunpack.c.h.b16 %v253
  %v1146 = vunpack.c.l.b16 %v254
  %v1147 = vunpack.c.h.b16 %v254
  %v1148 = vunpack.c.l.b16 %v255
  %v1149 = vunpack.c.h.b16 %v255
  %v1150 = vunpack.c.l.b16 %v256
  %v1151 = vunpack.c.h.b16 %v256
  %v1152 = vunpack.c.l.b16 %v257
  %v1153 = vunpack.c.h.b16 %v257
  %v1154 = vunpack.c.l.b16 %v258
  %v1155 = vunpack.c.h.b16 %v258
  %v1156 = vunpack.c.l.b16 %v259
  %v1157 = vunpack.c.h.b16 %v259
  %v1158 = vunpack.c.l.b16 %v260
  %v1159 = vunpack.c.h.b16 %v260
  %v1160 = vunpack.c.l.b16 %v261
  %v1161 = vunpack.c.h.b16 %v261
  %v1162 = vunpack.c.l.b16 %v262
  %v1163 = vunpack.c.h.b16 %v262
  %v1164 = vunpack.c.l.b16 %v263
  %v1165 = vunpack.c.h.b16 %v263
  %v1166 = vunpack.c.l.b16 %v264
  %v1167 = vunpack.c.h.b16 %v264
  %v1168 = vunpack.c.l.b16 %v265
  %v1169 = vunpack.c.h.b16 %v265
  %v1170 = vunpack.c.l.b16 %v266
  %v1171 = vunpack.c.h.b16 %v266
  %v1172 = vunpack.c.l.b16 %v267
  %v1173 = vunpack.c.h.b16 %v267
  %v1174 = vunpack.c.l.b16 %v268
  %v1175 = vunpack.c.h.b16 %v268
  %v1176 = vunpack.c.l.b16 %v269
  %v1177 = vunpack.c.h.b16 %v269
  %v1178 = vunpack.c.l.b16 %v270
  %v1179 = vunpack.c.h.b16 %v270
  %v1180 = vunpack.c.l.b16 %v271
  %v1181 = vunpack.c.h.b16 %v271
  %v1182 = vunpack.c.l.b16 %v272
  %v1183 = vunpack.c.h.b16 %v272
  %v1184 = vunpack.c.l.b16 %v273
  %v1185 = vunpack.c.h.b16 %v273
  %v1186 = vunpack.c.l.b16 %v274
  %v1187 = vunpack.c.h.b16 %v274
  %v1188 = vunpack.c.l.b16 %v275
  %v1189 = vunpack.c.h.b16 %v275
  %v1190 = vunpack.c.l.b16 %v276
  %v1191 = vunpack.c.h.b16 %v276
  %v1192 = vunpack.c.l.b16 %v277
  %v1193 = vunpack.c.h.b16 %v277
  %v1194 = vunpack.c.l.b16 %v278
  %v1195 = vunpack.c.h.b16 %v278
  %v1196 = vunpack.c.l.b16 %v279
  %v1197 = vunpack.c.h.b16 %v279
  %v1198 = vunpack.c.l.b16 %v280
  %v1199 = vunpack.c.h.b16 %v280
  %v1200 = vunpack.c.l.b16 %v281
  %v1201 = vunpack.c.h.b16 %v281
  %v1202 = vunpack.c.l.b16 %v282
  %v1203 = vunpack.c.h.b16 %v282
  %v1204 = vunpack.c.l.b16 %v283
  %v1205 = vunpack.c.h.b16 %v283
  %v1206 = vunpack.c.l.b16 %v284
  %v1207 = vunpack.c.h.b16 %v284
  %v1208 = vunpack.c.l.b16 %v285
  %v1209 = vunpack.c.h.b16 %v285
  %v1210 = vunpack.c.l.b16 %v286
  %v1211 = vunpack.c.h.b16 %v286
  %v1212 = vunpack.c.l.b16 %v287
  %v1213 = vunpack.c.h.b16 %v287
  %v1214 = vunpack.c.l.b16 %v288
  %v1215 = vunpack.c.h.b16 %v288
  %v1216 = vunpack.c.l.b16 %v289
  %v1217 = vunpack.c.h.b16 %v289
  %v1218 = vunpack.c.l.b16 %v290
  %v1219 = vunpack.c.h.b16 %v290
  %v1220 = vunpack.c.l.b16 %v291
  %v1221 = vunpack.c.h.b16 %v291
  %v1222 = vunpack.c.l.b16 %v292
  %v1223 = vunpack.c.h.b16 %v292
  %v1224 = vunpack.c.l.b16 %v293
  %v1225 = vunpack.c.h.b16 %v293
  %v1226 = vunpack.c.l.b16 %v294
  %v1227 = vunpack.c.h.b16 %v294
  %v1228 = vunpack.c.l.b16 %v295
  %v1229 = vunpack.c.h.b16 %v295
  %v1230 = vunpack.c.l.b16 %v296
  %v1231 = vunpack.c.h.b16 %v296
  %v1232 = vunpack.c.l.b16 %v297
  %v1233 = vunpack.c.h.b16 %v297
  %v1234 = vunpack.c.l.b16 %v298
  %v1235 = vunpack.c.h.b16 %v298
  %v1236 = vunpack.c.l.b16 %v299
  %v1237 = vunpack.c.h.b16 %v299
  %v1238 = vunpack.c.l.b16 %v300
  %v1239 = vunpack.c.h.b16 %v300
  %v1240 = vunpack.c.l.b16 %v301
  %v1241 = vunpack.c.h.b16 %v301
  %v1242 = vpack.c.b16 %v732, %v730
  %v1243 = vpack.c.b16 %v733, %v731
  %v1244 = vpack.c.b16 %v736, %v734
  %v1245 = vpack.c.b16 %v737, %v735
  %v1246 = vpack.c.b16 %v740, %v738
  %v1247 = vpack.c.b16 %v741, %v739
  %v1248 = vpack.c.b16 %v744, %v742
  %v1249 = vpack.c.b16 %v745, %v743
  %v1250 = vpack.c.b16 %v748, %v746
  %v1251 = vpack.c.b16 %v749, %v747
  %v1252 = vpack.c.b16 %v752, %v750
  %v1253 = vpack.c.b16 %v753, %v751
  %v1254 = vpack.c.b16 %v756, %v754
  %v1255 = vpack.c.b16 %v757, %v755
  %v1256 = vpack.c.b16 %v760, %v758
  %v1257 = vpack.c.b16 %v761, %v759
  %v1258 = vpack.c.b16 %v764, %v762
  %v1259 = vpack.c.b16 %v765, %v763
  %v1260 = vpack.c.b16 %v768, %v766
  %v1261 = vpack.c.b16 %v769, %v767
  %v1262 = vpack.c.b16 %v772, %v770
  %v1263 = vpack.c.b16 %v773, %v771
  %v1264 = vpack.c.b16 %v776, %v774
  %v1265 = vpack.c.b16 %v777, %v775
  %v1266 = vpack.c.b16 %v780, %v778
  %v1267 = vpack.c.b16 %v781, %v779
  %v1268 = vpack.c.b16 %v784, %v782
  %v1269 = vpack.c.b16 %v785, %v783
  %v1270 = vpack.c.b16 %v788, %v786
  %v1271 = vpack.c.b16 %v789, %v787
  %v1272 = vpack.c.b16 %v792, %v790
  %v1273 = vpack.c.b16 %v793, %v791
  %v1274 = vpack.c.b16 %v796, %v794
  %v1275 = vpack.c.b16 %v797, %v795
  %v1276 = vpack.c.b16 %v800, %v798
  %v1277 = vpack.c.b16 %v801, %v799
  %v1278 = vpack.c.b16 %v804, %v802
  %v1279 = vpack.c.b16 %v805, %v803
  %v1280 = vpack.c.b16 %v808, %v806
  %v1281 = vpack.c.b16 %v809, %v807
  %v1282 = vpack.c.b16 %v812, %v810
  %v1283 = vpack.c.b16 %v813, %v811
  %v1284 = vpack.c.b16 %v816, %v814
  %v1285 = vpack.c.b16 %v817, %v815
  %v1286 = vpack.c.b16 %v820, %v818
  %v1287 = vpack.c.b16 %v821, %v819
  %v1288 = vpack.c.b16 %v824, %v822
  %v1289 = vpack.c.b16 %v825, %v823
  %v1290 = vpack.c.b16 %v828, %v826
  %v1291 = vpack.c.b16 %v829, %v827
  %v1292 = vpack.c.b16 %v832, %v830
  %v1293 = vpack.c.b16 %v833, %v831
  %v1294 = vpack.c.b16 %v836, %v834
  %v1295 = vpack.c.b16 %v837, %v835
  %v1296 = vpack.c.b16 %v840, %v838
  %v1297 = vpack.c.b16 %v841, %v839
  %v1298 = vpack.c.b16 %v844, %v842
  %v1299 = vpack.c.b16 %v845, %v843
  %v1300 = vpack.c.b16 %v848, %v846
  %v1301 = vpack.c.b16 %v849, %v847
  %v1302 = vpack.c.b16 %v852, %v850
  %v1303 = vpack.c.b16 %v853, %v851
  %v1304 = vpack.c.b16 %v856, %v854
  %v1305 = vpack.c.b16 %v857, %v855
  %v1306 = vpack.c.b16 %v860, %v858
  %v1307 = vpack.c.b16 %v861, %v859
  %v1308 = vpack.c.b16 %v864, %v862
  %v1309 = vpack.c.b16 %v865, %v863
  %v1310 = vpack.c.b16 %v868, %v866
  %v1311 = vpack.c.b16 %v869, %v867
  %v1312 = vpack.c.b16 %v872, %v870
  %v1313 = vpack.c.b16 %v873, %v871
  %v1314 = vpack.c.b16 %v876, %v874
  %v1315 = vpack.c.b16 %v877, %v875
  %v1316 = vpack.c.b16 %v880, %v878
  %v1317 = vpack.c.b16 %v881, %v879
  %v1318 = vpack.c.b16 %v884, %v882
  %v1319 = vpack.c.b16 %v885, %v883
  %v1320 = vpack.c.b16 %v888, %v886
  %v1321 = vpack.c.b16 %v889, %v887
  %v1322 = vpack.c.b16 %v892, %v890
  %v1323 = vpack.c.b16 %v893, %v891
  %v1324 = vpack.c.b16 %v896, %v894
  %v1325 = vpack.c.b16 %v897, %v895
  %v1326 = vpack.c.b16 %v900, %v898
  %v1327 = vpack.c.b16 %v901, %v899
  %v1328 = vpack.c.b16 %v904, %v902
  %v1329 = vpack.c.b16 %v905, %v903
  %v1330 = vpack.c.b16 %v908, %v906
  %v1331 = vpack.c.b16 %v909, %v907
  %v1332 = vpack.c.b16 %v912, %v910
  %v1333 = vpack.c.b16 %v913, %v911
  %v1334 = vpack.c.b16 %v916, %v914
  %v1335 = vpack.c.b16 %v917, %v915
  %v1336 = vpack.c.b16 %v920, %v918
  %v1337 = vpack.c.b16 %v921, %v919
  %v1338 = vpack.c.b16 %v924, %v922
  %v1339 = vpack.c.b16 %v925, %v923
  %v1340 = vpack.c.b16 %v928, %v926
  %v1341 = vpack.c.b16 %v929, %v927
  %v1342 = vpack.c.b16 %v932, %v930
  %v1343 = vpack.c.b16 %v933, %v931
  %v1344 = vpack.c.b16 %v936, %v934
  %v1345 = vpack.c.b16 %v937, %v935
  %v1346 = vpack.c.b16 %v940, %v938
  %v1347 = vpack.c.b16 %v941, %v939
  %v1348 = vpack.c.b16 %v944, %v942
  %v1349 = vpack.c.b16 %v945, %v943
  %v1350 = vpack.c.b16 %v948, %v946
  %v1351 = vpack.c.b16 %v949, %v947
  %v1352 = vpack.c.b16 %v952, %v950
  %v1353 = vpack.c.b16 %v953, %v951
  %v1354 = vpack.c.b16 %v956, %v954
  %v1355 = vpack.c.b16 %v957, %v955
  %v1356 = vpack.c.b16 %v960, %v958
  %v1357 = vpack.c.b16 %v961, %v959
  %v1358 = vpack.c.b16 %v964, %v962
  %v1359 = vpack.c.b16 %v965, %v963
  %v1360 = vpack.c.b16 %v968, %v966
  %v1361 = vpack.c.b16 %v969, %v967
  %v1362 = vpack.c.b16 %v972, %v970
  %v1363 = vpack.c.b16 %v973, %v971
  %v1364 = vpack.c.b16 %v976, %v974
  %v1365 = vpack.c.b16 %v977, %v975
  %v1366 = vpack.c.b16 %v980, %v978
  %v1367 = vpack.c.b16 %v981, %v979
  %v1368 = vpack.c.b16 %v984, %v982
  %v1369 = vpack.c.b16 %v985, %v983
  %v1370 = vpack.c.b16 %v988, %v986
  %v1371 = vpack.c.b16 %v989, %v987
  %v1372 = vpack.c.b16 %v992, %v990
  %v1373 = vpack.c.b16 %v993, %v991
  %v1374 = vpack.c.b16 %v996, %v994
  %v1375 = vpack.c.b16 %v997, %v995
  %v1376 = vpack.c.b16 %v1000, %v998
  %v1377 = vpack.c.b16 %v1001, %v999
  %v1378 = vpack.c.b16 %v1004, %v1002
  %v1379 = vpack.c.b16 %v1005, %v1003
  %v1380 = vpack.c.b16 %v1008, %v1006
  %v1381 = vpack.c.b16 %v1009, %v1007
  %v1382 = vpack.c.b16 %v1012, %v1010
  %v1383 = vpack.c.b16 %v1013, %v1011
  %v1384 = vpack.c.b16 %v1016, %v1014
  %v1385 = vpack.c.b16 %v1017, %v1015
  %v1386 = vpack.c.b16 %v1020, %v1018
  %v1387 = vpack.c.b16 %v1021, %v1019
  %v1388 = vpack.c.b16 %v1024, %v1022
  %v1389 = vpack.c.b16 %v1025, %v1023
  %v1390 = vpack.c.b16 %v1028, %v1026
  %v1391 = vpack.c.b16 %v1029, %v1027
  %v1392 = vpack.c.b16 %v1032, %v1030
  %v1393 = vpack.c.b16 %v1033, %v1031
  %v1394 = vpack.c.b16 %v1036, %v1034
  %v1395 = vpack.c.b16 %v1037, %v1035
  %v1396 = vpack.c.b16 %v1040, %v1038
  %v1397 = vpack.c.b16 %v1041, %v1039
  %v1398 = vpack.c.b16 %v1044, %v1042
  %v1399 = vpack.c.b16 %v1045, %v1043
  %v1400 = vpack.c.b16 %v1048, %v1046
  %v1401 = vpack.c.b16 %v1049, %v1047
  %v1402 = vpack.c.b16 %v1052, %v1050
  %v1403 = vpack.c.b16 %v1053, %v1051
  %v1404 = vpack.c.b16 %v1056, %v1054
  %v1405 = vpack.c.b16 %v1057, %v1055
  %v1406 = vpack.c.b16 %v1060, %v1058
  %v1407 = vpack.c.b16 %v1061, %v1059
  %v1408 = vpack.c.b16 %v1064, %v1062
  %v1409 = vpack.c.b16 %v1065, %v1063
  %v1410 = vpack.c.b16 %v1068, %v1066
  %v1411 = vpack.c.b16 %v1069, %v1067
  %v1412 = vpack.c.b16 %v1072, %v1070
  %v1413 = vpack.c.b16 %v1073, %v1071
  %v1414 = vpack.c.b16 %v1076, %v1074
  %v1415 = vpack.c.b16 %v1077, %v1075
  %v1416 = vpack.c.b16 %v1080, %v1078
  %v1417 = vpack.c.b16 %v1081, %v1079
  %v1418 = vpack.c.b16 %v1084, %v1082
  %v1419 = vpack.c.b16 %v1085, %v1083
  %v1420 = vpack.c.b16 %v1088, %v1086
  %v1421 = vpack.c.b16 %v1089, %v1087
  %v1422 = vpack.c.b16 %v1092, %v1090
  %v1423 = vpack.c.b16 %v1093, %v1091
  %v1424 = vpack.c.b16 %v1096, %v1094
  %v1425 = vpack.c.b16 %v1097, %v1095
  %v1426 = vpack.c.b16 %v1100, %v1098
  %v1427 = vpack.c.b16 %v1101, %v1099
  %v1428 = vpack.c.b16 %v1104, %v1102
  %v1429 = vpack.c.b16 %v1105, %v1103
  %v1430 = vpack.c.b16 %v1108, %v1106
  %v1431 = vpack.c.b16 %v1109, %v1107
  %v1432 = vpack.c.b16 %v1112, %v1110
  %v1433 = vpack.c.b16 %v1113, %v1111
  %v1434 = vpack.c.b16 %v1116, %v1114
  %v1435 = vpack.c.b16 %v1117, %v1115
  %v1436 = vpack.c.b16 %v1120, %v1118
  %v1437 = vpack.c.b16 %v1121, %v1119
  %v1438 = vpack.c.b16 %v1124, %v1122
  %v1439 = vpack.c.b16 %v1125, %v1123
  %v1440 = vpack.c.b16 %v1128, %v1126
  %v1441 = vpack.c.b16 %v1129, %v1127
  %v1442 = vpack.c.b16 %v1132, %v1130
  %v1443 = vpack.c.b16 %v1133, %v1131
  %v1444 = vpack.c.b16 %v1136, %v1134
  %v1445 = vpack.c.b16 %v1137, %v1135
  %v1446 = vpack.c.b16 %v1140, %v1138
  %v1447 = vpack.c.b16 %v1141, %v1139
  %v1448 = vpack.c.b16 %v1144, %v1142
  %v1449 = vpack.c.b16 %v1145, %v1143
  %v1450 = vpack.c.b16 %v1148, %v1146
  %v1451 = vpack.c.b16 %v1149, %v1147
  %v1452 = vpack.c.b16 %v1152, %v1150
  %v1453 = vpack.c.b16 %v1153, %v1151
  %v1454 = vpack.c.b16 %v1156, %v1154
  %v1455 = vpack.c.b16 %v1157, %v1155
  %v1456 = vpack.c.b16 %v1160, %v1158
  %v1457 = vpack.c.b16 %v1161, %v1159
  %v1458 = vpack.c.b16 %v1164, %v1162
  %v1459 = vpack.c.b16 %v1165, %v1163
  %v1460 = vpack.c.b16 %v1168, %v1166
  %v1461 = vpack.c.b16 %v1169, %v1167
  %v1462 = vpack.c.b16 %v1172, %v1170
  %v1463 = vpack.c.b16 %v1173, %v1171
  %v1464 = vpack.c.b16 %v1176, %v1174
  %v1465 = vpack.c.b16 %v1177, %v1175
  %v1466 = vpack.c.b16 %v1180, %v1178
  %v1467 = vpack.c.b16 %v1181, %v1179
  %v1468 = vpack.c.b16 %v1184, %v1182
  %v1469 = vpack.c.b16 %v1185, %v1183
  %v1470 = vpack.c.b16 %v1188, %v1186
  %v1471 = vpack.c.b16 %v1189, %v1187
  %v1472 = vpack.c.b16 %v1192, %v1190
  %v1473 = vpack.c.b16 %v1193, %v1191
  %v1474 = vpack.c.b16 %v1196, %v1194
  %v1475 = vpack.c.b16 %v1197, %v1195
  %v1476 = vpack.c.b16 %v1200, %v1198
  %v1477 = vpack.c.b16 %v1201, %v1199
  %v1478 = vpack.c.b16 %v1204, %v1202
  %v1479 = vpack.c.b16 %v1205, %v1203
  %v1480 = vpack.c.b16 %v1208, %v1206
  %v1481 = vpack.c.b16 %v1209, %v1207
  %v1482 = vpack.c.b16 %v1212, %v1210
  %v1483 = vpack.c.b16 %v1213, %v1211
  %v1484 = vpack.c.b16 %v1216, %v1214
  %v1485 = vpack.c.b16 %v1217, %v1215
  %v1486 = vpack.c.b16 %v1220, %v1218
  %v1487 = vpack.c.b16 %v1221, %v1219
  %v1488 = vpack.c.b16 %v1224, %v1222
  %v1489 = vpack.c.b16 %v1225, %v1223
  %v1490 = vpack.c.b16 %v1228, %v1226
  %v1491 = vpack.c.b16 %v1229, %v1227
  %v1492 = vpack.c.b16 %v1232, %v1230
  %v1493 = vpack.c.b16 %v1233, %v1231
  %v1494 = vpack.c.b16 %v1236, %v1234
  %v1495 = vpack.c.b16 %v1237, %v1235
  %v1496 = vpack.c.b16 %v1240, %v1238
  %v1497 = vpack.c.b16 %v1241, %v1239
  %1754 = vmatprep.subr.bf16.mxu0 %v1243
  %1755 = vmatpush1.bf16.msra.mxu0 %v1242
  %1756 = vmatprep.subr.bf16.mxu0 %v1245
  %1757 = vmatpush1.bf16.msra.mxu0 %v1244
  %1758 = vmatprep.subr.bf16.mxu0 %v1247
  %1759 = vmatpush1.bf16.msra.mxu0 %v1246
  %1760 = vmatprep.subr.bf16.mxu0 %v1249
  %1761 = vmatpush1.bf16.msra.mxu0 %v1248
  %1762 = vmatprep.subr.bf16.mxu0 %v1251
  %1763 = vmatpush1.bf16.msra.mxu0 %v1250
  %1764 = vmatprep.subr.bf16.mxu0 %v1253
  %1765 = vmatpush1.bf16.msra.mxu0 %v1252
  %1766 = vmatprep.subr.bf16.mxu0 %v1255
  %1767 = vmatpush1.bf16.msra.mxu0 %v1254
  %1768 = vmatprep.subr.bf16.mxu0 %v1257
  %1769 = vmatpush1.bf16.msra.mxu0 %v1256
  %1770 = vmatprep.subr.bf16.mxu0 %v1259
  %1771 = vmatpush1.bf16.msra.mxu0 %v1258
  %1772 = vmatprep.subr.bf16.mxu0 %v1261
  %1773 = vmatpush1.bf16.msra.mxu0 %v1260
  %1774 = vmatprep.subr.bf16.mxu0 %v1263
  %1775 = vmatpush1.bf16.msra.mxu0 %v1262
  %1776 = vmatprep.subr.bf16.mxu0 %v1265
  %1777 = vmatpush1.bf16.msra.mxu0 %v1264
  %1778 = vmatprep.subr.bf16.mxu0 %v1267
  %1779 = vmatpush1.bf16.msra.mxu0 %v1266
  %1780 = vmatprep.subr.bf16.mxu0 %v1269
  %1781 = vmatpush1.bf16.msra.mxu0 %v1268
  %1782 = vmatprep.subr.bf16.mxu0 %v1271
  %1783 = vmatpush1.bf16.msra.mxu0 %v1270
  %1784 = vmatprep.subr.bf16.mxu0 %v1273
  %1785 = vmatpush1.bf16.msra.mxu0 %v1272
  %1786 = vmatprep.mubr.bf16.mxu0 %v411
  %1787 = vmatmul.mubr.bf16.gmra.mrb[0].mxu0 %v410
  %v1788 = vpop.f32.mrb[0].mxu0
  %v1789 = vadd.f32 %v307, %v1788
  %v1790 = vpop.f32.mrb[0].mxu0
  %v1791 = vadd.f32 %v311, %v1790
  %v1792 = vpop.f32.mrb[0].mxu0
  %v1793 = vadd.f32 %v307, %v1792
  %v1794 = vpop.f32.mrb[0].mxu0
  %v1795 = vadd.f32 %v311, %v1794
  %1796 = vmatprep.mubr.bf16.mxu0 %v427
  %1797 = vmatmul.mubr.bf16.gmra.mrb[0].mxu0 %v426
  %v1798 = vpop.f32.mrb[0].mxu0
  %v1799 = vadd.f32 %v307, %v1798
  %v1800 = vpop.f32.mrb[0].mxu0
  %v1801 = vadd.f32 %v311, %v1800
  %v1802 = vpop.f32.mrb[0].mxu0
  %v1803 = vadd.f32 %v307, %v1802
  %v1804 = vpop.f32.mrb[0].mxu0
  %v1805 = vadd.f32 %v311, %v1804
  %1806 = vdwg.mxu0
  %1807 = vmatprep.subr.bf16.mxu0 %v1275
  %1808 = vmatpush1.bf16.msra.mxu0 %v1274
  %1809 = vmatprep.subr.bf16.mxu0 %v1277
  %1810 = vmatpush1.bf16.msra.mxu0 %v1276
  %1811 = vmatprep.subr.bf16.mxu0 %v1279
  %1812 = vmatpush1.bf16.msra.mxu0 %v1278
  %1813 = vmatprep.subr.bf16.mxu0 %v1281
  %1814 = vmatpush1.bf16.msra.mxu0 %v1280
  %1815 = vmatprep.subr.bf16.mxu0 %v1283
  %1816 = vmatpush1.bf16.msra.mxu0 %v1282
  %1817 = vmatprep.subr.bf16.mxu0 %v1285
  %1818 = vmatpush1.bf16.msra.mxu0 %v1284
  %1819 = vmatprep.subr.bf16.mxu0 %v1287
  %1820 = vmatpush1.bf16.msra.mxu0 %v1286
  %1821 = vmatprep.subr.bf16.mxu0 %v1289
  %1822 = vmatpush1.bf16.msra.mxu0 %v1288
  %1823 = vmatprep.subr.bf16.mxu0 %v1291
  %1824 = vmatpush1.bf16.msra.mxu0 %v1290
  %1825 = vmatprep.subr.bf16.mxu0 %v1293
  %1826 = vmatpush1.bf16.msra.mxu0 %v1292
  %1827 = vmatprep.subr.bf16.mxu0 %v1295
  %1828 = vmatpush1.bf16.msra.mxu0 %v1294
  %1829 = vmatprep.subr.bf16.mxu0 %v1297
  %1830 = vmatpush1.bf16.msra.mxu0 %v1296
  %1831 = vmatprep.subr.bf16.mxu0 %v1299
  %1832 = vmatpush1.bf16.msra.mxu0 %v1298
  %1833 = vmatprep.subr.bf16.mxu0 %v1301
  %1834 = vmatpush1.bf16.msra.mxu0 %v1300
  %1835 = vmatprep.subr.bf16.mxu0 %v1303
  %1836 = vmatpush1.bf16.msra.mxu0 %v1302
  %1837 = vmatprep.subr.bf16.mxu0 %v1305
  %1838 = vmatpush1.bf16.msra.mxu0 %v1304
  %1839 = vmatprep.mubr.bf16.mxu0 %v413
  %1840 = vmatmul.mubr.bf16.gmra.mrb[0].mxu0 %v412
  %v1841 = vpop.f32.mrb[0].mxu0
  %v1842 = vadd.f32 %v1789, %v1841
  %v1843 = vpop.f32.mrb[0].mxu0
  %v1844 = vadd.f32 %v1791, %v1843
  %v1845 = vpop.f32.mrb[0].mxu0
  %v1846 = vadd.f32 %v1793, %v1845
  %v1847 = vpop.f32.mrb[0].mxu0
  %v1848 = vadd.f32 %v1795, %v1847
  %1849 = vmatprep.mubr.bf16.mxu0 %v429
  %1850 = vmatmul.mubr.bf16.gmra.mrb[0].mxu0 %v428
  %v1851 = vpop.f32.mrb[0].mxu0
  %v1852 = vadd.f32 %v1799, %v1851
  %v1853 = vpop.f32.mrb[0].mxu0
  %v1854 = vadd.f32 %v1801, %v1853
  %v1855 = vpop.f32.mrb[0].mxu0
  %v1856 = vadd.f32 %v1803, %v1855
  %v1857 = vpop.f32.mrb[0].mxu0
  %v1858 = vadd.f32 %v1805, %v1857
  %1859 = vdwg.mxu0
  %1860 = vmatprep.subr.bf16.mxu0 %v1307
  %1861 = vmatpush1.bf16.msra.mxu0 %v1306
  %1862 = vmatprep.subr.bf16.mxu0 %v1309
  %1863 = vmatpush1.bf16.msra.mxu0 %v1308
  %1864 = vmatprep.subr.bf16.mxu0 %v1311
  %1865 = vmatpush1.bf16.msra.mxu0 %v1310
  %1866 = vmatprep.subr.bf16.mxu0 %v1313
  %1867 = vmatpush1.bf16.msra.mxu0 %v1312
  %1868 = vmatprep.subr.bf16.mxu0 %v1315
  %1869 = vmatpush1.bf16.msra.mxu0 %v1314
  %1870 = vmatprep.subr.bf16.mxu0 %v1317
  %1871 = vmatpush1.bf16.msra.mxu0 %v1316
  %1872 = vmatprep.subr.bf16.mxu0 %v1319
  %1873 = vmatpush1.bf16.msra.mxu0 %v1318
  %1874 = vmatprep.subr.bf16.mxu0 %v1321
  %1875 = vmatpush1.bf16.msra.mxu0 %v1320
  %1876 = vmatprep.subr.bf16.mxu0 %v1323
  %1877 = vmatpush1.bf16.msra.mxu0 %v1322
  %1878 = vmatprep.subr.bf16.mxu0 %v1325
  %1879 = vmatpush1.bf16.msra.mxu0 %v1324
  %1880 = vmatprep.subr.bf16.mxu0 %v1327
  %1881 = vmatpush1.bf16.msra.mxu0 %v1326
  %1882 = vmatprep.subr.bf16.mxu0 %v1329
  %1883 = vmatpush1.bf16.msra.mxu0 %v1328
  %1884 = vmatprep.subr.bf16.mxu0 %v1331
  %1885 = vmatpush1.bf16.msra.mxu0 %v1330
  %1886 = vmatprep.subr.bf16.mxu0 %v1333
  %1887 = vmatpush1.bf16.msra.mxu0 %v1332
  %1888 = vmatprep.subr.bf16.mxu0 %v1335
  %1889 = vmatpush1.bf16.msra.mxu0 %v1334
  %1890 = vmatprep.subr.bf16.mxu0 %v1337
  %1891 = vmatpush1.bf16.msra.mxu0 %v1336
  %1892 = vmatprep.mubr.bf16.mxu0 %v415
  %1893 = vmatmul.mubr.bf16.gmra.mrb[0].mxu0 %v414
  %v1894 = vpop.f32.mrb[0].mxu0
  %v1895 = vadd.f32 %v1842, %v1894
  %v1896 = vpop.f32.mrb[0].mxu0
  %v1897 = vadd.f32 %v1844, %v1896
  %v1898 = vpop.f32.mrb[0].mxu0
  %v1899 = vadd.f32 %v1846, %v1898
  %v1900 = vpop.f32.mrb[0].mxu0
  %v1901 = vadd.f32 %v1848, %v1900
  %1902 = vmatprep.mubr.bf16.mxu0 %v431
  %1903 = vmatmul.mubr.bf16.gmra.mrb[0].mxu0 %v430
  %v1904 = vpop.f32.mrb[0].mxu0
  %v1905 = vadd.f32 %v1852, %v1904
  %v1906 = vpop.f32.mrb[0].mxu0
  %v1907 = vadd.f32 %v1854, %v1906
  %v1908 = vpop.f32.mrb[0].mxu0
  %v1909 = vadd.f32 %v1856, %v1908
  %v1910 = vpop.f32.mrb[0].mxu0
  %v1911 = vadd.f32 %v1858, %v1910
  %1912 = vdwg.mxu0
  %1913 = vmatprep.subr.bf16.mxu0 %v1339
  %1914 = vmatpush1.bf16.msra.mxu0 %v1338
  %1915 = vmatprep.subr.bf16.mxu0 %v1341
  %1916 = vmatpush1.bf16.msra.mxu0 %v1340
  %1917 = vmatprep.subr.bf16.mxu0 %v1343
  %1918 = vmatpush1.bf16.msra.mxu0 %v1342
  %1919 = vmatprep.subr.bf16.mxu0 %v1345
  %1920 = vmatpush1.bf16.msra.mxu0 %v1344
  %1921 = vmatprep.subr.bf16.mxu0 %v1347
  %1922 = vmatpush1.bf16.msra.mxu0 %v1346
  %1923 = vmatprep.subr.bf16.mxu0 %v1349
  %1924 = vmatpush1.bf16.msra.mxu0 %v1348
  %1925 = vmatprep.subr.bf16.mxu0 %v1351
  %1926 = vmatpush1.bf16.msra.mxu0 %v1350
  %1927 = vmatprep.subr.bf16.mxu0 %v1353
  %1928 = vmatpush1.bf16.msra.mxu0 %v1352
  %1929 = vmatprep.subr.bf16.mxu0 %v1355
  %1930 = vmatpush1.bf16.msra.mxu0 %v1354
  %1931 = vmatprep.subr.bf16.mxu0 %v1357
  %1932 = vmatpush1.bf16.msra.mxu0 %v1356
  %1933 = vmatprep.subr.bf16.mxu0 %v1359
  %1934 = vmatpush1.bf16.msra.mxu0 %v1358
  %1935 = vmatprep.subr.bf16.mxu0 %v1361
  %1936 = vmatpush1.bf16.msra.mxu0 %v1360
  %1937 = vmatprep.subr.bf16.mxu0 %v1363
  %1938 = vmatpush1.bf16.msra.mxu0 %v1362
  %1939 = vmatprep.subr.bf16.mxu0 %v1365
  %1940 = vmatpush1.bf16.msra.mxu0 %v1364
  %1941 = vmatprep.subr.bf16.mxu0 %v1367
  %1942 = vmatpush1.bf16.msra.mxu0 %v1366
  %1943 = vmatprep.subr.bf16.mxu0 %v1369
  %1944 = vmatpush1.bf16.msra.mxu0 %v1368
  %1945 = vmatprep.mubr.bf16.mxu0 %v417
  %1946 = vmatmul.mubr.bf16.gmra.mrb[0].mxu0 %v416
  %v1947 = vpop.f32.mrb[0].mxu0
  %v1948 = vadd.f32 %v1895, %v1947
  %v1949 = vpop.f32.mrb[0].mxu0
  %v1950 = vadd.f32 %v1897, %v1949
  %v1951 = vpop.f32.mrb[0].mxu0
  %v1952 = vadd.f32 %v1899, %v1951
  %v1953 = vpop.f32.mrb[0].mxu0
  %v1954 = vadd.f32 %v1901, %v1953
  %1955 = vmatprep.mubr.bf16.mxu0 %v433
  %1956 = vmatmul.mubr.bf16.gmra.mrb[0].mxu0 %v432
  %v1957 = vpop.f32.mrb[0].mxu0
  %v1958 = vadd.f32 %v1905, %v1957
  %v1959 = vpop.f32.mrb[0].mxu0
  %v1960 = vadd.f32 %v1907, %v1959
  %v1961 = vpop.f32.mrb[0].mxu0
  %v1962 = vadd.f32 %v1909, %v1961
  %v1963 = vpop.f32.mrb[0].mxu0
  %v1964 = vadd.f32 %v1911, %v1963
  %1965 = vdwg.mxu0
  %1966 = vmatprep.subr.bf16.mxu0 %v1371
  %1967 = vmatpush1.bf16.msra.mxu0 %v1370
  %1968 = vmatprep.subr.bf16.mxu0 %v1373
  %1969 = vmatpush1.bf16.msra.mxu0 %v1372
  %1970 = vmatprep.subr.bf16.mxu0 %v1375
  %1971 = vmatpush1.bf16.msra.mxu0 %v1374
  %1972 = vmatprep.subr.bf16.mxu0 %v1377
  %1973 = vmatpush1.bf16.msra.mxu0 %v1376
  %1974 = vmatprep.subr.bf16.mxu0 %v1379
  %1975 = vmatpush1.bf16.msra.mxu0 %v1378
  %1976 = vmatprep.subr.bf16.mxu0 %v1381
  %1977 = vmatpush1.bf16.msra.mxu0 %v1380
  %1978 = vmatprep.subr.bf16.mxu0 %v1383
  %1979 = vmatpush1.bf16.msra.mxu0 %v1382
  %1980 = vmatprep.subr.bf16.mxu0 %v1385
  %1981 = vmatpush1.bf16.msra.mxu0 %v1384
  %1982 = vmatprep.subr.bf16.mxu0 %v1387
  %1983 = vmatpush1.bf16.msra.mxu0 %v1386
  %1984 = vmatprep.subr.bf16.mxu0 %v1389
  %1985 = vmatpush1.bf16.msra.mxu0 %v1388
  %1986 = vmatprep.subr.bf16.mxu0 %v1391
  %1987 = vmatpush1.bf16.msra.mxu0 %v1390
  %1988 = vmatprep.subr.bf16.mxu0 %v1393
  %1989 = vmatpush1.bf16.msra.mxu0 %v1392
  %1990 = vmatprep.subr.bf16.mxu0 %v1395
  %1991 = vmatpush1.bf16.msra.mxu0 %v1394
  %1992 = vmatprep.subr.bf16.mxu0 %v1397
  %1993 = vmatpush1.bf16.msra.mxu0 %v1396
  %1994 = vmatprep.subr.bf16.mxu0 %v1399
  %1995 = vmatpush1.bf16.msra.mxu0 %v1398
  %1996 = vmatprep.subr.bf16.mxu0 %v1401
  %1997 = vmatpush1.bf16.msra.mxu0 %v1400
  %1998 = vmatprep.mubr.bf16.mxu0 %v419
  %1999 = vmatmul.mubr.bf16.gmra.mrb[0].mxu0 %v418
  %v2000 = vpop.f32.mrb[0].mxu0
  %v2001 = vadd.f32 %v1948, %v2000
  %v2002 = vpop.f32.mrb[0].mxu0
  %v2003 = vadd.f32 %v1950, %v2002
  %v2004 = vpop.f32.mrb[0].mxu0
  %v2005 = vadd.f32 %v1952, %v2004
  %v2006 = vpop.f32.mrb[0].mxu0
  %v2007 = vadd.f32 %v1954, %v2006
  %2008 = vmatprep.mubr.bf16.mxu0 %v435
  %2009 = vmatmul.mubr.bf16.gmra.mrb[0].mxu0 %v434
  %v2010 = vpop.f32.mrb[0].mxu0
  %v2011 = vadd.f32 %v1958, %v2010
  %v2012 = vpop.f32.mrb[0].mxu0
  %v2013 = vadd.f32 %v1960, %v2012
  %v2014 = vpop.f32.mrb[0].mxu0
  %v2015 = vadd.f32 %v1962, %v2014
  %v2016 = vpop.f32.mrb[0].mxu0
  %v2017 = vadd.f32 %v1964, %v2016
  %2018 = vdwg.mxu0
  %2019 = vmatprep.subr.bf16.mxu0 %v1403
  %2020 = vmatpush1.bf16.msra.mxu0 %v1402
  %2021 = vmatprep.subr.bf16.mxu0 %v1405
  %2022 = vmatpush1.bf16.msra.mxu0 %v1404
  %2023 = vmatprep.subr.bf16.mxu0 %v1407
  %2024 = vmatpush1.bf16.msra.mxu0 %v1406
  %2025 = vmatprep.subr.bf16.mxu0 %v1409
  %2026 = vmatpush1.bf16.msra.mxu0 %v1408
  %2027 = vmatprep.subr.bf16.mxu0 %v1411
  %2028 = vmatpush1.bf16.msra.mxu0 %v1410
  %2029 = vmatprep.subr.bf16.mxu0 %v1413
  %2030 = vmatpush1.bf16.msra.mxu0 %v1412
  %2031 = vmatprep.subr.bf16.mxu0 %v1415
  %2032 = vmatpush1.bf16.msra.mxu0 %v1414
  %2033 = vmatprep.subr.bf16.mxu0 %v1417
  %2034 = vmatpush1.bf16.msra.mxu0 %v1416
  %2035 = vmatprep.subr.bf16.mxu0 %v1419
  %2036 = vmatpush1.bf16.msra.mxu0 %v1418
  %2037 = vmatprep.subr.bf16.mxu0 %v1421
  %2038 = vmatpush1.bf16.msra.mxu0 %v1420
  %2039 = vmatprep.subr.bf16.mxu0 %v1423
  %2040 = vmatpush1.bf16.msra.mxu0 %v1422
  %2041 = vmatprep.subr.bf16.mxu0 %v1425
  %2042 = vmatpush1.bf16.msra.mxu0 %v1424
  %2043 = vmatprep.subr.bf16.mxu0 %v1427
  %2044 = vmatpush1.bf16.msra.mxu0 %v1426
  %2045 = vmatprep.subr.bf16.mxu0 %v1429
  %2046 = vmatpush1.bf16.msra.mxu0 %v1428
  %2047 = vmatprep.subr.bf16.mxu0 %v1431
  %2048 = vmatpush1.bf16.msra.mxu0 %v1430
  %2049 = vmatprep.subr.bf16.mxu0 %v1433
  %2050 = vmatpush1.bf16.msra.mxu0 %v1432
  %2051 = vmatprep.mubr.bf16.mxu0 %v421
  %2052 = vmatmul.mubr.bf16.gmra.mrb[0].mxu0 %v420
  %v2053 = vpop.f32.mrb[0].mxu0
  %v2054 = vadd.f32 %v2001, %v2053
  %v2055 = vpop.f32.mrb[0].mxu0
  %v2056 = vadd.f32 %v2003, %v2055
  %v2057 = vpop.f32.mrb[0].mxu0
  %v2058 = vadd.f32 %v2005, %v2057
  %v2059 = vpop.f32.mrb[0].mxu0
  %v2060 = vadd.f32 %v2007, %v2059
  %2061 = vmatprep.mubr.bf16.mxu0 %v437
  %2062 = vmatmul.mubr.bf16.gmra.mrb[0].mxu0 %v436
  %v2063 = vpop.f32.mrb[0].mxu0
  %v2064 = vadd.f32 %v2011, %v2063
  %v2065 = vpop.f32.mrb[0].mxu0
  %v2066 = vadd.f32 %v2013, %v2065
  %v2067 = vpop.f32.mrb[0].mxu0
  %v2068 = vadd.f32 %v2015, %v2067
  %v2069 = vpop.f32.mrb[0].mxu0
  %v2070 = vadd.f32 %v2017, %v2069
  %2071 = vdwg.mxu0
  %2072 = vmatprep.subr.bf16.mxu0 %v1435
  %2073 = vmatpush1.bf16.msra.mxu0 %v1434
  %2074 = vmatprep.subr.bf16.mxu0 %v1437
  %2075 = vmatpush1.bf16.msra.mxu0 %v1436
  %2076 = vmatprep.subr.bf16.mxu0 %v1439
  %2077 = vmatpush1.bf16.msra.mxu0 %v1438
  %2078 = vmatprep.subr.bf16.mxu0 %v1441
  %2079 = vmatpush1.bf16.msra.mxu0 %v1440
  %2080 = vmatprep.subr.bf16.mxu0 %v1443
  %2081 = vmatpush1.bf16.msra.mxu0 %v1442
  %2082 = vmatprep.subr.bf16.mxu0 %v1445
  %2083 = vmatpush1.bf16.msra.mxu0 %v1444
  %2084 = vmatprep.subr.bf16.mxu0 %v1447
  %2085 = vmatpush1.bf16.msra.mxu0 %v1446
  %2086 = vmatprep.subr.bf16.mxu0 %v1449
  %2087 = vmatpush1.bf16.msra.mxu0 %v1448
  %2088 = vmatprep.subr.bf16.mxu0 %v1451
  %2089 = vmatpush1.bf16.msra.mxu0 %v1450
  %2090 = vmatprep.subr.bf16.mxu0 %v1453
  %2091 = vmatpush1.bf16.msra.mxu0 %v1452
  %2092 = vmatprep.subr.bf16.mxu0 %v1455
  %2093 = vmatpush1.bf16.msra.mxu0 %v1454
  %2094 = vmatprep.subr.bf16.mxu0 %v1457
  %2095 = vmatpush1.bf16.msra.mxu0 %v1456
  %2096 = vmatprep.subr.bf16.mxu0 %v1459
  %2097 = vmatpush1.bf16.msra.mxu0 %v1458
  %2098 = vmatprep.subr.bf16.mxu0 %v1461
  %2099 = vmatpush1.bf16.msra.mxu0 %v1460
  %2100 = vmatprep.subr.bf16.mxu0 %v1463
  %2101 = vmatpush1.bf16.msra.mxu0 %v1462
  %2102 = vmatprep.subr.bf16.mxu0 %v1465
  %2103 = vmatpush1.bf16.msra.mxu0 %v1464
  %2104 = vmatprep.mubr.bf16.mxu0 %v423
  %2105 = vmatmul.mubr.bf16.gmra.mrb[0].mxu0 %v422
  %v2106 = vpop.f32.mrb[0].mxu0
  %v2107 = vadd.f32 %v2054, %v2106
  %v2108 = vpop.f32.mrb[0].mxu0
  %v2109 = vadd.f32 %v2056, %v2108
  %v2110 = vpop.f32.mrb[0].mxu0
  %v2111 = vadd.f32 %v2058, %v2110
  %v2112 = vpop.f32.mrb[0].mxu0
  %v2113 = vadd.f32 %v2060, %v2112
  %2114 = vmatprep.mubr.bf16.mxu0 %v439
  %2115 = vmatmul.mubr.bf16.gmra.mrb[0].mxu0 %v438
  %v2116 = vpop.f32.mrb[0].mxu0
  %v2117 = vadd.f32 %v2064, %v2116
  %v2118 = vpop.f32.mrb[0].mxu0
  %v2119 = vadd.f32 %v2066, %v2118
  %v2120 = vpop.f32.mrb[0].mxu0
  %v2121 = vadd.f32 %v2068, %v2120
  %v2122 = vpop.f32.mrb[0].mxu0
  %v2123 = vadd.f32 %v2070, %v2122
  %2124 = vdwg.mxu0
  %2125 = vmatprep.subr.bf16.mxu0 %v1467
  %2126 = vmatpush1.bf16.msra.mxu0 %v1466
  %2127 = vmatprep.subr.bf16.mxu0 %v1469
  %2128 = vmatpush1.bf16.msra.mxu0 %v1468
  %2129 = vmatprep.subr.bf16.mxu0 %v1471
  %2130 = vmatpush1.bf16.msra.mxu0 %v1470
  %2131 = vmatprep.subr.bf16.mxu0 %v1473
  %2132 = vmatpush1.bf16.msra.mxu0 %v1472
  %2133 = vmatprep.subr.bf16.mxu0 %v1475
  %2134 = vmatpush1.bf16.msra.mxu0 %v1474
  %2135 = vmatprep.subr.bf16.mxu0 %v1477
  %2136 = vmatpush1.bf16.msra.mxu0 %v1476
  %2137 = vmatprep.subr.bf16.mxu0 %v1479
  %2138 = vmatpush1.bf16.msra.mxu0 %v1478
  %2139 = vmatprep.subr.bf16.mxu0 %v1481
  %2140 = vmatpush1.bf16.msra.mxu0 %v1480
  %2141 = vmatprep.subr.bf16.mxu0 %v1483
  %2142 = vmatpush1.bf16.msra.mxu0 %v1482
  %2143 = vmatprep.subr.bf16.mxu0 %v1485
  %2144 = vmatpush1.bf16.msra.mxu0 %v1484
  %2145 = vmatprep.subr.bf16.mxu0 %v1487
  %2146 = vmatpush1.bf16.msra.mxu0 %v1486
  %2147 = vmatprep.subr.bf16.mxu0 %v1489
  %2148 = vmatpush1.bf16.msra.mxu0 %v1488
  %2149 = vmatprep.subr.bf16.mxu0 %v1491
  %2150 = vmatpush1.bf16.msra.mxu0 %v1490
  %2151 = vmatprep.subr.bf16.mxu0 %v1493
  %2152 = vmatpush1.bf16.msra.mxu0 %v1492
  %2153 = vmatprep.subr.bf16.mxu0 %v1495
  %2154 = vmatpush1.bf16.msra.mxu0 %v1494
  %2155 = vmatprep.subr.bf16.mxu0 %v1497
  %2156 = vmatpush1.bf16.msra.mxu0 %v1496
  %2157 = vmatprep.mubr.bf16.mxu0 %v425
  %2158 = vmatmul.mubr.bf16.gmra.mrb[0].mxu0 %v424
  %v2159 = vpop.f32.mrb[0].mxu0
  %v2160 = vadd.f32 %v2107, %v2159
  %v2161 = vpop.f32.mrb[0].mxu0
  %v2162 = vadd.f32 %v2109, %v2161
  %v2163 = vpop.f32.mrb[0].mxu0
  %v2164 = vadd.f32 %v2111, %v2163
  %v2165 = vpop.f32.mrb[0].mxu0
  %v2166 = vadd.f32 %v2113, %v2165
  %2167 = vmatprep.mubr.bf16.mxu0 %v441
  %2168 = vmatmul.mubr.bf16.gmra.mrb[0].mxu0 %v440
  %v2169 = vpop.f32.mrb[0].mxu0
  %v2170 = vadd.f32 %v2117, %v2169
  %v2171 = vpop.f32.mrb[0].mxu0
  %v2172 = vadd.f32 %v2119, %v2171
  %v2173 = vpop.f32.mrb[0].mxu0
  %v2174 = vadd.f32 %v2121, %v2173
  %v2175 = vpop.f32.mrb[0].mxu0
  %v2176 = vadd.f32 %v2123, %v2175
  %2177 = vdwg.mxu0
  %v2178 = vpack.c.bf16 %v2164, %v2160
  %v2179 = vpack.c.bf16 %v2166, %v2162
  %v2180 = vpack.c.bf16 %v2174, %v2170
  %v2181 = vpack.c.bf16 %v2176, %v2172
  %v2186 = vunpack.c.l.b16 %v2178
  %v2187 = vunpack.c.l.b16 %v2179
  %v2188 = vunpack.c.h.b16 %v2178
  %v2189 = vunpack.c.h.b16 %v2179
  %v2190 = vunpack.c.l.b16 %v2180
  %v2191 = vunpack.c.l.b16 %v2181
  %v2192 = vunpack.c.h.b16 %v2180
  %v2193 = vunpack.c.h.b16 %v2181
  %v2194 = vpack.c.b16 %v2187, %v2186
  %v2195 = vpack.c.b16 %v2189, %v2188
  %v2196 = vpack.c.b16 %v2191, %v2190
  %v2197 = vpack.c.b16 %v2193, %v2192
  %2202 = vst [vmem:[%s3] sm:$0xff] %v2194
  %2203 = vst [vmem:[%s3 + $0x8] sm:$0xff] %v2195
  %2204 = vst [vmem:[%s3 + $0x10] sm:$0xff] %v2196
  %2205 = vst [vmem:[%s3 + $0x18] sm:$0xff] %v2197
  // Predicated region
  $region14: #{discriminator_forward.11} parent=0 // pred_check
    _
  $region15: #{discriminator_forward.11} parent=0 // pred_check_branch
    %2207 = sbr.rel (0) target = $region17
  $region16: #{discriminator_forward.11} parent=0 // pred_region
    _
  $region17: #{discriminator_forward.11} parent=0 // pred_fallthru
    _
  // Predicated region
  $region18: #{discriminator_forward.11} parent=0 // pred_check
    _
  $region19: #{discriminator_forward.11} parent=0 // pred_check_branch
    %2209 = sbr.rel (0) target = $region21
  $region20: #{discriminator_forward.11} parent=0 // pred_region
    _
  $region21: #{discriminator_forward.11} parent=0 // pred_fallthru
    _

// kernel: discriminator_forward.14
$region0: #{discriminator_forward.14}
  #allocation0 [shape = 'u32[]', space=smem, size = 0x4, offset = 0x4, fixed_abs, tag = 'smem constant byte address 0x4 - core index']
  #allocation1 [shape = 'u32[144,128]{1,0:T(1,128)}', space=vmem, size = 0x12000, scoped, tag = 'internal scratch']
  %s0 = inlined_call_operand.vmem [shape: f32[2,4,512], index: 0, kind: input, shape index: {}]
  %s1 = inlined_call_operand.vmem [shape: bf16[2,4,512], index: 1, kind: output, shape index: {}]
  %s2 = sld [smem:[#allocation0]]
  $region37: #{discriminator_forward.14} parent=0
    _
  %s4 = ssub.s32 1, %s2
  %s5 = scalar_select 0, %s4, %s2
  loop: start=0, step=1, limit=4
  $region2: #{discriminator_forward.14} parent=0 // loop_pre_header
    _
  $region3: #{discriminator_forward.14} parent=0 // loop_header
    %s7 = sphi 0, %s11
    %p8 = scmp.ge.s32.totalorder %s7, 4
    %s17 = sphi 0, %s19
    %s20 = sphi 0, %s17
    %s21 = sphi 0, %s20
    %s37 = sphi 0, %s21
    %s43 = sphi 0, %s45
    %s46 = sphi 0, %s43
    %s47 = sphi 0, %s46
    %s63 = sphi 0, %s47
  $region4: #{discriminator_forward.14} parent=0 // loop_header_branch
    %10 = sbr.rel (%p8) target = $region8
  $region5: #{discriminator_forward.14} parent=0 // loop_body
    %s12 = ssub.s32 %s7, 1
    %s13 = ssub.s32 %s7, 2
    %s14 = sadd.s32 %s7, 1
    %s15 = ssub.s32 %s7, %s14
    %p16 = scmp.eq.s32.totalorder %s15, 0
    %s18 = sadd.s32 %s17, 1
    %s19 = scalar_select %p16, %s17, %s18
    %p22 = pneg %p16
    %p23 = scmp.eq.s32.totalorder %s7, 1
    %p24 = por %p22, %p23
    %p25 = scmp.ne.s32.totalorder %s17, %s20
    %p26 = scmp.eq.s32.totalorder %s7, 0
    %p27 = por %p25, %p26
    %p28 = scmp.ne.s32.totalorder %s17, %s20
    %p29 = scmp.eq.s32.totalorder %s12, 1
    %p30 = por %p28, %p29
    %p31 = scmp.ne.s32.totalorder %s20, %s21
    %p32 = scmp.eq.s32.totalorder %s12, 0
    %p33 = por %p31, %p32
    %p34 = scmp.ne.s32.totalorder %s20, %s21
    %p35 = scmp.eq.s32.totalorder %s13, 1
    %p36 = por %p34, %p35
    %p38 = scmp.ne.s32.totalorder %s21, %s37
    %p39 = scmp.eq.s32.totalorder %s13, 0
    %p40 = por %p38, %p39
    %s41 = ssub.s32 %s7, %s14
    %p42 = scmp.eq.s32.totalorder %s41, 0
    %s44 = sadd.s32 %s43, 1
    %s45 = scalar_select %p42, %s43, %s44
    %p48 = pneg %p42
    %p49 = scmp.eq.s32.totalorder %s7, 1
    %p50 = por %p48, %p49
    %p51 = scmp.ne.s32.totalorder %s43, %s46
    %p52 = scmp.eq.s32.totalorder %s7, 0
    %p53 = por %p51, %p52
    %p54 = scmp.ne.s32.totalorder %s43, %s46
    %p55 = scmp.eq.s32.totalorder %s12, 1
    %p56 = por %p54, %p55
    %p57 = scmp.ne.s32.totalorder %s46, %s47
    %p58 = scmp.eq.s32.totalorder %s12, 0
    %p59 = por %p57, %p58
    %p60 = scmp.ne.s32.totalorder %s46, %s47
    %p61 = scmp.eq.s32.totalorder %s13, 1
    %p62 = por %p60, %p61
    %p64 = scmp.ne.s32.totalorder %s47, %s63
    %p65 = scmp.eq.s32.totalorder %s13, 0
    %p66 = por %p64, %p65
    %p67 = scmp.le.s32.totalorder 1, %s7
    %p68 = scmp.lt.s32.totalorder %s7, 3
    %p69 = pnand %p67, %p68
    %p70 = pneg %p69
    // Predicated region
    $region9: #{discriminator_forward.14} parent=5 // pred_check
      _
    $region10: #{discriminator_forward.14} parent=5 // pred_check_branch
      %72 = sbr.rel (%p69) target = $region12
    $region11: #{discriminator_forward.14} parent=5 // pred_region
      %s73 = ssub.s32 %s7, 1
    $region12: #{discriminator_forward.14} parent=5 // pred_fallthru
      _
    %p74 = scmp.lt.s32.totalorder %s7, 2
    // Predicated region
    $region13: #{discriminator_forward.14} parent=5 // pred_check
      %p75 = pneg %p74
    $region14: #{discriminator_forward.14} parent=5 // pred_check_branch
      %77 = sbr.rel (%p75) target = $region16
    $region15: #{discriminator_forward.14} parent=5 // pred_region
      // Predicated region
      $region17: #{discriminator_forward.14} parent=15 // pred_check
        %p78 = pneg %p27
      $region18: #{discriminator_forward.14} parent=15 // pred_check_branch
        %80 = sbr.rel (%p78) target = $region20
      $region19: #{discriminator_forward.14} parent=15 // pred_region
        %p81 = scmp.lt.s32.totalorder %s7, 1
        %s82 = scalar_select %p81, %s7, 1
        %s83 = smul.addr %s82, 4
        %s84 = smul.addr %s83, 4
        %s85 = scalar_lea.vmem %s0, %s84
      $region20: #{discriminator_forward.14} parent=15 // pred_fallthru
        _
    $region16: #{discriminator_forward.14} parent=5 // pred_fallthru
      _
    %p86 = scmp.le.s32.totalorder 1, %s7
    %p87 = scmp.lt.s32.totalorder %s7, 3
    %p88 = pnand %p86, %p87
    %p89 = pneg %p88
    // Predicated region
    $region21: #{discriminator_forward.14} parent=5 // pred_check
      _
    $region22: #{discriminator_forward.14} parent=5 // pred_check_branch
      %91 = sbr.rel (%p88) target = $region24
    $region23: #{discriminator_forward.14} parent=5 // pred_region
      %s92 = ssub.s32 %s7, 1
      %p93 = scmp.lt.s32.totalorder %s12, 1
      %s94 = scalar_select %p93, %s12, 1
      %s95 = smul.addr %s94, 4
      %s96 = smul.addr %s95, 4
      %s97 = scalar_lea.vmem %s0, %s96
      %p98 = pneg %p33
      %p99 = pneg %p30
      %p100 = pneg %p59
      %p101 = pneg %p56
      %p102 = scmp.lt.s32.totalorder %s12, 1
      %s103 = scalar_select %p102, %s12, 1
      %s104 = smul.addr %s103, 4
      %s105 = smul.addr %s104, 2
      %s106 = scalar_lea.vmem %s1, %s105
      %p107 = scmp.lt.s32.totalorder %s12, 1
      %s108 = scalar_select %p107, %s12, 1
      %s109 = smul.addr %s108, 4
      %s110 = smul.addr %s109, 4
      %s111 = scalar_lea.vmem %s0, %s110
      %p112 = scmp.lt.s32.totalorder %s12, 1
      %s113 = scalar_select %p112, %s12, 1
      %s114 = smul.addr %s113, 4
      %s115 = smul.addr %s114, 2
      %s116 = scalar_lea.vmem %s1, %s115
      %v117 = vld [vmem:[%s111] sm:$0xff]
      %v118 = vld [vmem:[%s111 + $0x8] sm:$0xff]
      %v121 = vcombine.high %v117, %v117
      %v122 = vcombine.high %v118, %v118
      %vm125 = vcmask 1043456
      %v126 = vsel %vm125, %v117, 0.0
      %v127 = vrot.slane %v126, 4
      %v128 = vadd.f32 %v126, %v127
      %v129 = vrot.slane %v128, 2
      %v130 = vadd.f32 %v128, %v129
      %v131 = vrot.slane %v130, 1
      %v132 = vadd.f32 %v130, %v131
      %v133 = vsel %vm125, %v121, 0.0
      %v134 = vrot.slane %v133, 4
      %v135 = vadd.f32 %v133, %v134
      %v136 = vrot.slane %v135, 2
      %v137 = vadd.f32 %v135, %v136
      %v138 = vrot.slane %v137, 1
      %v139 = vadd.f32 %v137, %v138
      %v140 = vsel %vm125, %v118, 0.0
      %v141 = vrot.slane %v140, 4
      %v142 = vadd.f32 %v140, %v141
      %v143 = vrot.slane %v142, 2
      %v144 = vadd.f32 %v142, %v143
      %v145 = vrot.slane %v144, 1
      %v146 = vadd.f32 %v144, %v145
      %v147 = vsel %vm125, %v122, 0.0
      %v148 = vrot.slane %v147, 4
      %v149 = vadd.f32 %v147, %v148
      %v150 = vrot.slane %v149, 2
      %v151 = vadd.f32 %v149, %v150
      %v152 = vrot.slane %v151, 1
      %v153 = vadd.f32 %v151, %v152
      %v154 = vmul.f32 %v117, %v117
      %v155 = vmul.f32 %v118, %v118
      %v158 = vcombine.high %v154, %v154
      %v159 = vcombine.high %v155, %v155
      %v162 = vsel %vm125, %v154, 0.0
      %v163 = vrot.slane %v162, 4
      %v164 = vadd.f32 %v162, %v163
      %v165 = vrot.slane %v164, 2
      %v166 = vadd.f32 %v164, %v165
      %v167 = vrot.slane %v166, 1
      %v168 = vadd.f32 %v166, %v167
      %v169 = vsel %vm125, %v158, 0.0
      %v170 = vrot.slane %v169, 4
      %v171 = vadd.f32 %v169, %v170
      %v172 = vrot.slane %v171, 2
      %v173 = vadd.f32 %v171, %v172
      %v174 = vrot.slane %v173, 1
      %v175 = vadd.f32 %v173, %v174
      %v176 = vsel %vm125, %v155, 0.0
      %v177 = vrot.slane %v176, 4
      %v178 = vadd.f32 %v176, %v177
      %v179 = vrot.slane %v178, 2
      %v180 = vadd.f32 %v178, %v179
      %v181 = vrot.slane %v180, 1
      %v182 = vadd.f32 %v180, %v181
      %v183 = vsel %vm125, %v159, 0.0
      %v184 = vrot.slane %v183, 4
      %v185 = vadd.f32 %v183, %v184
      %v186 = vrot.slane %v185, 2
      %v187 = vadd.f32 %v185, %v186
      %v188 = vrot.slane %v187, 1
      %v189 = vadd.f32 %v187, %v188
      %v190 = vmul.f32 %v132, 0.25
      %v191 = vmul.f32 %v139, 0.25
      %v192 = vmul.f32 %v146, 0.25
      %v193 = vmul.f32 %v153, 0.25
      %v194 = vmul.f32 %v168, 0.25
      %v195 = vmul.f32 %v175, 0.25
      %v196 = vmul.f32 %v182, 0.25
      %v197 = vmul.f32 %v189, 0.25
      %v198 = vmul.f32 %v190, %v190
      %v199 = vmul.f32 %v191, %v191
      %v200 = vmul.f32 %v192, %v192
      %v201 = vmul.f32 %v193, %v193
      %v202 = vsub.f32 %v194, %v198
      %v203 = vsub.f32 %v195, %v199
      %v204 = vsub.f32 %v196, %v200
      %v205 = vsub.f32 %v197, %v201
      %v206 = vmax.f32 %v202, 0.0
      %v207 = vmax.f32 %v203, 0.0
      %v208 = vmax.f32 %v204, 0.0
      %v209 = vmax.f32 %v205, 0.0
      %v214 = vcombine.low %v190, %v191
      %v215 = vcombine.low %v192, %v193
      %v218 = vsub.f32 %v117, %v214
      %v219 = vsub.f32 %v118, %v215
      %v220 = vadd.f32 %v206, 1e-05
      %v221 = vadd.f32 %v207, 1e-05
      %v222 = vadd.f32 %v208, 1e-05
      %v223 = vadd.f32 %v209, 1e-05
      %v224 = vrsqrt.pop %v220
      %v225 = vrsqrt.pop %v221
      %v226 = vrsqrt.pop %v222
      %v227 = vrsqrt.pop %v223
      %v232 = vcombine.low %v224, %v225
      %v233 = vcombine.low %v226, %v227
      %v236 = vmul.f32 %v218, %v232
      %v237 = vmul.f32 %v219, %v233
      %vm238 = vcmp.ge.f32.partialorder %v236, 0.0
      %vm239 = vcmp.ge.f32.partialorder %v237, 0.0
      %v240 = vmul.f32 %v236, 0.2
      %v241 = vmul.f32 %v237, 0.2
      %v242 = vsel %vm238, %v236, %v240
      %v243 = vsel %vm239, %v237, %v241
      %v246 = vcombine.high %v242, %v242
      %v247 = vcombine.high %v243, %v243
      %v250 = vpack.c.bf16 %v242, %v242
      %v251 = vpack.c.bf16 %v246, %v246
      %v252 = vpack.c.bf16 %v243, %v243
      %v253 = vpack.c.bf16 %v247, %v247
      %v258 = vcombine.low %v250, %v251
      %v259 = vcombine.low %v252, %v253
      %v261 = vunpack.c.l.s4 1983009808
      %v262 = vunpack.c.0.s8 %v261
      %v263 = vlaneseq
      %v264 = vshrl.u32 %v263, 7
      %v265 = vsub.s32 %v262, %v264
      %v266 = vrot.slane %v258, %v265
      %v268 = vunpack.c.l.s4 1983009808
      %v269 = vunpack.c.0.s8 %v268
      %v270 = vlaneseq
      %v271 = vshrl.u32 %v270, 7
      %v272 = vsub.s32 %v269, %v271
      %v273 = vrot.slane %v259, %v272
      %v274 = vcombine.low %v266, %v273
      %276 = vst [vmem:[%s116] sm:$0xff] %v274
      %p277 = scmp.lt.s32.totalorder %s12, 1
      %s278 = scalar_select %p277, %s12, 1
      %s279 = smul.addr %s278, 4
      %s280 = smul.addr %s279, 2
      %s281 = scalar_lea.vmem %s1, %s280
      // Predicated region
      $region25: #{discriminator_forward.14} parent=23 // pred_check
        %p282 = pneg %p56
      $region26: #{discriminator_forward.14} parent=23 // pred_check_branch
        %284 = sbr.rel (%p282) target = $region28
      $region27: #{discriminator_forward.14} parent=23 // pred_region
        _
      $region28: #{discriminator_forward.14} parent=23 // pred_fallthru
        _
    $region24: #{discriminator_forward.14} parent=5 // pred_fallthru
      _
    %p285 = scmp.le.s32.totalorder 2, %s7
    // Predicated region
    $region29: #{discriminator_forward.14} parent=5 // pred_check
      %p286 = pneg %p285
    $region30: #{discriminator_forward.14} parent=5 // pred_check_branch
      %288 = sbr.rel (%p286) target = $region32
    $region31: #{discriminator_forward.14} parent=5 // pred_region
      %s289 = ssub.s32 %s7, 2
      // Predicated region
      $region33: #{discriminator_forward.14} parent=31 // pred_check
        %p290 = pneg %p62
      $region34: #{discriminator_forward.14} parent=31 // pred_check_branch
        %292 = sbr.rel (%p290) target = $region36
      $region35: #{discriminator_forward.14} parent=31 // pred_region
        %p293 = scmp.lt.s32.totalorder %s13, 1
        %s294 = scalar_select %p293, %s13, 1
        %s295 = smul.addr %s294, 4
        %s296 = smul.addr %s295, 2
        %s297 = scalar_lea.vmem %s1, %s296
      $region36: #{discriminator_forward.14} parent=31 // pred_fallthru
        _
    $region32: #{discriminator_forward.14} parent=5 // pred_fallthru
      _
  $region6: #{discriminator_forward.14} parent=0 // loop_footer
    %s11 = sadd.s32 1, %s7
  $region7: #{discriminator_forward.14} parent=0 // loop_footer_branch
    %6 = sbr.rel target = $region3
  $region8: #{discriminator_forward.14} parent=0 // loop_exit
    _

// kernel: discriminator_forward.15
$region0: #{discriminator_forward.15}
  #allocation0 [shape = 'u32[]', space=smem, size = 0x4, offset = 0x4, fixed_abs, tag = 'smem constant byte address 0x4 - core index']
  #allocation1 [shape = 'u32[144,128]{1,0:T(1,128)}', space=vmem, size = 0x12000, scoped, tag = 'internal scratch']
  %s0 = inlined_call_operand.vmem [shape: bf16[16,8192], index: 0, kind: input, shape index: {}]
  %s1 = inlined_call_operand.vmem [shape: bf16[8192,128], index: 1, kind: input, shape index: {}]
  %s2 = inlined_call_operand.vmem [shape: f32[1,128], index: 2, kind: input, shape index: {}]
  %s3 = inlined_call_operand.vmem [shape: f32[16,128], index: 3, kind: output, shape index: {}]
  %s4 = sld [smem:[#allocation0]]
  $region76: #{discriminator_forward.15} parent=0
    _
  %s6 = ssub.s32 1, %s4
  %s7 = scalar_select 0, %s6, %s4
  $region1: #{discriminator_forward.15} parent=0
    #allocation2 [shape = 'u8[131072]{0}', space=vmem, size = 0x20000, scoped, tag = 'input window, operand 0']
    loop: start=0, step=1, limit=6
    $region2: #{discriminator_forward.15} parent=1 // loop_pre_header
      _
    $region3: #{discriminator_forward.15} parent=1 // loop_header
      %s9 = sphi 0, %s13
      %p10 = scmp.ge.s32.totalorder %s9, 6
      %s16 = sphi 0, %s35
      %s17 = sphi 0, %s31
      %s18 = sphi 0, %s27
      %s19 = sphi 0, %s16
      %s20 = sphi 0, %s17
      %s21 = sphi 0, %s18
      %s22 = sphi 0, %s19
      %s23 = sphi 0, %s20
      %s24 = sphi 0, %s21
      %s40 = sphi 0, %s42
      %s43 = sphi 0, %s40
      %s44 = sphi 0, %s43
      %s60 = sphi 0, %s44
      %s68 = sphi 0, %s70
      %s71 = sphi 0, %s68
      %s72 = sphi 0, %s71
      %s88 = sphi 0, %s72
      %s94 = sphi 0, %s96
      %s97 = sphi 0, %s94
      %s98 = sphi 0, %s97
      %s114 = sphi 0, %s98
      %s122 = sphi 0, %s124
      %s125 = sphi 0, %s122
      %s126 = sphi 0, %s125
      %s142 = sphi 0, %s126
    $region4: #{discriminator_forward.15} parent=1 // loop_header_branch
      %12 = sbr.rel (%p10) target = $region8
    $region5: #{discriminator_forward.15} parent=1 // loop_body
      %s14 = ssub.s32 %s9, 1
      %s15 = ssub.s32 %s9, 2
      %s25 = sadd.s32 1, %s18
      %p26 = scmp.ge.s32.totalorder %s25, 4
      %s27 = scalar_select %p26, 0, %s25
      %s28 = sadd.s32 1, %s17
      %s29 = scalar_select %p26, %s28, %s17
      %p30 = scmp.ge.s32.totalorder %s29, 1
      %s31 = scalar_select %p30, 0, %s29
      %s32 = sadd.s32 1, %s16
      %s33 = scalar_select %p30, %s32, %s16
      %p34 = scmp.ge.s32.totalorder %s33, 1
      %s35 = scalar_select %p34, 0, %s33
      %s36 = ssub.s32 %s16, %s35
      %s37 = ssub.s32 %s18, %s27
      %s38 = sor.u32 %s36, %s37
      %p39 = scmp.eq.s32.totalorder %s38, 0
      %s41 = sadd.s32 %s40, 1
      %s42 = scalar_select %p39, %s40, %s41
      %p45 = pneg %p39
      %p46 = scmp.eq.s32.totalorder %s9, 3
      %p47 = por %p45, %p46
      %p48 = scmp.ne.s32.totalorder %s40, %s43
      %p49 = scmp.eq.s32.totalorder %s9, 0
      %p50 = por %p48, %p49
      %p51 = scmp.ne.s32.totalorder %s40, %s43
      %p52 = scmp.eq.s32.totalorder %s14, 3
      %p53 = por %p51, %p52
      %p54 = scmp.ne.s32.totalorder %s43, %s44
      %p55 = scmp.eq.s32.totalorder %s14, 0
      %p56 = por %p54, %p55
      %p57 = scmp.ne.s32.totalorder %s43, %s44
      %p58 = scmp.eq.s32.totalorder %s15, 3
      %p59 = por %p57, %p58
      %p61 = scmp.ne.s32.totalorder %s44, %s60
      %p62 = scmp.eq.s32.totalorder %s15, 0
      %p63 = por %p61, %p62
      %s64 = ssub.s32 %s18, %s27
      %s65 = ssub.s32 %s17, %s31
      %s66 = sor.u32 %s64, %s65
      %p67 = scmp.eq.s32.totalorder %s66, 0
      %s69 = sadd.s32 %s68, 1
      %s70 = scalar_select %p67, %s68, %s69
      %p73 = pneg %p67
      %p74 = scmp.eq.s32.totalorder %s9, 3
      %p75 = por %p73, %p74
      %p76 = scmp.ne.s32.totalorder %s68, %s71
      %p77 = scmp.eq.s32.totalorder %s9, 0
      %p78 = por %p76, %p77
      %p79 = scmp.ne.s32.totalorder %s68, %s71
      %p80 = scmp.eq.s32.totalorder %s14, 3
      %p81 = por %p79, %p80
      %p82 = scmp.ne.s32.totalorder %s71, %s72
      %p83 = scmp.eq.s32.totalorder %s14, 0
      %p84 = por %p82, %p83
      %p85 = scmp.ne.s32.totalorder %s71, %s72
      %p86 = scmp.eq.s32.totalorder %s15, 3
      %p87 = por %p85, %p86
      %p89 = scmp.ne.s32.totalorder %s72, %s88
      %p90 = scmp.eq.s32.totalorder %s15, 0
      %p91 = por %p89, %p90
      %s92 = ssub.s32 %s17, %s31
      %p93 = scmp.eq.s32.totalorder %s92, 0
      %s95 = sadd.s32 %s94, 1
      %s96 = scalar_select %p93, %s94, %s95
      %p99 = pneg %p93
      %p100 = scmp.eq.s32.totalorder %s9, 3
      %p101 = por %p99, %p100
      %p102 = scmp.ne.s32.totalorder %s94, %s97
      %p103 = scmp.eq.s32.totalorder %s9, 0
      %p104 = por %p102, %p103
      %p105 = scmp.ne.s32.totalorder %s94, %s97
      %p106 = scmp.eq.s32.totalorder %s14, 3
      %p107 = por %p105, %p106
      %p108 = scmp.ne.s32.totalorder %s97, %s98
      %p109 = scmp.eq.s32.totalorder %s14, 0
      %p110 = por %p108, %p109
      %p111 = scmp.ne.s32.totalorder %s97, %s98
      %p112 = scmp.eq.s32.totalorder %s15, 3
      %p113 = por %p111, %p112
      %p115 = scmp.ne.s32.totalorder %s98, %s114
      %p116 = scmp.eq.s32.totalorder %s15, 0
      %p117 = por %p115, %p116
      %s118 = ssub.s32 %s16, %s35
      %s119 = ssub.s32 %s17, %s31
      %s120 = sor.u32 %s118, %s119
      %p121 = scmp.eq.s32.totalorder %s120, 0
      %s123 = sadd.s32 %s122, 1
      %s124 = scalar_select %p121, %s122, %s123
      %p127 = pneg %p121
      %p128 = scmp.eq.s32.totalorder %s9, 3
      %p129 = por %p127, %p128
      %p130 = scmp.ne.s32.totalorder %s122, %s125
      %p131 = scmp.eq.s32.totalorder %s9, 0
      %p132 = por %p130, %p131
      %p133 = scmp.ne.s32.totalorder %s122, %s125
      %p134 = scmp.eq.s32.totalorder %s14, 3
      %p135 = por %p133, %p134
      %p136 = scmp.ne.s32.totalorder %s125, %s126
      %p137 = scmp.eq.s32.totalorder %s14, 0
      %p138 = por %p136, %p137
      %p139 = scmp.ne.s32.totalorder %s125, %s126
      %p140 = scmp.eq.s32.totalorder %s15, 3
      %p141 = por %p139, %p140
      %p143 = scmp.ne.s32.totalorder %s126, %s142
      %p144 = scmp.eq.s32.totalorder %s15, 0
      %p145 = por %p143, %p144
      %p146 = scmp.le.s32.totalorder 1, %s9
      %p147 = scmp.lt.s32.totalorder %s9, 5
      %p148 = pnand %p146, %p147
      %p149 = pneg %p148
      // Predicated region
      $region9: #{discriminator_forward.15} parent=5 // pred_check
        _
      $region10: #{discriminator_forward.15} parent=5 // pred_check_branch
        %151 = sbr.rel (%p148) target = $region12
      $region11: #{discriminator_forward.15} parent=5 // pred_region
        %s152 = ssub.s32 %s9, 1
        // Predicated region
        $region13: #{discriminator_forward.15} parent=11 // pred_check
          %p153 = pneg %p110
        $region14: #{discriminator_forward.15} parent=11 // pred_check_branch
          %155 = sbr.rel (%p153) target = $region16
        $region15: #{discriminator_forward.15} parent=11 // pred_region
          %p156 = scmp.lt.s32.totalorder %s20, 0
          %s157 = scalar_select %p156, %s20, 0
          %s158 = scalar_lea.vmem %s2, %s157
        $region16: #{discriminator_forward.15} parent=11 // pred_fallthru
          _
      $region12: #{discriminator_forward.15} parent=5 // pred_fallthru
        _
      %p159 = scmp.lt.s32.totalorder %s9, 4
      // Predicated region
      $region17: #{discriminator_forward.15} parent=5 // pred_check
        %p160 = pneg %p159
      $region18: #{discriminator_forward.15} parent=5 // pred_check_branch
        %162 = sbr.rel (%p160) target = $region20
      $region19: #{discriminator_forward.15} parent=5 // pred_region
        // Predicated region
        $region21: #{discriminator_forward.15} parent=19 // pred_check
          %p163 = pneg %p50
        $region22: #{discriminator_forward.15} parent=19 // pred_check_branch
          %165 = sbr.rel (%p163) target = $region24
        $region23: #{discriminator_forward.15} parent=19 // pred_region
          %s166 = sand.u32 %s40, 1
          %s167 = sand.u32 %s40, 1
          %s168 = smul.addr %s167, 128
          %s169 = scalar_lea.vmem [#allocation2], %s168
          %s170 = smul.u32 2, %s16
          %s171 = smul.u32 16, %s18
          %s172 = smul.addr %s170, 64
          %s173 = sadd.s32 %s171, %s172
          %s174 = smul.addr %s173, 4
          %s175 = scalar_lea.vmem %s0, %s174
          // Predicated region
          $region25: #{discriminator_forward.15} parent=23 // pred_check
            _
          $region26: #{discriminator_forward.15} parent=23 // pred_check_branch
            %177 = sbr.rel (0) target = $region28
          $region27: #{discriminator_forward.15} parent=23 // pred_region
            // Predicated region
            $region29: #{discriminator_forward.15} parent=27 // pred_check
              _
            $region30: #{discriminator_forward.15} parent=27 // pred_check_branch
              %179 = sbr.rel (0) target = $region32
            $region31: #{discriminator_forward.15} parent=27 // pred_region
              loop: start=0, step=1, limit=1
              $region33: #{discriminator_forward.15} parent=31 // loop_pre_header
                _
              $region34: #{discriminator_forward.15} parent=31 // loop_header
                %s181 = sphi 0, %s185
                %p182 = scmp.ge.s32.totalorder %s181, 1
                %s186 = sphi %s175, %s175
                %s187 = sphi %s169, %s169
              $region35: #{discriminator_forward.15} parent=31 // loop_header_branch
                %184 = sbr.rel (%p182) target = $region39
              $region36: #{discriminator_forward.15} parent=31 // loop_body
                %v188 = vld [vmem:[%s186] sm:$0xff]
                %189 = vst [vmem:[%s187] sm:$0xff] %v188
                %v190 = vld [vmem:[%s186 + $0x8] sm:$0xff]
                %191 = vst [vmem:[%s187 + $0x8] sm:$0xff] %v190
                %v192 = vld [vmem:[%s186 + $0x10] sm:$0xff]
                %193 = vst [vmem:[%s187 + $0x10] sm:$0xff] %v192
                %v194 = vld [vmem:[%s186 + $0x18] sm:$0xff]
                %195 = vst [vmem:[%s187 + $0x18] sm:$0xff] %v194
                %v196 = vld [vmem:[%s186 + $0x20] sm:$0xff]
                %197 = vst [vmem:[%s187 + $0x20] sm:$0xff] %v196
                %v198 = vld [vmem:[%s186 + $0x28] sm:$0xff]
                %199 = vst [vmem:[%s187 + $0x28] sm:$0xff] %v198
                %v200 = vld [vmem:[%s186 + $0x30] sm:$0xff]
                %201 = vst [vmem:[%s187 + $0x30] sm:$0xff] %v200
                %v202 = vld [vmem:[%s186 + $0x38] sm:$0xff]
                %203 = vst [vmem:[%s187 + $0x38] sm:$0xff] %v202
                %v204 = vld [vmem:[%s186 + $0x100] sm:$0xff]
                %205 = vst [vmem:[%s187 + $0x40] sm:$0xff] %v204
                %v206 = vld [vmem:[%s186 + $0x108] sm:$0xff]
                %207 = vst [vmem:[%s187 + $0x48] sm:$0xff] %v206
                %v208 = vld [vmem:[%s186 + $0x110] sm:$0xff]
                %209 = vst [vmem:[%s187 + $0x50] sm:$0xff] %v208
                %v210 = vld [vmem:[%s186 + $0x118] sm:$0xff]
                %211 = vst [vmem:[%s187 + $0x58] sm:$0xff] %v210
                %v212 = vld [vmem:[%s186 + $0x120] sm:$0xff]
                %213 = vst [vmem:[%s187 + $0x60] sm:$0xff] %v212
                %v214 = vld [vmem:[%s186 + $0x128] sm:$0xff]
                %215 = vst [vmem:[%s187 + $0x68] sm:$0xff] %v214
                %v216 = vld [vmem:[%s186 + $0x130] sm:$0xff]
                %217 = vst [vmem:[%s187 + $0x70] sm:$0xff] %v216
                %v218 = vld [vmem:[%s186 + $0x138] sm:$0xff]
                %219 = vst [vmem:[%s187 + $0x78] sm:$0xff] %v218
              $region37: #{discriminator_forward.15} parent=31 // loop_footer
                %s185 = sadd.s32 1, %s181
              $region38: #{discriminator_forward.15} parent=31 // loop_footer_branch
                %180 = sbr.rel target = $region34
              $region39: #{discriminator_forward.15} parent=31 // loop_exit
                _
            $region32: #{discriminator_forward.15} parent=27 // pred_fallthru
              _
            // Predicated region
            $region40: #{discriminator_forward.15} parent=27 // pred_check
              _
            $region41: #{discriminator_forward.15} parent=27 // pred_check_branch
              %221 = sbr.rel target = $region43
            $region42: #{discriminator_forward.15} parent=27 // pred_region
              _
            $region43: #{discriminator_forward.15} parent=27 // pred_fallthru
              _
          $region28: #{discriminator_forward.15} parent=23 // pred_fallthru
            _
          %222 = vnop
        $region24: #{discriminator_forward.15} parent=19 // pred_fallthru
          _
        // Predicated region
        $region44: #{discriminator_forward.15} parent=19 // pred_check
          %p223 = pneg %p78
        $region45: #{discriminator_forward.15} parent=19 // pred_check_branch
          %225 = sbr.rel (%p223) target = $region47
        $region46: #{discriminator_forward.15} parent=19 // pred_region
          %s226 = smul.u32 256, %s18
          %p227 = scmp.lt.s32.totalorder %s226, 1023
          %s228 = scalar_select %p227, %s226, 1023
          %p229 = scmp.lt.s32.totalorder %s17, 0
          %s230 = scalar_select %p229, %s17, 0
          %s231 = sadd.s32 %s230, %s228
          %s232 = smul.addr %s231, 4
          %s233 = scalar_lea.vmem %s1, %s232
          %s234 = smul.u32 256, %s18
        $region47: #{discriminator_forward.15} parent=19 // pred_fallthru
          _
      $region20: #{discriminator_forward.15} parent=5 // pred_fallthru
        _
      %p235 = scmp.le.s32.totalorder 1, %s9
      %p236 = scmp.lt.s32.totalorder %s9, 5
      %p237 = pnand %p235, %p236
      %p238 = pneg %p237
      // Predicated region
      $region48: #{discriminator_forward.15} parent=5 // pred_check
        _
      $region49: #{discriminator_forward.15} parent=5 // pred_check_branch
        %240 = sbr.rel (%p237) target = $region51
      $region50: #{discriminator_forward.15} parent=5 // pred_region
        %s241 = ssub.s32 %s9, 1
        %s242 = sand.u32 %s43, 1
        %s243 = sand.u32 %s43, 1
        %s244 = smul.addr %s243, 128
        %s245 = scalar_lea.vmem [#allocation2], %s244
        // Predicated region
        $region52: #{discriminator_forward.15} parent=50 // pred_check
          %p246 = pneg %p56
        $region53: #{discriminator_forward.15} parent=50 // pred_check_branch
          %248 = sbr.rel (%p246) target = $region55
        $region54: #{discriminator_forward.15} parent=50 // pred_region
          _
        $region55: #{discriminator_forward.15} parent=50 // pred_fallthru
          _
        %s249 = sand.u32 %s43, 1
        %s250 = sand.u32 %s43, 1
        %s251 = smul.addr %s250, 128
        %s252 = scalar_lea.vmem [#allocation2], %s251
        %p253 = pneg %p56
        %p254 = pneg %p53
        %s255 = smul.u32 256, %s21
        %p256 = scmp.lt.s32.totalorder %s255, 1023
        %s257 = scalar_select %p256, %s255, 1023
        %p258 = scmp.lt.s32.totalorder %s20, 0
        %s259 = scalar_select %p258, %s20, 0
        %s260 = sadd.s32 %s259, %s257
        %s261 = smul.addr %s260, 4
        %s262 = scalar_lea.vmem %s1, %s261
        %p263 = pneg %p84
        %p264 = pneg %p81
        %p265 = scmp.lt.s32.totalorder %s20, 0
        %s266 = scalar_select %p265, %s20, 0
        %s267 = scalar_lea.vmem %s2, %s266
        %p268 = pneg %p110
        %p269 = pneg %p107
        %p270 = pneg %p138
        %p271 = pneg %p135
        %s272 = smul.u32 2, %s19
        %p273 = scmp.lt.s32.totalorder %s272, 1
        %s274 = scalar_select %p273, %s272, 1
        %p275 = scmp.lt.s32.totalorder %s20, 0
        %s276 = scalar_select %p275, %s20, 0
        %s277 = sadd.s32 %s276, %s274
        %s278 = smul.addr %s277, 8
        %s279 = scalar_lea.vmem %s3, %s278
        %s280 = smul.u32 2, %s19
        %s281 = smul.u32 16, %s21
        %s282 = smul.u32 256, %s21
        %p283 = scmp.lt.s32.totalorder %s282, 1023
        %s284 = scalar_select %p283, %s282, 1023
        %p285 = scmp.lt.s32.totalorder %s20, 0
        %s286 = scalar_select %p285, %s20, 0
        %s287 = sadd.s32 %s286, %s284
        %s288 = smul.addr %s287, 4
        %s289 = scalar_lea.vmem %s1, %s288
        %s290 = smul.u32 256, %s21
        %p291 = scmp.lt.s32.totalorder %s20, 0
        %s292 = scalar_select %p291, %s20, 0
        %s293 = scalar_lea.vmem %s2, %s292
        %s294 = smul.u32 2, %s19
        %p295 = scmp.lt.s32.totalorder %s294, 1
        %s296 = scalar_select %p295, %s294, 1
        %p297 = scmp.lt.s32.totalorder %s20, 0
        %s298 = scalar_select %p297, %s20, 0
        %s299 = sadd.s32 %s298, %s296
        %s300 = smul.addr %s299, 8
        %s301 = scalar_lea.vmem %s3, %s300
        %s302 = smul.u32 2, %s19
        %p304 = scmp.eq.s32.totalorder %s21, 0
        // Predicated region
        $region56: #{discriminator_forward.15} parent=50 // pred_check
          %p305 = pneg %p304
        $region57: #{discriminator_forward.15} parent=50 // pred_check_branch
          %307 = sbr.rel (%p305) target = $region59
        $region58: #{discriminator_forward.15} parent=50 // pred_region
          %308 = vst [vmem:[%s301] sm:$0xff] 0.0
          %309 = vst [vmem:[%s301 + $0x8] sm:$0xff] 0.0
        $region59: #{discriminator_forward.15} parent=50 // pred_fallthru
          _
        %v310 = vld [vmem:[%s301] sm:$0xff]
        %v311 = vld [vmem:[%s301 + $0x8] sm:$0xff]
        %v312 = vld [vmem:[%s245] sm:$0xff]
        %v313 = vld [vmem:[%s245 + $0x8] sm:$0xff]
        %v314 = vld [vmem:[%s245 + $0x10] sm:$0xff]
        %v315 = vld [vmem:[%s245 + $0x18] sm:$0xff]
        %v316 = vld [vmem:[%s245 + $0x20] sm:$0xff]
        %v317 = vld [vmem:[%s245 + $0x28] sm:$0xff]
        %v318 = vld [vmem:[%s245 + $0x30] sm:$0xff]
        %v319 = vld [vmem:[%s245 + $0x38] sm:$0xff]
        %v320 = vld [vmem:[%s245 + $0x40] sm:$0xff]
        %v321 = vld [vmem:[%s245 + $0x48] sm:$0xff]
        %v322 = vld [vmem:[%s245 + $0x50] sm:$0xff]
        %v323 = vld [vmem:[%s245 + $0x58] sm:$0xff]
        %v324 = vld [vmem:[%s245 + $0x60] sm:$0xff]
        %v325 = vld [vmem:[%s245 + $0x68] sm:$0xff]
        %v326 = vld [vmem:[%s245 + $0x70] sm:$0xff]
        %v327 = vld [vmem:[%s245 + $0x78] sm:$0xff]
        %v328 = vld [vmem:[%s289] sm:$0xf]
        %v329 = vld [vmem:[%s289 + $0x4] sm:$0xf]
        %v330 = vld [vmem:[%s289 + $0x8] sm:$0xf]
        %v331 = vld [vmem:[%s289 + $0xc] sm:$0xf]
        %v332 = vld [vmem:[%s289 + $0x10] sm:$0xf]
        %v333 = vld [vmem:[%s289 + $0x14] sm:$0xf]
        %v334 = vld [vmem:[%s289 + $0x18] sm:$0xf]
        %v335 = vld [vmem:[%s289 + $0x1c] sm:$0xf]
        %v336 = vld [vmem:[%s289 + $0x20] sm:$0xf]
        %v337 = vld [vmem:[%s289 + $0x24] sm:$0xf]
        %v338 = vld [vmem:[%s289 + $0x28] sm:$0xf]
        %v339 = vld [vmem:[%s289 + $0x2c] sm:$0xf]
        %v340 = vld [vmem:[%s289 + $0x30] sm:$0xf]
        %v341 = vld [vmem:[%s289 + $0x34] sm:$0xf]
        %v342 = vld [vmem:[%s289 + $0x38] sm:$0xf]
        %v343 = vld [vmem:[%s289 + $0x3c] sm:$0xf]
        %v344 = vld [vmem:[%s289 + $0x40] sm:$0xf]
        %v345 = vld [vmem:[%s289 + $0x44] sm:$0xf]
        %v346 = vld [vmem:[%s289 + $0x48] sm:$0xf]
        %v347 = vld [vmem:[%s289 + $0x4c] sm:$0xf]
        %v348 = vld [vmem:[%s289 + $0x50] sm:$0xf]
        %v349 = vld [vmem:[%s289 + $0x54] sm:$0xf]
        %v350 = vld [vmem:[%s289 + $0x58] sm:$0xf]
        %v351 = vld [vmem:[%s289 + $0x5c] sm:$0xf]
        %v352 = vld [vmem:[%s289 + $0x60] sm:$0xf]
        %v353 = vld [vmem:[%s289 + $0x64] sm:$0xf]
        %v354 = vld [vmem:[%s289 + $0x68] sm:$0xf]
        %v355 = vld [vmem:[%s289 + $0x6c] sm:$0xf]
        %v356 = vld [vmem:[%s289 + $0x70] sm:$0xf]
        %v357 = vld [vmem:[%s289 + $0x74] sm:$0xf]
        %v358 = vld [vmem:[%s289 + $0x78] sm:$0xf]
        %v359 = vld [vmem:[%s289 + $0x7c] sm:$0xf]
        %v360 = vld [vmem:[%s289 + $0x80] sm:$0xf]
        %v361 = vld [vmem:[%s289 + $0x84] sm:$0xf]
        %v362 = vld [vmem:[%s289 + $0x88] sm:$0xf]
        %v363 = vld [vmem:[%s289 + $0x8c] sm:$0xf]
        %v364 = vld [vmem:[%s289 + $0x90] sm:$0xf]
        %v365 = vld [vmem:[%s289 + $0x94] sm:$0xf]
        %v366 = vld [vmem:[%s289 + $0x98] sm:$0xf]
        %v367 = vld [vmem:[%s289 + $0x9c] sm:$0xf]
        %v368 = vld [vmem:[%s289 + $0xa0] sm:$0xf]
        %v369 = vld [vmem:[%s289 + $0xa4] sm:$0xf]
        %v370 = vld [vmem:[%s289 + $0xa8] sm:$0xf]
        %v371 = vld [vmem:[%s289 + $0xac] sm:$0xf]
        %v372 = vld [vmem:[%s289 + $0xb0] sm:$0xf]
        %v373 = vld [vmem:[%s289 + $0xb4] sm:$0xf]
        %v374 = vld [vmem:[%s289 + $0xb8] sm:$0xf]
        %v375 = vld [vmem:[%s289 + $0xbc] sm:$0xf]
        %v376 = vld [vmem:[%s289 + $0xc0] sm:$0xf]
        %v377 = vld [vmem:[%s289 + $0xc4] sm:$0xf]
        %v378 = vld [vmem:[%s289 + $0xc8] sm:$0xf]
        %v379 = vld [vmem:[%s289 + $0xcc] sm:$0xf]
        %v380 = vld [vmem:[%s289 + $0xd0] sm:$0xf]
        %v381 = vld [vmem:[%s289 + $0xd4] sm:$0xf]
        %v382 = vld [vmem:[%s289 + $0xd8] sm:$0xf]
        %v383 = vld [vmem:[%s289 + $0xdc] sm:$0xf]
        %v384 = vld [vmem:[%s289 + $0xe0] sm:$0xf]
        %v385 = vld [vmem:[%s289 + $0xe4] sm:$0xf]
        %v386 = vld [vmem:[%s289 + $0xe8] sm:$0xf]
        %v387 = vld [vmem:[%s289 + $0xec] sm:$0xf]
        %v388 = vld [vmem:[%s289 + $0xf0] sm:$0xf]
        %v389 = vld [vmem:[%s289 + $0xf4] sm:$0xf]
        %v390 = vld [vmem:[%s289 + $0xf8] sm:$0xf]
        %v391 = vld [vmem:[%s289 + $0xfc] sm:$0xf]
        %v392 = vld [vmem:[%s289 + $0x100] sm:$0xf]
        %v393 = vld [vmem:[%s289 + $0x104] sm:$0xf]
        %v394 = vld [vmem:[%s289 + $0x108] sm:$0xf]
        %v395 = vld [vmem:[%s289 + $0x10c] sm:$0xf]
        %v396 = vld [vmem:[%s289 + $0x110] sm:$0xf]
        %v397 = vld [vmem:[%s289 + $0x114] sm:$0xf]
        %v398 = vld [vmem:[%s289 + $0x118] sm:$0xf]
        %v399 = vld [vmem:[%s289 + $0x11c] sm:$0xf]
        %v400 = vld [vmem:[%s289 + $0x120] sm:$0xf]
        %v401 = vld [vmem:[%s289 + $0x124] sm:$0xf]
        %v402 = vld [vmem:[%s289 + $0x128] sm:$0xf]
        %v403 = vld [vmem:[%s289 + $0x12c] sm:$0xf]
        %v404 = vld [vmem:[%s289 + $0x130] sm:$0xf]
        %v405 = vld [vmem:[%s289 + $0x134] sm:$0xf]
        %v406 = vld [vmem:[%s289 + $0x138] sm:$0xf]
        %v407 = vld [vmem:[%s289 + $0x13c] sm:$0xf]
        %v408 = vld [vmem:[%s289 + $0x140] sm:$0xf]
        %v409 = vld [vmem:[%s289 + $0x144] sm:$0xf]
        %v410 = vld [vmem:[%s289 + $0x148] sm:$0xf]
        %v411 = vld [vmem:[%s289 + $0x14c] sm:$0xf]
        %v412 = vld [vmem:[%s289 + $0x150] sm:$0xf]
        %v413 = vld [vmem:[%s289 + $0x154] sm:$0xf]
        %v414 = vld [vmem:[%s289 + $0x158] sm:$0xf]
        %v415 = vld [vmem:[%s289 + $0x15c] sm:$0xf]
        %v416 = vld [vmem:[%s289 + $0x160] sm:$0xf]
        %v417 = vld [vmem:[%s289 + $0x164] sm:$0xf]
        %v418 = vld [vmem:[%s289 + $0x168] sm:$0xf]
        %v419 = vld [vmem:[%s289 + $0x16c] sm:$0xf]
        %v420 = vld [vmem:[%s289 + $0x170] sm:$0xf]
        %v421 = vld [vmem:[%s289 + $0x174] sm:$0xf]
        %v422 = vld [vmem:[%s289 + $0x178] sm:$0xf]
        %v423 = vld [vmem:[%s289 + $0x17c] sm:$0xf]
        %v424 = vld [vmem:[%s289 + $0x180] sm:$0xf]
        %v425 = vld [vmem:[%s289 + $0x184] sm:$0xf]
        %v426 = vld [vmem:[%s289 + $0x188] sm:$0xf]
        %v427 = vld [vmem:[%s289 + $0x18c] sm:$0xf]
        %v428 = vld [vmem:[%s289 + $0x190] sm:$0xf]
        %v429 = vld [vmem:[%s289 + $0x194] sm:$0xf]
        %v430 = vld [vmem:[%s289 + $0x198] sm:$0xf]
        %v431 = vld [vmem:[%s289 + $0x19c] sm:$0xf]
        %v432 = vld [vmem:[%s289 + $0x1a0] sm:$0xf]
        %v433 = vld [vmem:[%s289 + $0x1a4] sm:$0xf]
        %v434 = vld [vmem:[%s289 + $0x1a8] sm:$0xf]
        %v435 = vld [vmem:[%s289 + $0x1ac] sm:$0xf]
        %v436 = vld [vmem:[%s289 + $0x1b0] sm:$0xf]
        %v437 = vld [vmem:[%s289 + $0x1b4] sm:$0xf]
        %v438 = vld [vmem:[%s289 + $0x1b8] sm:$0xf]
        %v439 = vld [vmem:[%s289 + $0x1bc] sm:$0xf]
        %v440 = vld [vmem:[%s289 + $0x1c0] sm:$0xf]
        %v441 = vld [vmem:[%s289 + $0x1c4] sm:$0xf]
        %v442 = vld [vmem:[%s289 + $0x1c8] sm:$0xf]
        %v443 = vld [vmem:[%s289 + $0x1cc] sm:$0xf]
        %v444 = vld [vmem:[%s289 + $0x1d0] sm:$0xf]
        %v445 = vld [vmem:[%s289 + $0x1d4] sm:$0xf]
        %v446 = vld [vmem:[%s289 + $0x1d8] sm:$0xf]
        %v447 = vld [vmem:[%s289 + $0x1dc] sm:$0xf]
        %v448 = vld [vmem:[%s289 + $0x1e0] sm:$0xf]
        %v449 = vld [vmem:[%s289 + $0x1e4] sm:$0xf]
        %v450 = vld [vmem:[%s289 + $0x1e8] sm:$0xf]
        %v451 = vld [vmem:[%s289 + $0x1ec] sm:$0xf]
        %v452 = vld [vmem:[%s289 + $0x1f0] sm:$0xf]
        %v453 = vld [vmem:[%s289 + $0x1f4] sm:$0xf]
        %v454 = vld [vmem:[%s289 + $0x1f8] sm:$0xf]
        %v455 = vld [vmem:[%s289 + $0x1fc] sm:$0xf]
        %v456 = vld [vmem:[%s289 + $0x200] sm:$0xf]
        %v457 = vld [vmem:[%s289 + $0x204] sm:$0xf]
        %v458 = vld [vmem:[%s289 + $0x208] sm:$0xf]
        %v459 = vld [vmem:[%s289 + $0x20c] sm:$0xf]
        %v460 = vld [vmem:[%s289 + $0x210] sm:$0xf]
        %v461 = vld [vmem:[%s289 + $0x214] sm:$0xf]
        %v462 = vld [vmem:[%s289 + $0x218] sm:$0xf]
        %v463 = vld [vmem:[%s289 + $0x21c] sm:$0xf]
        %v464 = vld [vmem:[%s289 + $0x220] sm:$0xf]
        %v465 = vld [vmem:[%s289 + $0x224] sm:$0xf]
        %v466 = vld [vmem:[%s289 + $0x228] sm:$0xf]
        %v467 = vld [vmem:[%s289 + $0x22c] sm:$0xf]
        %v468 = vld [vmem:[%s289 + $0x230] sm:$0xf]
        %v469 = vld [vmem:[%s289 + $0x234] sm:$0xf]
        %v470 = vld [vmem:[%s289 + $0x238] sm:$0xf]
        %v471 = vld [vmem:[%s289 + $0x23c] sm:$0xf]
        %v472 = vld [vmem:[%s289 + $0x240] sm:$0xf]
        %v473 = vld [vmem:[%s289 + $0x244] sm:$0xf]
        %v474 = vld [vmem:[%s289 + $0x248] sm:$0xf]
        %v475 = vld [vmem:[%s289 + $0x24c] sm:$0xf]
        %v476 = vld [vmem:[%s289 + $0x250] sm:$0xf]
        %v477 = vld [vmem:[%s289 + $0x254] sm:$0xf]
        %v478 = vld [vmem:[%s289 + $0x258] sm:$0xf]
        %v479 = vld [vmem:[%s289 + $0x25c] sm:$0xf]
        %v480 = vld [vmem:[%s289 + $0x260] sm:$0xf]
        %v481 = vld [vmem:[%s289 + $0x264] sm:$0xf]
        %v482 = vld [vmem:[%s289 + $0x268] sm:$0xf]
        %v483 = vld [vmem:[%s289 + $0x26c] sm:$0xf]
        %v484 = vld [vmem:[%s289 + $0x270] sm:$0xf]
        %v485 = vld [vmem:[%s289 + $0x274] sm:$0xf]
        %v486 = vld [vmem:[%s289 + $0x278] sm:$0xf]
        %v487 = vld [vmem:[%s289 + $0x27c] sm:$0xf]
        %v488 = vld [vmem:[%s289 + $0x280] sm:$0xf]
        %v489 = vld [vmem:[%s289 + $0x284] sm:$0xf]
        %v490 = vld [vmem:[%s289 + $0x288] sm:$0xf]
        %v491 = vld [vmem:[%s289 + $0x28c] sm:$0xf]
        %v492 = vld [vmem:[%s289 + $0x290] sm:$0xf]
        %v493 = vld [vmem:[%s289 + $0x294] sm:$0xf]
        %v494 = vld [vmem:[%s289 + $0x298] sm:$0xf]
        %v495 = vld [vmem:[%s289 + $0x29c] sm:$0xf]
        %v496 = vld [vmem:[%s289 + $0x2a0] sm:$0xf]
        %v497 = vld [vmem:[%s289 + $0x2a4] sm:$0xf]
        %v498 = vld [vmem:[%s289 + $0x2a8] sm:$0xf]
        %v499 = vld [vmem:[%s289 + $0x2ac] sm:$0xf]
        %v500 = vld [vmem:[%s289 + $0x2b0] sm:$0xf]
        %v501 = vld [vmem:[%s289 + $0x2b4] sm:$0xf]
        %v502 = vld [vmem:[%s289 + $0x2b8] sm:$0xf]
        %v503 = vld [vmem:[%s289 + $0x2bc] sm:$0xf]
        %v504 = vld [vmem:[%s289 + $0x2c0] sm:$0xf]
        %v505 = vld [vmem:[%s289 + $0x2c4] sm:$0xf]
        %v506 = vld [vmem:[%s289 + $0x2c8] sm:$0xf]
        %v507 = vld [vmem:[%s289 + $0x2cc] sm:$0xf]
        %v508 = vld [vmem:[%s289 + $0x2d0] sm:$0xf]
        %v509 = vld [vmem:[%s289 + $0x2d4] sm:$0xf]
        %v510 = vld [vmem:[%s289 + $0x2d8] sm:$0xf]
        %v511 = vld [vmem:[%s289 + $0x2dc] sm:$0xf]
        %v512 = vld [vmem:[%s289 + $0x2e0] sm:$0xf]
        %v513 = vld [vmem:[%s289 + $0x2e4] sm:$0xf]
        %v514 = vld [vmem:[%s289 + $0x2e8] sm:$0xf]
        %v515 = vld [vmem:[%s289 + $0x2ec] sm:$0xf]
        %v516 = vld [vmem:[%s289 + $0x2f0] sm:$0xf]
        %v517 = vld [vmem:[%s289 + $0x2f4] sm:$0xf]
        %v518 = vld [vmem:[%s289 + $0x2f8] sm:$0xf]
        %v519 = vld [vmem:[%s289 + $0x2fc] sm:$0xf]
        %v520 = vld [vmem:[%s289 + $0x300] sm:$0xf]
        %v521 = vld [vmem:[%s289 + $0x304] sm:$0xf]
        %v522 = vld [vmem:[%s289 + $0x308] sm:$0xf]
        %v523 = vld [vmem:[%s289 + $0x30c] sm:$0xf]
        %v524 = vld [vmem:[%s289 + $0x310] sm:$0xf]
        %v525 = vld [vmem:[%s289 + $0x314] sm:$0xf]
        %v526 = vld [vmem:[%s289 + $0x318] sm:$0xf]
        %v527 = vld [vmem:[%s289 + $0x31c] sm:$0xf]
        %v528 = vld [vmem:[%s289 + $0x320] sm:$0xf]
        %v529 = vld [vmem:[%s289 + $0x324] sm:$0xf]
        %v530 = vld [vmem:[%s289 + $0x328] sm:$0xf]
        %v531 = vld [vmem:[%s289 + $0x32c] sm:$0xf]
        %v532 = vld [vmem:[%s289 + $0x330] sm:$0xf]
        %v533 = vld [vmem:[%s289 + $0x334] sm:$0xf]
        %v534 = vld [vmem:[%s289 + $0x338] sm:$0xf]
        %v535 = vld [vmem:[%s289 + $0x33c] sm:$0xf]
        %v536 = vld [vmem:[%s289 + $0x340] sm:$0xf]
        %v537 = vld [vmem:[%s289 + $0x344] sm:$0xf]
        %v538 = vld [vmem:[%s289 + $0x348] sm:$0xf]
        %v539 = vld [vmem:[%s289 + $0x34c] sm:$0xf]
        %v540 = vld [vmem:[%s289 + $0x350] sm:$0xf]
        %v541 = vld [vmem:[%s289 + $0x354] sm:$0xf]
        %v542 = vld [vmem:[%s289 + $0x358] sm:$0xf]
        %v543 = vld [vmem:[%s289 + $0x35c] sm:$0xf]
        %v544 = vld [vmem:[%s289 + $0x360] sm:$0xf]
        %v545 = vld [vmem:[%s289 + $0x364] sm:$0xf]
        %v546 = vld [vmem:[%s289 + $0x368] sm:$0xf]
        %v547 = vld [vmem:[%s289 + $0x36c] sm:$0xf]
        %v548 = vld [vmem:[%s289 + $0x370] sm:$0xf]
        %v549 = vld [vmem:[%s289 + $0x374] sm:$0xf]
        %v550 = vld [vmem:[%s289 + $0x378] sm:$0xf]
        %v551 = vld [vmem:[%s289 + $0x37c] sm:$0xf]
        %v552 = vld [vmem:[%s289 + $0x380] sm:$0xf]
        %v553 = vld [vmem:[%s289 + $0x384] sm:$0xf]
        %v554 = vld [vmem:[%s289 + $0x388] sm:$0xf]
        %v555 = vld [vmem:[%s289 + $0x38c] sm:$0xf]
        %v556 = vld [vmem:[%s289 + $0x390] sm:$0xf]
        %v557 = vld [vmem:[%s289 + $0x394] sm:$0xf]
        %v558 = vld [vmem:[%s289 + $0x398] sm:$0xf]
        %v559 = vld [vmem:[%s289 + $0x39c] sm:$0xf]
        %v560 = vld [vmem:[%s289 + $0x3a0] sm:$0xf]
        %v561 = vld [vmem:[%s289 + $0x3a4] sm:$0xf]
        %v562 = vld [vmem:[%s289 + $0x3a8] sm:$0xf]
        %v563 = vld [vmem:[%s289 + $0x3ac] sm:$0xf]
        %v564 = vld [vmem:[%s289 + $0x3b0] sm:$0xf]
        %v565 = vld [vmem:[%s289 + $0x3b4] sm:$0xf]
        %v566 = vld [vmem:[%s289 + $0x3b8] sm:$0xf]
        %v567 = vld [vmem:[%s289 + $0x3bc] sm:$0xf]
        %v568 = vld [vmem:[%s289 + $0x3c0] sm:$0xf]
        %v569 = vld [vmem:[%s289 + $0x3c4] sm:$0xf]
        %v570 = vld [vmem:[%s289 + $0x3c8] sm:$0xf]
        %v571 = vld [vmem:[%s289 + $0x3cc] sm:$0xf]
        %v572 = vld [vmem:[%s289 + $0x3d0] sm:$0xf]
        %v573 = vld [vmem:[%s289 + $0x3d4] sm:$0xf]
        %v574 = vld [vmem:[%s289 + $0x3d8] sm:$0xf]
        %v575 = vld [vmem:[%s289 + $0x3dc] sm:$0xf]
        %v576 = vld [vmem:[%s289 + $0x3e0] sm:$0xf]
        %v577 = vld [vmem:[%s289 + $0x3e4] sm:$0xf]
        %v578 = vld [vmem:[%s289 + $0x3e8] sm:$0xf]
        %v579 = vld [vmem:[%s289 + $0x3ec] sm:$0xf]
        %v580 = vld [vmem:[%s289 + $0x3f0] sm:$0xf]
        %v581 = vld [vmem:[%s289 + $0x3f4] sm:$0xf]
        %v582 = vld [vmem:[%s289 + $0x3f8] sm:$0xf]
        %v583 = vld [vmem:[%s289 + $0x3fc] sm:$0xf]
        %v600 = vunpack.c.l.b16 %v312
        %v601 = vunpack.c.h.b16 %v312
        %v602 = vunpack.c.l.b16 %v313
        %v603 = vunpack.c.h.b16 %v313
        %v604 = vunpack.c.l.b16 %v314
        %v605 = vunpack.c.h.b16 %v314
        %v606 = vunpack.c.l.b16 %v315
        %v607 = vunpack.c.h.b16 %v315
        %v608 = vunpack.c.l.b16 %v316
        %v609 = vunpack.c.h.b16 %v316
        %v610 = vunpack.c.l.b16 %v317
        %v611 = vunpack.c.h.b16 %v317
        %v612 = vunpack.c.l.b16 %v318
        %v613 = vunpack.c.h.b16 %v318
        %v614 = vunpack.c.l.b16 %v319
        %v615 = vunpack.c.h.b16 %v319
        %v616 = vunpack.c.l.b16 %v320
        %v617 = vunpack.c.h.b16 %v320
        %v618 = vunpack.c.l.b16 %v321
        %v619 = vunpack.c.h.b16 %v321
        %v620 = vunpack.c.l.b16 %v322
        %v621 = vunpack.c.h.b16 %v322
        %v622 = vunpack.c.l.b16 %v323
        %v623 = vunpack.c.h.b16 %v323
        %v624 = vunpack.c.l.b16 %v324
        %v625 = vunpack.c.h.b16 %v324
        %v626 = vunpack.c.l.b16 %v325
        %v627 = vunpack.c.h.b16 %v325
        %v628 = vunpack.c.l.b16 %v326
        %v629 = vunpack.c.h.b16 %v326
        %v630 = vunpack.c.l.b16 %v327
        %v631 = vunpack.c.h.b16 %v327
        %v632 = vpack.c.b16 %v616, %v600
        %v633 = vpack.c.b16 %v617, %v601
        %v634 = vpack.c.b16 %v618, %v602
        %v635 = vpack.c.b16 %v619, %v603
        %v636 = vpack.c.b16 %v620, %v604
        %v637 = vpack.c.b16 %v621, %v605
        %v638 = vpack.c.b16 %v622, %v606
        %v639 = vpack.c.b16 %v623, %v607
        %v640 = vpack.c.b16 %v624, %v608
        %v641 = vpack.c.b16 %v625, %v609
        %v642 = vpack.c.b16 %v626, %v610
        %v643 = vpack.c.b16 %v627, %v611
        %v644 = vpack.c.b16 %v628, %v612
        %v645 = vpack.c.b16 %v629, %v613
        %v646 = vpack.c.b16 %v630, %v614
        %v647 = vpack.c.b16 %v631, %v615
        %v920 = vunpack.c.l.b16 %v328
        %v921 = vunpack.c.l.b16 %v329
        %v922 = vunpack.c.l.b16 %v330
        %v923 = vunpack.c.l.b16 %v331
        %v924 = vunpack.c.l.b16 %v332
        %v925 = vunpack.c.l.b16 %v333
        %v926 = vunpack.c.l.b16 %v334
        %v927 = vunpack.c.l.b16 %v335
        %v928 = vunpack.c.l.b16 %v336
        %v929 = vunpack.c.l.b16 %v337
        %v930 = vunpack.c.l.b16 %v338
        %v931 = vunpack.c.l.b16 %v339
        %v932 = vunpack.c.l.b16 %v340
        %v933 = vunpack.c.l.b16 %v341
        %v934 = vunpack.c.l.b16 %v342
        %v935 = vunpack.c.l.b16 %v343
        %v936 = vunpack.c.l.b16 %v344
        %v937 = vunpack.c.l.b16 %v345
        %v938 = vunpack.c.l.b16 %v346
        %v939 = vunpack.c.l.b16 %v347
        %v940 = vunpack.c.l.b16 %v348
        %v941 = vunpack.c.l.b16 %v349
        %v942 = vunpack.c.l.b16 %v350
        %v943 = vunpack.c.l.b16 %v351
        %v944 = vunpack.c.l.b16 %v352
        %v945 = vunpack.c.l.b16 %v353
        %v946 = vunpack.c.l.b16 %v354
        %v947 = vunpack.c.l.b16 %v355
        %v948 = vunpack.c.l.b16 %v356
        %v949 = vunpack.c.l.b16 %v357
        %v950 = vunpack.c.l.b16 %v358
        %v951 = vunpack.c.l.b16 %v359
        %v952 = vunpack.c.l.b16 %v360
        %v953 = vunpack.c.l.b16 %v361
        %v954 = vunpack.c.l.b16 %v362
        %v955 = vunpack.c.l.b16 %v363
        %v956 = vunpack.c.l.b16 %v364
        %v957 = vunpack.c.l.b16 %v365
        %v958 = vunpack.c.l.b16 %v366
        %v959 = vunpack.c.l.b16 %v367
        %v960 = vunpack.c.l.b16 %v368
        %v961 = vunpack.c.l.b16 %v369
        %v962 = vunpack.c.l.b16 %v370
        %v963 = vunpack.c.l.b16 %v371
        %v964 = vunpack.c.l.b16 %v372
        %v965 = vunpack.c.l.b16 %v373
        %v966 = vunpack.c.l.b16 %v374
        %v967 = vunpack.c.l.b16 %v375
        %v968 = vunpack.c.l.b16 %v376
        %v969 = vunpack.c.l.b16 %v377
        %v970 = vunpack.c.l.b16 %v378
        %v971 = vunpack.c.l.b16 %v379
        %v972 = vunpack.c.l.b16 %v380
        %v973 = vunpack.c.l.b16 %v381
        %v974 = vunpack.c.l.b16 %v382
        %v975 = vunpack.c.l.b16 %v383
        %v976 = vunpack.c.l.b16 %v384
        %v977 = vunpack.c.l.b16 %v385
        %v978 = vunpack.c.l.b16 %v386
        %v979 = vunpack.c.l.b16 %v387
        %v980 = vunpack.c.l.b16 %v388
        %v981 = vunpack.c.l.b16 %v389
        %v982 = vunpack.c.l.b16 %v390
        %v983 = vunpack.c.l.b16 %v391
        %v984 = vunpack.c.l.b16 %v392
        %v985 = vunpack.c.l.b16 %v393
        %v986 = vunpack.c.l.b16 %v394
        %v987 = vunpack.c.l.b16 %v395
        %v988 = vunpack.c.l.b16 %v396
        %v989 = vunpack.c.l.b16 %v397
        %v990 = vunpack.c.l.b16 %v398
        %v991 = vunpack.c.l.b16 %v399
        %v992 = vunpack.c.l.b16 %v400
        %v993 = vunpack.c.l.b16 %v401
        %v994 = vunpack.c.l.b16 %v402
        %v995 = vunpack.c.l.b16 %v403
        %v996 = vunpack.c.l.b16 %v404
        %v997 = vunpack.c.l.b16 %v405
        %v998 = vunpack.c.l.b16 %v406
        %v999 = vunpack.c.l.b16 %v407
        %v1000 = vunpack.c.l.b16 %v408
        %v1001 = vunpack.c.l.b16 %v409
        %v1002 = vunpack.c.l.b16 %v410
        %v1003 = vunpack.c.l.b16 %v411
        %v1004 = vunpack.c.l.b16 %v412
        %v1005 = vunpack.c.l.b16 %v413
        %v1006 = vunpack.c.l.b16 %v414
        %v1007 = vunpack.c.l.b16 %v415
        %v1008 = vunpack.c.l.b16 %v416
        %v1009 = vunpack.c.l.b16 %v417
        %v1010 = vunpack.c.l.b16 %v418
        %v1011 = vunpack.c.l.b16 %v419
        %v1012 = vunpack.c.l.b16 %v420
        %v1013 = vunpack.c.l.b16 %v421
        %v1014 = vunpack.c.l.b16 %v422
        %v1015 = vunpack.c.l.b16 %v423
        %v1016 = vunpack.c.l.b16 %v424
        %v1017 = vunpack.c.l.b16 %v425
        %v1018 = vunpack.c.l.b16 %v426
        %v1019 = vunpack.c.l.b16 %v427
        %v1020 = vunpack.c.l.b16 %v428
        %v1021 = vunpack.c.l.b16 %v429
        %v1022 = vunpack.c.l.b16 %v430
        %v1023 = vunpack.c.l.b16 %v431
        %v1024 = vunpack.c.l.b16 %v432
        %v1025 = vunpack.c.l.b16 %v433
        %v1026 = vunpack.c.l.b16 %v434
        %v1027 = vunpack.c.l.b16 %v435
        %v1028 = vunpack.c.l.b16 %v436
        %v1029 = vunpack.c.l.b16 %v437
        %v1030 = vunpack.c.l.b16 %v438
        %v1031 = vunpack.c.l.b16 %v439
        %v1032 = vunpack.c.l.b16 %v440
        %v1033 = vunpack.c.l.b16 %v441
        %v1034 = vunpack.c.l.b16 %v442
        %v1035 = vunpack.c.l.b16 %v443
        %v1036 = vunpack.c.l.b16 %v444
        %v1037 = vunpack.c.l.b16 %v445
        %v1038 = vunpack.c.l.b16 %v446
        %v1039 = vunpack.c.l.b16 %v447
        %v1040 = vunpack.c.l.b16 %v448
        %v1041 = vunpack.c.l.b16 %v449
        %v1042 = vunpack.c.l.b16 %v450
        %v1043 = vunpack.c.l.b16 %v451
        %v1044 = vunpack.c.l.b16 %v452
        %v1045 = vunpack.c.l.b16 %v453
        %v1046 = vunpack.c.l.b16 %v454
        %v1047 = vunpack.c.l.b16 %v455
        %v1048 = vunpack.c.l.b16 %v456
        %v1049 = vunpack.c.l.b16 %v457
        %v1050 = vunpack.c.l.b16 %v458
        %v1051 = vunpack.c.l.b16 %v459
        %v1052 = vunpack.c.l.b16 %v460
        %v1053 = vunpack.c.l.b16 %v461
        %v1054 = vunpack.c.l.b16 %v462
        %v1055 = vunpack.c.l.b16 %v463
        %v1056 = vunpack.c.l.b16 %v464
        %v1057 = vunpack.c.l.b16 %v465
        %v1058 = vunpack.c.l.b16 %v466
        %v1059 = vunpack.c.l.b16 %v467
        %v1060 = vunpack.c.l.b16 %v468
        %v1061 = vunpack.c.l.b16 %v469
        %v1062 = vunpack.c.l.b16 %v470
        %v1063 = vunpack.c.l.b16 %v471
        %v1064 = vunpack.c.l.b16 %v472
        %v1065 = vunpack.c.l.b16 %v473
        %v1066 = vunpack.c.l.b16 %v474
        %v1067 = vunpack.c.l.b16 %v475
        %v1068 = vunpack.c.l.b16 %v476
        %v1069 = vunpack.c.l.b16 %v477
        %v1070 = vunpack.c.l.b16 %v478
        %v1071 = vunpack.c.l.b16 %v479
        %v1072 = vunpack.c.l.b16 %v480
        %v1073 = vunpack.c.l.b16 %v481
        %v1074 = vunpack.c.l.b16 %v482
        %v1075 = vunpack.c.l.b16 %v483
        %v1076 = vunpack.c.l.b16 %v484
        %v1077 = vunpack.c.l.b16 %v485
        %v1078 = vunpack.c.l.b16 %v486
        %v1079 = vunpack.c.l.b16 %v487
        %v1080 = vunpack.c.l.b16 %v488
        %v1081 = vunpack.c.l.b16 %v489
        %v1082 = vunpack.c.l.b16 %v490
        %v1083 = vunpack.c.l.b16 %v491
        %v1084 = vunpack.c.l.b16 %v492
        %v1085 = vunpack.c.l.b16 %v493
        %v1086 = vunpack.c.l.b16 %v494
        %v1087 = vunpack.c.l.b16 %v495
        %v1088 = vunpack.c.l.b16 %v496
        %v1089 = vunpack.c.l.b16 %v497
        %v1090 = vunpack.c.l.b16 %v498
        %v1091 = vunpack.c.l.b16 %v499
        %v1092 = vunpack.c.l.b16 %v500
        %v1093 = vunpack.c.l.b16 %v501
        %v1094 = vunpack.c.l.b16 %v502
        %v1095 = vunpack.c.l.b16 %v503
        %v1096 = vunpack.c.l.b16 %v504
        %v1097 = vunpack.c.l.b16 %v505
        %v1098 = vunpack.c.l.b16 %v506
        %v1099 = vunpack.c.l.b16 %v507
        %v1100 = vunpack.c.l.b16 %v508
        %v1101 = vunpack.c.l.b16 %v509
        %v1102 = vunpack.c.l.b16 %v510
        %v1103 = vunpack.c.l.b16 %v511
        %v1104 = vunpack.c.l.b16 %v512
        %v1105 = vunpack.c.l.b16 %v513
        %v1106 = vunpack.c.l.b16 %v514
        %v1107 = vunpack.c.l.b16 %v515
        %v1108 = vunpack.c.l.b16 %v516
        %v1109 = vunpack.c.l.b16 %v517
        %v1110 = vunpack.c.l.b16 %v518
        %v1111 = vunpack.c.l.b16 %v519
        %v1112 = vunpack.c.l.b16 %v520
        %v1113 = vunpack.c.l.b16 %v521
        %v1114 = vunpack.c.l.b16 %v522
        %v1115 = vunpack.c.l.b16 %v523
        %v1116 = vunpack.c.l.b16 %v524
        %v1117 = vunpack.c.l.b16 %v525
        %v1118 = vunpack.c.l.b16 %v526
        %v1119 = vunpack.c.l.b16 %v527
        %v1120 = vunpack.c.l.b16 %v528
        %v1121 = vunpack.c.l.b16 %v529
        %v1122 = vunpack.c.l.b16 %v530
        %v1123 = vunpack.c.l.b16 %v531
        %v1124 = vunpack.c.l.b16 %v532
        %v1125 = vunpack.c.l.b16 %v533
        %v1126 = vunpack.c.l.b16 %v534
        %v1127 = vunpack.c.l.b16 %v535
        %v1128 = vunpack.c.l.b16 %v536
        %v1129 = vunpack.c.l.b16 %v537
        %v1130 = vunpack.c.l.b16 %v538
        %v1131 = vunpack.c.l.b16 %v539
        %v1132 = vunpack.c.l.b16 %v540
        %v1133 = vunpack.c.l.b16 %v541
        %v1134 = vunpack.c.l.b16 %v542
        %v1135 = vunpack.c.l.b16 %v543
        %v1136 = vunpack.c.l.b16 %v544
        %v1137 = vunpack.c.l.b16 %v545
        %v1138 = vunpack.c.l.b16 %v546
        %v1139 = vunpack.c.l.b16 %v547
        %v1140 = vunpack.c.l.b16 %v548
        %v1141 = vunpack.c.l.b16 %v549
        %v1142 = vunpack.c.l.b16 %v550
        %v1143 = vunpack.c.l.b16 %v551
        %v1144 = vunpack.c.l.b16 %v552
        %v1145 = vunpack.c.l.b16 %v553
        %v1146 = vunpack.c.l.b16 %v554
        %v1147 = vunpack.c.l.b16 %v555
        %v1148 = vunpack.c.l.b16 %v556
        %v1149 = vunpack.c.l.b16 %v557
        %v1150 = vunpack.c.l.b16 %v558
        %v1151 = vunpack.c.l.b16 %v559
        %v1152 = vunpack.c.l.b16 %v560
        %v1153 = vunpack.c.l.b16 %v561
        %v1154 = vunpack.c.l.b16 %v562
        %v1155 = vunpack.c.l.b16 %v563
        %v1156 = vunpack.c.l.b16 %v564
        %v1157 = vunpack.c.l.b16 %v565
        %v1158 = vunpack.c.l.b16 %v566
        %v1159 = vunpack.c.l.b16 %v567
        %v1160 = vunpack.c.l.b16 %v568
        %v1161 = vunpack.c.l.b16 %v569
        %v1162 = vunpack.c.l.b16 %v570
        %v1163 = vunpack.c.l.b16 %v571
        %v1164 = vunpack.c.l.b16 %v572
        %v1165 = vunpack.c.l.b16 %v573
        %v1166 = vunpack.c.l.b16 %v574
        %v1167 = vunpack.c.l.b16 %v575
        %v1168 = vunpack.c.l.b16 %v576
        %v1169 = vunpack.c.l.b16 %v577
        %v1170 = vunpack.c.l.b16 %v578
        %v1171 = vunpack.c.l.b16 %v579
        %v1172 = vunpack.c.l.b16 %v580
        %v1173 = vunpack.c.l.b16 %v581
        %v1174 = vunpack.c.l.b16 %v582
        %v1175 = vunpack.c.l.b16 %v583
        %v1176 = vpack.c.b16 %v921, %v920
        %v1177 = vpack.c.b16 %v923, %v922
        %v1178 = vpack.c.b16 %v925, %v924
        %v1179 = vpack.c.b16 %v927, %v926
        %v1180 = vpack.c.b16 %v929, %v928
        %v1181 = vpack.c.b16 %v931, %v930
        %v1182 = vpack.c.b16 %v933, %v932
        %v1183 = vpack.c.b16 %v935, %v934
        %v1184 = vpack.c.b16 %v937, %v936
        %v1185 = vpack.c.b16 %v939, %v938
        %v1186 = vpack.c.b16 %v941, %v940
        %v1187 = vpack.c.b16 %v943, %v942
        %v1188 = vpack.c.b16 %v945, %v944
        %v1189 = vpack.c.b16 %v947, %v946
        %v1190 = vpack.c.b16 %v949, %v948
        %v1191 = vpack.c.b16 %v951, %v950
        %v1192 = vpack.c.b16 %v953, %v952
        %v1193 = vpack.c.b16 %v955, %v954
        %v1194 = vpack.c.b16 %v957, %v956
        %v1195 = vpack.c.b16 %v959, %v958
        %v1196 = vpack.c.b16 %v961, %v960
        %v1197 = vpack.c.b16 %v963, %v962
        %v1198 = vpack.c.b16 %v965, %v964
        %v1199 = vpack.c.b16 %v967, %v966
        %v1200 = vpack.c.b16 %v969, %v968
        %v1201 = vpack.c.b16 %v971, %v970
        %v1202 = vpack.c.b16 %v973, %v972
        %v1203 = vpack.c.b16 %v975, %v974
        %v1204 = vpack.c.b16 %v977, %v976
        %v1205 = vpack.c.b16 %v979, %v978
        %v1206 = vpack.c.b16 %v981, %v980
        %v1207 = vpack.c.b16 %v983, %v982
        %v1208 = vpack.c.b16 %v985, %v984
        %v1209 = vpack.c.b16 %v987, %v986
        %v1210 = vpack.c.b16 %v989, %v988
        %v1211 = vpack.c.b16 %v991, %v990
        %v1212 = vpack.c.b16 %v993, %v992
        %v1213 = vpack.c.b16 %v995, %v994
        %v1214 = vpack.c.b16 %v997, %v996
        %v1215 = vpack.c.b16 %v999, %v998
        %v1216 = vpack.c.b16 %v1001, %v1000
        %v1217 = vpack.c.b16 %v1003, %v1002
        %v1218 = vpack.c.b16 %v1005, %v1004
        %v1219 = vpack.c.b16 %v1007, %v1006
        %v1220 = vpack.c.b16 %v1009, %v1008
        %v1221 = vpack.c.b16 %v1011, %v1010
        %v1222 = vpack.c.b16 %v1013, %v1012
        %v1223 = vpack.c.b16 %v1015, %v1014
        %v1224 = vpack.c.b16 %v1017, %v1016
        %v1225 = vpack.c.b16 %v1019, %v1018
        %v1226 = vpack.c.b16 %v1021, %v1020
        %v1227 = vpack.c.b16 %v1023, %v1022
        %v1228 = vpack.c.b16 %v1025, %v1024
        %v1229 = vpack.c.b16 %v1027, %v1026
        %v1230 = vpack.c.b16 %v1029, %v1028
        %v1231 = vpack.c.b16 %v1031, %v1030
        %v1232 = vpack.c.b16 %v1033, %v1032
        %v1233 = vpack.c.b16 %v1035, %v1034
        %v1234 = vpack.c.b16 %v1037, %v1036
        %v1235 = vpack.c.b16 %v1039, %v1038
        %v1236 = vpack.c.b16 %v1041, %v1040
        %v1237 = vpack.c.b16 %v1043, %v1042
        %v1238 = vpack.c.b16 %v1045, %v1044
        %v1239 = vpack.c.b16 %v1047, %v1046
        %v1240 = vpack.c.b16 %v1049, %v1048
        %v1241 = vpack.c.b16 %v1051, %v1050
        %v1242 = vpack.c.b16 %v1053, %v1052
        %v1243 = vpack.c.b16 %v1055, %v1054
        %v1244 = vpack.c.b16 %v1057, %v1056
        %v1245 = vpack.c.b16 %v1059, %v1058
        %v1246 = vpack.c.b16 %v1061, %v1060
        %v1247 = vpack.c.b16 %v1063, %v1062
        %v1248 = vpack.c.b16 %v1065, %v1064
        %v1249 = vpack.c.b16 %v1067, %v1066
        %v1250 = vpack.c.b16 %v1069, %v1068
        %v1251 = vpack.c.b16 %v1071, %v1070
        %v1252 = vpack.c.b16 %v1073, %v1072
        %v1253 = vpack.c.b16 %v1075, %v1074
        %v1254 = vpack.c.b16 %v1077, %v1076
        %v1255 = vpack.c.b16 %v1079, %v1078
        %v1256 = vpack.c.b16 %v1081, %v1080
        %v1257 = vpack.c.b16 %v1083, %v1082
        %v1258 = vpack.c.b16 %v1085, %v1084
        %v1259 = vpack.c.b16 %v1087, %v1086
        %v1260 = vpack.c.b16 %v1089, %v1088
        %v1261 = vpack.c.b16 %v1091, %v1090
        %v1262 = vpack.c.b16 %v1093, %v1092
        %v1263 = vpack.c.b16 %v1095, %v1094
        %v1264 = vpack.c.b16 %v1097, %v1096
        %v1265 = vpack.c.b16 %v1099, %v1098
        %v1266 = vpack.c.b16 %v1101, %v1100
        %v1267 = vpack.c.b16 %v1103, %v1102
        %v1268 = vpack.c.b16 %v1105, %v1104
        %v1269 = vpack.c.b16 %v1107, %v1106
        %v1270 = vpack.c.b16 %v1109, %v1108
        %v1271 = vpack.c.b16 %v1111, %v1110
        %v1272 = vpack.c.b16 %v1113, %v1112
        %v1273 = vpack.c.b16 %v1115, %v1114
        %v1274 = vpack.c.b16 %v1117, %v1116
        %v1275 = vpack.c.b16 %v1119, %v1118
        %v1276 = vpack.c.b16 %v1121, %v1120
        %v1277 = vpack.c.b16 %v1123, %v1122
        %v1278 = vpack.c.b16 %v1125, %v1124
        %v1279 = vpack.c.b16 %v1127, %v1126
        %v1280 = vpack.c.b16 %v1129, %v1128
        %v1281 = vpack.c.b16 %v1131, %v1130
        %v1282 = vpack.c.b16 %v1133, %v1132
        %v1283 = vpack.c.b16 %v1135, %v1134
        %v1284 = vpack.c.b16 %v1137, %v1136
        %v1285 = vpack.c.b16 %v1139, %v1138
        %v1286 = vpack.c.b16 %v1141, %v1140
        %v1287 = vpack.c.b16 %v1143, %v1142
        %v1288 = vpack.c.b16 %v1145, %v1144
        %v1289 = vpack.c.b16 %v1147, %v1146
        %v1290 = vpack.c.b16 %v1149, %v1148
        %v1291 = vpack.c.b16 %v1151, %v1150
        %v1292 = vpack.c.b16 %v1153, %v1152
        %v1293 = vpack.c.b16 %v1155, %v1154
        %v1294 = vpack.c.b16 %v1157, %v1156
        %v1295 = vpack.c.b16 %v1159, %v1158
        %v1296 = vpack.c.b16 %v1161, %v1160
        %v1297 = vpack.c.b16 %v1163, %v1162
        %v1298 = vpack.c.b16 %v1165, %v1164
        %v1299 = vpack.c.b16 %v1167, %v1166
        %v1300 = vpack.c.b16 %v1169, %v1168
        %v1301 = vpack.c.b16 %v1171, %v1170
        %v1302 = vpack.c.b16 %v1173, %v1172
        %v1303 = vpack.c.b16 %v1175, %v1174
        %1432 = vmatprep.subr.bf16.mxu0 0
        %1433 = vmatpush1.bf16.msra.mxu0 %v1176
        %1434 = vmatprep.subr.bf16.mxu0 0
        %1435 = vmatpush1.bf16.msra.mxu0 %v1177
        %1436 = vmatprep.subr.bf16.mxu0 0
        %1437 = vmatpush1.bf16.msra.mxu0 %v1178
        %1438 = vmatprep.subr.bf16.mxu0 0
        %1439 = vmatpush1.bf16.msra.mxu0 %v1179
        %1440 = vmatprep.subr.bf16.mxu0 0
        %1441 = vmatpush1.bf16.msra.mxu0 %v1180
        %1442 = vmatprep.subr.bf16.mxu0 0
        %1443 = vmatpush1.bf16.msra.mxu0 %v1181
        %1444 = vmatprep.subr.bf16.mxu0 0
        %1445 = vmatpush1.bf16.msra.mxu0 %v1182
        %1446 = vmatprep.subr.bf16.mxu0 0
        %1447 = vmatpush1.bf16.msra.mxu0 %v1183
        %1448 = vmatprep.subr.bf16.mxu0 0
        %1449 = vmatpush1.bf16.msra.mxu0 %v1184
        %1450 = vmatprep.subr.bf16.mxu0 0
        %1451 = vmatpush1.bf16.msra.mxu0 %v1185
        %1452 = vmatprep.subr.bf16.mxu0 0
        %1453 = vmatpush1.bf16.msra.mxu0 %v1186
        %1454 = vmatprep.subr.bf16.mxu0 0
        %1455 = vmatpush1.bf16.msra.mxu0 %v1187
        %1456 = vmatprep.subr.bf16.mxu0 0
        %1457 = vmatpush1.bf16.msra.mxu0 %v1188
        %1458 = vmatprep.subr.bf16.mxu0 0
        %1459 = vmatpush1.bf16.msra.mxu0 %v1189
        %1460 = vmatprep.subr.bf16.mxu0 0
        %1461 = vmatpush1.bf16.msra.mxu0 %v1190
        %1462 = vmatprep.subr.bf16.mxu0 0
        %1463 = vmatpush1.bf16.msra.mxu0 %v1191
        %1464 = vmatprep.mubr.bf16.mxu0 %v633
        %1465 = vmatmul.mubr.bf16.gmra.mrb[0].mxu0 %v632
        %v1466 = vpop.f32.mrb[0].mxu0
        %v1467 = vadd.f32 0.0, %v1466
        %v1468 = vpop.f32.mrb[0].mxu0
        %v1469 = vpop.f32.mrb[0].mxu0
        %v1470 = vadd.f32 0.0, %v1469
        %v1471 = vpop.f32.mrb[0].mxu0
        %1472 = vdwg.mxu0
        %1473 = vmatprep.subr.bf16.mxu0 0
        %1474 = vmatpush1.bf16.msra.mxu0 %v1192
        %1475 = vmatprep.subr.bf16.mxu0 0
        %1476 = vmatpush1.bf16.msra.mxu0 %v1193
        %1477 = vmatprep.subr.bf16.mxu0 0
        %1478 = vmatpush1.bf16.msra.mxu0 %v1194
        %1479 = vmatprep.subr.bf16.mxu0 0
        %1480 = vmatpush1.bf16.msra.mxu0 %v1195
        %1481 = vmatprep.subr.bf16.mxu0 0
        %1482 = vmatpush1.bf16.msra.mxu0 %v1196
        %1483 = vmatprep.subr.bf16.mxu0 0
        %1484 = vmatpush1.bf16.msra.mxu0 %v1197
        %1485 = vmatprep.subr.bf16.mxu0 0
        %1486 = vmatpush1.bf16.msra.mxu0 %v1198
        %1487 = vmatprep.subr.bf16.mxu0 0
        %1488 = vmatpush1.bf16.msra.mxu0 %v1199
        %1489 = vmatprep.subr.bf16.mxu0 0
        %1490 = vmatpush1.bf16.msra.mxu0 %v1200
        %1491 = vmatprep.subr.bf16.mxu0 0
        %1492 = vmatpush1.bf16.msra.mxu0 %v1201
        %1493 = vmatprep.subr.bf16.mxu0 0
        %1494 = vmatpush1.bf16.msra.mxu0 %v1202
        %1495 = vmatprep.subr.bf16.mxu0 0
        %1496 = vmatpush1.bf16.msra.mxu0 %v1203
        %1497 = vmatprep.subr.bf16.mxu0 0
        %1498 = vmatpush1.bf16.msra.mxu0 %v1204
        %1499 = vmatprep.subr.bf16.mxu0 0
        %1500 = vmatpush1.bf16.msra.mxu0 %v1205
        %1501 = vmatprep.subr.bf16.mxu0 0
        %1502 = vmatpush1.bf16.msra.mxu0 %v1206
        %1503 = vmatprep.subr.bf16.mxu0 0
        %1504 = vmatpush1.bf16.msra.mxu0 %v1207
        %1505 = vmatprep.mubr.bf16.mxu0 %v635
        %1506 = vmatmul.mubr.bf16.gmra.mrb[0].mxu0 %v634
        %v1507 = vpop.f32.mrb[0].mxu0
        %v1508 = vadd.f32 %v1467, %v1507
        %v1509 = vpop.f32.mrb[0].mxu0
        %v1510 = vpop.f32.mrb[0].mxu0
        %v1511 = vadd.f32 %v1470, %v1510
        %v1512 = vpop.f32.mrb[0].mxu0
        %1513 = vdwg.mxu0
        %1514 = vmatprep.subr.bf16.mxu0 0
        %1515 = vmatpush1.bf16.msra.mxu0 %v1208
        %1516 = vmatprep.subr.bf16.mxu0 0
        %1517 = vmatpush1.bf16.msra.mxu0 %v1209
        %1518 = vmatprep.subr.bf16.mxu0 0
        %1519 = vmatpush1.bf16.msra.mxu0 %v1210
        %1520 = vmatprep.subr.bf16.mxu0 0
        %1521 = vmatpush1.bf16.msra.mxu0 %v1211
        %1522 = vmatprep.subr.bf16.mxu0 0
        %1523 = vmatpush1.bf16.msra.mxu0 %v1212
        %1524 = vmatprep.subr.bf16.mxu0 0
        %1525 = vmatpush1.bf16.msra.mxu0 %v1213
        %1526 = vmatprep.subr.bf16.mxu0 0
        %1527 = vmatpush1.bf16.msra.mxu0 %v1214
        %1528 = vmatprep.subr.bf16.mxu0 0
        %1529 = vmatpush1.bf16.msra.mxu0 %v1215
        %1530 = vmatprep.subr.bf16.mxu0 0
        %1531 = vmatpush1.bf16.msra.mxu0 %v1216
        %1532 = vmatprep.subr.bf16.mxu0 0
        %1533 = vmatpush1.bf16.msra.mxu0 %v1217
        %1534 = vmatprep.subr.bf16.mxu0 0
        %1535 = vmatpush1.bf16.msra.mxu0 %v1218
        %1536 = vmatprep.subr.bf16.mxu0 0
        %1537 = vmatpush1.bf16.msra.mxu0 %v1219
        %1538 = vmatprep.subr.bf16.mxu0 0
        %1539 = vmatpush1.bf16.msra.mxu0 %v1220
        %1540 = vmatprep.subr.bf16.mxu0 0
        %1541 = vmatpush1.bf16.msra.mxu0 %v1221
        %1542 = vmatprep.subr.bf16.mxu0 0
        %1543 = vmatpush1.bf16.msra.mxu0 %v1222
        %1544 = vmatprep.subr.bf16.mxu0 0
        %1545 = vmatpush1.bf16.msra.mxu0 %v1223
        %1546 = vmatprep.mubr.bf16.mxu0 %v637
        %1547 = vmatmul.mubr.bf16.gmra.mrb[0].mxu0 %v636
        %v1548 = vpop.f32.mrb[0].mxu0
        %v1549 = vadd.f32 %v1508, %v1548
        %v1550 = vpop.f32.mrb[0].mxu0
        %v1551 = vpop.f32.mrb[0].mxu0
        %v1552 = vadd.f32 %v1511, %v1551
        %v1553 = vpop.f32.mrb[0].mxu0
        %1554 = vdwg.mxu0
        %1555 = vmatprep.subr.bf16.mxu0 0
        %1556 = vmatpush1.bf16.msra.mxu0 %v1224
        %1557 = vmatprep.subr.bf16.mxu0 0
        %1558 = vmatpush1.bf16.msra.mxu0 %v1225
        %1559 = vmatprep.subr.bf16.mxu0 0
        %1560 = vmatpush1.bf16.msra.mxu0 %v1226
        %1561 = vmatprep.subr.bf16.mxu0 0
        %1562 = vmatpush1.bf16.msra.mxu0 %v1227
        %1563 = vmatprep.subr.bf16.mxu0 0
        %1564 = vmatpush1.bf16.msra.mxu0 %v1228
        %1565 = vmatprep.subr.bf16.mxu0 0
        %1566 = vmatpush1.bf16.msra.mxu0 %v1229
        %1567 = vmatprep.subr.bf16.mxu0 0
        %1568 = vmatpush1.bf16.msra.mxu0 %v1230
        %1569 = vmatprep.subr.bf16.mxu0 0
        %1570 = vmatpush1.bf16.msra.mxu0 %v1231
        %1571 = vmatprep.subr.bf16.mxu0 0
        %1572 = vmatpush1.bf16.msra.mxu0 %v1232
        %1573 = vmatprep.subr.bf16.mxu0 0
        %1574 = vmatpush1.bf16.msra.mxu0 %v1233
        %1575 = vmatprep.subr.bf16.mxu0 0
        %1576 = vmatpush1.bf16.msra.mxu0 %v1234
        %1577 = vmatprep.subr.bf16.mxu0 0
        %1578 = vmatpush1.bf16.msra.mxu0 %v1235
        %1579 = vmatprep.subr.bf16.mxu0 0
        %1580 = vmatpush1.bf16.msra.mxu0 %v1236
        %1581 = vmatprep.subr.bf16.mxu0 0
        %1582 = vmatpush1.bf16.msra.mxu0 %v1237
        %1583 = vmatprep.subr.bf16.mxu0 0
        %1584 = vmatpush1.bf16.msra.mxu0 %v1238
        %1585 = vmatprep.subr.bf16.mxu0 0
        %1586 = vmatpush1.bf16.msra.mxu0 %v1239
        %1587 = vmatprep.mubr.bf16.mxu0 %v639
        %1588 = vmatmul.mubr.bf16.gmra.mrb[0].mxu0 %v638
        %v1589 = vpop.f32.mrb[0].mxu0
        %v1590 = vadd.f32 %v1549, %v1589
        %v1591 = vpop.f32.mrb[0].mxu0
        %v1592 = vpop.f32.mrb[0].mxu0
        %v1593 = vadd.f32 %v1552, %v1592
        %v1594 = vpop.f32.mrb[0].mxu0
        %1595 = vdwg.mxu0
        %1596 = vmatprep.subr.bf16.mxu0 0
        %1597 = vmatpush1.bf16.msra.mxu0 %v1240
        %1598 = vmatprep.subr.bf16.mxu0 0
        %1599 = vmatpush1.bf16.msra.mxu0 %v1241
        %1600 = vmatprep.subr.bf16.mxu0 0
        %1601 = vmatpush1.bf16.msra.mxu0 %v1242
        %1602 = vmatprep.subr.bf16.mxu0 0
        %1603 = vmatpush1.bf16.msra.mxu0 %v1243
        %1604 = vmatprep.subr.bf16.mxu0 0
        %1605 = vmatpush1.bf16.msra.mxu0 %v1244
        %1606 = vmatprep.subr.bf16.mxu0 0
        %1607 = vmatpush1.bf16.msra.mxu0 %v1245
        %1608 = vmatprep.subr.bf16.mxu0 0
        %1609 = vmatpush1.bf16.msra.mxu0 %v1246
        %1610 = vmatprep.subr.bf16.mxu0 0
        %1611 = vmatpush1.bf16.msra.mxu0 %v1247
        %1612 = vmatprep.subr.bf16.mxu0 0
        %1613 = vmatpush1.bf16.msra.mxu0 %v1248
        %1614 = vmatprep.subr.bf16.mxu0 0
        %1615 = vmatpush1.bf16.msra.mxu0 %v1249
        %1616 = vmatprep.subr.bf16.mxu0 0
        %1617 = vmatpush1.bf16.msra.mxu0 %v1250
        %1618 = vmatprep.subr.bf16.mxu0 0
        %1619 = vmatpush1.bf16.msra.mxu0 %v1251
        %1620 = vmatprep.subr.bf16.mxu0 0
        %1621 = vmatpush1.bf16.msra.mxu0 %v1252
        %1622 = vmatprep.subr.bf16.mxu0 0
        %1623 = vmatpush1.bf16.msra.mxu0 %v1253
        %1624 = vmatprep.subr.bf16.mxu0 0
        %1625 = vmatpush1.bf16.msra.mxu0 %v1254
        %1626 = vmatprep.subr.bf16.mxu0 0
        %1627 = vmatpush1.bf16.msra.mxu0 %v1255
        %1628 = vmatprep.mubr.bf16.mxu0 %v641
        %1629 = vmatmul.mubr.bf16.gmra.mrb[0].mxu0 %v640
        %v1630 = vpop.f32.mrb[0].mxu0
        %v1631 = vadd.f32 %v1590, %v1630
        %v1632 = vpop.f32.mrb[0].mxu0
        %v1633 = vpop.f32.mrb[0].mxu0
        %v1634 = vadd.f32 %v1593, %v1633
        %v1635 = vpop.f32.mrb[0].mxu0
        %1636 = vdwg.mxu0
        %1637 = vmatprep.subr.bf16.mxu0 0
        %1638 = vmatpush1.bf16.msra.mxu0 %v1256
        %1639 = vmatprep.subr.bf16.mxu0 0
        %1640 = vmatpush1.bf16.msra.mxu0 %v1257
        %1641 = vmatprep.subr.bf16.mxu0 0
        %1642 = vmatpush1.bf16.msra.mxu0 %v1258
        %1643 = vmatprep.subr.bf16.mxu0 0
        %1644 = vmatpush1.bf16.msra.mxu0 %v1259
        %1645 = vmatprep.subr.bf16.mxu0 0
        %1646 = vmatpush1.bf16.msra.mxu0 %v1260
        %1647 = vmatprep.subr.bf16.mxu0 0
        %1648 = vmatpush1.bf16.msra.mxu0 %v1261
        %1649 = vmatprep.subr.bf16.mxu0 0
        %1650 = vmatpush1.bf16.msra.mxu0 %v1262
        %1651 = vmatprep.subr.bf16.mxu0 0
        %1652 = vmatpush1.bf16.msra.mxu0 %v1263
        %1653 = vmatprep.subr.bf16.mxu0 0
        %1654 = vmatpush1.bf16.msra.mxu0 %v1264
        %1655 = vmatprep.subr.bf16.mxu0 0
        %1656 = vmatpush1.bf16.msra.mxu0 %v1265
        %1657 = vmatprep.subr.bf16.mxu0 0
        %1658 = vmatpush1.bf16.msra.mxu0 %v1266
        %1659 = vmatprep.subr.bf16.mxu0 0
        %1660 = vmatpush1.bf16.msra.mxu0 %v1267
        %1661 = vmatprep.subr.bf16.mxu0 0
        %1662 = vmatpush1.bf16.msra.mxu0 %v1268
        %1663 = vmatprep.subr.bf16.mxu0 0
        %1664 = vmatpush1.bf16.msra.mxu0 %v1269
        %1665 = vmatprep.subr.bf16.mxu0 0
        %1666 = vmatpush1.bf16.msra.mxu0 %v1270
        %1667 = vmatprep.subr.bf16.mxu0 0
        %1668 = vmatpush1.bf16.msra.mxu0 %v1271
        %1669 = vmatprep.mubr.bf16.mxu0 %v643
        %1670 = vmatmul.mubr.bf16.gmra.mrb[0].mxu0 %v642
        %v1671 = vpop.f32.mrb[0].mxu0
        %v1672 = vadd.f32 %v1631, %v1671
        %v1673 = vpop.f32.mrb[0].mxu0
        %v1674 = vpop.f32.mrb[0].mxu0
        %v1675 = vadd.f32 %v1634, %v1674
        %v1676 = vpop.f32.mrb[0].mxu0
        %1677 = vdwg.mxu0
        %1678 = vmatprep.subr.bf16.mxu0 0
        %1679 = vmatpush1.bf16.msra.mxu0 %v1272
        %1680 = vmatprep.subr.bf16.mxu0 0
        %1681 = vmatpush1.bf16.msra.mxu0 %v1273
        %1682 = vmatprep.subr.bf16.mxu0 0
        %1683 = vmatpush1.bf16.msra.mxu0 %v1274
        %1684 = vmatprep.subr.bf16.mxu0 0
        %1685 = vmatpush1.bf16.msra.mxu0 %v1275
        %1686 = vmatprep.subr.bf16.mxu0 0
        %1687 = vmatpush1.bf16.msra.mxu0 %v1276
        %1688 = vmatprep.subr.bf16.mxu0 0
        %1689 = vmatpush1.bf16.msra.mxu0 %v1277
        %1690 = vmatprep.subr.bf16.mxu0 0
        %1691 = vmatpush1.bf16.msra.mxu0 %v1278
        %1692 = vmatprep.subr.bf16.mxu0 0
        %1693 = vmatpush1.bf16.msra.mxu0 %v1279
        %1694 = vmatprep.subr.bf16.mxu0 0
        %1695 = vmatpush1.bf16.msra.mxu0 %v1280
        %1696 = vmatprep.subr.bf16.mxu0 0
        %1697 = vmatpush1.bf16.msra.mxu0 %v1281
        %1698 = vmatprep.subr.bf16.mxu0 0
        %1699 = vmatpush1.bf16.msra.mxu0 %v1282
        %1700 = vmatprep.subr.bf16.mxu0 0
        %1701 = vmatpush1.bf16.msra.mxu0 %v1283
        %1702 = vmatprep.subr.bf16.mxu0 0
        %1703 = vmatpush1.bf16.msra.mxu0 %v1284
        %1704 = vmatprep.subr.bf16.mxu0 0
        %1705 = vmatpush1.bf16.msra.mxu0 %v1285
        %1706 = vmatprep.subr.bf16.mxu0 0
        %1707 = vmatpush1.bf16.msra.mxu0 %v1286
        %1708 = vmatprep.subr.bf16.mxu0 0
        %1709 = vmatpush1.bf16.msra.mxu0 %v1287
        %1710 = vmatprep.mubr.bf16.mxu0 %v645
        %1711 = vmatmul.mubr.bf16.gmra.mrb[0].mxu0 %v644
        %v1712 = vpop.f32.mrb[0].mxu0
        %v1713 = vadd.f32 %v1672, %v1712
        %v1714 = vpop.f32.mrb[0].mxu0
        %v1715 = vpop.f32.mrb[0].mxu0
        %v1716 = vadd.f32 %v1675, %v1715
        %v1717 = vpop.f32.mrb[0].mxu0
        %1718 = vdwg.mxu0
        %1719 = vmatprep.subr.bf16.mxu0 0
        %1720 = vmatpush1.bf16.msra.mxu0 %v1288
        %1721 = vmatprep.subr.bf16.mxu0 0
        %1722 = vmatpush1.bf16.msra.mxu0 %v1289
        %1723 = vmatprep.subr.bf16.mxu0 0
        %1724 = vmatpush1.bf16.msra.mxu0 %v1290
        %1725 = vmatprep.subr.bf16.mxu0 0
        %1726 = vmatpush1.bf16.msra.mxu0 %v1291
        %1727 = vmatprep.subr.bf16.mxu0 0
        %1728 = vmatpush1.bf16.msra.mxu0 %v1292
        %1729 = vmatprep.subr.bf16.mxu0 0
        %1730 = vmatpush1.bf16.msra.mxu0 %v1293
        %1731 = vmatprep.subr.bf16.mxu0 0
        %1732 = vmatpush1.bf16.msra.mxu0 %v1294
        %1733 = vmatprep.subr.bf16.mxu0 0
        %1734 = vmatpush1.bf16.msra.mxu0 %v1295
        %1735 = vmatprep.subr.bf16.mxu0 0
        %1736 = vmatpush1.bf16.msra.mxu0 %v1296
        %1737 = vmatprep.subr.bf16.mxu0 0
        %1738 = vmatpush1.bf16.msra.mxu0 %v1297
        %1739 = vmatprep.subr.bf16.mxu0 0
        %1740 = vmatpush1.bf16.msra.mxu0 %v1298
        %1741 = vmatprep.subr.bf16.mxu0 0
        %1742 = vmatpush1.bf16.msra.mxu0 %v1299
        %1743 = vmatprep.subr.bf16.mxu0 0
        %1744 = vmatpush1.bf16.msra.mxu0 %v1300
        %1745 = vmatprep.subr.bf16.mxu0 0
        %1746 = vmatpush1.bf16.msra.mxu0 %v1301
        %1747 = vmatprep.subr.bf16.mxu0 0
        %1748 = vmatpush1.bf16.msra.mxu0 %v1302
        %1749 = vmatprep.subr.bf16.mxu0 0
        %1750 = vmatpush1.bf16.msra.mxu0 %v1303
        %1751 = vmatprep.mubr.bf16.mxu0 %v647
        %1752 = vmatmul.mubr.bf16.gmra.mrb[0].mxu0 %v646
        %v1753 = vpop.f32.mrb[0].mxu0
        %v1754 = vadd.f32 %v1713, %v1753
        %v1755 = vpop.f32.mrb[0].mxu0
        %v1756 = vpop.f32.mrb[0].mxu0
        %v1757 = vadd.f32 %v1716, %v1756
        %v1758 = vpop.f32.mrb[0].mxu0
        %1759 = vdwg.mxu0
        %v1760 = vadd.f32 %v310, %v1754
        %v1761 = vadd.f32 %v311, %v1757
        %1762 = vst [vmem:[%s301] sm:$0xff] %v1760
        %1763 = vst [vmem:[%s301 + $0x8] sm:$0xff] %v1761
        %p1764 = scmp.eq.s32.totalorder %s21, 3
        // Predicated region
        $region60: #{discriminator_forward.15} parent=50 // pred_check
          %p1765 = pneg %p1764
        $region61: #{discriminator_forward.15} parent=50 // pred_check_branch
          %1767 = sbr.rel (%p1765) target = $region63
        $region62: #{discriminator_forward.15} parent=50 // pred_region
          %v1768 = vld [vmem:[%s301] sm:$0xff]
          %v1769 = vld [vmem:[%s301 + $0x8] sm:$0xff]
          %v1770 = vld [vmem:[%s293] sm:$0x1]
          %v1772 = vlaneseq
          %v1773 = vshrl.u32 %v1772, 7
          %v1774 = vsub.s32 0, %v1773
          %v1775 = vrot.slane %v1770, %v1774
          %v1777 = vadd.f32 %v1768, %v1775
          %v1778 = vadd.f32 %v1769, %v1775
          %1779 = vst [vmem:[%s301] sm:$0xff] %v1777
          %1780 = vst [vmem:[%s301 + $0x8] sm:$0xff] %v1778
        $region63: #{discriminator_forward.15} parent=50 // pred_fallthru
          _
        %s1781 = smul.u32 2, %s19
        %p1782 = scmp.lt.s32.totalorder %s1781, 1
        %s1783 = scalar_select %p1782, %s1781, 1
        %p1784 = scmp.lt.s32.totalorder %s20, 0
        %s1785 = scalar_select %p1784, %s20, 0
        %s1786 = sadd.s32 %s1785, %s1783
        %s1787 = smul.addr %s1786, 8
        %s1788 = scalar_lea.vmem %s3, %s1787
        // Predicated region
        $region64: #{discriminator_forward.15} parent=50 // pred_check
          %p1789 = pneg %p135
        $region65: #{discriminator_forward.15} parent=50 // pred_check_branch
          %1791 = sbr.rel (%p1789) target = $region67
        $region66: #{discriminator_forward.15} parent=50 // pred_region
          %s1792 = smul.u32 2, %s19
        $region67: #{discriminator_forward.15} parent=50 // pred_fallthru
          _
        // Predicated region
        $region68: #{discriminator_forward.15} parent=50 // pred_check
          %p1793 = pneg %p135
        $region69: #{discriminator_forward.15} parent=50 // pred_check_branch
          %1795 = sbr.rel (%p1793) target = $region71
        $region70: #{discriminator_forward.15} parent=50 // pred_region
          %s1796 = smul.u32 2, %s19
          %p1797 = scmp.lt.s32.totalorder %s1796, 1
          %s1798 = scalar_select %p1797, %s1796, 1
          %p1799 = scmp.lt.s32.totalorder %s20, 0
          %s1800 = scalar_select %p1799, %s20, 0
          %s1801 = sadd.s32 %s1800, %s1798
          %s1802 = smul.addr %s1801, 8
          %s1803 = scalar_lea.vmem %s3, %s1802
        $region71: #{discriminator_forward.15} parent=50 // pred_fallthru
          _
      $region51: #{discriminator_forward.15} parent=5 // pred_fallthru
        _
      %p1804 = scmp.le.s32.totalorder 2, %s9
      // Predicated region
      $region72: #{discriminator_forward.15} parent=5 // pred_check
        %p1805 = pneg %p1804
      $region73: #{discriminator_forward.15} parent=5 // pred_check_branch
        %1807 = sbr.rel (%p1805) target = $region75
      $region74: #{discriminator_forward.15} parent=5 // pred_region
        %s1808 = ssub.s32 %s9, 2
      $region75: #{discriminator_forward.15} parent=5 // pred_fallthru
        _
    $region6: #{discriminator_forward.15} parent=1 // loop_footer
      %s13 = sadd.s32 1, %s9
    $region7: #{discriminator_forward.15} parent=1 // loop_footer_branch
      %8 = sbr.rel target = $region3
    $region8: #{discriminator_forward.15} parent=1 // loop_exit
      _

// kernel: discriminator_forward.13
$region0: #{discriminator_forward.13}
  #allocation0 [shape = 'u32[]', space=smem, size = 0x4, offset = 0x4, fixed_abs, tag = 'smem constant byte address 0x4 - core index']
  #allocation1 [shape = 'u32[144,128]{1,0:T(1,128)}', space=vmem, size = 0x12000, scoped, tag = 'internal scratch']
  %s0 = inlined_call_operand.vmem [shape: bf16[16,4096], index: 0, kind: input, shape index: {}]
  %s1 = inlined_call_operand.vmem [shape: bf16[4096,512], index: 1, kind: input, shape index: {}]
  %s2 = inlined_call_operand.vmem [shape: f32[1,512], index: 2, kind: input, shape index: {}]
  %s3 = inlined_call_operand.vmem [shape: f32[16,512], index: 3, kind: output, shape index: {}]
  %s4 = sld [smem:[#allocation0]]
  $region76: #{discriminator_forward.13} parent=0
    _
  %s6 = ssub.s32 1, %s4
  %s7 = scalar_select 0, %s6, %s4
  $region1: #{discriminator_forward.13} parent=0
    #allocation2 [shape = 'u8[131072]{0}', space=vmem, size = 0x20000, scoped, tag = 'input window, operand 0']
    loop: start=0, step=1, limit=4
    $region2: #{discriminator_forward.13} parent=1 // loop_pre_header
      _
    $region3: #{discriminator_forward.13} parent=1 // loop_header
      %s9 = sphi 0, %s13
      %p10 = scmp.ge.s32.totalorder %s9, 4
      %s16 = sphi 0, %s35
      %s17 = sphi 0, %s31
      %s18 = sphi 0, %s27
      %s19 = sphi 0, %s16
      %s20 = sphi 0, %s17
      %s21 = sphi 0, %s18
      %s22 = sphi 0, %s19
      %s23 = sphi 0, %s20
      %s24 = sphi 0, %s21
      %s40 = sphi 0, %s42
      %s43 = sphi 0, %s40
      %s44 = sphi 0, %s43
      %s60 = sphi 0, %s44
      %s68 = sphi 0, %s70
      %s71 = sphi 0, %s68
      %s72 = sphi 0, %s71
      %s88 = sphi 0, %s72
      %s94 = sphi 0, %s96
      %s97 = sphi 0, %s94
      %s98 = sphi 0, %s97
      %s114 = sphi 0, %s98
      %s122 = sphi 0, %s124
      %s125 = sphi 0, %s122
      %s126 = sphi 0, %s125
      %s142 = sphi 0, %s126
    $region4: #{discriminator_forward.13} parent=1 // loop_header_branch
      %12 = sbr.rel (%p10) target = $region8
    $region5: #{discriminator_forward.13} parent=1 // loop_body
      %s14 = ssub.s32 %s9, 1
      %s15 = ssub.s32 %s9, 2
      %s25 = sadd.s32 1, %s18
      %p26 = scmp.ge.s32.totalorder %s25, 2
      %s27 = scalar_select %p26, 0, %s25
      %s28 = sadd.s32 1, %s17
      %s29 = scalar_select %p26, %s28, %s17
      %p30 = scmp.ge.s32.totalorder %s29, 1
      %s31 = scalar_select %p30, 0, %s29
      %s32 = sadd.s32 1, %s16
      %s33 = scalar_select %p30, %s32, %s16
      %p34 = scmp.ge.s32.totalorder %s33, 1
      %s35 = scalar_select %p34, 0, %s33
      %s36 = ssub.s32 %s16, %s35
      %s37 = ssub.s32 %s18, %s27
      %s38 = sor.u32 %s36, %s37
      %p39 = scmp.eq.s32.totalorder %s38, 0
      %s41 = sadd.s32 %s40, 1
      %s42 = scalar_select %p39, %s40, %s41
      %p45 = pneg %p39
      %p46 = scmp.eq.s32.totalorder %s9, 1
      %p47 = por %p45, %p46
      %p48 = scmp.ne.s32.totalorder %s40, %s43
      %p49 = scmp.eq.s32.totalorder %s9, 0
      %p50 = por %p48, %p49
      %p51 = scmp.ne.s32.totalorder %s40, %s43
      %p52 = scmp.eq.s32.totalorder %s14, 1
      %p53 = por %p51, %p52
      %p54 = scmp.ne.s32.totalorder %s43, %s44
      %p55 = scmp.eq.s32.totalorder %s14, 0
      %p56 = por %p54, %p55
      %p57 = scmp.ne.s32.totalorder %s43, %s44
      %p58 = scmp.eq.s32.totalorder %s15, 1
      %p59 = por %p57, %p58
      %p61 = scmp.ne.s32.totalorder %s44, %s60
      %p62 = scmp.eq.s32.totalorder %s15, 0
      %p63 = por %p61, %p62
      %s64 = ssub.s32 %s18, %s27
      %s65 = ssub.s32 %s17, %s31
      %s66 = sor.u32 %s64, %s65
      %p67 = scmp.eq.s32.totalorder %s66, 0
      %s69 = sadd.s32 %s68, 1
      %s70 = scalar_select %p67, %s68, %s69
      %p73 = pneg %p67
      %p74 = scmp.eq.s32.totalorder %s9, 1
      %p75 = por %p73, %p74
      %p76 = scmp.ne.s32.totalorder %s68, %s71
      %p77 = scmp.eq.s32.totalorder %s9, 0
      %p78 = por %p76, %p77
      %p79 = scmp.ne.s32.totalorder %s68, %s71
      %p80 = scmp.eq.s32.totalorder %s14, 1
      %p81 = por %p79, %p80
      %p82 = scmp.ne.s32.totalorder %s71, %s72
      %p83 = scmp.eq.s32.totalorder %s14, 0
      %p84 = por %p82, %p83
      %p85 = scmp.ne.s32.totalorder %s71, %s72
      %p86 = scmp.eq.s32.totalorder %s15, 1
      %p87 = por %p85, %p86
      %p89 = scmp.ne.s32.totalorder %s72, %s88
      %p90 = scmp.eq.s32.totalorder %s15, 0
      %p91 = por %p89, %p90
      %s92 = ssub.s32 %s17, %s31
      %p93 = scmp.eq.s32.totalorder %s92, 0
      %s95 = sadd.s32 %s94, 1
      %s96 = scalar_select %p93, %s94, %s95
      %p99 = pneg %p93
      %p100 = scmp.eq.s32.totalorder %s9, 1
      %p101 = por %p99, %p100
      %p102 = scmp.ne.s32.totalorder %s94, %s97
      %p103 = scmp.eq.s32.totalorder %s9, 0
      %p104 = por %p102, %p103
      %p105 = scmp.ne.s32.totalorder %s94, %s97
      %p106 = scmp.eq.s32.totalorder %s14, 1
      %p107 = por %p105, %p106
      %p108 = scmp.ne.s32.totalorder %s97, %s98
      %p109 = scmp.eq.s32.totalorder %s14, 0
      %p110 = por %p108, %p109
      %p111 = scmp.ne.s32.totalorder %s97, %s98
      %p112 = scmp.eq.s32.totalorder %s15, 1
      %p113 = por %p111, %p112
      %p115 = scmp.ne.s32.totalorder %s98, %s114
      %p116 = scmp.eq.s32.totalorder %s15, 0
      %p117 = por %p115, %p116
      %s118 = ssub.s32 %s16, %s35
      %s119 = ssub.s32 %s17, %s31
      %s120 = sor.u32 %s118, %s119
      %p121 = scmp.eq.s32.totalorder %s120, 0
      %s123 = sadd.s32 %s122, 1
      %s124 = scalar_select %p121, %s122, %s123
      %p127 = pneg %p121
      %p128 = scmp.eq.s32.totalorder %s9, 1
      %p129 = por %p127, %p128
      %p130 = scmp.ne.s32.totalorder %s122, %s125
      %p131 = scmp.eq.s32.totalorder %s9, 0
      %p132 = por %p130, %p131
      %p133 = scmp.ne.s32.totalorder %s122, %s125
      %p134 = scmp.eq.s32.totalorder %s14, 1
      %p135 = por %p133, %p134
      %p136 = scmp.ne.s32.totalorder %s125, %s126
      %p137 = scmp.eq.s32.totalorder %s14, 0
      %p138 = por %p136, %p137
      %p139 = scmp.ne.s32.totalorder %s125, %s126
      %p140 = scmp.eq.s32.totalorder %s15, 1
      %p141 = por %p139, %p140
      %p143 = scmp.ne.s32.totalorder %s126, %s142
      %p144 = scmp.eq.s32.totalorder %s15, 0
      %p145 = por %p143, %p144
      %p146 = scmp.le.s32.totalorder 1, %s9
      %p147 = scmp.lt.s32.totalorder %s9, 3
      %p148 = pnand %p146, %p147
      %p149 = pneg %p148
      // Predicated region
      $region9: #{discriminator_forward.13} parent=5 // pred_check
        _
      $region10: #{discriminator_forward.13} parent=5 // pred_check_branch
        %151 = sbr.rel (%p148) target = $region12
      $region11: #{discriminator_forward.13} parent=5 // pred_region
        %s152 = ssub.s32 %s9, 1
        // Predicated region
        $region13: #{discriminator_forward.13} parent=11 // pred_check
          %p153 = pneg %p110
        $region14: #{discriminator_forward.13} parent=11 // pred_check_branch
          %155 = sbr.rel (%p153) target = $region16
        $region15: #{discriminator_forward.13} parent=11 // pred_region
          %s156 = smul.u32 4, %s20
          %p157 = scmp.lt.s32.totalorder %s156, 3
          %s158 = scalar_select %p157, %s156, 3
          %s159 = scalar_lea.vmem %s2, %s158
          %s160 = smul.u32 4, %s20
        $region16: #{discriminator_forward.13} parent=11 // pred_fallthru
          _
      $region12: #{discriminator_forward.13} parent=5 // pred_fallthru
        _
      %p161 = scmp.lt.s32.totalorder %s9, 2
      // Predicated region
      $region17: #{discriminator_forward.13} parent=5 // pred_check
        %p162 = pneg %p161
      $region18: #{discriminator_forward.13} parent=5 // pred_check_branch
        %164 = sbr.rel (%p162) target = $region20
      $region19: #{discriminator_forward.13} parent=5 // pred_region
        // Predicated region
        $region21: #{discriminator_forward.13} parent=19 // pred_check
          %p165 = pneg %p50
        $region22: #{discriminator_forward.13} parent=19 // pred_check_branch
          %167 = sbr.rel (%p165) target = $region24
        $region23: #{discriminator_forward.13} parent=19 // pred_region
          %s168 = sand.u32 %s40, 1
          %s169 = sand.u32 %s40, 1
          %s170 = smul.addr %s169, 128
          %s171 = scalar_lea.vmem [#allocation2], %s170
          %s172 = smul.u32 2, %s16
          %s173 = smul.u32 16, %s18
          %s174 = smul.addr %s172, 32
          %s175 = sadd.s32 %s173, %s174
          %s176 = smul.addr %s175, 4
          %s177 = scalar_lea.vmem %s0, %s176
          // Predicated region
          $region25: #{discriminator_forward.13} parent=23 // pred_check
            _
          $region26: #{discriminator_forward.13} parent=23 // pred_check_branch
            %179 = sbr.rel (0) target = $region28
          $region27: #{discriminator_forward.13} parent=23 // pred_region
            // Predicated region
            $region29: #{discriminator_forward.13} parent=27 // pred_check
              _
            $region30: #{discriminator_forward.13} parent=27 // pred_check_branch
              %181 = sbr.rel (0) target = $region32
            $region31: #{discriminator_forward.13} parent=27 // pred_region
              loop: start=0, step=1, limit=1
              $region33: #{discriminator_forward.13} parent=31 // loop_pre_header
                _
              $region34: #{discriminator_forward.13} parent=31 // loop_header
                %s183 = sphi 0, %s187
                %p184 = scmp.ge.s32.totalorder %s183, 1
                %s188 = sphi %s177, %s177
                %s189 = sphi %s171, %s171
              $region35: #{discriminator_forward.13} parent=31 // loop_header_branch
                %186 = sbr.rel (%p184) target = $region39
              $region36: #{discriminator_forward.13} parent=31 // loop_body
                %v190 = vld [vmem:[%s188] sm:$0xff]
                %191 = vst [vmem:[%s189] sm:$0xff] %v190
                %v192 = vld [vmem:[%s188 + $0x8] sm:$0xff]
                %193 = vst [vmem:[%s189 + $0x8] sm:$0xff] %v192
                %v194 = vld [vmem:[%s188 + $0x10] sm:$0xff]
                %195 = vst [vmem:[%s189 + $0x10] sm:$0xff] %v194
                %v196 = vld [vmem:[%s188 + $0x18] sm:$0xff]
                %197 = vst [vmem:[%s189 + $0x18] sm:$0xff] %v196
                %v198 = vld [vmem:[%s188 + $0x20] sm:$0xff]
                %199 = vst [vmem:[%s189 + $0x20] sm:$0xff] %v198
                %v200 = vld [vmem:[%s188 + $0x28] sm:$0xff]
                %201 = vst [vmem:[%s189 + $0x28] sm:$0xff] %v200
                %v202 = vld [vmem:[%s188 + $0x30] sm:$0xff]
                %203 = vst [vmem:[%s189 + $0x30] sm:$0xff] %v202
                %v204 = vld [vmem:[%s188 + $0x38] sm:$0xff]
                %205 = vst [vmem:[%s189 + $0x38] sm:$0xff] %v204
                %v206 = vld [vmem:[%s188 + $0x80] sm:$0xff]
                %207 = vst [vmem:[%s189 + $0x40] sm:$0xff] %v206
                %v208 = vld [vmem:[%s188 + $0x88] sm:$0xff]
                %209 = vst [vmem:[%s189 + $0x48] sm:$0xff] %v208
                %v210 = vld [vmem:[%s188 + $0x90] sm:$0xff]
                %211 = vst [vmem:[%s189 + $0x50] sm:$0xff] %v210
                %v212 = vld [vmem:[%s188 + $0x98] sm:$0xff]
                %213 = vst [vmem:[%s189 + $0x58] sm:$0xff] %v212
                %v214 = vld [vmem:[%s188 + $0xa0] sm:$0xff]
                %215 = vst [vmem:[%s189 + $0x60] sm:$0xff] %v214
                %v216 = vld [vmem:[%s188 + $0xa8] sm:$0xff]
                %217 = vst [vmem:[%s189 + $0x68] sm:$0xff] %v216
                %v218 = vld [vmem:[%s188 + $0xb0] sm:$0xff]
                %219 = vst [vmem:[%s189 + $0x70] sm:$0xff] %v218
                %v220 = vld [vmem:[%s188 + $0xb8] sm:$0xff]
                %221 = vst [vmem:[%s189 + $0x78] sm:$0xff] %v220
              $region37: #{discriminator_forward.13} parent=31 // loop_footer
                %s187 = sadd.s32 1, %s183
              $region38: #{discriminator_forward.13} parent=31 // loop_footer_branch
                %182 = sbr.rel target = $region34
              $region39: #{discriminator_forward.13} parent=31 // loop_exit
                _
            $region32: #{discriminator_forward.13} parent=27 // pred_fallthru
              _
            // Predicated region
            $region40: #{discriminator_forward.13} parent=27 // pred_check
              _
            $region41: #{discriminator_forward.13} parent=27 // pred_check_branch
              %223 = sbr.rel target = $region43
            $region42: #{discriminator_forward.13} parent=27 // pred_region
              _
            $region43: #{discriminator_forward.13} parent=27 // pred_fallthru
              _
          $region28: #{discriminator_forward.13} parent=23 // pred_fallthru
            _
          %224 = vnop
        $region24: #{discriminator_forward.13} parent=19 // pred_fallthru
          _
        // Predicated region
        $region44: #{discriminator_forward.13} parent=19 // pred_check
          %p225 = pneg %p78
        $region45: #{discriminator_forward.13} parent=19 // pred_check_branch
          %227 = sbr.rel (%p225) target = $region47
        $region46: #{discriminator_forward.13} parent=19 // pred_region
          %s228 = smul.u32 256, %s18
          %s229 = smul.u32 4, %s17
          %p230 = scmp.lt.s32.totalorder %s228, 511
          %s231 = scalar_select %p230, %s228, 511
          %p232 = scmp.lt.s32.totalorder %s229, 3
          %s233 = scalar_select %p232, %s229, 3
          %s234 = smul.addr %s231, 4
          %s235 = sadd.s32 %s233, %s234
          %s236 = smul.addr %s235, 4
          %s237 = scalar_lea.vmem %s1, %s236
          %s238 = smul.u32 256, %s18
          %s239 = smul.u32 4, %s17
        $region47: #{discriminator_forward.13} parent=19 // pred_fallthru
          _
      $region20: #{discriminator_forward.13} parent=5 // pred_fallthru
        _
      %p240 = scmp.le.s32.totalorder 1, %s9
      %p241 = scmp.lt.s32.totalorder %s9, 3
      %p242 = pnand %p240, %p241
      %p243 = pneg %p242
      // Predicated region
      $region48: #{discriminator_forward.13} parent=5 // pred_check
        _
      $region49: #{discriminator_forward.13} parent=5 // pred_check_branch
        %245 = sbr.rel (%p242) target = $region51
      $region50: #{discriminator_forward.13} parent=5 // pred_region
        %s246 = ssub.s32 %s9, 1
        %s247 = sand.u32 %s43, 1
        %s248 = sand.u32 %s43, 1
        %s249 = smul.addr %s248, 128
        %s250 = scalar_lea.vmem [#allocation2], %s249
        // Predicated region
        $region52: #{discriminator_forward.13} parent=50 // pred_check
          %p251 = pneg %p56
        $region53: #{discriminator_forward.13} parent=50 // pred_check_branch
          %253 = sbr.rel (%p251) target = $region55
        $region54: #{discriminator_forward.13} parent=50 // pred_region
          _
        $region55: #{discriminator_forward.13} parent=50 // pred_fallthru
          _
        %s254 = sand.u32 %s43, 1
        %s255 = sand.u32 %s43, 1
        %s256 = smul.addr %s255, 128
        %s257 = scalar_lea.vmem [#allocation2], %s256
        %p258 = pneg %p56
        %p259 = pneg %p53
        %s260 = smul.u32 256, %s21
        %s261 = smul.u32 4, %s20
        %p262 = scmp.lt.s32.totalorder %s260, 511
        %s263 = scalar_select %p262, %s260, 511
        %p264 = scmp.lt.s32.totalorder %s261, 3
        %s265 = scalar_select %p264, %s261, 3
        %s266 = smul.addr %s263, 4
        %s267 = sadd.s32 %s265, %s266
        %s268 = smul.addr %s267, 4
        %s269 = scalar_lea.vmem %s1, %s268
        %p270 = pneg %p84
        %p271 = pneg %p81
        %s272 = smul.u32 4, %s20
        %p273 = scmp.lt.s32.totalorder %s272, 3
        %s274 = scalar_select %p273, %s272, 3
        %s275 = scalar_lea.vmem %s2, %s274
        %p276 = pneg %p110
        %p277 = pneg %p107
        %p278 = pneg %p138
        %p279 = pneg %p135
        %s280 = smul.u32 2, %s19
        %s281 = smul.u32 4, %s20
        %p282 = scmp.lt.s32.totalorder %s280, 1
        %s283 = scalar_select %p282, %s280, 1
        %p284 = scmp.lt.s32.totalorder %s281, 3
        %s285 = scalar_select %p284, %s281, 3
        %s286 = smul.addr %s283, 4
        %s287 = sadd.s32 %s285, %s286
        %s288 = smul.addr %s287, 8
        %s289 = scalar_lea.vmem %s3, %s288
        %s290 = smul.u32 2, %s19
        %s291 = smul.u32 16, %s21
        %s292 = smul.u32 256, %s21
        %s293 = smul.u32 4, %s20
        %p294 = scmp.lt.s32.totalorder %s292, 511
        %s295 = scalar_select %p294, %s292, 511
        %p296 = scmp.lt.s32.totalorder %s293, 3
        %s297 = scalar_select %p296, %s293, 3
        %s298 = smul.addr %s295, 4
        %s299 = sadd.s32 %s297, %s298
        %s300 = smul.addr %s299, 4
        %s301 = scalar_lea.vmem %s1, %s300
        %s302 = smul.u32 256, %s21
        %s303 = smul.u32 4, %s20
        %s304 = smul.u32 4, %s20
        %p305 = scmp.lt.s32.totalorder %s304, 3
        %s306 = scalar_select %p305, %s304, 3
        %s307 = scalar_lea.vmem %s2, %s306
        %s308 = smul.u32 4, %s20
        %s309 = smul.u32 2, %s19
        %s310 = smul.u32 4, %s20
        %p311 = scmp.lt.s32.totalorder %s309, 1
        %s312 = scalar_select %p311, %s309, 1
        %p313 = scmp.lt.s32.totalorder %s310, 3
        %s314 = scalar_select %p313, %s310, 3
        %s315 = smul.addr %s312, 4
        %s316 = sadd.s32 %s314, %s315
        %s317 = smul.addr %s316, 8
        %s318 = scalar_lea.vmem %s3, %s317
        %s319 = smul.u32 2, %s19
        %s320 = smul.u32 4, %s20
        %p321 = scmp.eq.s32.totalorder %s21, 0
        // Predicated region
        $region56: #{discriminator_forward.13} parent=50 // pred_check
          %p322 = pneg %p321
        $region57: #{discriminator_forward.13} parent=50 // pred_check_branch
          %324 = sbr.rel (%p322) target = $region59
        $region58: #{discriminator_forward.13} parent=50 // pred_region
          %325 = vst [vmem:[%s318] sm:$0xff] 0.0
          %326 = vst [vmem:[%s318 + $0x8] sm:$0xff] 0.0
          %327 = vst [vmem:[%s318 + $0x10] sm:$0xff] 0.0
          %328 = vst [vmem:[%s318 + $0x18] sm:$0xff] 0.0
          %329 = vst [vmem:[%s318 + $0x20] sm:$0xff] 0.0
          %330 = vst [vmem:[%s318 + $0x28] sm:$0xff] 0.0
          %331 = vst [vmem:[%s318 + $0x30] sm:$0xff] 0.0
          %332 = vst [vmem:[%s318 + $0x38] sm:$0xff] 0.0
        $region59: #{discriminator_forward.13} parent=50 // pred_fallthru
          _
        %v333 = vld [vmem:[%s318] sm:$0xff]
        %v334 = vld [vmem:[%s318 + $0x8] sm:$0xff]
        %v335 = vld [vmem:[%s318 + $0x10] sm:$0xff]
        %v336 = vld [vmem:[%s318 + $0x18] sm:$0xff]
        %v337 = vld [vmem:[%s318 + $0x20] sm:$0xff]
        %v338 = vld [vmem:[%s318 + $0x28] sm:$0xff]
        %v339 = vld [vmem:[%s318 + $0x30] sm:$0xff]
        %v340 = vld [vmem:[%s318 + $0x38] sm:$0xff]
        %v341 = vld [vmem:[%s250] sm:$0xff]
        %v342 = vld [vmem:[%s250 + $0x8] sm:$0xff]
        %v343 = vld [vmem:[%s250 + $0x10] sm:$0xff]
        %v344 = vld [vmem:[%s250 + $0x18] sm:$0xff]
        %v345 = vld [vmem:[%s250 + $0x20] sm:$0xff]
        %v346 = vld [vmem:[%s250 + $0x28] sm:$0xff]
        %v347 = vld [vmem:[%s250 + $0x30] sm:$0xff]
        %v348 = vld [vmem:[%s250 + $0x38] sm:$0xff]
        %v349 = vld [vmem:[%s250 + $0x40] sm:$0xff]
        %v350 = vld [vmem:[%s250 + $0x48] sm:$0xff]
        %v351 = vld [vmem:[%s250 + $0x50] sm:$0xff]
        %v352 = vld [vmem:[%s250 + $0x58] sm:$0xff]
        %v353 = vld [vmem:[%s250 + $0x60] sm:$0xff]
        %v354 = vld [vmem:[%s250 + $0x68] sm:$0xff]
        %v355 = vld [vmem:[%s250 + $0x70] sm:$0xff]
        %v356 = vld [vmem:[%s250 + $0x78] sm:$0xff]
        %v357 = vld [vmem:[%s301] sm:$0xff]
        %v358 = vld [vmem:[%s301 + $0x8] sm:$0xff]
        %v359 = vld [vmem:[%s301 + $0x10] sm:$0xff]
        %v360 = vld [vmem:[%s301 + $0x18] sm:$0xff]
        %v361 = vld [vmem:[%s301 + $0x20] sm:$0xff]
        %v362 = vld [vmem:[%s301 + $0x28] sm:$0xff]
        %v363 = vld [vmem:[%s301 + $0x30] sm:$0xff]
        %v364 = vld [vmem:[%s301 + $0x38] sm:$0xff]
        %v365 = vld [vmem:[%s301 + $0x40] sm:$0xff]
        %v366 = vld [vmem:[%s301 + $0x48] sm:$0xff]
        %v367 = vld [vmem:[%s301 + $0x50] sm:$0xff]
        %v368 = vld [vmem:[%s301 + $0x58] sm:$0xff]
        %v369 = vld [vmem:[%s301 + $0x60] sm:$0xff]
        %v370 = vld [vmem:[%s301 + $0x68] sm:$0xff]
        %v371 = vld [vmem:[%s301 + $0x70] sm:$0xff]
        %v372 = vld [vmem:[%s301 + $0x78] sm:$0xff]
        %v373 = vld [vmem:[%s301 + $0x80] sm:$0xff]
        %v374 = vld [vmem:[%s301 + $0x88] sm:$0xff]
        %v375 = vld [vmem:[%s301 + $0x90] sm:$0xff]
        %v376 = vld [vmem:[%s301 + $0x98] sm:$0xff]
        %v377 = vld [vmem:[%s301 + $0xa0] sm:$0xff]
        %v378 = vld [vmem:[%s301 + $0xa8] sm:$0xff]
        %v379 = vld [vmem:[%s301 + $0xb0] sm:$0xff]
        %v380 = vld [vmem:[%s301 + $0xb8] sm:$0xff]
        %v381 = vld [vmem:[%s301 + $0xc0] sm:$0xff]
        %v382 = vld [vmem:[%s301 + $0xc8] sm:$0xff]
        %v383 = vld [vmem:[%s301 + $0xd0] sm:$0xff]
        %v384 = vld [vmem:[%s301 + $0xd8] sm:$0xff]
        %v385 = vld [vmem:[%s301 + $0xe0] sm:$0xff]
        %v386 = vld [vmem:[%s301 + $0xe8] sm:$0xff]
        %v387 = vld [vmem:[%s301 + $0xf0] sm:$0xff]
        %v388 = vld [vmem:[%s301 + $0xf8] sm:$0xff]
        %v389 = vld [vmem:[%s301 + $0x100] sm:$0xff]
        %v390 = vld [vmem:[%s301 + $0x108] sm:$0xff]
        %v391 = vld [vmem:[%s301 + $0x110] sm:$0xff]
        %v392 = vld [vmem:[%s301 + $0x118] sm:$0xff]
        %v393 = vld [vmem:[%s301 + $0x120] sm:$0xff]
        %v394 = vld [vmem:[%s301 + $0x128] sm:$0xff]
        %v395 = vld [vmem:[%s301 + $0x130] sm:$0xff]
        %v396 = vld [vmem:[%s301 + $0x138] sm:$0xff]
        %v397 = vld [vmem:[%s301 + $0x140] sm:$0xff]
        %v398 = vld [vmem:[%s301 + $0x148] sm:$0xff]
        %v399 = vld [vmem:[%s301 + $0x150] sm:$0xff]
        %v400 = vld [vmem:[%s301 + $0x158] sm:$0xff]
        %v401 = vld [vmem:[%s301 + $0x160] sm:$0xff]
        %v402 = vld [vmem:[%s301 + $0x168] sm:$0xff]
        %v403 = vld [vmem:[%s301 + $0x170] sm:$0xff]
        %v404 = vld [vmem:[%s301 + $0x178] sm:$0xff]
        %v405 = vld [vmem:[%s301 + $0x180] sm:$0xff]
        %v406 = vld [vmem:[%s301 + $0x188] sm:$0xff]
        %v407 = vld [vmem:[%s301 + $0x190] sm:$0xff]
        %v408 = vld [vmem:[%s301 + $0x198] sm:$0xff]
        %v409 = vld [vmem:[%s301 + $0x1a0] sm:$0xff]
        %v410 = vld [vmem:[%s301 + $0x1a8] sm:$0xff]
        %v411 = vld [vmem:[%s301 + $0x1b0] sm:$0xff]
        %v412 = vld [vmem:[%s301 + $0x1b8] sm:$0xff]
        %v413 = vld [vmem:[%s301 + $0x1c0] sm:$0xff]
        %v414 = vld [vmem:[%s301 + $0x1c8] sm:$0xff]
        %v415 = vld [vmem:[%s301 + $0x1d0] sm:$0xff]
        %v416 = vld [vmem:[%s301 + $0x1d8] sm:$0xff]
        %v417 = vld [vmem:[%s301 + $0x1e0] sm:$0xff]
        %v418 = vld [vmem:[%s301 + $0x1e8] sm:$0xff]
        %v419 = vld [vmem:[%s301 + $0x1f0] sm:$0xff]
        %v420 = vld [vmem:[%s301 + $0x1f8] sm:$0xff]
        %v421 = vld [vmem:[%s301 + $0x200] sm:$0xff]
        %v422 = vld [vmem:[%s301 + $0x208] sm:$0xff]
        %v423 = vld [vmem:[%s301 + $0x210] sm:$0xff]
        %v424 = vld [vmem:[%s301 + $0x218] sm:$0xff]
        %v425 = vld [vmem:[%s301 + $0x220] sm:$0xff]
        %v426 = vld [vmem:[%s301 + $0x228] sm:$0xff]
        %v427 = vld [vmem:[%s301 + $0x230] sm:$0xff]
        %v428 = vld [vmem:[%s301 + $0x238] sm:$0xff]
        %v429 = vld [vmem:[%s301 + $0x240] sm:$0xff]
        %v430 = vld [vmem:[%s301 + $0x248] sm:$0xff]
        %v431 = vld [vmem:[%s301 + $0x250] sm:$0xff]
        %v432 = vld [vmem:[%s301 + $0x258] sm:$0xff]
        %v433 = vld [vmem:[%s301 + $0x260] sm:$0xff]
        %v434 = vld [vmem:[%s301 + $0x268] sm:$0xff]
        %v435 = vld [vmem:[%s301 + $0x270] sm:$0xff]
        %v436 = vld [vmem:[%s301 + $0x278] sm:$0xff]
        %v437 = vld [vmem:[%s301 + $0x280] sm:$0xff]
        %v438 = vld [vmem:[%s301 + $0x288] sm:$0xff]
        %v439 = vld [vmem:[%s301 + $0x290] sm:$0xff]
        %v440 = vld [vmem:[%s301 + $0x298] sm:$0xff]
        %v441 = vld [vmem:[%s301 + $0x2a0] sm:$0xff]
        %v442 = vld [vmem:[%s301 + $0x2a8] sm:$0xff]
        %v443 = vld [vmem:[%s301 + $0x2b0] sm:$0xff]
        %v444 = vld [vmem:[%s301 + $0x2b8] sm:$0xff]
        %v445 = vld [vmem:[%s301 + $0x2c0] sm:$0xff]
        %v446 = vld [vmem:[%s301 + $0x2c8] sm:$0xff]
        %v447 = vld [vmem:[%s301 + $0x2d0] sm:$0xff]
        %v448 = vld [vmem:[%s301 + $0x2d8] sm:$0xff]
        %v449 = vld [vmem:[%s301 + $0x2e0] sm:$0xff]
        %v450 = vld [vmem:[%s301 + $0x2e8] sm:$0xff]
        %v451 = vld [vmem:[%s301 + $0x2f0] sm:$0xff]
        %v452 = vld [vmem:[%s301 + $0x2f8] sm:$0xff]
        %v453 = vld [vmem:[%s301 + $0x300] sm:$0xff]
        %v454 = vld [vmem:[%s301 + $0x308] sm:$0xff]
        %v455 = vld [vmem:[%s301 + $0x310] sm:$0xff]
        %v456 = vld [vmem:[%s301 + $0x318] sm:$0xff]
        %v457 = vld [vmem:[%s301 + $0x320] sm:$0xff]
        %v458 = vld [vmem:[%s301 + $0x328] sm:$0xff]
        %v459 = vld [vmem:[%s301 + $0x330] sm:$0xff]
        %v460 = vld [vmem:[%s301 + $0x338] sm:$0xff]
        %v461 = vld [vmem:[%s301 + $0x340] sm:$0xff]
        %v462 = vld [vmem:[%s301 + $0x348] sm:$0xff]
        %v463 = vld [vmem:[%s301 + $0x350] sm:$0xff]
        %v464 = vld [vmem:[%s301 + $0x358] sm:$0xff]
        %v465 = vld [vmem:[%s301 + $0x360] sm:$0xff]
        %v466 = vld [vmem:[%s301 + $0x368] sm:$0xff]
        %v467 = vld [vmem:[%s301 + $0x370] sm:$0xff]
        %v468 = vld [vmem:[%s301 + $0x378] sm:$0xff]
        %v469 = vld [vmem:[%s301 + $0x380] sm:$0xff]
        %v470 = vld [vmem:[%s301 + $0x388] sm:$0xff]
        %v471 = vld [vmem:[%s301 + $0x390] sm:$0xff]
        %v472 = vld [vmem:[%s301 + $0x398] sm:$0xff]
        %v473 = vld [vmem:[%s301 + $0x3a0] sm:$0xff]
        %v474 = vld [vmem:[%s301 + $0x3a8] sm:$0xff]
        %v475 = vld [vmem:[%s301 + $0x3b0] sm:$0xff]
        %v476 = vld [vmem:[%s301 + $0x3b8] sm:$0xff]
        %v477 = vld [vmem:[%s301 + $0x3c0] sm:$0xff]
        %v478 = vld [vmem:[%s301 + $0x3c8] sm:$0xff]
        %v479 = vld [vmem:[%s301 + $0x3d0] sm:$0xff]
        %v480 = vld [vmem:[%s301 + $0x3d8] sm:$0xff]
        %v481 = vld [vmem:[%s301 + $0x3e0] sm:$0xff]
        %v482 = vld [vmem:[%s301 + $0x3e8] sm:$0xff]
        %v483 = vld [vmem:[%s301 + $0x3f0] sm:$0xff]
        %v484 = vld [vmem:[%s301 + $0x3f8] sm:$0xff]
        %v485 = vld [vmem:[%s301 + $0x400] sm:$0xff]
        %v486 = vld [vmem:[%s301 + $0x408] sm:$0xff]
        %v487 = vld [vmem:[%s301 + $0x410] sm:$0xff]
        %v488 = vld [vmem:[%s301 + $0x418] sm:$0xff]
        %v489 = vld [vmem:[%s301 + $0x420] sm:$0xff]
        %v490 = vld [vmem:[%s301 + $0x428] sm:$0xff]
        %v491 = vld [vmem:[%s301 + $0x430] sm:$0xff]
        %v492 = vld [vmem:[%s301 + $0x438] sm:$0xff]
        %v493 = vld [vmem:[%s301 + $0x440] sm:$0xff]
        %v494 = vld [vmem:[%s301 + $0x448] sm:$0xff]
        %v495 = vld [vmem:[%s301 + $0x450] sm:$0xff]
        %v496 = vld [vmem:[%s301 + $0x458] sm:$0xff]
        %v497 = vld [vmem:[%s301 + $0x460] sm:$0xff]
        %v498 = vld [vmem:[%s301 + $0x468] sm:$0xff]
        %v499 = vld [vmem:[%s301 + $0x470] sm:$0xff]
        %v500 = vld [vmem:[%s301 + $0x478] sm:$0xff]
        %v501 = vld [vmem:[%s301 + $0x480] sm:$0xff]
        %v502 = vld [vmem:[%s301 + $0x488] sm:$0xff]
        %v503 = vld [vmem:[%s301 + $0x490] sm:$0xff]
        %v504 = vld [vmem:[%s301 + $0x498] sm:$0xff]
        %v505 = vld [vmem:[%s301 + $0x4a0] sm:$0xff]
        %v506 = vld [vmem:[%s301 + $0x4a8] sm:$0xff]
        %v507 = vld [vmem:[%s301 + $0x4b0] sm:$0xff]
        %v508 = vld [vmem:[%s301 + $0x4b8] sm:$0xff]
        %v509 = vld [vmem:[%s301 + $0x4c0] sm:$0xff]
        %v510 = vld [vmem:[%s301 + $0x4c8] sm:$0xff]
        %v511 = vld [vmem:[%s301 + $0x4d0] sm:$0xff]
        %v512 = vld [vmem:[%s301 + $0x4d8] sm:$0xff]
        %v513 = vld [vmem:[%s301 + $0x4e0] sm:$0xff]
        %v514 = vld [vmem:[%s301 + $0x4e8] sm:$0xff]
        %v515 = vld [vmem:[%s301 + $0x4f0] sm:$0xff]
        %v516 = vld [vmem:[%s301 + $0x4f8] sm:$0xff]
        %v517 = vld [vmem:[%s301 + $0x500] sm:$0xff]
        %v518 = vld [vmem:[%s301 + $0x508] sm:$0xff]
        %v519 = vld [vmem:[%s301 + $0x510] sm:$0xff]
        %v520 = vld [vmem:[%s301 + $0x518] sm:$0xff]
        %v521 = vld [vmem:[%s301 + $0x520] sm:$0xff]
        %v522 = vld [vmem:[%s301 + $0x528] sm:$0xff]
        %v523 = vld [vmem:[%s301 + $0x530] sm:$0xff]
        %v524 = vld [vmem:[%s301 + $0x538] sm:$0xff]
        %v525 = vld [vmem:[%s301 + $0x540] sm:$0xff]
        %v526 = vld [vmem:[%s301 + $0x548] sm:$0xff]
        %v527 = vld [vmem:[%s301 + $0x550] sm:$0xff]
        %v528 = vld [vmem:[%s301 + $0x558] sm:$0xff]
        %v529 = vld [vmem:[%s301 + $0x560] sm:$0xff]
        %v530 = vld [vmem:[%s301 + $0x568] sm:$0xff]
        %v531 = vld [vmem:[%s301 + $0x570] sm:$0xff]
        %v532 = vld [vmem:[%s301 + $0x578] sm:$0xff]
        %v533 = vld [vmem:[%s301 + $0x580] sm:$0xff]
        %v534 = vld [vmem:[%s301 + $0x588] sm:$0xff]
        %v535 = vld [vmem:[%s301 + $0x590] sm:$0xff]
        %v536 = vld [vmem:[%s301 + $0x598] sm:$0xff]
        %v537 = vld [vmem:[%s301 + $0x5a0] sm:$0xff]
        %v538 = vld [vmem:[%s301 + $0x5a8] sm:$0xff]
        %v539 = vld [vmem:[%s301 + $0x5b0] sm:$0xff]
        %v540 = vld [vmem:[%s301 + $0x5b8] sm:$0xff]
        %v541 = vld [vmem:[%s301 + $0x5c0] sm:$0xff]
        %v542 = vld [vmem:[%s301 + $0x5c8] sm:$0xff]
        %v543 = vld [vmem:[%s301 + $0x5d0] sm:$0xff]
        %v544 = vld [vmem:[%s301 + $0x5d8] sm:$0xff]
        %v545 = vld [vmem:[%s301 + $0x5e0] sm:$0xff]
        %v546 = vld [vmem:[%s301 + $0x5e8] sm:$0xff]
        %v547 = vld [vmem:[%s301 + $0x5f0] sm:$0xff]
        %v548 = vld [vmem:[%s301 + $0x5f8] sm:$0xff]
        %v549 = vld [vmem:[%s301 + $0x600] sm:$0xff]
        %v550 = vld [vmem:[%s301 + $0x608] sm:$0xff]
        %v551 = vld [vmem:[%s301 + $0x610] sm:$0xff]
        %v552 = vld [vmem:[%s301 + $0x618] sm:$0xff]
        %v553 = vld [vmem:[%s301 + $0x620] sm:$0xff]
        %v554 = vld [vmem:[%s301 + $0x628] sm:$0xff]
        %v555 = vld [vmem:[%s301 + $0x630] sm:$0xff]
        %v556 = vld [vmem:[%s301 + $0x638] sm:$0xff]
        %v557 = vld [vmem:[%s301 + $0x640] sm:$0xff]
        %v558 = vld [vmem:[%s301 + $0x648] sm:$0xff]
        %v559 = vld [vmem:[%s301 + $0x650] sm:$0xff]
        %v560 = vld [vmem:[%s301 + $0x658] sm:$0xff]
        %v561 = vld [vmem:[%s301 + $0x660] sm:$0xff]
        %v562 = vld [vmem:[%s301 + $0x668] sm:$0xff]
        %v563 = vld [vmem:[%s301 + $0x670] sm:$0xff]
        %v564 = vld [vmem:[%s301 + $0x678] sm:$0xff]
        %v565 = vld [vmem:[%s301 + $0x680] sm:$0xff]
        %v566 = vld [vmem:[%s301 + $0x688] sm:$0xff]
        %v567 = vld [vmem:[%s301 + $0x690] sm:$0xff]
        %v568 = vld [vmem:[%s301 + $0x698] sm:$0xff]
        %v569 = vld [vmem:[%s301 + $0x6a0] sm:$0xff]
        %v570 = vld [vmem:[%s301 + $0x6a8] sm:$0xff]
        %v571 = vld [vmem:[%s301 + $0x6b0] sm:$0xff]
        %v572 = vld [vmem:[%s301 + $0x6b8] sm:$0xff]
        %v573 = vld [vmem:[%s301 + $0x6c0] sm:$0xff]
        %v574 = vld [vmem:[%s301 + $0x6c8] sm:$0xff]
        %v575 = vld [vmem:[%s301 + $0x6d0] sm:$0xff]
        %v576 = vld [vmem:[%s301 + $0x6d8] sm:$0xff]
        %v577 = vld [vmem:[%s301 + $0x6e0] sm:$0xff]
        %v578 = vld [vmem:[%s301 + $0x6e8] sm:$0xff]
        %v579 = vld [vmem:[%s301 + $0x6f0] sm:$0xff]
        %v580 = vld [vmem:[%s301 + $0x6f8] sm:$0xff]
        %v581 = vld [vmem:[%s301 + $0x700] sm:$0xff]
        %v582 = vld [vmem:[%s301 + $0x708] sm:$0xff]
        %v583 = vld [vmem:[%s301 + $0x710] sm:$0xff]
        %v584 = vld [vmem:[%s301 + $0x718] sm:$0xff]
        %v585 = vld [vmem:[%s301 + $0x720] sm:$0xff]
        %v586 = vld [vmem:[%s301 + $0x728] sm:$0xff]
        %v587 = vld [vmem:[%s301 + $0x730] sm:$0xff]
        %v588 = vld [vmem:[%s301 + $0x738] sm:$0xff]
        %v589 = vld [vmem:[%s301 + $0x740] sm:$0xff]
        %v590 = vld [vmem:[%s301 + $0x748] sm:$0xff]
        %v591 = vld [vmem:[%s301 + $0x750] sm:$0xff]
        %v592 = vld [vmem:[%s301 + $0x758] sm:$0xff]
        %v593 = vld [vmem:[%s301 + $0x760] sm:$0xff]
        %v594 = vld [vmem:[%s301 + $0x768] sm:$0xff]
        %v595 = vld [vmem:[%s301 + $0x770] sm:$0xff]
        %v596 = vld [vmem:[%s301 + $0x778] sm:$0xff]
        %v597 = vld [vmem:[%s301 + $0x780] sm:$0xff]
        %v598 = vld [vmem:[%s301 + $0x788] sm:$0xff]
        %v599 = vld [vmem:[%s301 + $0x790] sm:$0xff]
        %v600 = vld [vmem:[%s301 + $0x798] sm:$0xff]
        %v601 = vld [vmem:[%s301 + $0x7a0] sm:$0xff]
        %v602 = vld [vmem:[%s301 + $0x7a8] sm:$0xff]
        %v603 = vld [vmem:[%s301 + $0x7b0] sm:$0xff]
        %v604 = vld [vmem:[%s301 + $0x7b8] sm:$0xff]
        %v605 = vld [vmem:[%s301 + $0x7c0] sm:$0xff]
        %v606 = vld [vmem:[%s301 + $0x7c8] sm:$0xff]
        %v607 = vld [vmem:[%s301 + $0x7d0] sm:$0xff]
        %v608 = vld [vmem:[%s301 + $0x7d8] sm:$0xff]
        %v609 = vld [vmem:[%s301 + $0x7e0] sm:$0xff]
        %v610 = vld [vmem:[%s301 + $0x7e8] sm:$0xff]
        %v611 = vld [vmem:[%s301 + $0x7f0] sm:$0xff]
        %v612 = vld [vmem:[%s301 + $0x7f8] sm:$0xff]
        %v613 = vld [vmem:[%s301 + $0x800] sm:$0xff]
        %v614 = vld [vmem:[%s301 + $0x808] sm:$0xff]
        %v615 = vld [vmem:[%s301 + $0x810] sm:$0xff]
        %v616 = vld [vmem:[%s301 + $0x818] sm:$0xff]
        %v617 = vld [vmem:[%s301 + $0x820] sm:$0xff]
        %v618 = vld [vmem:[%s301 + $0x828] sm:$0xff]
        %v619 = vld [vmem:[%s301 + $0x830] sm:$0xff]
        %v620 = vld [vmem:[%s301 + $0x838] sm:$0xff]
        %v621 = vld [vmem:[%s301 + $0x840] sm:$0xff]
        %v622 = vld [vmem:[%s301 + $0x848] sm:$0xff]
        %v623 = vld [vmem:[%s301 + $0x850] sm:$0xff]
        %v624 = vld [vmem:[%s301 + $0x858] sm:$0xff]
        %v625 = vld [vmem:[%s301 + $0x860] sm:$0xff]
        %v626 = vld [vmem:[%s301 + $0x868] sm:$0xff]
        %v627 = vld [vmem:[%s301 + $0x870] sm:$0xff]
        %v628 = vld [vmem:[%s301 + $0x878] sm:$0xff]
        %v629 = vld [vmem:[%s301 + $0x880] sm:$0xff]
        %v630 = vld [vmem:[%s301 + $0x888] sm:$0xff]
        %v631 = vld [vmem:[%s301 + $0x890] sm:$0xff]
        %v632 = vld [vmem:[%s301 + $0x898] sm:$0xff]
        %v633 = vld [vmem:[%s301 + $0x8a0] sm:$0xff]
        %v634 = vld [vmem:[%s301 + $0x8a8] sm:$0xff]
        %v635 = vld [vmem:[%s301 + $0x8b0] sm:$0xff]
        %v636 = vld [vmem:[%s301 + $0x8b8] sm:$0xff]
        %v637 = vld [vmem:[%s301 + $0x8c0] sm:$0xff]
        %v638 = vld [vmem:[%s301 + $0x8c8] sm:$0xff]
        %v639 = vld [vmem:[%s301 + $0x8d0] sm:$0xff]
        %v640 = vld [vmem:[%s301 + $0x8d8] sm:$0xff]
        %v641 = vld [vmem:[%s301 + $0x8e0] sm:$0xff]
        %v642 = vld [vmem:[%s301 + $0x8e8] sm:$0xff]
        %v643 = vld [vmem:[%s301 + $0x8f0] sm:$0xff]
        %v644 = vld [vmem:[%s301 + $0x8f8] sm:$0xff]
        %v645 = vld [vmem:[%s301 + $0x900] sm:$0xff]
        %v646 = vld [vmem:[%s301 + $0x908] sm:$0xff]
        %v647 = vld [vmem:[%s301 + $0x910] sm:$0xff]
        %v648 = vld [vmem:[%s301 + $0x918] sm:$0xff]
        %v649 = vld [vmem:[%s301 + $0x920] sm:$0xff]
        %v650 = vld [vmem:[%s301 + $0x928] sm:$0xff]
        %v651 = vld [vmem:[%s301 + $0x930] sm:$0xff]
        %v652 = vld [vmem:[%s301 + $0x938] sm:$0xff]
        %v653 = vld [vmem:[%s301 + $0x940] sm:$0xff]
        %v654 = vld [vmem:[%s301 + $0x948] sm:$0xff]
        %v655 = vld [vmem:[%s301 + $0x950] sm:$0xff]
        %v656 = vld [vmem:[%s301 + $0x958] sm:$0xff]
        %v657 = vld [vmem:[%s301 + $0x960] sm:$0xff]
        %v658 = vld [vmem:[%s301 + $0x968] sm:$0xff]
        %v659 = vld [vmem:[%s301 + $0x970] sm:$0xff]
        %v660 = vld [vmem:[%s301 + $0x978] sm:$0xff]
        %v661 = vld [vmem:[%s301 + $0x980] sm:$0xff]
        %v662 = vld [vmem:[%s301 + $0x988] sm:$0xff]
        %v663 = vld [vmem:[%s301 + $0x990] sm:$0xff]
        %v664 = vld [vmem:[%s301 + $0x998] sm:$0xff]
        %v665 = vld [vmem:[%s301 + $0x9a0] sm:$0xff]
        %v666 = vld [vmem:[%s301 + $0x9a8] sm:$0xff]
        %v667 = vld [vmem:[%s301 + $0x9b0] sm:$0xff]
        %v668 = vld [vmem:[%s301 + $0x9b8] sm:$0xff]
        %v669 = vld [vmem:[%s301 + $0x9c0] sm:$0xff]
        %v670 = vld [vmem:[%s301 + $0x9c8] sm:$0xff]
        %v671 = vld [vmem:[%s301 + $0x9d0] sm:$0xff]
        %v672 = vld [vmem:[%s301 + $0x9d8] sm:$0xff]
        %v673 = vld [vmem:[%s301 + $0x9e0] sm:$0xff]
        %v674 = vld [vmem:[%s301 + $0x9e8] sm:$0xff]
        %v675 = vld [vmem:[%s301 + $0x9f0] sm:$0xff]
        %v676 = vld [vmem:[%s301 + $0x9f8] sm:$0xff]
        %v677 = vld [vmem:[%s301 + $0xa00] sm:$0xff]
        %v678 = vld [vmem:[%s301 + $0xa08] sm:$0xff]
        %v679 = vld [vmem:[%s301 + $0xa10] sm:$0xff]
        %v680 = vld [vmem:[%s301 + $0xa18] sm:$0xff]
        %v681 = vld [vmem:[%s301 + $0xa20] sm:$0xff]
        %v682 = vld [vmem:[%s301 + $0xa28] sm:$0xff]
        %v683 = vld [vmem:[%s301 + $0xa30] sm:$0xff]
        %v684 = vld [vmem:[%s301 + $0xa38] sm:$0xff]
        %v685 = vld [vmem:[%s301 + $0xa40] sm:$0xff]
        %v686 = vld [vmem:[%s301 + $0xa48] sm:$0xff]
        %v687 = vld [vmem:[%s301 + $0xa50] sm:$0xff]
        %v688 = vld [vmem:[%s301 + $0xa58] sm:$0xff]
        %v689 = vld [vmem:[%s301 + $0xa60] sm:$0xff]
        %v690 = vld [vmem:[%s301 + $0xa68] sm:$0xff]
        %v691 = vld [vmem:[%s301 + $0xa70] sm:$0xff]
        %v692 = vld [vmem:[%s301 + $0xa78] sm:$0xff]
        %v693 = vld [vmem:[%s301 + $0xa80] sm:$0xff]
        %v694 = vld [vmem:[%s301 + $0xa88] sm:$0xff]
        %v695 = vld [vmem:[%s301 + $0xa90] sm:$0xff]
        %v696 = vld [vmem:[%s301 + $0xa98] sm:$0xff]
        %v697 = vld [vmem:[%s301 + $0xaa0] sm:$0xff]
        %v698 = vld [vmem:[%s301 + $0xaa8] sm:$0xff]
        %v699 = vld [vmem:[%s301 + $0xab0] sm:$0xff]
        %v700 = vld [vmem:[%s301 + $0xab8] sm:$0xff]
        %v701 = vld [vmem:[%s301 + $0xac0] sm:$0xff]
        %v702 = vld [vmem:[%s301 + $0xac8] sm:$0xff]
        %v703 = vld [vmem:[%s301 + $0xad0] sm:$0xff]
        %v704 = vld [vmem:[%s301 + $0xad8] sm:$0xff]
        %v705 = vld [vmem:[%s301 + $0xae0] sm:$0xff]
        %v706 = vld [vmem:[%s301 + $0xae8] sm:$0xff]
        %v707 = vld [vmem:[%s301 + $0xaf0] sm:$0xff]
        %v708 = vld [vmem:[%s301 + $0xaf8] sm:$0xff]
        %v709 = vld [vmem:[%s301 + $0xb00] sm:$0xff]
        %v710 = vld [vmem:[%s301 + $0xb08] sm:$0xff]
        %v711 = vld [vmem:[%s301 + $0xb10] sm:$0xff]
        %v712 = vld [vmem:[%s301 + $0xb18] sm:$0xff]
        %v713 = vld [vmem:[%s301 + $0xb20] sm:$0xff]
        %v714 = vld [vmem:[%s301 + $0xb28] sm:$0xff]
        %v715 = vld [vmem:[%s301 + $0xb30] sm:$0xff]
        %v716 = vld [vmem:[%s301 + $0xb38] sm:$0xff]
        %v717 = vld [vmem:[%s301 + $0xb40] sm:$0xff]
        %v718 = vld [vmem:[%s301 + $0xb48] sm:$0xff]
        %v719 = vld [vmem:[%s301 + $0xb50] sm:$0xff]
        %v720 = vld [vmem:[%s301 + $0xb58] sm:$0xff]
        %v721 = vld [vmem:[%s301 + $0xb60] sm:$0xff]
        %v722 = vld [vmem:[%s301 + $0xb68] sm:$0xff]
        %v723 = vld [vmem:[%s301 + $0xb70] sm:$0xff]
        %v724 = vld [vmem:[%s301 + $0xb78] sm:$0xff]
        %v725 = vld [vmem:[%s301 + $0xb80] sm:$0xff]
        %v726 = vld [vmem:[%s301 + $0xb88] sm:$0xff]
        %v727 = vld [vmem:[%s301 + $0xb90] sm:$0xff]
        %v728 = vld [vmem:[%s301 + $0xb98] sm:$0xff]
        %v729 = vld [vmem:[%s301 + $0xba0] sm:$0xff]
        %v730 = vld [vmem:[%s301 + $0xba8] sm:$0xff]
        %v731 = vld [vmem:[%s301 + $0xbb0] sm:$0xff]
        %v732 = vld [vmem:[%s301 + $0xbb8] sm:$0xff]
        %v733 = vld [vmem:[%s301 + $0xbc0] sm:$0xff]
        %v734 = vld [vmem:[%s301 + $0xbc8] sm:$0xff]
        %v735 = vld [vmem:[%s301 + $0xbd0] sm:$0xff]
        %v736 = vld [vmem:[%s301 + $0xbd8] sm:$0xff]
        %v737 = vld [vmem:[%s301 + $0xbe0] sm:$0xff]
        %v738 = vld [vmem:[%s301 + $0xbe8] sm:$0xff]
        %v739 = vld [vmem:[%s301 + $0xbf0] sm:$0xff]
        %v740 = vld [vmem:[%s301 + $0xbf8] sm:$0xff]
        %v741 = vld [vmem:[%s301 + $0xc00] sm:$0xff]
        %v742 = vld [vmem:[%s301 + $0xc08] sm:$0xff]
        %v743 = vld [vmem:[%s301 + $0xc10] sm:$0xff]
        %v744 = vld [vmem:[%s301 + $0xc18] sm:$0xff]
        %v745 = vld [vmem:[%s301 + $0xc20] sm:$0xff]
        %v746 = vld [vmem:[%s301 + $0xc28] sm:$0xff]
        %v747 = vld [vmem:[%s301 + $0xc30] sm:$0xff]
        %v748 = vld [vmem:[%s301 + $0xc38] sm:$0xff]
        %v749 = vld [vmem:[%s301 + $0xc40] sm:$0xff]
        %v750 = vld [vmem:[%s301 + $0xc48] sm:$0xff]
        %v751 = vld [vmem:[%s301 + $0xc50] sm:$0xff]
        %v752 = vld [vmem:[%s301 + $0xc58] sm:$0xff]
        %v753 = vld [vmem:[%s301 + $0xc60] sm:$0xff]
        %v754 = vld [vmem:[%s301 + $0xc68] sm:$0xff]
        %v755 = vld [vmem:[%s301 + $0xc70] sm:$0xff]
        %v756 = vld [vmem:[%s301 + $0xc78] sm:$0xff]
        %v757 = vld [vmem:[%s301 + $0xc80] sm:$0xff]
        %v758 = vld [vmem:[%s301 + $0xc88] sm:$0xff]
        %v759 = vld [vmem:[%s301 + $0xc90] sm:$0xff]
        %v760 = vld [vmem:[%s301 + $0xc98] sm:$0xff]
        %v761 = vld [vmem:[%s301 + $0xca0] sm:$0xff]
        %v762 = vld [vmem:[%s301 + $0xca8] sm:$0xff]
        %v763 = vld [vmem:[%s301 + $0xcb0] sm:$0xff]
        %v764 = vld [vmem:[%s301 + $0xcb8] sm:$0xff]
        %v765 = vld [vmem:[%s301 + $0xcc0] sm:$0xff]
        %v766 = vld [vmem:[%s301 + $0xcc8] sm:$0xff]
        %v767 = vld [vmem:[%s301 + $0xcd0] sm:$0xff]
        %v768 = vld [vmem:[%s301 + $0xcd8] sm:$0xff]
        %v769 = vld [vmem:[%s301 + $0xce0] sm:$0xff]
        %v770 = vld [vmem:[%s301 + $0xce8] sm:$0xff]
        %v771 = vld [vmem:[%s301 + $0xcf0] sm:$0xff]
        %v772 = vld [vmem:[%s301 + $0xcf8] sm:$0xff]
        %v773 = vld [vmem:[%s301 + $0xd00] sm:$0xff]
        %v774 = vld [vmem:[%s301 + $0xd08] sm:$0xff]
        %v775 = vld [vmem:[%s301 + $0xd10] sm:$0xff]
        %v776 = vld [vmem:[%s301 + $0xd18] sm:$0xff]
        %v777 = vld [vmem:[%s301 + $0xd20] sm:$0xff]
        %v778 = vld [vmem:[%s301 + $0xd28] sm:$0xff]
        %v779 = vld [vmem:[%s301 + $0xd30] sm:$0xff]
        %v780 = vld [vmem:[%s301 + $0xd38] sm:$0xff]
        %v781 = vld [vmem:[%s301 + $0xd40] sm:$0xff]
        %v782 = vld [vmem:[%s301 + $0xd48] sm:$0xff]
        %v783 = vld [vmem:[%s301 + $0xd50] sm:$0xff]
        %v784 = vld [vmem:[%s301 + $0xd58] sm:$0xff]
        %v785 = vld [vmem:[%s301 + $0xd60] sm:$0xff]
        %v786 = vld [vmem:[%s301 + $0xd68] sm:$0xff]
        %v787 = vld [vmem:[%s301 + $0xd70] sm:$0xff]
        %v788 = vld [vmem:[%s301 + $0xd78] sm:$0xff]
        %v789 = vld [vmem:[%s301 + $0xd80] sm:$0xff]
        %v790 = vld [vmem:[%s301 + $0xd88] sm:$0xff]
        %v791 = vld [vmem:[%s301 + $0xd90] sm:$0xff]
        %v792 = vld [vmem:[%s301 + $0xd98] sm:$0xff]
        %v793 = vld [vmem:[%s301 + $0xda0] sm:$0xff]
        %v794 = vld [vmem:[%s301 + $0xda8] sm:$0xff]
        %v795 = vld [vmem:[%s301 + $0xdb0] sm:$0xff]
        %v796 = vld [vmem:[%s301 + $0xdb8] sm:$0xff]
        %v797 = vld [vmem:[%s301 + $0xdc0] sm:$0xff]
        %v798 = vld [vmem:[%s301 + $0xdc8] sm:$0xff]
        %v799 = vld [vmem:[%s301 + $0xdd0] sm:$0xff]
        %v800 = vld [vmem:[%s301 + $0xdd8] sm:$0xff]
        %v801 = vld [vmem:[%s301 + $0xde0] sm:$0xff]
        %v802 = vld [vmem:[%s301 + $0xde8] sm:$0xff]
        %v803 = vld [vmem:[%s301 + $0xdf0] sm:$0xff]
        %v804 = vld [vmem:[%s301 + $0xdf8] sm:$0xff]
        %v805 = vld [vmem:[%s301 + $0xe00] sm:$0xff]
        %v806 = vld [vmem:[%s301 + $0xe08] sm:$0xff]
        %v807 = vld [vmem:[%s301 + $0xe10] sm:$0xff]
        %v808 = vld [vmem:[%s301 + $0xe18] sm:$0xff]
        %v809 = vld [vmem:[%s301 + $0xe20] sm:$0xff]
        %v810 = vld [vmem:[%s301 + $0xe28] sm:$0xff]
        %v811 = vld [vmem:[%s301 + $0xe30] sm:$0xff]
        %v812 = vld [vmem:[%s301 + $0xe38] sm:$0xff]
        %v813 = vld [vmem:[%s301 + $0xe40] sm:$0xff]
        %v814 = vld [vmem:[%s301 + $0xe48] sm:$0xff]
        %v815 = vld [vmem:[%s301 + $0xe50] sm:$0xff]
        %v816 = vld [vmem:[%s301 + $0xe58] sm:$0xff]
        %v817 = vld [vmem:[%s301 + $0xe60] sm:$0xff]
        %v818 = vld [vmem:[%s301 + $0xe68] sm:$0xff]
        %v819 = vld [vmem:[%s301 + $0xe70] sm:$0xff]
        %v820 = vld [vmem:[%s301 + $0xe78] sm:$0xff]
        %v821 = vld [vmem:[%s301 + $0xe80] sm:$0xff]
        %v822 = vld [vmem:[%s301 + $0xe88] sm:$0xff]
        %v823 = vld [vmem:[%s301 + $0xe90] sm:$0xff]
        %v824 = vld [vmem:[%s301 + $0xe98] sm:$0xff]
        %v825 = vld [vmem:[%s301 + $0xea0] sm:$0xff]
        %v826 = vld [vmem:[%s301 + $0xea8] sm:$0xff]
        %v827 = vld [vmem:[%s301 + $0xeb0] sm:$0xff]
        %v828 = vld [vmem:[%s301 + $0xeb8] sm:$0xff]
        %v829 = vld [vmem:[%s301 + $0xec0] sm:$0xff]
        %v830 = vld [vmem:[%s301 + $0xec8] sm:$0xff]
        %v831 = vld [vmem:[%s301 + $0xed0] sm:$0xff]
        %v832 = vld [vmem:[%s301 + $0xed8] sm:$0xff]
        %v833 = vld [vmem:[%s301 + $0xee0] sm:$0xff]
        %v834 = vld [vmem:[%s301 + $0xee8] sm:$0xff]
        %v835 = vld [vmem:[%s301 + $0xef0] sm:$0xff]
        %v836 = vld [vmem:[%s301 + $0xef8] sm:$0xff]
        %v837 = vld [vmem:[%s301 + $0xf00] sm:$0xff]
        %v838 = vld [vmem:[%s301 + $0xf08] sm:$0xff]
        %v839 = vld [vmem:[%s301 + $0xf10] sm:$0xff]
        %v840 = vld [vmem:[%s301 + $0xf18] sm:$0xff]
        %v841 = vld [vmem:[%s301 + $0xf20] sm:$0xff]
        %v842 = vld [vmem:[%s301 + $0xf28] sm:$0xff]
        %v843 = vld [vmem:[%s301 + $0xf30] sm:$0xff]
        %v844 = vld [vmem:[%s301 + $0xf38] sm:$0xff]
        %v845 = vld [vmem:[%s301 + $0xf40] sm:$0xff]
        %v846 = vld [vmem:[%s301 + $0xf48] sm:$0xff]
        %v847 = vld [vmem:[%s301 + $0xf50] sm:$0xff]
        %v848 = vld [vmem:[%s301 + $0xf58] sm:$0xff]
        %v849 = vld [vmem:[%s301 + $0xf60] sm:$0xff]
        %v850 = vld [vmem:[%s301 + $0xf68] sm:$0xff]
        %v851 = vld [vmem:[%s301 + $0xf70] sm:$0xff]
        %v852 = vld [vmem:[%s301 + $0xf78] sm:$0xff]
        %v853 = vld [vmem:[%s301 + $0xf80] sm:$0xff]
        %v854 = vld [vmem:[%s301 + $0xf88] sm:$0xff]
        %v855 = vld [vmem:[%s301 + $0xf90] sm:$0xff]
        %v856 = vld [vmem:[%s301 + $0xf98] sm:$0xff]
        %v857 = vld [vmem:[%s301 + $0xfa0] sm:$0xff]
        %v858 = vld [vmem:[%s301 + $0xfa8] sm:$0xff]
        %v859 = vld [vmem:[%s301 + $0xfb0] sm:$0xff]
        %v860 = vld [vmem:[%s301 + $0xfb8] sm:$0xff]
        %v861 = vld [vmem:[%s301 + $0xfc0] sm:$0xff]
        %v862 = vld [vmem:[%s301 + $0xfc8] sm:$0xff]
        %v863 = vld [vmem:[%s301 + $0xfd0] sm:$0xff]
        %v864 = vld [vmem:[%s301 + $0xfd8] sm:$0xff]
        %v865 = vld [vmem:[%s301 + $0xfe0] sm:$0xff]
        %v866 = vld [vmem:[%s301 + $0xfe8] sm:$0xff]
        %v867 = vld [vmem:[%s301 + $0xff0] sm:$0xff]
        %v868 = vld [vmem:[%s301 + $0xff8] sm:$0xff]
        %v885 = vunpack.c.l.b16 %v341
        %v886 = vunpack.c.h.b16 %v341
        %v887 = vunpack.c.l.b16 %v342
        %v888 = vunpack.c.h.b16 %v342
        %v889 = vunpack.c.l.b16 %v343
        %v890 = vunpack.c.h.b16 %v343
        %v891 = vunpack.c.l.b16 %v344
        %v892 = vunpack.c.h.b16 %v344
        %v893 = vunpack.c.l.b16 %v345
        %v894 = vunpack.c.h.b16 %v345
        %v895 = vunpack.c.l.b16 %v346
        %v896 = vunpack.c.h.b16 %v346
        %v897 = vunpack.c.l.b16 %v347
        %v898 = vunpack.c.h.b16 %v347
        %v899 = vunpack.c.l.b16 %v348
        %v900 = vunpack.c.h.b16 %v348
        %v901 = vunpack.c.l.b16 %v349
        %v902 = vunpack.c.h.b16 %v349
        %v903 = vunpack.c.l.b16 %v350
        %v904 = vunpack.c.h.b16 %v350
        %v905 = vunpack.c.l.b16 %v351
        %v906 = vunpack.c.h.b16 %v351
        %v907 = vunpack.c.l.b16 %v352
        %v908 = vunpack.c.h.b16 %v352
        %v909 = vunpack.c.l.b16 %v353
        %v910 = vunpack.c.h.b16 %v353
        %v911 = vunpack.c.l.b16 %v354
        %v912 = vunpack.c.h.b16 %v354
        %v913 = vunpack.c.l.b16 %v355
        %v914 = vunpack.c.h.b16 %v355
        %v915 = vunpack.c.l.b16 %v356
        %v916 = vunpack.c.h.b16 %v356
        %v917 = vpack.c.b16 %v901, %v885
        %v918 = vpack.c.b16 %v902, %v886
        %v919 = vpack.c.b16 %v903, %v887
        %v920 = vpack.c.b16 %v904, %v888
        %v921 = vpack.c.b16 %v905, %v889
        %v922 = vpack.c.b16 %v906, %v890
        %v923 = vpack.c.b16 %v907, %v891
        %v924 = vpack.c.b16 %v908, %v892
        %v925 = vpack.c.b16 %v909, %v893
        %v926 = vpack.c.b16 %v910, %v894
        %v927 = vpack.c.b16 %v911, %v895
        %v928 = vpack.c.b16 %v912, %v896
        %v929 = vpack.c.b16 %v913, %v897
        %v930 = vpack.c.b16 %v914, %v898
        %v931 = vpack.c.b16 %v915, %v899
        %v932 = vpack.c.b16 %v916, %v900
        %v1461 = vunpack.c.l.b16 %v357
        %v1462 = vunpack.c.h.b16 %v357
        %v1463 = vunpack.c.l.b16 %v358
        %v1464 = vunpack.c.h.b16 %v358
        %v1465 = vunpack.c.l.b16 %v359
        %v1466 = vunpack.c.h.b16 %v359
        %v1467 = vunpack.c.l.b16 %v360
        %v1468 = vunpack.c.h.b16 %v360
        %v1469 = vunpack.c.l.b16 %v361
        %v1470 = vunpack.c.h.b16 %v361
        %v1471 = vunpack.c.l.b16 %v362
        %v1472 = vunpack.c.h.b16 %v362
        %v1473 = vunpack.c.l.b16 %v363
        %v1474 = vunpack.c.h.b16 %v363
        %v1475 = vunpack.c.l.b16 %v364
        %v1476 = vunpack.c.h.b16 %v364
        %v1477 = vunpack.c.l.b16 %v365
        %v1478 = vunpack.c.h.b16 %v365
        %v1479 = vunpack.c.l.b16 %v366
        %v1480 = vunpack.c.h.b16 %v366
        %v1481 = vunpack.c.l.b16 %v367
        %v1482 = vunpack.c.h.b16 %v367
        %v1483 = vunpack.c.l.b16 %v368
        %v1484 = vunpack.c.h.b16 %v368
        %v1485 = vunpack.c.l.b16 %v369
        %v1486 = vunpack.c.h.b16 %v369
        %v1487 = vunpack.c.l.b16 %v370
        %v1488 = vunpack.c.h.b16 %v370
        %v1489 = vunpack.c.l.b16 %v371
        %v1490 = vunpack.c.h.b16 %v371
        %v1491 = vunpack.c.l.b16 %v372
        %v1492 = vunpack.c.h.b16 %v372
        %v1493 = vunpack.c.l.b16 %v373
        %v1494 = vunpack.c.h.b16 %v373
        %v1495 = vunpack.c.l.b16 %v374
        %v1496 = vunpack.c.h.b16 %v374
        %v1497 = vunpack.c.l.b16 %v375
        %v1498 = vunpack.c.h.b16 %v375
        %v1499 = vunpack.c.l.b16 %v376
        %v1500 = vunpack.c.h.b16 %v376
        %v1501 = vunpack.c.l.b16 %v377
        %v1502 = vunpack.c.h.b16 %v377
        %v1503 = vunpack.c.l.b16 %v378
        %v1504 = vunpack.c.h.b16 %v378
        %v1505 = vunpack.c.l.b16 %v379
        %v1506 = vunpack.c.h.b16 %v379
        %v1507 = vunpack.c.l.b16 %v380
        %v1508 = vunpack.c.h.b16 %v380
        %v1509 = vunpack.c.l.b16 %v381
        %v1510 = vunpack.c.h.b16 %v381
        %v1511 = vunpack.c.l.b16 %v382
        %v1512 = vunpack.c.h.b16 %v382
        %v1513 = vunpack.c.l.b16 %v383
        %v1514 = vunpack.c.h.b16 %v383
        %v1515 = vunpack.c.l.b16 %v384
        %v1516 = vunpack.c.h.b16 %v384
        %v1517 = vunpack.c.l.b16 %v385
        %v1518 = vunpack.c.h.b16 %v385
        %v1519 = vunpack.c.l.b16 %v386
        %v1520 = vunpack.c.h.b16 %v386
        %v1521 = vunpack.c.l.b16 %v387
        %v1522 = vunpack.c.h.b16 %v387
        %v1523 = vunpack.c.l.b16 %v388
        %v1524 = vunpack.c.h.b16 %v388
        %v1525 = vunpack.c.l.b16 %v389
        %v1526 = vunpack.c.h.b16 %v389
        %v1527 = vunpack.c.l.b16 %v390
        %v1528 = vunpack.c.h.b16 %v390
        %v1529 = vunpack.c.l.b16 %v391
        %v1530 = vunpack.c.h.b16 %v391
        %v1531 = vunpack.c.l.b16 %v392
        %v1532 = vunpack.c.h.b16 %v392
        %v1533 = vunpack.c.l.b16 %v393
        %v1534 = vunpack.c.h.b16 %v393
        %v1535 = vunpack.c.l.b16 %v394
        %v1536 = vunpack.c.h.b16 %v394
        %v1537 = vunpack.c.l.b16 %v395
        %v1538 = vunpack.c.h.b16 %v395
        %v1539 = vunpack.c.l.b16 %v396
        %v1540 = vunpack.c.h.b16 %v396
        %v1541 = vunpack.c.l.b16 %v397
        %v1542 = vunpack.c.h.b16 %v397
        %v1543 = vunpack.c.l.b16 %v398
        %v1544 = vunpack.c.h.b16 %v398
        %v1545 = vunpack.c.l.b16 %v399
        %v1546 = vunpack.c.h.b16 %v399
        %v1547 = vunpack.c.l.b16 %v400
        %v1548 = vunpack.c.h.b16 %v400
        %v1549 = vunpack.c.l.b16 %v401
        %v1550 = vunpack.c.h.b16 %v401
        %v1551 = vunpack.c.l.b16 %v402
        %v1552 = vunpack.c.h.b16 %v402
        %v1553 = vunpack.c.l.b16 %v403
        %v1554 = vunpack.c.h.b16 %v403
        %v1555 = vunpack.c.l.b16 %v404
        %v1556 = vunpack.c.h.b16 %v404
        %v1557 = vunpack.c.l.b16 %v405
        %v1558 = vunpack.c.h.b16 %v405
        %v1559 = vunpack.c.l.b16 %v406
        %v1560 = vunpack.c.h.b16 %v406
        %v1561 = vunpack.c.l.b16 %v407
        %v1562 = vunpack.c.h.b16 %v407
        %v1563 = vunpack.c.l.b16 %v408
        %v1564 = vunpack.c.h.b16 %v408
        %v1565 = vunpack.c.l.b16 %v409
        %v1566 = vunpack.c.h.b16 %v409
        %v1567 = vunpack.c.l.b16 %v410
        %v1568 = vunpack.c.h.b16 %v410
        %v1569 = vunpack.c.l.b16 %v411
        %v1570 = vunpack.c.h.b16 %v411
        %v1571 = vunpack.c.l.b16 %v412
        %v1572 = vunpack.c.h.b16 %v412
        %v1573 = vunpack.c.l.b16 %v413
        %v1574 = vunpack.c.h.b16 %v413
        %v1575 = vunpack.c.l.b16 %v414
        %v1576 = vunpack.c.h.b16 %v414
        %v1577 = vunpack.c.l.b16 %v415
        %v1578 = vunpack.c.h.b16 %v415
        %v1579 = vunpack.c.l.b16 %v416
        %v1580 = vunpack.c.h.b16 %v416
        %v1581 = vunpack.c.l.b16 %v417
        %v1582 = vunpack.c.h.b16 %v417
        %v1583 = vunpack.c.l.b16 %v418
        %v1584 = vunpack.c.h.b16 %v418
        %v1585 = vunpack.c.l.b16 %v419
        %v1586 = vunpack.c.h.b16 %v419
        %v1587 = vunpack.c.l.b16 %v420
        %v1588 = vunpack.c.h.b16 %v420
        %v1589 = vunpack.c.l.b16 %v421
        %v1590 = vunpack.c.h.b16 %v421
        %v1591 = vunpack.c.l.b16 %v422
        %v1592 = vunpack.c.h.b16 %v422
        %v1593 = vunpack.c.l.b16 %v423
        %v1594 = vunpack.c.h.b16 %v423
        %v1595 = vunpack.c.l.b16 %v424
        %v1596 = vunpack.c.h.b16 %v424
        %v1597 = vunpack.c.l.b16 %v425
        %v1598 = vunpack.c.h.b16 %v425
        %v1599 = vunpack.c.l.b16 %v426
        %v1600 = vunpack.c.h.b16 %v426
        %v1601 = vunpack.c.l.b16 %v427
        %v1602 = vunpack.c.h.b16 %v427
        %v1603 = vunpack.c.l.b16 %v428
        %v1604 = vunpack.c.h.b16 %v428
        %v1605 = vunpack.c.l.b16 %v429
        %v1606 = vunpack.c.h.b16 %v429
        %v1607 = vunpack.c.l.b16 %v430
        %v1608 = vunpack.c.h.b16 %v430
        %v1609 = vunpack.c.l.b16 %v431
        %v1610 = vunpack.c.h.b16 %v431
        %v1611 = vunpack.c.l.b16 %v432
        %v1612 = vunpack.c.h.b16 %v432
        %v1613 = vunpack.c.l.b16 %v433
        %v1614 = vunpack.c.h.b16 %v433
        %v1615 = vunpack.c.l.b16 %v434
        %v1616 = vunpack.c.h.b16 %v434
        %v1617 = vunpack.c.l.b16 %v435
        %v1618 = vunpack.c.h.b16 %v435
        %v1619 = vunpack.c.l.b16 %v436
        %v1620 = vunpack.c.h.b16 %v436
        %v1621 = vunpack.c.l.b16 %v437
        %v1622 = vunpack.c.h.b16 %v437
        %v1623 = vunpack.c.l.b16 %v438
        %v1624 = vunpack.c.h.b16 %v438
        %v1625 = vunpack.c.l.b16 %v439
        %v1626 = vunpack.c.h.b16 %v439
        %v1627 = vunpack.c.l.b16 %v440
        %v1628 = vunpack.c.h.b16 %v440
        %v1629 = vunpack.c.l.b16 %v441
        %v1630 = vunpack.c.h.b16 %v441
        %v1631 = vunpack.c.l.b16 %v442
        %v1632 = vunpack.c.h.b16 %v442
        %v1633 = vunpack.c.l.b16 %v443
        %v1634 = vunpack.c.h.b16 %v443
        %v1635 = vunpack.c.l.b16 %v444
        %v1636 = vunpack.c.h.b16 %v444
        %v1637 = vunpack.c.l.b16 %v445
        %v1638 = vunpack.c.h.b16 %v445
        %v1639 = vunpack.c.l.b16 %v446
        %v1640 = vunpack.c.h.b16 %v446
        %v1641 = vunpack.c.l.b16 %v447
        %v1642 = vunpack.c.h.b16 %v447
        %v1643 = vunpack.c.l.b16 %v448
        %v1644 = vunpack.c.h.b16 %v448
        %v1645 = vunpack.c.l.b16 %v449
        %v1646 = vunpack.c.h.b16 %v449
        %v1647 = vunpack.c.l.b16 %v450
        %v1648 = vunpack.c.h.b16 %v450
        %v1649 = vunpack.c.l.b16 %v451
        %v1650 = vunpack.c.h.b16 %v451
        %v1651 = vunpack.c.l.b16 %v452
        %v1652 = vunpack.c.h.b16 %v452
        %v1653 = vunpack.c.l.b16 %v453
        %v1654 = vunpack.c.h.b16 %v453
        %v1655 = vunpack.c.l.b16 %v454
        %v1656 = vunpack.c.h.b16 %v454
        %v1657 = vunpack.c.l.b16 %v455
        %v1658 = vunpack.c.h.b16 %v455
        %v1659 = vunpack.c.l.b16 %v456
        %v1660 = vunpack.c.h.b16 %v456
        %v1661 = vunpack.c.l.b16 %v457
        %v1662 = vunpack.c.h.b16 %v457
        %v1663 = vunpack.c.l.b16 %v458
        %v1664 = vunpack.c.h.b16 %v458
        %v1665 = vunpack.c.l.b16 %v459
        %v1666 = vunpack.c.h.b16 %v459
        %v1667 = vunpack.c.l.b16 %v460
        %v1668 = vunpack.c.h.b16 %v460
        %v1669 = vunpack.c.l.b16 %v461
        %v1670 = vunpack.c.h.b16 %v461
        %v1671 = vunpack.c.l.b16 %v462
        %v1672 = vunpack.c.h.b16 %v462
        %v1673 = vunpack.c.l.b16 %v463
        %v1674 = vunpack.c.h.b16 %v463
        %v1675 = vunpack.c.l.b16 %v464
        %v1676 = vunpack.c.h.b16 %v464
        %v1677 = vunpack.c.l.b16 %v465
        %v1678 = vunpack.c.h.b16 %v465
        %v1679 = vunpack.c.l.b16 %v466
        %v1680 = vunpack.c.h.b16 %v466
        %v1681 = vunpack.c.l.b16 %v467
        %v1682 = vunpack.c.h.b16 %v467
        %v1683 = vunpack.c.l.b16 %v468
        %v1684 = vunpack.c.h.b16 %v468
        %v1685 = vunpack.c.l.b16 %v469
        %v1686 = vunpack.c.h.b16 %v469
        %v1687 = vunpack.c.l.b16 %v470
        %v1688 = vunpack.c.h.b16 %v470
        %v1689 = vunpack.c.l.b16 %v471
        %v1690 = vunpack.c.h.b16 %v471
        %v1691 = vunpack.c.l.b16 %v472
        %v1692 = vunpack.c.h.b16 %v472
        %v1693 = vunpack.c.l.b16 %v473
        %v1694 = vunpack.c.h.b16 %v473
        %v1695 = vunpack.c.l.b16 %v474
        %v1696 = vunpack.c.h.b16 %v474
        %v1697 = vunpack.c.l.b16 %v475
        %v1698 = vunpack.c.h.b16 %v475
        %v1699 = vunpack.c.l.b16 %v476
        %v1700 = vunpack.c.h.b16 %v476
        %v1701 = vunpack.c.l.b16 %v477
        %v1702 = vunpack.c.h.b16 %v477
        %v1703 = vunpack.c.l.b16 %v478
        %v1704 = vunpack.c.h.b16 %v478
        %v1705 = vunpack.c.l.b16 %v479
        %v1706 = vunpack.c.h.b16 %v479
        %v1707 = vunpack.c.l.b16 %v480
        %v1708 = vunpack.c.h.b16 %v480
        %v1709 = vunpack.c.l.b16 %v481
        %v1710 = vunpack.c.h.b16 %v481
        %v1711 = vunpack.c.l.b16 %v482
        %v1712 = vunpack.c.h.b16 %v482
        %v1713 = vunpack.c.l.b16 %v483
        %v1714 = vunpack.c.h.b16 %v483
        %v1715 = vunpack.c.l.b16 %v484
        %v1716 = vunpack.c.h.b16 %v484
        %v1717 = vunpack.c.l.b16 %v485
        %v1718 = vunpack.c.h.b16 %v485
        %v1719 = vunpack.c.l.b16 %v486
        %v1720 = vunpack.c.h.b16 %v486
        %v1721 = vunpack.c.l.b16 %v487
        %v1722 = vunpack.c.h.b16 %v487
        %v1723 = vunpack.c.l.b16 %v488
        %v1724 = vunpack.c.h.b16 %v488
        %v1725 = vunpack.c.l.b16 %v489
        %v1726 = vunpack.c.h.b16 %v489
        %v1727 = vunpack.c.l.b16 %v490
        %v1728 = vunpack.c.h.b16 %v490
        %v1729 = vunpack.c.l.b16 %v491
        %v1730 = vunpack.c.h.b16 %v491
        %v1731 = vunpack.c.l.b16 %v492
        %v1732 = vunpack.c.h.b16 %v492
        %v1733 = vunpack.c.l.b16 %v493
        %v1734 = vunpack.c.h.b16 %v493
        %v1735 = vunpack.c.l.b16 %v494
        %v1736 = vunpack.c.h.b16 %v494
        %v1737 = vunpack.c.l.b16 %v495
        %v1738 = vunpack.c.h.b16 %v495
        %v1739 = vunpack.c.l.b16 %v496
        %v1740 = vunpack.c.h.b16 %v496
        %v1741 = vunpack.c.l.b16 %v497
        %v1742 = vunpack.c.h.b16 %v497
        %v1743 = vunpack.c.l.b16 %v498
        %v1744 = vunpack.c.h.b16 %v498
        %v1745 = vunpack.c.l.b16 %v499
        %v1746 = vunpack.c.h.b16 %v499
        %v1747 = vunpack.c.l.b16 %v500
        %v1748 = vunpack.c.h.b16 %v500
        %v1749 = vunpack.c.l.b16 %v501
        %v1750 = vunpack.c.h.b16 %v501
        %v1751 = vunpack.c.l.b16 %v502
        %v1752 = vunpack.c.h.b16 %v502
        %v1753 = vunpack.c.l.b16 %v503
        %v1754 = vunpack.c.h.b16 %v503
        %v1755 = vunpack.c.l.b16 %v504
        %v1756 = vunpack.c.h.b16 %v504
        %v1757 = vunpack.c.l.b16 %v505
        %v1758 = vunpack.c.h.b16 %v505
        %v1759 = vunpack.c.l.b16 %v506
        %v1760 = vunpack.c.h.b16 %v506
        %v1761 = vunpack.c.l.b16 %v507
        %v1762 = vunpack.c.h.b16 %v507
        %v1763 = vunpack.c.l.b16 %v508
        %v1764 = vunpack.c.h.b16 %v508
        %v1765 = vunpack.c.l.b16 %v509
        %v1766 = vunpack.c.h.b16 %v509
        %v1767 = vunpack.c.l.b16 %v510
        %v1768 = vunpack.c.h.b16 %v510
        %v1769 = vunpack.c.l.b16 %v511
        %v1770 = vunpack.c.h.b16 %v511
        %v1771 = vunpack.c.l.b16 %v512
        %v1772 = vunpack.c.h.b16 %v512
        %v1773 = vunpack.c.l.b16 %v513
        %v1774 = vunpack.c.h.b16 %v513
        %v1775 = vunpack.c.l.b16 %v514
        %v1776 = vunpack.c.h.b16 %v514
        %v1777 = vunpack.c.l.b16 %v515
        %v1778 = vunpack.c.h.b16 %v515
        %v1779 = vunpack.c.l.b16 %v516
        %v1780 = vunpack.c.h.b16 %v516
        %v1781 = vunpack.c.l.b16 %v517
        %v1782 = vunpack.c.h.b16 %v517
        %v1783 = vunpack.c.l.b16 %v518
        %v1784 = vunpack.c.h.b16 %v518
        %v1785 = vunpack.c.l.b16 %v519
        %v1786 = vunpack.c.h.b16 %v519
        %v1787 = vunpack.c.l.b16 %v520
        %v1788 = vunpack.c.h.b16 %v520
        %v1789 = vunpack.c.l.b16 %v521
        %v1790 = vunpack.c.h.b16 %v521
        %v1791 = vunpack.c.l.b16 %v522
        %v1792 = vunpack.c.h.b16 %v522
        %v1793 = vunpack.c.l.b16 %v523
        %v1794 = vunpack.c.h.b16 %v523
        %v1795 = vunpack.c.l.b16 %v524
        %v1796 = vunpack.c.h.b16 %v524
        %v1797 = vunpack.c.l.b16 %v525
        %v1798 = vunpack.c.h.b16 %v525
        %v1799 = vunpack.c.l.b16 %v526
        %v1800 = vunpack.c.h.b16 %v526
        %v1801 = vunpack.c.l.b16 %v527
        %v1802 = vunpack.c.h.b16 %v527
        %v1803 = vunpack.c.l.b16 %v528
        %v1804 = vunpack.c.h.b16 %v528
        %v1805 = vunpack.c.l.b16 %v529
        %v1806 = vunpack.c.h.b16 %v529
        %v1807 = vunpack.c.l.b16 %v530
        %v1808 = vunpack.c.h.b16 %v530
        %v1809 = vunpack.c.l.b16 %v531
        %v1810 = vunpack.c.h.b16 %v531
        %v1811 = vunpack.c.l.b16 %v532
        %v1812 = vunpack.c.h.b16 %v532
        %v1813 = vunpack.c.l.b16 %v533
        %v1814 = vunpack.c.h.b16 %v533
        %v1815 = vunpack.c.l.b16 %v534
        %v1816 = vunpack.c.h.b16 %v534
        %v1817 = vunpack.c.l.b16 %v535
        %v1818 = vunpack.c.h.b16 %v535
        %v1819 = vunpack.c.l.b16 %v536
        %v1820 = vunpack.c.h.b16 %v536
        %v1821 = vunpack.c.l.b16 %v537
        %v1822 = vunpack.c.h.b16 %v537
        %v1823 = vunpack.c.l.b16 %v538
        %v1824 = vunpack.c.h.b16 %v538
        %v1825 = vunpack.c.l.b16 %v539
        %v1826 = vunpack.c.h.b16 %v539
        %v1827 = vunpack.c.l.b16 %v540
        %v1828 = vunpack.c.h.b16 %v540
        %v1829 = vunpack.c.l.b16 %v541
        %v1830 = vunpack.c.h.b16 %v541
        %v1831 = vunpack.c.l.b16 %v542
        %v1832 = vunpack.c.h.b16 %v542
        %v1833 = vunpack.c.l.b16 %v543
        %v1834 = vunpack.c.h.b16 %v543
        %v1835 = vunpack.c.l.b16 %v544
        %v1836 = vunpack.c.h.b16 %v544
        %v1837 = vunpack.c.l.b16 %v545
        %v1838 = vunpack.c.h.b16 %v545
        %v1839 = vunpack.c.l.b16 %v546
        %v1840 = vunpack.c.h.b16 %v546
        %v1841 = vunpack.c.l.b16 %v547
        %v1842 = vunpack.c.h.b16 %v547
        %v1843 = vunpack.c.l.b16 %v548
        %v1844 = vunpack.c.h.b16 %v548
        %v1845 = vunpack.c.l.b16 %v549
        %v1846 = vunpack.c.h.b16 %v549
        %v1847 = vunpack.c.l.b16 %v550
        %v1848 = vunpack.c.h.b16 %v550
        %v1849 = vunpack.c.l.b16 %v551
        %v1850 = vunpack.c.h.b16 %v551
        %v1851 = vunpack.c.l.b16 %v552
        %v1852 = vunpack.c.h.b16 %v552
        %v1853 = vunpack.c.l.b16 %v553
        %v1854 = vunpack.c.h.b16 %v553
        %v1855 = vunpack.c.l.b16 %v554
        %v1856 = vunpack.c.h.b16 %v554
        %v1857 = vunpack.c.l.b16 %v555
        %v1858 = vunpack.c.h.b16 %v555
        %v1859 = vunpack.c.l.b16 %v556
        %v1860 = vunpack.c.h.b16 %v556
        %v1861 = vunpack.c.l.b16 %v557
        %v1862 = vunpack.c.h.b16 %v557
        %v1863 = vunpack.c.l.b16 %v558
        %v1864 = vunpack.c.h.b16 %v558
        %v1865 = vunpack.c.l.b16 %v559
        %v1866 = vunpack.c.h.b16 %v559
        %v1867 = vunpack.c.l.b16 %v560
        %v1868 = vunpack.c.h.b16 %v560
        %v1869 = vunpack.c.l.b16 %v561
        %v1870 = vunpack.c.h.b16 %v561
        %v1871 = vunpack.c.l.b16 %v562
        %v1872 = vunpack.c.h.b16 %v562
        %v1873 = vunpack.c.l.b16 %v563
        %v1874 = vunpack.c.h.b16 %v563
        %v1875 = vunpack.c.l.b16 %v564
        %v1876 = vunpack.c.h.b16 %v564
        %v1877 = vunpack.c.l.b16 %v565
        %v1878 = vunpack.c.h.b16 %v565
        %v1879 = vunpack.c.l.b16 %v566
        %v1880 = vunpack.c.h.b16 %v566
        %v1881 = vunpack.c.l.b16 %v567
        %v1882 = vunpack.c.h.b16 %v567
        %v1883 = vunpack.c.l.b16 %v568
        %v1884 = vunpack.c.h.b16 %v568
        %v1885 = vunpack.c.l.b16 %v569
        %v1886 = vunpack.c.h.b16 %v569
        %v1887 = vunpack.c.l.b16 %v570
        %v1888 = vunpack.c.h.b16 %v570
        %v1889 = vunpack.c.l.b16 %v571
        %v1890 = vunpack.c.h.b16 %v571
        %v1891 = vunpack.c.l.b16 %v572
        %v1892 = vunpack.c.h.b16 %v572
        %v1893 = vunpack.c.l.b16 %v573
        %v1894 = vunpack.c.h.b16 %v573
        %v1895 = vunpack.c.l.b16 %v574
        %v1896 = vunpack.c.h.b16 %v574
        %v1897 = vunpack.c.l.b16 %v575
        %v1898 = vunpack.c.h.b16 %v575
        %v1899 = vunpack.c.l.b16 %v576
        %v1900 = vunpack.c.h.b16 %v576
        %v1901 = vunpack.c.l.b16 %v577
        %v1902 = vunpack.c.h.b16 %v577
        %v1903 = vunpack.c.l.b16 %v578
        %v1904 = vunpack.c.h.b16 %v578
        %v1905 = vunpack.c.l.b16 %v579
        %v1906 = vunpack.c.h.b16 %v579
        %v1907 = vunpack.c.l.b16 %v580
        %v1908 = vunpack.c.h.b16 %v580
        %v1909 = vunpack.c.l.b16 %v581
        %v1910 = vunpack.c.h.b16 %v581
        %v1911 = vunpack.c.l.b16 %v582
        %v1912 = vunpack.c.h.b16 %v582
        %v1913 = vunpack.c.l.b16 %v583
        %v1914 = vunpack.c.h.b16 %v583
        %v1915 = vunpack.c.l.b16 %v584
        %v1916 = vunpack.c.h.b16 %v584
        %v1917 = vunpack.c.l.b16 %v585
        %v1918 = vunpack.c.h.b16 %v585
        %v1919 = vunpack.c.l.b16 %v586
        %v1920 = vunpack.c.h.b16 %v586
        %v1921 = vunpack.c.l.b16 %v587
        %v1922 = vunpack.c.h.b16 %v587
        %v1923 = vunpack.c.l.b16 %v588
        %v1924 = vunpack.c.h.b16 %v588
        %v1925 = vunpack.c.l.b16 %v589
        %v1926 = vunpack.c.h.b16 %v589
        %v1927 = vunpack.c.l.b16 %v590
        %v1928 = vunpack.c.h.b16 %v590
        %v1929 = vunpack.c.l.b16 %v591
        %v1930 = vunpack.c.h.b16 %v591
        %v1931 = vunpack.c.l.b16 %v592
        %v1932 = vunpack.c.h.b16 %v592
        %v1933 = vunpack.c.l.b16 %v593
        %v1934 = vunpack.c.h.b16 %v593
        %v1935 = vunpack.c.l.b16 %v594
        %v1936 = vunpack.c.h.b16 %v594
        %v1937 = vunpack.c.l.b16 %v595
        %v1938 = vunpack.c.h.b16 %v595
        %v1939 = vunpack.c.l.b16 %v596
        %v1940 = vunpack.c.h.b16 %v596
        %v1941 = vunpack.c.l.b16 %v597
        %v1942 = vunpack.c.h.b16 %v597
        %v1943 = vunpack.c.l.b16 %v598
        %v1944 = vunpack.c.h.b16 %v598
        %v1945 = vunpack.c.l.b16 %v599
        %v1946 = vunpack.c.h.b16 %v599
        %v1947 = vunpack.c.l.b16 %v600
        %v1948 = vunpack.c.h.b16 %v600
        %v1949 = vunpack.c.l.b16 %v601
        %v1950 = vunpack.c.h.b16 %v601
        %v1951 = vunpack.c.l.b16 %v602
        %v1952 = vunpack.c.h.b16 %v602
        %v1953 = vunpack.c.l.b16 %v603
        %v1954 = vunpack.c.h.b16 %v603
        %v1955 = vunpack.c.l.b16 %v604
        %v1956 = vunpack.c.h.b16 %v604
        %v1957 = vunpack.c.l.b16 %v605
        %v1958 = vunpack.c.h.b16 %v605
        %v1959 = vunpack.c.l.b16 %v606
        %v1960 = vunpack.c.h.b16 %v606
        %v1961 = vunpack.c.l.b16 %v607
        %v1962 = vunpack.c.h.b16 %v607
        %v1963 = vunpack.c.l.b16 %v608
        %v1964 = vunpack.c.h.b16 %v608
        %v1965 = vunpack.c.l.b16 %v609
        %v1966 = vunpack.c.h.b16 %v609
        %v1967 = vunpack.c.l.b16 %v610
        %v1968 = vunpack.c.h.b16 %v610
        %v1969 = vunpack.c.l.b16 %v611
        %v1970 = vunpack.c.h.b16 %v611
        %v1971 = vunpack.c.l.b16 %v612
        %v1972 = vunpack.c.h.b16 %v612
        %v1973 = vunpack.c.l.b16 %v613
        %v1974 = vunpack.c.h.b16 %v613
        %v1975 = vunpack.c.l.b16 %v614
        %v1976 = vunpack.c.h.b16 %v614
        %v1977 = vunpack.c.l.b16 %v615
        %v1978 = vunpack.c.h.b16 %v615
        %v1979 = vunpack.c.l.b16 %v616
        %v1980 = vunpack.c.h.b16 %v616
        %v1981 = vunpack.c.l.b16 %v617
        %v1982 = vunpack.c.h.b16 %v617
        %v1983 = vunpack.c.l.b16 %v618
        %v1984 = vunpack.c.h.b16 %v618
        %v1985 = vunpack.c.l.b16 %v619
        %v1986 = vunpack.c.h.b16 %v619
        %v1987 = vunpack.c.l.b16 %v620
        %v1988 = vunpack.c.h.b16 %v620
        %v1989 = vunpack.c.l.b16 %v621
        %v1990 = vunpack.c.h.b16 %v621
        %v1991 = vunpack.c.l.b16 %v622
        %v1992 = vunpack.c.h.b16 %v622
        %v1993 = vunpack.c.l.b16 %v623
        %v1994 = vunpack.c.h.b16 %v623
        %v1995 = vunpack.c.l.b16 %v624
        %v1996 = vunpack.c.h.b16 %v624
        %v1997 = vunpack.c.l.b16 %v625
        %v1998 = vunpack.c.h.b16 %v625
        %v1999 = vunpack.c.l.b16 %v626
        %v2000 = vunpack.c.h.b16 %v626
        %v2001 = vunpack.c.l.b16 %v627
        %v2002 = vunpack.c.h.b16 %v627
        %v2003 = vunpack.c.l.b16 %v628
        %v2004 = vunpack.c.h.b16 %v628
        %v2005 = vunpack.c.l.b16 %v629
        %v2006 = vunpack.c.h.b16 %v629
        %v2007 = vunpack.c.l.b16 %v630
        %v2008 = vunpack.c.h.b16 %v630
        %v2009 = vunpack.c.l.b16 %v631
        %v2010 = vunpack.c.h.b16 %v631
        %v2011 = vunpack.c.l.b16 %v632
        %v2012 = vunpack.c.h.b16 %v632
        %v2013 = vunpack.c.l.b16 %v633
        %v2014 = vunpack.c.h.b16 %v633
        %v2015 = vunpack.c.l.b16 %v634
        %v2016 = vunpack.c.h.b16 %v634
        %v2017 = vunpack.c.l.b16 %v635
        %v2018 = vunpack.c.h.b16 %v635
        %v2019 = vunpack.c.l.b16 %v636
        %v2020 = vunpack.c.h.b16 %v636
        %v2021 = vunpack.c.l.b16 %v637
        %v2022 = vunpack.c.h.b16 %v637
        %v2023 = vunpack.c.l.b16 %v638
        %v2024 = vunpack.c.h.b16 %v638
        %v2025 = vunpack.c.l.b16 %v639
        %v2026 = vunpack.c.h.b16 %v639
        %v2027 = vunpack.c.l.b16 %v640
        %v2028 = vunpack.c.h.b16 %v640
        %v2029 = vunpack.c.l.b16 %v641
        %v2030 = vunpack.c.h.b16 %v641
        %v2031 = vunpack.c.l.b16 %v642
        %v2032 = vunpack.c.h.b16 %v642
        %v2033 = vunpack.c.l.b16 %v643
        %v2034 = vunpack.c.h.b16 %v643
        %v2035 = vunpack.c.l.b16 %v644
        %v2036 = vunpack.c.h.b16 %v644
        %v2037 = vunpack.c.l.b16 %v645
        %v2038 = vunpack.c.h.b16 %v645
        %v2039 = vunpack.c.l.b16 %v646
        %v2040 = vunpack.c.h.b16 %v646
        %v2041 = vunpack.c.l.b16 %v647
        %v2042 = vunpack.c.h.b16 %v647
        %v2043 = vunpack.c.l.b16 %v648
        %v2044 = vunpack.c.h.b16 %v648
        %v2045 = vunpack.c.l.b16 %v649
        %v2046 = vunpack.c.h.b16 %v649
        %v2047 = vunpack.c.l.b16 %v650
        %v2048 = vunpack.c.h.b16 %v650
        %v2049 = vunpack.c.l.b16 %v651
        %v2050 = vunpack.c.h.b16 %v651
        %v2051 = vunpack.c.l.b16 %v652
        %v2052 = vunpack.c.h.b16 %v652
        %v2053 = vunpack.c.l.b16 %v653
        %v2054 = vunpack.c.h.b16 %v653
        %v2055 = vunpack.c.l.b16 %v654
        %v2056 = vunpack.c.h.b16 %v654
        %v2057 = vunpack.c.l.b16 %v655
        %v2058 = vunpack.c.h.b16 %v655
        %v2059 = vunpack.c.l.b16 %v656
        %v2060 = vunpack.c.h.b16 %v656
        %v2061 = vunpack.c.l.b16 %v657
        %v2062 = vunpack.c.h.b16 %v657
        %v2063 = vunpack.c.l.b16 %v658
        %v2064 = vunpack.c.h.b16 %v658
        %v2065 = vunpack.c.l.b16 %v659
        %v2066 = vunpack.c.h.b16 %v659
        %v2067 = vunpack.c.l.b16 %v660
        %v2068 = vunpack.c.h.b16 %v660
        %v2069 = vunpack.c.l.b16 %v661
        %v2070 = vunpack.c.h.b16 %v661
        %v2071 = vunpack.c.l.b16 %v662
        %v2072 = vunpack.c.h.b16 %v662
        %v2073 = vunpack.c.l.b16 %v663
        %v2074 = vunpack.c.h.b16 %v663
        %v2075 = vunpack.c.l.b16 %v664
        %v2076 = vunpack.c.h.b16 %v664
        %v2077 = vunpack.c.l.b16 %v665
        %v2078 = vunpack.c.h.b16 %v665
        %v2079 = vunpack.c.l.b16 %v666
        %v2080 = vunpack.c.h.b16 %v666
        %v2081 = vunpack.c.l.b16 %v667
        %v2082 = vunpack.c.h.b16 %v667
        %v2083 = vunpack.c.l.b16 %v668
        %v2084 = vunpack.c.h.b16 %v668
        %v2085 = vunpack.c.l.b16 %v669
        %v2086 = vunpack.c.h.b16 %v669
        %v2087 = vunpack.c.l.b16 %v670
        %v2088 = vunpack.c.h.b16 %v670
        %v2089 = vunpack.c.l.b16 %v671
        %v2090 = vunpack.c.h.b16 %v671
        %v2091 = vunpack.c.l.b16 %v672
        %v2092 = vunpack.c.h.b16 %v672
        %v2093 = vunpack.c.l.b16 %v673
        %v2094 = vunpack.c.h.b16 %v673
        %v2095 = vunpack.c.l.b16 %v674
        %v2096 = vunpack.c.h.b16 %v674
        %v2097 = vunpack.c.l.b16 %v675
        %v2098 = vunpack.c.h.b16 %v675
        %v2099 = vunpack.c.l.b16 %v676
        %v2100 = vunpack.c.h.b16 %v676
        %v2101 = vunpack.c.l.b16 %v677
        %v2102 = vunpack.c.h.b16 %v677
        %v2103 = vunpack.c.l.b16 %v678
        %v2104 = vunpack.c.h.b16 %v678
        %v2105 = vunpack.c.l.b16 %v679
        %v2106 = vunpack.c.h.b16 %v679
        %v2107 = vunpack.c.l.b16 %v680
        %v2108 = vunpack.c.h.b16 %v680
        %v2109 = vunpack.c.l.b16 %v681
        %v2110 = vunpack.c.h.b16 %v681
        %v2111 = vunpack.c.l.b16 %v682
        %v2112 = vunpack.c.h.b16 %v682
        %v2113 = vunpack.c.l.b16 %v683
        %v2114 = vunpack.c.h.b16 %v683
        %v2115 = vunpack.c.l.b16 %v684
        %v2116 = vunpack.c.h.b16 %v684
        %v2117 = vunpack.c.l.b16 %v685
        %v2118 = vunpack.c.h.b16 %v685
        %v2119 = vunpack.c.l.b16 %v686
        %v2120 = vunpack.c.h.b16 %v686
        %v2121 = vunpack.c.l.b16 %v687
        %v2122 = vunpack.c.h.b16 %v687
        %v2123 = vunpack.c.l.b16 %v688
        %v2124 = vunpack.c.h.b16 %v688
        %v2125 = vunpack.c.l.b16 %v689
        %v2126 = vunpack.c.h.b16 %v689
        %v2127 = vunpack.c.l.b16 %v690
        %v2128 = vunpack.c.h.b16 %v690
        %v2129 = vunpack.c.l.b16 %v691
        %v2130 = vunpack.c.h.b16 %v691
        %v2131 = vunpack.c.l.b16 %v692
        %v2132 = vunpack.c.h.b16 %v692
        %v2133 = vunpack.c.l.b16 %v693
        %v2134 = vunpack.c.h.b16 %v693
        %v2135 = vunpack.c.l.b16 %v694
        %v2136 = vunpack.c.h.b16 %v694
        %v2137 = vunpack.c.l.b16 %v695
        %v2138 = vunpack.c.h.b16 %v695
        %v2139 = vunpack.c.l.b16 %v696
        %v2140 = vunpack.c.h.b16 %v696
        %v2141 = vunpack.c.l.b16 %v697
        %v2142 = vunpack.c.h.b16 %v697
        %v2143 = vunpack.c.l.b16 %v698
        %v2144 = vunpack.c.h.b16 %v698
        %v2145 = vunpack.c.l.b16 %v699
        %v2146 = vunpack.c.h.b16 %v699
        %v2147 = vunpack.c.l.b16 %v700
        %v2148 = vunpack.c.h.b16 %v700
        %v2149 = vunpack.c.l.b16 %v701
        %v2150 = vunpack.c.h.b16 %v701
        %v2151 = vunpack.c.l.b16 %v702
        %v2152 = vunpack.c.h.b16 %v702
        %v2153 = vunpack.c.l.b16 %v703
        %v2154 = vunpack.c.h.b16 %v703
        %v2155 = vunpack.c.l.b16 %v704
        %v2156 = vunpack.c.h.b16 %v704
        %v2157 = vunpack.c.l.b16 %v705
        %v2158 = vunpack.c.h.b16 %v705
        %v2159 = vunpack.c.l.b16 %v706
        %v2160 = vunpack.c.h.b16 %v706
        %v2161 = vunpack.c.l.b16 %v707
        %v2162 = vunpack.c.h.b16 %v707
        %v2163 = vunpack.c.l.b16 %v708
        %v2164 = vunpack.c.h.b16 %v708
        %v2165 = vunpack.c.l.b16 %v709
        %v2166 = vunpack.c.h.b16 %v709
        %v2167 = vunpack.c.l.b16 %v710
        %v2168 = vunpack.c.h.b16 %v710
        %v2169 = vunpack.c.l.b16 %v711
        %v2170 = vunpack.c.h.b16 %v711
        %v2171 = vunpack.c.l.b16 %v712
        %v2172 = vunpack.c.h.b16 %v712
        %v2173 = vunpack.c.l.b16 %v713
        %v2174 = vunpack.c.h.b16 %v713
        %v2175 = vunpack.c.l.b16 %v714
        %v2176 = vunpack.c.h.b16 %v714
        %v2177 = vunpack.c.l.b16 %v715
        %v2178 = vunpack.c.h.b16 %v715
        %v2179 = vunpack.c.l.b16 %v716
        %v2180 = vunpack.c.h.b16 %v716
        %v2181 = vunpack.c.l.b16 %v717
        %v2182 = vunpack.c.h.b16 %v717
        %v2183 = vunpack.c.l.b16 %v718
        %v2184 = vunpack.c.h.b16 %v718
        %v2185 = vunpack.c.l.b16 %v719
        %v2186 = vunpack.c.h.b16 %v719
        %v2187 = vunpack.c.l.b16 %v720
        %v2188 = vunpack.c.h.b16 %v720
        %v2189 = vunpack.c.l.b16 %v721
        %v2190 = vunpack.c.h.b16 %v721
        %v2191 = vunpack.c.l.b16 %v722
        %v2192 = vunpack.c.h.b16 %v722
        %v2193 = vunpack.c.l.b16 %v723
        %v2194 = vunpack.c.h.b16 %v723
        %v2195 = vunpack.c.l.b16 %v724
        %v2196 = vunpack.c.h.b16 %v724
        %v2197 = vunpack.c.l.b16 %v725
        %v2198 = vunpack.c.h.b16 %v725
        %v2199 = vunpack.c.l.b16 %v726
        %v2200 = vunpack.c.h.b16 %v726
        %v2201 = vunpack.c.l.b16 %v727
        %v2202 = vunpack.c.h.b16 %v727
        %v2203 = vunpack.c.l.b16 %v728
        %v2204 = vunpack.c.h.b16 %v728
        %v2205 = vunpack.c.l.b16 %v729
        %v2206 = vunpack.c.h.b16 %v729
        %v2207 = vunpack.c.l.b16 %v730
        %v2208 = vunpack.c.h.b16 %v730
        %v2209 = vunpack.c.l.b16 %v731
        %v2210 = vunpack.c.h.b16 %v731
        %v2211 = vunpack.c.l.b16 %v732
        %v2212 = vunpack.c.h.b16 %v732
        %v2213 = vunpack.c.l.b16 %v733
        %v2214 = vunpack.c.h.b16 %v733
        %v2215 = vunpack.c.l.b16 %v734
        %v2216 = vunpack.c.h.b16 %v734
        %v2217 = vunpack.c.l.b16 %v735
        %v2218 = vunpack.c.h.b16 %v735
        %v2219 = vunpack.c.l.b16 %v736
        %v2220 = vunpack.c.h.b16 %v736
        %v2221 = vunpack.c.l.b16 %v737
        %v2222 = vunpack.c.h.b16 %v737
        %v2223 = vunpack.c.l.b16 %v738
        %v2224 = vunpack.c.h.b16 %v738
        %v2225 = vunpack.c.l.b16 %v739
        %v2226 = vunpack.c.h.b16 %v739
        %v2227 = vunpack.c.l.b16 %v740
        %v2228 = vunpack.c.h.b16 %v740
        %v2229 = vunpack.c.l.b16 %v741
        %v2230 = vunpack.c.h.b16 %v741
        %v2231 = vunpack.c.l.b16 %v742
        %v2232 = vunpack.c.h.b16 %v742
        %v2233 = vunpack.c.l.b16 %v743
        %v2234 = vunpack.c.h.b16 %v743
        %v2235 = vunpack.c.l.b16 %v744
        %v2236 = vunpack.c.h.b16 %v744
        %v2237 = vunpack.c.l.b16 %v745
        %v2238 = vunpack.c.h.b16 %v745
        %v2239 = vunpack.c.l.b16 %v746
        %v2240 = vunpack.c.h.b16 %v746
        %v2241 = vunpack.c.l.b16 %v747
        %v2242 = vunpack.c.h.b16 %v747
        %v2243 = vunpack.c.l.b16 %v748
        %v2244 = vunpack.c.h.b16 %v748
        %v2245 = vunpack.c.l.b16 %v749
        %v2246 = vunpack.c.h.b16 %v749
        %v2247 = vunpack.c.l.b16 %v750
        %v2248 = vunpack.c.h.b16 %v750
        %v2249 = vunpack.c.l.b16 %v751
        %v2250 = vunpack.c.h.b16 %v751
        %v2251 = vunpack.c.l.b16 %v752
        %v2252 = vunpack.c.h.b16 %v752
        %v2253 = vunpack.c.l.b16 %v753
        %v2254 = vunpack.c.h.b16 %v753
        %v2255 = vunpack.c.l.b16 %v754
        %v2256 = vunpack.c.h.b16 %v754
        %v2257 = vunpack.c.l.b16 %v755
        %v2258 = vunpack.c.h.b16 %v755
        %v2259 = vunpack.c.l.b16 %v756
        %v2260 = vunpack.c.h.b16 %v756
        %v2261 = vunpack.c.l.b16 %v757
        %v2262 = vunpack.c.h.b16 %v757
        %v2263 = vunpack.c.l.b16 %v758
        %v2264 = vunpack.c.h.b16 %v758
        %v2265 = vunpack.c.l.b16 %v759
        %v2266 = vunpack.c.h.b16 %v759
        %v2267 = vunpack.c.l.b16 %v760
        %v2268 = vunpack.c.h.b16 %v760
        %v2269 = vunpack.c.l.b16 %v761
        %v2270 = vunpack.c.h.b16 %v761
        %v2271 = vunpack.c.l.b16 %v762
        %v2272 = vunpack.c.h.b16 %v762
        %v2273 = vunpack.c.l.b16 %v763
        %v2274 = vunpack.c.h.b16 %v763
        %v2275 = vunpack.c.l.b16 %v764
        %v2276 = vunpack.c.h.b16 %v764
        %v2277 = vunpack.c.l.b16 %v765
        %v2278 = vunpack.c.h.b16 %v765
        %v2279 = vunpack.c.l.b16 %v766
        %v2280 = vunpack.c.h.b16 %v766
        %v2281 = vunpack.c.l.b16 %v767
        %v2282 = vunpack.c.h.b16 %v767
        %v2283 = vunpack.c.l.b16 %v768
        %v2284 = vunpack.c.h.b16 %v768
        %v2285 = vunpack.c.l.b16 %v769
        %v2286 = vunpack.c.h.b16 %v769
        %v2287 = vunpack.c.l.b16 %v770
        %v2288 = vunpack.c.h.b16 %v770
        %v2289 = vunpack.c.l.b16 %v771
        %v2290 = vunpack.c.h.b16 %v771
        %v2291 = vunpack.c.l.b16 %v772
        %v2292 = vunpack.c.h.b16 %v772
        %v2293 = vunpack.c.l.b16 %v773
        %v2294 = vunpack.c.h.b16 %v773
        %v2295 = vunpack.c.l.b16 %v774
        %v2296 = vunpack.c.h.b16 %v774
        %v2297 = vunpack.c.l.b16 %v775
        %v2298 = vunpack.c.h.b16 %v775
        %v2299 = vunpack.c.l.b16 %v776
        %v2300 = vunpack.c.h.b16 %v776
        %v2301 = vunpack.c.l.b16 %v777
        %v2302 = vunpack.c.h.b16 %v777
        %v2303 = vunpack.c.l.b16 %v778
        %v2304 = vunpack.c.h.b16 %v778
        %v2305 = vunpack.c.l.b16 %v779
        %v2306 = vunpack.c.h.b16 %v779
        %v2307 = vunpack.c.l.b16 %v780
        %v2308 = vunpack.c.h.b16 %v780
        %v2309 = vunpack.c.l.b16 %v781
        %v2310 = vunpack.c.h.b16 %v781
        %v2311 = vunpack.c.l.b16 %v782
        %v2312 = vunpack.c.h.b16 %v782
        %v2313 = vunpack.c.l.b16 %v783
        %v2314 = vunpack.c.h.b16 %v783
        %v2315 = vunpack.c.l.b16 %v784
        %v2316 = vunpack.c.h.b16 %v784
        %v2317 = vunpack.c.l.b16 %v785
        %v2318 = vunpack.c.h.b16 %v785
        %v2319 = vunpack.c.l.b16 %v786
        %v2320 = vunpack.c.h.b16 %v786
        %v2321 = vunpack.c.l.b16 %v787
        %v2322 = vunpack.c.h.b16 %v787
        %v2323 = vunpack.c.l.b16 %v788
        %v2324 = vunpack.c.h.b16 %v788
        %v2325 = vunpack.c.l.b16 %v789
        %v2326 = vunpack.c.h.b16 %v789
        %v2327 = vunpack.c.l.b16 %v790
        %v2328 = vunpack.c.h.b16 %v790
        %v2329 = vunpack.c.l.b16 %v791
        %v2330 = vunpack.c.h.b16 %v791
        %v2331 = vunpack.c.l.b16 %v792
        %v2332 = vunpack.c.h.b16 %v792
        %v2333 = vunpack.c.l.b16 %v793
        %v2334 = vunpack.c.h.b16 %v793
        %v2335 = vunpack.c.l.b16 %v794
        %v2336 = vunpack.c.h.b16 %v794
        %v2337 = vunpack.c.l.b16 %v795
        %v2338 = vunpack.c.h.b16 %v795
        %v2339 = vunpack.c.l.b16 %v796
        %v2340 = vunpack.c.h.b16 %v796
        %v2341 = vunpack.c.l.b16 %v797
        %v2342 = vunpack.c.h.b16 %v797
        %v2343 = vunpack.c.l.b16 %v798
        %v2344 = vunpack.c.h.b16 %v798
        %v2345 = vunpack.c.l.b16 %v799
        %v2346 = vunpack.c.h.b16 %v799
        %v2347 = vunpack.c.l.b16 %v800
        %v2348 = vunpack.c.h.b16 %v800
        %v2349 = vunpack.c.l.b16 %v801
        %v2350 = vunpack.c.h.b16 %v801
        %v2351 = vunpack.c.l.b16 %v802
        %v2352 = vunpack.c.h.b16 %v802
        %v2353 = vunpack.c.l.b16 %v803
        %v2354 = vunpack.c.h.b16 %v803
        %v2355 = vunpack.c.l.b16 %v804
        %v2356 = vunpack.c.h.b16 %v804
        %v2357 = vunpack.c.l.b16 %v805
        %v2358 = vunpack.c.h.b16 %v805
        %v2359 = vunpack.c.l.b16 %v806
        %v2360 = vunpack.c.h.b16 %v806
        %v2361 = vunpack.c.l.b16 %v807
        %v2362 = vunpack.c.h.b16 %v807
        %v2363 = vunpack.c.l.b16 %v808
        %v2364 = vunpack.c.h.b16 %v808
        %v2365 = vunpack.c.l.b16 %v809
        %v2366 = vunpack.c.h.b16 %v809
        %v2367 = vunpack.c.l.b16 %v810
        %v2368 = vunpack.c.h.b16 %v810
        %v2369 = vunpack.c.l.b16 %v811
        %v2370 = vunpack.c.h.b16 %v811
        %v2371 = vunpack.c.l.b16 %v812
        %v2372 = vunpack.c.h.b16 %v812
        %v2373 = vunpack.c.l.b16 %v813
        %v2374 = vunpack.c.h.b16 %v813
        %v2375 = vunpack.c.l.b16 %v814
        %v2376 = vunpack.c.h.b16 %v814
        %v2377 = vunpack.c.l.b16 %v815
        %v2378 = vunpack.c.h.b16 %v815
        %v2379 = vunpack.c.l.b16 %v816
        %v2380 = vunpack.c.h.b16 %v816
        %v2381 = vunpack.c.l.b16 %v817
        %v2382 = vunpack.c.h.b16 %v817
        %v2383 = vunpack.c.l.b16 %v818
        %v2384 = vunpack.c.h.b16 %v818
        %v2385 = vunpack.c.l.b16 %v819
        %v2386 = vunpack.c.h.b16 %v819
        %v2387 = vunpack.c.l.b16 %v820
        %v2388 = vunpack.c.h.b16 %v820
        %v2389 = vunpack.c.l.b16 %v821
        %v2390 = vunpack.c.h.b16 %v821
        %v2391 = vunpack.c.l.b16 %v822
        %v2392 = vunpack.c.h.b16 %v822
        %v2393 = vunpack.c.l.b16 %v823
        %v2394 = vunpack.c.h.b16 %v823
        %v2395 = vunpack.c.l.b16 %v824
        %v2396 = vunpack.c.h.b16 %v824
        %v2397 = vunpack.c.l.b16 %v825
        %v2398 = vunpack.c.h.b16 %v825
        %v2399 = vunpack.c.l.b16 %v826
        %v2400 = vunpack.c.h.b16 %v826
        %v2401 = vunpack.c.l.b16 %v827
        %v2402 = vunpack.c.h.b16 %v827
        %v2403 = vunpack.c.l.b16 %v828
        %v2404 = vunpack.c.h.b16 %v828
        %v2405 = vunpack.c.l.b16 %v829
        %v2406 = vunpack.c.h.b16 %v829
        %v2407 = vunpack.c.l.b16 %v830
        %v2408 = vunpack.c.h.b16 %v830
        %v2409 = vunpack.c.l.b16 %v831
        %v2410 = vunpack.c.h.b16 %v831
        %v2411 = vunpack.c.l.b16 %v832
        %v2412 = vunpack.c.h.b16 %v832
        %v2413 = vunpack.c.l.b16 %v833
        %v2414 = vunpack.c.h.b16 %v833
        %v2415 = vunpack.c.l.b16 %v834
        %v2416 = vunpack.c.h.b16 %v834
        %v2417 = vunpack.c.l.b16 %v835
        %v2418 = vunpack.c.h.b16 %v835
        %v2419 = vunpack.c.l.b16 %v836
        %v2420 = vunpack.c.h.b16 %v836
        %v2421 = vunpack.c.l.b16 %v837
        %v2422 = vunpack.c.h.b16 %v837
        %v2423 = vunpack.c.l.b16 %v838
        %v2424 = vunpack.c.h.b16 %v838
        %v2425 = vunpack.c.l.b16 %v839
        %v2426 = vunpack.c.h.b16 %v839
        %v2427 = vunpack.c.l.b16 %v840
        %v2428 = vunpack.c.h.b16 %v840
        %v2429 = vunpack.c.l.b16 %v841
        %v2430 = vunpack.c.h.b16 %v841
        %v2431 = vunpack.c.l.b16 %v842
        %v2432 = vunpack.c.h.b16 %v842
        %v2433 = vunpack.c.l.b16 %v843
        %v2434 = vunpack.c.h.b16 %v843
        %v2435 = vunpack.c.l.b16 %v844
        %v2436 = vunpack.c.h.b16 %v844
        %v2437 = vunpack.c.l.b16 %v845
        %v2438 = vunpack.c.h.b16 %v845
        %v2439 = vunpack.c.l.b16 %v846
        %v2440 = vunpack.c.h.b16 %v846
        %v2441 = vunpack.c.l.b16 %v847
        %v2442 = vunpack.c.h.b16 %v847
        %v2443 = vunpack.c.l.b16 %v848
        %v2444 = vunpack.c.h.b16 %v848
        %v2445 = vunpack.c.l.b16 %v849
        %v2446 = vunpack.c.h.b16 %v849
        %v2447 = vunpack.c.l.b16 %v850
        %v2448 = vunpack.c.h.b16 %v850
        %v2449 = vunpack.c.l.b16 %v851
        %v2450 = vunpack.c.h.b16 %v851
        %v2451 = vunpack.c.l.b16 %v852
        %v2452 = vunpack.c.h.b16 %v852
        %v2453 = vunpack.c.l.b16 %v853
        %v2454 = vunpack.c.h.b16 %v853
        %v2455 = vunpack.c.l.b16 %v854
        %v2456 = vunpack.c.h.b16 %v854
        %v2457 = vunpack.c.l.b16 %v855
        %v2458 = vunpack.c.h.b16 %v855
        %v2459 = vunpack.c.l.b16 %v856
        %v2460 = vunpack.c.h.b16 %v856
        %v2461 = vunpack.c.l.b16 %v857
        %v2462 = vunpack.c.h.b16 %v857
        %v2463 = vunpack.c.l.b16 %v858
        %v2464 = vunpack.c.h.b16 %v858
        %v2465 = vunpack.c.l.b16 %v859
        %v2466 = vunpack.c.h.b16 %v859
        %v2467 = vunpack.c.l.b16 %v860
        %v2468 = vunpack.c.h.b16 %v860
        %v2469 = vunpack.c.l.b16 %v861
        %v2470 = vunpack.c.h.b16 %v861
        %v2471 = vunpack.c.l.b16 %v862
        %v2472 = vunpack.c.h.b16 %v862
        %v2473 = vunpack.c.l.b16 %v863
        %v2474 = vunpack.c.h.b16 %v863
        %v2475 = vunpack.c.l.b16 %v864
        %v2476 = vunpack.c.h.b16 %v864
        %v2477 = vunpack.c.l.b16 %v865
        %v2478 = vunpack.c.h.b16 %v865
        %v2479 = vunpack.c.l.b16 %v866
        %v2480 = vunpack.c.h.b16 %v866
        %v2481 = vunpack.c.l.b16 %v867
        %v2482 = vunpack.c.h.b16 %v867
        %v2483 = vunpack.c.l.b16 %v868
        %v2484 = vunpack.c.h.b16 %v868
        %v2485 = vpack.c.b16 %v1465, %v1461
        %v2486 = vpack.c.b16 %v1466, %v1462
        %v2487 = vpack.c.b16 %v1467, %v1463
        %v2488 = vpack.c.b16 %v1468, %v1464
        %v2489 = vpack.c.b16 %v1473, %v1469
        %v2490 = vpack.c.b16 %v1474, %v1470
        %v2491 = vpack.c.b16 %v1475, %v1471
        %v2492 = vpack.c.b16 %v1476, %v1472
        %v2493 = vpack.c.b16 %v1481, %v1477
        %v2494 = vpack.c.b16 %v1482, %v1478
        %v2495 = vpack.c.b16 %v1483, %v1479
        %v2496 = vpack.c.b16 %v1484, %v1480
        %v2497 = vpack.c.b16 %v1489, %v1485
        %v2498 = vpack.c.b16 %v1490, %v1486
        %v2499 = vpack.c.b16 %v1491, %v1487
        %v2500 = vpack.c.b16 %v1492, %v1488
        %v2501 = vpack.c.b16 %v1497, %v1493
        %v2502 = vpack.c.b16 %v1498, %v1494
        %v2503 = vpack.c.b16 %v1499, %v1495
        %v2504 = vpack.c.b16 %v1500, %v1496
        %v2505 = vpack.c.b16 %v1505, %v1501
        %v2506 = vpack.c.b16 %v1506, %v1502
        %v2507 = vpack.c.b16 %v1507, %v1503
        %v2508 = vpack.c.b16 %v1508, %v1504
        %v2509 = vpack.c.b16 %v1513, %v1509
        %v2510 = vpack.c.b16 %v1514, %v1510
        %v2511 = vpack.c.b16 %v1515, %v1511
        %v2512 = vpack.c.b16 %v1516, %v1512
        %v2513 = vpack.c.b16 %v1521, %v1517
        %v2514 = vpack.c.b16 %v1522, %v1518
        %v2515 = vpack.c.b16 %v1523, %v1519
        %v2516 = vpack.c.b16 %v1524, %v1520
        %v2517 = vpack.c.b16 %v1529, %v1525
        %v2518 = vpack.c.b16 %v1530, %v1526
        %v2519 = vpack.c.b16 %v1531, %v1527
        %v2520 = vpack.c.b16 %v1532, %v1528
        %v2521 = vpack.c.b16 %v1537, %v1533
        %v2522 = vpack.c.b16 %v1538, %v1534
        %v2523 = vpack.c.b16 %v1539, %v1535
        %v2524 = vpack.c.b16 %v1540, %v1536
        %v2525 = vpack.c.b16 %v1545, %v1541
        %v2526 = vpack.c.b16 %v1546, %v1542
        %v2527 = vpack.c.b16 %v1547, %v1543
        %v2528 = vpack.c.b16 %v1548, %v1544
        %v2529 = vpack.c.b16 %v1553, %v1549
        %v2530 = vpack.c.b16 %v1554, %v1550
        %v2531 = vpack.c.b16 %v1555, %v1551
        %v2532 = vpack.c.b16 %v1556, %v1552
        %v2533 = vpack.c.b16 %v1561, %v1557
        %v2534 = vpack.c.b16 %v1562, %v1558
        %v2535 = vpack.c.b16 %v1563, %v1559
        %v2536 = vpack.c.b16 %v1564, %v1560
        %v2537 = vpack.c.b16 %v1569, %v1565
        %v2538 = vpack.c.b16 %v1570, %v1566
        %v2539 = vpack.c.b16 %v1571, %v1567
        %v2540 = vpack.c.b16 %v1572, %v1568
        %v2541 = vpack.c.b16 %v1577, %v1573
        %v2542 = vpack.c.b16 %v1578, %v1574
        %v2543 = vpack.c.b16 %v1579, %v1575
        %v2544 = vpack.c.b16 %v1580, %v1576
        %v2545 = vpack.c.b16 %v1585, %v1581
        %v2546 = vpack.c.b16 %v1586, %v1582
        %v2547 = vpack.c.b16 %v1587, %v1583
        %v2548 = vpack.c.b16 %v1588, %v1584
        %v2549 = vpack.c.b16 %v1593, %v1589
        %v2550 = vpack.c.b16 %v1594, %v1590
        %v2551 = vpack.c.b16 %v1595, %v1591
        %v2552 = vpack.c.b16 %v1596, %v1592
        %v2553 = vpack.c.b16 %v1601, %v1597
        %v2554 = vpack.c.b16 %v1602, %v1598
        %v2555 = vpack.c.b16 %v1603, %v1599
        %v2556 = vpack.c.b16 %v1604, %v1600
        %v2557 = vpack.c.b16 %v1609, %v1605
        %v2558 = vpack.c.b16 %v1610, %v1606
        %v2559 = vpack.c.b16 %v1611, %v1607
        %v2560 = vpack.c.b16 %v1612, %v1608
        %v2561 = vpack.c.b16 %v1617, %v1613
        %v2562 = vpack.c.b16 %v1618, %v1614
        %v2563 = vpack.c.b16 %v1619, %v1615
        %v2564 = vpack.c.b16 %v1620, %v1616
        %v2565 = vpack.c.b16 %v1625, %v1621
        %v2566 = vpack.c.b16 %v1626, %v1622
        %v2567 = vpack.c.b16 %v1627, %v1623
        %v2568 = vpack.c.b16 %v1628, %v1624
        %v2569 = vpack.c.b16 %v1633, %v1629
        %v2570 = vpack.c.b16 %v1634, %v1630
        %v2571 = vpack.c.b16 %v1635, %v1631
        %v2572 = vpack.c.b16 %v1636, %v1632
        %v2573 = vpack.c.b16 %v1641, %v1637
        %v2574 = vpack.c.b16 %v1642, %v1638
        %v2575 = vpack.c.b16 %v1643, %v1639
        %v2576 = vpack.c.b16 %v1644, %v1640
        %v2577 = vpack.c.b16 %v1649, %v1645
        %v2578 = vpack.c.b16 %v1650, %v1646
        %v2579 = vpack.c.b16 %v1651, %v1647
        %v2580 = vpack.c.b16 %v1652, %v1648
        %v2581 = vpack.c.b16 %v1657, %v1653
        %v2582 = vpack.c.b16 %v1658, %v1654
        %v2583 = vpack.c.b16 %v1659, %v1655
        %v2584 = vpack.c.b16 %v1660, %v1656
        %v2585 = vpack.c.b16 %v1665, %v1661
        %v2586 = vpack.c.b16 %v1666, %v1662
        %v2587 = vpack.c.b16 %v1667, %v1663
        %v2588 = vpack.c.b16 %v1668, %v1664
        %v2589 = vpack.c.b16 %v1673, %v1669
        %v2590 = vpack.c.b16 %v1674, %v1670
        %v2591 = vpack.c.b16 %v1675, %v1671
        %v2592 = vpack.c.b16 %v1676, %v1672
        %v2593 = vpack.c.b16 %v1681, %v1677
        %v2594 = vpack.c.b16 %v1682, %v1678
        %v2595 = vpack.c.b16 %v1683, %v1679
        %v2596 = vpack.c.b16 %v1684, %v1680
        %v2597 = vpack.c.b16 %v1689, %v1685
        %v2598 = vpack.c.b16 %v1690, %v1686
        %v2599 = vpack.c.b16 %v1691, %v1687
        %v2600 = vpack.c.b16 %v1692, %v1688
        %v2601 = vpack.c.b16 %v1697, %v1693
        %v2602 = vpack.c.b16 %v1698, %v1694
        %v2603 = vpack.c.b16 %v1699, %v1695
        %v2604 = vpack.c.b16 %v1700, %v1696
        %v2605 = vpack.c.b16 %v1705, %v1701
        %v2606 = vpack.c.b16 %v1706, %v1702
        %v2607 = vpack.c.b16 %v1707, %v1703
        %v2608 = vpack.c.b16 %v1708, %v1704
        %v2609 = vpack.c.b16 %v1713, %v1709
        %v2610 = vpack.c.b16 %v1714, %v1710
        %v2611 = vpack.c.b16 %v1715, %v1711
        %v2612 = vpack.c.b16 %v1716, %v1712
        %v2613 = vpack.c.b16 %v1721, %v1717
        %v2614 = vpack.c.b16 %v1722, %v1718
        %v2615 = vpack.c.b16 %v1723, %v1719
        %v2616 = vpack.c.b16 %v1724, %v1720
        %v2617 = vpack.c.b16 %v1729, %v1725
        %v2618 = vpack.c.b16 %v1730, %v1726
        %v2619 = vpack.c.b16 %v1731, %v1727
        %v2620 = vpack.c.b16 %v1732, %v1728
        %v2621 = vpack.c.b16 %v1737, %v1733
        %v2622 = vpack.c.b16 %v1738, %v1734
        %v2623 = vpack.c.b16 %v1739, %v1735
        %v2624 = vpack.c.b16 %v1740, %v1736
        %v2625 = vpack.c.b16 %v1745, %v1741
        %v2626 = vpack.c.b16 %v1746, %v1742
        %v2627 = vpack.c.b16 %v1747, %v1743
        %v2628 = vpack.c.b16 %v1748, %v1744
        %v2629 = vpack.c.b16 %v1753, %v1749
        %v2630 = vpack.c.b16 %v1754, %v1750
        %v2631 = vpack.c.b16 %v1755, %v1751
        %v2632 = vpack.c.b16 %v1756, %v1752
        %v2633 = vpack.c.b16 %v1761, %v1757
        %v2634 = vpack.c.b16 %v1762, %v1758
        %v2635 = vpack.c.b16 %v1763, %v1759
        %v2636 = vpack.c.b16 %v1764, %v1760
        %v2637 = vpack.c.b16 %v1769, %v1765
        %v2638 = vpack.c.b16 %v1770, %v1766
        %v2639 = vpack.c.b16 %v1771, %v1767
        %v2640 = vpack.c.b16 %v1772, %v1768
        %v2641 = vpack.c.b16 %v1777, %v1773
        %v2642 = vpack.c.b16 %v1778, %v1774
        %v2643 = vpack.c.b16 %v1779, %v1775
        %v2644 = vpack.c.b16 %v1780, %v1776
        %v2645 = vpack.c.b16 %v1785, %v1781
        %v2646 = vpack.c.b16 %v1786, %v1782
        %v2647 = vpack.c.b16 %v1787, %v1783
        %v2648 = vpack.c.b16 %v1788, %v1784
        %v2649 = vpack.c.b16 %v1793, %v1789
        %v2650 = vpack.c.b16 %v1794, %v1790
        %v2651 = vpack.c.b16 %v1795, %v1791
        %v2652 = vpack.c.b16 %v1796, %v1792
        %v2653 = vpack.c.b16 %v1801, %v1797
        %v2654 = vpack.c.b16 %v1802, %v1798
        %v2655 = vpack.c.b16 %v1803, %v1799
        %v2656 = vpack.c.b16 %v1804, %v1800
        %v2657 = vpack.c.b16 %v1809, %v1805
        %v2658 = vpack.c.b16 %v1810, %v1806
        %v2659 = vpack.c.b16 %v1811, %v1807
        %v2660 = vpack.c.b16 %v1812, %v1808
        %v2661 = vpack.c.b16 %v1817, %v1813
        %v2662 = vpack.c.b16 %v1818, %v1814
        %v2663 = vpack.c.b16 %v1819, %v1815
        %v2664 = vpack.c.b16 %v1820, %v1816
        %v2665 = vpack.c.b16 %v1825, %v1821
        %v2666 = vpack.c.b16 %v1826, %v1822
        %v2667 = vpack.c.b16 %v1827, %v1823
        %v2668 = vpack.c.b16 %v1828, %v1824
        %v2669 = vpack.c.b16 %v1833, %v1829
        %v2670 = vpack.c.b16 %v1834, %v1830
        %v2671 = vpack.c.b16 %v1835, %v1831
        %v2672 = vpack.c.b16 %v1836, %v1832
        %v2673 = vpack.c.b16 %v1841, %v1837
        %v2674 = vpack.c.b16 %v1842, %v1838
        %v2675 = vpack.c.b16 %v1843, %v1839
        %v2676 = vpack.c.b16 %v1844, %v1840
        %v2677 = vpack.c.b16 %v1849, %v1845
        %v2678 = vpack.c.b16 %v1850, %v1846
        %v2679 = vpack.c.b16 %v1851, %v1847
        %v2680 = vpack.c.b16 %v1852, %v1848
        %v2681 = vpack.c.b16 %v1857, %v1853
        %v2682 = vpack.c.b16 %v1858, %v1854
        %v2683 = vpack.c.b16 %v1859, %v1855
        %v2684 = vpack.c.b16 %v1860, %v1856
        %v2685 = vpack.c.b16 %v1865, %v1861
        %v2686 = vpack.c.b16 %v1866, %v1862
        %v2687 = vpack.c.b16 %v1867, %v1863
        %v2688 = vpack.c.b16 %v1868, %v1864
        %v2689 = vpack.c.b16 %v1873, %v1869
        %v2690 = vpack.c.b16 %v1874, %v1870
        %v2691 = vpack.c.b16 %v1875, %v1871
        %v2692 = vpack.c.b16 %v1876, %v1872
        %v2693 = vpack.c.b16 %v1881, %v1877
        %v2694 = vpack.c.b16 %v1882, %v1878
        %v2695 = vpack.c.b16 %v1883, %v1879
        %v2696 = vpack.c.b16 %v1884, %v1880
        %v2697 = vpack.c.b16 %v1889, %v1885
        %v2698 = vpack.c.b16 %v1890, %v1886
        %v2699 = vpack.c.b16 %v1891, %v1887
        %v2700 = vpack.c.b16 %v1892, %v1888
        %v2701 = vpack.c.b16 %v1897, %v1893
        %v2702 = vpack.c.b16 %v1898, %v1894
        %v2703 = vpack.c.b16 %v1899, %v1895
        %v2704 = vpack.c.b16 %v1900, %v1896
        %v2705 = vpack.c.b16 %v1905, %v1901
        %v2706 = vpack.c.b16 %v1906, %v1902
        %v2707 = vpack.c.b16 %v1907, %v1903
        %v2708 = vpack.c.b16 %v1908, %v1904
        %v2709 = vpack.c.b16 %v1913, %v1909
        %v2710 = vpack.c.b16 %v1914, %v1910
        %v2711 = vpack.c.b16 %v1915, %v1911
        %v2712 = vpack.c.b16 %v1916, %v1912
        %v2713 = vpack.c.b16 %v1921, %v1917
        %v2714 = vpack.c.b16 %v1922, %v1918
        %v2715 = vpack.c.b16 %v1923, %v1919
        %v2716 = vpack.c.b16 %v1924, %v1920
        %v2717 = vpack.c.b16 %v1929, %v1925
        %v2718 = vpack.c.b16 %v1930, %v1926
        %v2719 = vpack.c.b16 %v1931, %v1927
        %v2720 = vpack.c.b16 %v1932, %v1928
        %v2721 = vpack.c.b16 %v1937, %v1933
        %v2722 = vpack.c.b16 %v1938, %v1934
        %v2723 = vpack.c.b16 %v1939, %v1935
        %v2724 = vpack.c.b16 %v1940, %v1936
        %v2725 = vpack.c.b16 %v1945, %v1941
        %v2726 = vpack.c.b16 %v1946, %v1942
        %v2727 = vpack.c.b16 %v1947, %v1943
        %v2728 = vpack.c.b16 %v1948, %v1944
        %v2729 = vpack.c.b16 %v1953, %v1949
        %v2730 = vpack.c.b16 %v1954, %v1950
        %v2731 = vpack.c.b16 %v1955, %v1951
        %v2732 = vpack.c.b16 %v1956, %v1952
        %v2733 = vpack.c.b16 %v1961, %v1957
        %v2734 = vpack.c.b16 %v1962, %v1958
        %v2735 = vpack.c.b16 %v1963, %v1959
        %v2736 = vpack.c.b16 %v1964, %v1960
        %v2737 = vpack.c.b16 %v1969, %v1965
        %v2738 = vpack.c.b16 %v1970, %v1966
        %v2739 = vpack.c.b16 %v1971, %v1967
        %v2740 = vpack.c.b16 %v1972, %v1968
        %v2741 = vpack.c.b16 %v1977, %v1973
        %v2742 = vpack.c.b16 %v1978, %v1974
        %v2743 = vpack.c.b16 %v1979, %v1975
        %v2744 = vpack.c.b16 %v1980, %v1976
        %v2745 = vpack.c.b16 %v1985, %v1981
        %v2746 = vpack.c.b16 %v1986, %v1982
        %v2747 = vpack.c.b16 %v1987, %v1983
        %v2748 = vpack.c.b16 %v1988, %v1984
        %v2749 = vpack.c.b16 %v1993, %v1989
        %v2750 = vpack.c.b16 %v1994, %v1990
        %v2751 = vpack.c.b16 %v1995, %v1991
        %v2752 = vpack.c.b16 %v1996, %v1992
        %v2753 = vpack.c.b16 %v2001, %v1997
        %v2754 = vpack.c.b16 %v2002, %v1998
        %v2755 = vpack.c.b16 %v2003, %v1999
        %v2756 = vpack.c.b16 %v2004, %v2000
        %v2757 = vpack.c.b16 %v2009, %v2005
        %v2758 = vpack.c.b16 %v2010, %v2006
        %v2759 = vpack.c.b16 %v2011, %v2007
        %v2760 = vpack.c.b16 %v2012, %v2008
        %v2761 = vpack.c.b16 %v2017, %v2013
        %v2762 = vpack.c.b16 %v2018, %v2014
        %v2763 = vpack.c.b16 %v2019, %v2015
        %v2764 = vpack.c.b16 %v2020, %v2016
        %v2765 = vpack.c.b16 %v2025, %v2021
        %v2766 = vpack.c.b16 %v2026, %v2022
        %v2767 = vpack.c.b16 %v2027, %v2023
        %v2768 = vpack.c.b16 %v2028, %v2024
        %v2769 = vpack.c.b16 %v2033, %v2029
        %v2770 = vpack.c.b16 %v2034, %v2030
        %v2771 = vpack.c.b16 %v2035, %v2031
        %v2772 = vpack.c.b16 %v2036, %v2032
        %v2773 = vpack.c.b16 %v2041, %v2037
        %v2774 = vpack.c.b16 %v2042, %v2038
        %v2775 = vpack.c.b16 %v2043, %v2039
        %v2776 = vpack.c.b16 %v2044, %v2040
        %v2777 = vpack.c.b16 %v2049, %v2045
        %v2778 = vpack.c.b16 %v2050, %v2046
        %v2779 = vpack.c.b16 %v2051, %v2047
        %v2780 = vpack.c.b16 %v2052, %v2048
        %v2781 = vpack.c.b16 %v2057, %v2053
        %v2782 = vpack.c.b16 %v2058, %v2054
        %v2783 = vpack.c.b16 %v2059, %v2055
        %v2784 = vpack.c.b16 %v2060, %v2056
        %v2785 = vpack.c.b16 %v2065, %v2061
        %v2786 = vpack.c.b16 %v2066, %v2062
        %v2787 = vpack.c.b16 %v2067, %v2063
        %v2788 = vpack.c.b16 %v2068, %v2064
        %v2789 = vpack.c.b16 %v2073, %v2069
        %v2790 = vpack.c.b16 %v2074, %v2070
        %v2791 = vpack.c.b16 %v2075, %v2071
        %v2792 = vpack.c.b16 %v2076, %v2072
        %v2793 = vpack.c.b16 %v2081, %v2077
        %v2794 = vpack.c.b16 %v2082, %v2078
        %v2795 = vpack.c.b16 %v2083, %v2079
        %v2796 = vpack.c.b16 %v2084, %v2080
        %v2797 = vpack.c.b16 %v2089, %v2085
        %v2798 = vpack.c.b16 %v2090, %v2086
        %v2799 = vpack.c.b16 %v2091, %v2087
        %v2800 = vpack.c.b16 %v2092, %v2088
        %v2801 = vpack.c.b16 %v2097, %v2093
        %v2802 = vpack.c.b16 %v2098, %v2094
        %v2803 = vpack.c.b16 %v2099, %v2095
        %v2804 = vpack.c.b16 %v2100, %v2096
        %v2805 = vpack.c.b16 %v2105, %v2101
        %v2806 = vpack.c.b16 %v2106, %v2102
        %v2807 = vpack.c.b16 %v2107, %v2103
        %v2808 = vpack.c.b16 %v2108, %v2104
        %v2809 = vpack.c.b16 %v2113, %v2109
        %v2810 = vpack.c.b16 %v2114, %v2110
        %v2811 = vpack.c.b16 %v2115, %v2111
        %v2812 = vpack.c.b16 %v2116, %v2112
        %v2813 = vpack.c.b16 %v2121, %v2117
        %v2814 = vpack.c.b16 %v2122, %v2118
        %v2815 = vpack.c.b16 %v2123, %v2119
        %v2816 = vpack.c.b16 %v2124, %v2120
        %v2817 = vpack.c.b16 %v2129, %v2125
        %v2818 = vpack.c.b16 %v2130, %v2126
        %v2819 = vpack.c.b16 %v2131, %v2127
        %v2820 = vpack.c.b16 %v2132, %v2128
        %v2821 = vpack.c.b16 %v2137, %v2133
        %v2822 = vpack.c.b16 %v2138, %v2134
        %v2823 = vpack.c.b16 %v2139, %v2135
        %v2824 = vpack.c.b16 %v2140, %v2136
        %v2825 = vpack.c.b16 %v2145, %v2141
        %v2826 = vpack.c.b16 %v2146, %v2142
        %v2827 = vpack.c.b16 %v2147, %v2143
        %v2828 = vpack.c.b16 %v2148, %v2144
        %v2829 = vpack.c.b16 %v2153, %v2149
        %v2830 = vpack.c.b16 %v2154, %v2150
        %v2831 = vpack.c.b16 %v2155, %v2151
        %v2832 = vpack.c.b16 %v2156, %v2152
        %v2833 = vpack.c.b16 %v2161, %v2157
        %v2834 = vpack.c.b16 %v2162, %v2158
        %v2835 = vpack.c.b16 %v2163, %v2159
        %v2836 = vpack.c.b16 %v2164, %v2160
        %v2837 = vpack.c.b16 %v2169, %v2165
        %v2838 = vpack.c.b16 %v2170, %v2166
        %v2839 = vpack.c.b16 %v2171, %v2167
        %v2840 = vpack.c.b16 %v2172, %v2168
        %v2841 = vpack.c.b16 %v2177, %v2173
        %v2842 = vpack.c.b16 %v2178, %v2174
        %v2843 = vpack.c.b16 %v2179, %v2175
        %v2844 = vpack.c.b16 %v2180, %v2176
        %v2845 = vpack.c.b16 %v2185, %v2181
        %v2846 = vpack.c.b16 %v2186, %v2182
        %v2847 = vpack.c.b16 %v2187, %v2183
        %v2848 = vpack.c.b16 %v2188, %v2184
        %v2849 = vpack.c.b16 %v2193, %v2189
        %v2850 = vpack.c.b16 %v2194, %v2190
        %v2851 = vpack.c.b16 %v2195, %v2191
        %v2852 = vpack.c.b16 %v2196, %v2192
        %v2853 = vpack.c.b16 %v2201, %v2197
        %v2854 = vpack.c.b16 %v2202, %v2198
        %v2855 = vpack.c.b16 %v2203, %v2199
        %v2856 = vpack.c.b16 %v2204, %v2200
        %v2857 = vpack.c.b16 %v2209, %v2205
        %v2858 = vpack.c.b16 %v2210, %v2206
        %v2859 = vpack.c.b16 %v2211, %v2207
        %v2860 = vpack.c.b16 %v2212, %v2208
        %v2861 = vpack.c.b16 %v2217, %v2213
        %v2862 = vpack.c.b16 %v2218, %v2214
        %v2863 = vpack.c.b16 %v2219, %v2215
        %v2864 = vpack.c.b16 %v2220, %v2216
        %v2865 = vpack.c.b16 %v2225, %v2221
        %v2866 = vpack.c.b16 %v2226, %v2222
        %v2867 = vpack.c.b16 %v2227, %v2223
        %v2868 = vpack.c.b16 %v2228, %v2224
        %v2869 = vpack.c.b16 %v2233, %v2229
        %v2870 = vpack.c.b16 %v2234, %v2230
        %v2871 = vpack.c.b16 %v2235, %v2231
        %v2872 = vpack.c.b16 %v2236, %v2232
        %v2873 = vpack.c.b16 %v2241, %v2237
        %v2874 = vpack.c.b16 %v2242, %v2238
        %v2875 = vpack.c.b16 %v2243, %v2239
        %v2876 = vpack.c.b16 %v2244, %v2240
        %v2877 = vpack.c.b16 %v2249, %v2245
        %v2878 = vpack.c.b16 %v2250, %v2246
        %v2879 = vpack.c.b16 %v2251, %v2247
        %v2880 = vpack.c.b16 %v2252, %v2248
        %v2881 = vpack.c.b16 %v2257, %v2253
        %v2882 = vpack.c.b16 %v2258, %v2254
        %v2883 = vpack.c.b16 %v2259, %v2255
        %v2884 = vpack.c.b16 %v2260, %v2256
        %v2885 = vpack.c.b16 %v2265, %v2261
        %v2886 = vpack.c.b16 %v2266, %v2262
        %v2887 = vpack.c.b16 %v2267, %v2263
        %v2888 = vpack.c.b16 %v2268, %v2264
        %v2889 = vpack.c.b16 %v2273, %v2269
        %v2890 = vpack.c.b16 %v2274, %v2270
        %v2891 = vpack.c.b16 %v2275, %v2271
        %v2892 = vpack.c.b16 %v2276, %v2272
        %v2893 = vpack.c.b16 %v2281, %v2277
        %v2894 = vpack.c.b16 %v2282, %v2278
        %v2895 = vpack.c.b16 %v2283, %v2279
        %v2896 = vpack.c.b16 %v2284, %v2280
        %v2897 = vpack.c.b16 %v2289, %v2285
        %v2898 = vpack.c.b16 %v2290, %v2286
        %v2899 = vpack.c.b16 %v2291, %v2287
        %v2900 = vpack.c.b16 %v2292, %v2288
        %v2901 = vpack.c.b16 %v2297, %v2293
        %v2902 = vpack.c.b16 %v2298, %v2294
        %v2903 = vpack.c.b16 %v2299, %v2295
        %v2904 = vpack.c.b16 %v2300, %v2296
        %v2905 = vpack.c.b16 %v2305, %v2301
        %v2906 = vpack.c.b16 %v2306, %v2302
        %v2907 = vpack.c.b16 %v2307, %v2303
        %v2908 = vpack.c.b16 %v2308, %v2304
        %v2909 = vpack.c.b16 %v2313, %v2309
        %v2910 = vpack.c.b16 %v2314, %v2310
        %v2911 = vpack.c.b16 %v2315, %v2311
        %v2912 = vpack.c.b16 %v2316, %v2312
        %v2913 = vpack.c.b16 %v2321, %v2317
        %v2914 = vpack.c.b16 %v2322, %v2318
        %v2915 = vpack.c.b16 %v2323, %v2319
        %v2916 = vpack.c.b16 %v2324, %v2320
        %v2917 = vpack.c.b16 %v2329, %v2325
        %v2918 = vpack.c.b16 %v2330, %v2326
        %v2919 = vpack.c.b16 %v2331, %v2327
        %v2920 = vpack.c.b16 %v2332, %v2328
        %v2921 = vpack.c.b16 %v2337, %v2333
        %v2922 = vpack.c.b16 %v2338, %v2334
        %v2923 = vpack.c.b16 %v2339, %v2335
        %v2924 = vpack.c.b16 %v2340, %v2336
        %v2925 = vpack.c.b16 %v2345, %v2341
        %v2926 = vpack.c.b16 %v2346, %v2342
        %v2927 = vpack.c.b16 %v2347, %v2343
        %v2928 = vpack.c.b16 %v2348, %v2344
        %v2929 = vpack.c.b16 %v2353, %v2349
        %v2930 = vpack.c.b16 %v2354, %v2350
        %v2931 = vpack.c.b16 %v2355, %v2351
        %v2932 = vpack.c.b16 %v2356, %v2352
        %v2933 = vpack.c.b16 %v2361, %v2357
        %v2934 = vpack.c.b16 %v2362, %v2358
        %v2935 = vpack.c.b16 %v2363, %v2359
        %v2936 = vpack.c.b16 %v2364, %v2360
        %v2937 = vpack.c.b16 %v2369, %v2365
        %v2938 = vpack.c.b16 %v2370, %v2366
        %v2939 = vpack.c.b16 %v2371, %v2367
        %v2940 = vpack.c.b16 %v2372, %v2368
        %v2941 = vpack.c.b16 %v2377, %v2373
        %v2942 = vpack.c.b16 %v2378, %v2374
        %v2943 = vpack.c.b16 %v2379, %v2375
        %v2944 = vpack.c.b16 %v2380, %v2376
        %v2945 = vpack.c.b16 %v2385, %v2381
        %v2946 = vpack.c.b16 %v2386, %v2382
        %v2947 = vpack.c.b16 %v2387, %v2383
        %v2948 = vpack.c.b16 %v2388, %v2384
        %v2949 = vpack.c.b16 %v2393, %v2389
        %v2950 = vpack.c.b16 %v2394, %v2390
        %v2951 = vpack.c.b16 %v2395, %v2391
        %v2952 = vpack.c.b16 %v2396, %v2392
        %v2953 = vpack.c.b16 %v2401, %v2397
        %v2954 = vpack.c.b16 %v2402, %v2398
        %v2955 = vpack.c.b16 %v2403, %v2399
        %v2956 = vpack.c.b16 %v2404, %v2400
        %v2957 = vpack.c.b16 %v2409, %v2405
        %v2958 = vpack.c.b16 %v2410, %v2406
        %v2959 = vpack.c.b16 %v2411, %v2407
        %v2960 = vpack.c.b16 %v2412, %v2408
        %v2961 = vpack.c.b16 %v2417, %v2413
        %v2962 = vpack.c.b16 %v2418, %v2414
        %v2963 = vpack.c.b16 %v2419, %v2415
        %v2964 = vpack.c.b16 %v2420, %v2416
        %v2965 = vpack.c.b16 %v2425, %v2421
        %v2966 = vpack.c.b16 %v2426, %v2422
        %v2967 = vpack.c.b16 %v2427, %v2423
        %v2968 = vpack.c.b16 %v2428, %v2424
        %v2969 = vpack.c.b16 %v2433, %v2429
        %v2970 = vpack.c.b16 %v2434, %v2430
        %v2971 = vpack.c.b16 %v2435, %v2431
        %v2972 = vpack.c.b16 %v2436, %v2432
        %v2973 = vpack.c.b16 %v2441, %v2437
        %v2974 = vpack.c.b16 %v2442, %v2438
        %v2975 = vpack.c.b16 %v2443, %v2439
        %v2976 = vpack.c.b16 %v2444, %v2440
        %v2977 = vpack.c.b16 %v2449, %v2445
        %v2978 = vpack.c.b16 %v2450, %v2446
        %v2979 = vpack.c.b16 %v2451, %v2447
        %v2980 = vpack.c.b16 %v2452, %v2448
        %v2981 = vpack.c.b16 %v2457, %v2453
        %v2982 = vpack.c.b16 %v2458, %v2454
        %v2983 = vpack.c.b16 %v2459, %v2455
        %v2984 = vpack.c.b16 %v2460, %v2456
        %v2985 = vpack.c.b16 %v2465, %v2461
        %v2986 = vpack.c.b16 %v2466, %v2462
        %v2987 = vpack.c.b16 %v2467, %v2463
        %v2988 = vpack.c.b16 %v2468, %v2464
        %v2989 = vpack.c.b16 %v2473, %v2469
        %v2990 = vpack.c.b16 %v2474, %v2470
        %v2991 = vpack.c.b16 %v2475, %v2471
        %v2992 = vpack.c.b16 %v2476, %v2472
        %v2993 = vpack.c.b16 %v2481, %v2477
        %v2994 = vpack.c.b16 %v2482, %v2478
        %v2995 = vpack.c.b16 %v2483, %v2479
        %v2996 = vpack.c.b16 %v2484, %v2480
        %3509 = vmatprep.subr.bf16.mxu0 %v2486
        %3510 = vmatpush1.bf16.msra.mxu0 %v2485
        %3511 = vmatprep.subr.bf16.mxu0 %v2490
        %3512 = vmatpush1.bf16.msra.mxu0 %v2489
        %3513 = vmatprep.subr.bf16.mxu0 %v2494
        %3514 = vmatpush1.bf16.msra.mxu0 %v2493
        %3515 = vmatprep.subr.bf16.mxu0 %v2498
        %3516 = vmatpush1.bf16.msra.mxu0 %v2497
        %3517 = vmatprep.subr.bf16.mxu0 %v2502
        %3518 = vmatpush1.bf16.msra.mxu0 %v2501
        %3519 = vmatprep.subr.bf16.mxu0 %v2506
        %3520 = vmatpush1.bf16.msra.mxu0 %v2505
        %3521 = vmatprep.subr.bf16.mxu0 %v2510
        %3522 = vmatpush1.bf16.msra.mxu0 %v2509
        %3523 = vmatprep.subr.bf16.mxu0 %v2514
        %3524 = vmatpush1.bf16.msra.mxu0 %v2513
        %3525 = vmatprep.subr.bf16.mxu0 %v2518
        %3526 = vmatpush1.bf16.msra.mxu0 %v2517
        %3527 = vmatprep.subr.bf16.mxu0 %v2522
        %3528 = vmatpush1.bf16.msra.mxu0 %v2521
        %3529 = vmatprep.subr.bf16.mxu0 %v2526
        %3530 = vmatpush1.bf16.msra.mxu0 %v2525
        %3531 = vmatprep.subr.bf16.mxu0 %v2530
        %3532 = vmatpush1.bf16.msra.mxu0 %v2529
        %3533 = vmatprep.subr.bf16.mxu0 %v2534
        %3534 = vmatpush1.bf16.msra.mxu0 %v2533
        %3535 = vmatprep.subr.bf16.mxu0 %v2538
        %3536 = vmatpush1.bf16.msra.mxu0 %v2537
        %3537 = vmatprep.subr.bf16.mxu0 %v2542
        %3538 = vmatpush1.bf16.msra.mxu0 %v2541
        %3539 = vmatprep.subr.bf16.mxu0 %v2546
        %3540 = vmatpush1.bf16.msra.mxu0 %v2545
        %3541 = vmatprep.mubr.bf16.mxu0 %v918
        %3542 = vmatmul.mubr.bf16.gmra.mrb[0].mxu0 %v917
        %v3543 = vpop.f32.mrb[0].mxu0
        %v3544 = vadd.f32 0.0, %v3543
        %v3545 = vpop.f32.mrb[0].mxu0
        %v3546 = vadd.f32 0.0, %v3545
        %v3547 = vpop.f32.mrb[0].mxu0
        %v3548 = vadd.f32 0.0, %v3547
        %v3549 = vpop.f32.mrb[0].mxu0
        %v3550 = vadd.f32 0.0, %v3549
        %3551 = vdwg.mxu0
        %3552 = vmatprep.subr.bf16.mxu0 %v2550
        %3553 = vmatpush1.bf16.msra.mxu0 %v2549
        %3554 = vmatprep.subr.bf16.mxu0 %v2554
        %3555 = vmatpush1.bf16.msra.mxu0 %v2553
        %3556 = vmatprep.subr.bf16.mxu0 %v2558
        %3557 = vmatpush1.bf16.msra.mxu0 %v2557
        %3558 = vmatprep.subr.bf16.mxu0 %v2562
        %3559 = vmatpush1.bf16.msra.mxu0 %v2561
        %3560 = vmatprep.subr.bf16.mxu0 %v2566
        %3561 = vmatpush1.bf16.msra.mxu0 %v2565
        %3562 = vmatprep.subr.bf16.mxu0 %v2570
        %3563 = vmatpush1.bf16.msra.mxu0 %v2569
        %3564 = vmatprep.subr.bf16.mxu0 %v2574
        %3565 = vmatpush1.bf16.msra.mxu0 %v2573
        %3566 = vmatprep.subr.bf16.mxu0 %v2578
        %3567 = vmatpush1.bf16.msra.mxu0 %v2577
        %3568 = vmatprep.subr.bf16.mxu0 %v2582
        %3569 = vmatpush1.bf16.msra.mxu0 %v2581
        %3570 = vmatprep.subr.bf16.mxu0 %v2586
        %3571 = vmatpush1.bf16.msra.mxu0 %v2585
        %3572 = vmatprep.subr.bf16.mxu0 %v2590
        %3573 = vmatpush1.bf16.msra.mxu0 %v2589
        %3574 = vmatprep.subr.bf16.mxu0 %v2594
        %3575 = vmatpush1.bf16.msra.mxu0 %v2593
        %3576 = vmatprep.subr.bf16.mxu0 %v2598
        %3577 = vmatpush1.bf16.msra.mxu0 %v2597
        %3578 = vmatprep.subr.bf16.mxu0 %v2602
        %3579 = vmatpush1.bf16.msra.mxu0 %v2601
        %3580 = vmatprep.subr.bf16.mxu0 %v2606
        %3581 = vmatpush1.bf16.msra.mxu0 %v2605
        %3582 = vmatprep.subr.bf16.mxu0 %v2610
        %3583 = vmatpush1.bf16.msra.mxu0 %v2609
        %3584 = vmatprep.mubr.bf16.mxu0 %v920
        %3585 = vmatmul.mubr.bf16.gmra.mrb[0].mxu0 %v919
        %v3586 = vpop.f32.mrb[0].mxu0
        %v3587 = vadd.f32 %v3544, %v3586
        %v3588 = vpop.f32.mrb[0].mxu0
        %v3589 = vadd.f32 %v3546, %v3588
        %v3590 = vpop.f32.mrb[0].mxu0
        %v3591 = vadd.f32 %v3548, %v3590
        %v3592 = vpop.f32.mrb[0].mxu0
        %v3593 = vadd.f32 %v3550, %v3592
        %3594 = vdwg.mxu0
        %3595 = vmatprep.subr.bf16.mxu0 %v2614
        %3596 = vmatpush1.bf16.msra.mxu0 %v2613
        %3597 = vmatprep.subr.bf16.mxu0 %v2618
        %3598 = vmatpush1.bf16.msra.mxu0 %v2617
        %3599 = vmatprep.subr.bf16.mxu0 %v2622
        %3600 = vmatpush1.bf16.msra.mxu0 %v2621
        %3601 = vmatprep.subr.bf16.mxu0 %v2626
        %3602 = vmatpush1.bf16.msra.mxu0 %v2625
        %3603 = vmatprep.subr.bf16.mxu0 %v2630
        %3604 = vmatpush1.bf16.msra.mxu0 %v2629
        %3605 = vmatprep.subr.bf16.mxu0 %v2634
        %3606 = vmatpush1.bf16.msra.mxu0 %v2633
        %3607 = vmatprep.subr.bf16.mxu0 %v2638
        %3608 = vmatpush1.bf16.msra.mxu0 %v2637
        %3609 = vmatprep.subr.bf16.mxu0 %v2642
        %3610 = vmatpush1.bf16.msra.mxu0 %v2641
        %3611 = vmatprep.subr.bf16.mxu0 %v2646
        %3612 = vmatpush1.bf16.msra.mxu0 %v2645
        %3613 = vmatprep.subr.bf16.mxu0 %v2650
        %3614 = vmatpush1.bf16.msra.mxu0 %v2649
        %3615 = vmatprep.subr.bf16.mxu0 %v2654
        %3616 = vmatpush1.bf16.msra.mxu0 %v2653
        %3617 = vmatprep.subr.bf16.mxu0 %v2658
        %3618 = vmatpush1.bf16.msra.mxu0 %v2657
        %3619 = vmatprep.subr.bf16.mxu0 %v2662
        %3620 = vmatpush1.bf16.msra.mxu0 %v2661
        %3621 = vmatprep.subr.bf16.mxu0 %v2666
        %3622 = vmatpush1.bf16.msra.mxu0 %v2665
        %3623 = vmatprep.subr.bf16.mxu0 %v2670
        %3624 = vmatpush1.bf16.msra.mxu0 %v2669
        %3625 = vmatprep.subr.bf16.mxu0 %v2674
        %3626 = vmatpush1.bf16.msra.mxu0 %v2673
        %3627 = vmatprep.mubr.bf16.mxu0 %v922
        %3628 = vmatmul.mubr.bf16.gmra.mrb[0].mxu0 %v921
        %v3629 = vpop.f32.mrb[0].mxu0
        %v3630 = vadd.f32 %v3587, %v3629
        %v3631 = vpop.f32.mrb[0].mxu0
        %v3632 = vadd.f32 %v3589, %v3631
        %v3633 = vpop.f32.mrb[0].mxu0
        %v3634 = vadd.f32 %v3591, %v3633
        %v3635 = vpop.f32.mrb[0].mxu0
        %v3636 = vadd.f32 %v3593, %v3635
        %3637 = vdwg.mxu0
        %3638 = vmatprep.subr.bf16.mxu0 %v2678
        %3639 = vmatpush1.bf16.msra.mxu0 %v2677
        %3640 = vmatprep.subr.bf16.mxu0 %v2682
        %3641 = vmatpush1.bf16.msra.mxu0 %v2681
        %3642 = vmatprep.subr.bf16.mxu0 %v2686
        %3643 = vmatpush1.bf16.msra.mxu0 %v2685
        %3644 = vmatprep.subr.bf16.mxu0 %v2690
        %3645 = vmatpush1.bf16.msra.mxu0 %v2689
        %3646 = vmatprep.subr.bf16.mxu0 %v2694
        %3647 = vmatpush1.bf16.msra.mxu0 %v2693
        %3648 = vmatprep.subr.bf16.mxu0 %v2698
        %3649 = vmatpush1.bf16.msra.mxu0 %v2697
        %3650 = vmatprep.subr.bf16.mxu0 %v2702
        %3651 = vmatpush1.bf16.msra.mxu0 %v2701
        %3652 = vmatprep.subr.bf16.mxu0 %v2706
        %3653 = vmatpush1.bf16.msra.mxu0 %v2705
        %3654 = vmatprep.subr.bf16.mxu0 %v2710
        %3655 = vmatpush1.bf16.msra.mxu0 %v2709
        %3656 = vmatprep.subr.bf16.mxu0 %v2714
        %3657 = vmatpush1.bf16.msra.mxu0 %v2713
        %3658 = vmatprep.subr.bf16.mxu0 %v2718
        %3659 = vmatpush1.bf16.msra.mxu0 %v2717
        %3660 = vmatprep.subr.bf16.mxu0 %v2722
        %3661 = vmatpush1.bf16.msra.mxu0 %v2721
        %3662 = vmatprep.subr.bf16.mxu0 %v2726
        %3663 = vmatpush1.bf16.msra.mxu0 %v2725
        %3664 = vmatprep.subr.bf16.mxu0 %v2730
        %3665 = vmatpush1.bf16.msra.mxu0 %v2729
        %3666 = vmatprep.subr.bf16.mxu0 %v2734
        %3667 = vmatpush1.bf16.msra.mxu0 %v2733
        %3668 = vmatprep.subr.bf16.mxu0 %v2738
        %3669 = vmatpush1.bf16.msra.mxu0 %v2737
        %3670 = vmatprep.mubr.bf16.mxu0 %v924
        %3671 = vmatmul.mubr.bf16.gmra.mrb[0].mxu0 %v923
        %v3672 = vpop.f32.mrb[0].mxu0
        %v3673 = vadd.f32 %v3630, %v3672
        %v3674 = vpop.f32.mrb[0].mxu0
        %v3675 = vadd.f32 %v3632, %v3674
        %v3676 = vpop.f32.mrb[0].mxu0
        %v3677 = vadd.f32 %v3634, %v3676
        %v3678 = vpop.f32.mrb[0].mxu0
        %v3679 = vadd.f32 %v3636, %v3678
        %3680 = vdwg.mxu0
        %3681 = vmatprep.subr.bf16.mxu0 %v2742
        %3682 = vmatpush1.bf16.msra.mxu0 %v2741
        %3683 = vmatprep.subr.bf16.mxu0 %v2746
        %3684 = vmatpush1.bf16.msra.mxu0 %v2745
        %3685 = vmatprep.subr.bf16.mxu0 %v2750
        %3686 = vmatpush1.bf16.msra.mxu0 %v2749
        %3687 = vmatprep.subr.bf16.mxu0 %v2754
        %3688 = vmatpush1.bf16.msra.mxu0 %v2753
        %3689 = vmatprep.subr.bf16.mxu0 %v2758
        %3690 = vmatpush1.bf16.msra.mxu0 %v2757
        %3691 = vmatprep.subr.bf16.mxu0 %v2762
        %3692 = vmatpush1.bf16.msra.mxu0 %v2761
        %3693 = vmatprep.subr.bf16.mxu0 %v2766
        %3694 = vmatpush1.bf16.msra.mxu0 %v2765
        %3695 = vmatprep.subr.bf16.mxu0 %v2770
        %3696 = vmatpush1.bf16.msra.mxu0 %v2769
        %3697 = vmatprep.subr.bf16.mxu0 %v2774
        %3698 = vmatpush1.bf16.msra.mxu0 %v2773
        %3699 = vmatprep.subr.bf16.mxu0 %v2778
        %3700 = vmatpush1.bf16.msra.mxu0 %v2777
        %3701 = vmatprep.subr.bf16.mxu0 %v2782
        %3702 = vmatpush1.bf16.msra.mxu0 %v2781
        %3703 = vmatprep.subr.bf16.mxu0 %v2786
        %3704 = vmatpush1.bf16.msra.mxu0 %v2785
        %3705 = vmatprep.subr.bf16.mxu0 %v2790
        %3706 = vmatpush1.bf16.msra.mxu0 %v2789
        %3707 = vmatprep.subr.bf16.mxu0 %v2794
        %3708 = vmatpush1.bf16.msra.mxu0 %v2793
        %3709 = vmatprep.subr.bf16.mxu0 %v2798
        %3710 = vmatpush1.bf16.msra.mxu0 %v2797
        %3711 = vmatprep.subr.bf16.mxu0 %v2802
        %3712 = vmatpush1.bf16.msra.mxu0 %v2801
        %3713 = vmatprep.mubr.bf16.mxu0 %v926
        %3714 = vmatmul.mubr.bf16.gmra.mrb[0].mxu0 %v925
        %v3715 = vpop.f32.mrb[0].mxu0
        %v3716 = vadd.f32 %v3673, %v3715
        %v3717 = vpop.f32.mrb[0].mxu0
        %v3718 = vadd.f32 %v3675, %v3717
        %v3719 = vpop.f32.mrb[0].mxu0
        %v3720 = vadd.f32 %v3677, %v3719
        %v3721 = vpop.f32.mrb[0].mxu0
        %v3722 = vadd.f32 %v3679, %v3721
        %3723 = vdwg.mxu0
        %3724 = vmatprep.subr.bf16.mxu0 %v2806
        %3725 = vmatpush1.bf16.msra.mxu0 %v2805
        %3726 = vmatprep.subr.bf16.mxu0 %v2810
        %3727 = vmatpush1.bf16.msra.mxu0 %v2809
        %3728 = vmatprep.subr.bf16.mxu0 %v2814
        %3729 = vmatpush1.bf16.msra.mxu0 %v2813
        %3730 = vmatprep.subr.bf16.mxu0 %v2818
        %3731 = vmatpush1.bf16.msra.mxu0 %v2817
        %3732 = vmatprep.subr.bf16.mxu0 %v2822
        %3733 = vmatpush1.bf16.msra.mxu0 %v2821
        %3734 = vmatprep.subr.bf16.mxu0 %v2826
        %3735 = vmatpush1.bf16.msra.mxu0 %v2825
        %3736 = vmatprep.subr.bf16.mxu0 %v2830
        %3737 = vmatpush1.bf16.msra.mxu0 %v2829
        %3738 = vmatprep.subr.bf16.mxu0 %v2834
        %3739 = vmatpush1.bf16.msra.mxu0 %v2833
        %3740 = vmatprep.subr.bf16.mxu0 %v2838
        %3741 = vmatpush1.bf16.msra.mxu0 %v2837
        %3742 = vmatprep.subr.bf16.mxu0 %v2842
        %3743 = vmatpush1.bf16.msra.mxu0 %v2841
        %3744 = vmatprep.subr.bf16.mxu0 %v2846
        %3745 = vmatpush1.bf16.msra.mxu0 %v2845
        %3746 = vmatprep.subr.bf16.mxu0 %v2850
        %3747 = vmatpush1.bf16.msra.mxu0 %v2849
        %3748 = vmatprep.subr.bf16.mxu0 %v2854
        %3749 = vmatpush1.bf16.msra.mxu0 %v2853
        %3750 = vmatprep.subr.bf16.mxu0 %v2858
        %3751 = vmatpush1.bf16.msra.mxu0 %v2857
        %3752 = vmatprep.subr.bf16.mxu0 %v2862
        %3753 = vmatpush1.bf16.msra.mxu0 %v2861
        %3754 = vmatprep.subr.bf16.mxu0 %v2866
        %3755 = vmatpush1.bf16.msra.mxu0 %v2865
        %3756 = vmatprep.mubr.bf16.mxu0 %v928
        %3757 = vmatmul.mubr.bf16.gmra.mrb[0].mxu0 %v927
        %v3758 = vpop.f32.mrb[0].mxu0
        %v3759 = vadd.f32 %v3716, %v3758
        %v3760 = vpop.f32.mrb[0].mxu0
        %v3761 = vadd.f32 %v3718, %v3760
        %v3762 = vpop.f32.mrb[0].mxu0
        %v3763 = vadd.f32 %v3720, %v3762
        %v3764 = vpop.f32.mrb[0].mxu0
        %v3765 = vadd.f32 %v3722, %v3764
        %3766 = vdwg.mxu0
        %3767 = vmatprep.subr.bf16.mxu0 %v2870
        %3768 = vmatpush1.bf16.msra.mxu0 %v2869
        %3769 = vmatprep.subr.bf16.mxu0 %v2874
        %3770 = vmatpush1.bf16.msra.mxu0 %v2873
        %3771 = vmatprep.subr.bf16.mxu0 %v2878
        %3772 = vmatpush1.bf16.msra.mxu0 %v2877
        %3773 = vmatprep.subr.bf16.mxu0 %v2882
        %3774 = vmatpush1.bf16.msra.mxu0 %v2881
        %3775 = vmatprep.subr.bf16.mxu0 %v2886
        %3776 = vmatpush1.bf16.msra.mxu0 %v2885
        %3777 = vmatprep.subr.bf16.mxu0 %v2890
        %3778 = vmatpush1.bf16.msra.mxu0 %v2889
        %3779 = vmatprep.subr.bf16.mxu0 %v2894
        %3780 = vmatpush1.bf16.msra.mxu0 %v2893
        %3781 = vmatprep.subr.bf16.mxu0 %v2898
        %3782 = vmatpush1.bf16.msra.mxu0 %v2897
        %3783 = vmatprep.subr.bf16.mxu0 %v2902
        %3784 = vmatpush1.bf16.msra.mxu0 %v2901
        %3785 = vmatprep.subr.bf16.mxu0 %v2906
        %3786 = vmatpush1.bf16.msra.mxu0 %v2905
        %3787 = vmatprep.subr.bf16.mxu0 %v2910
        %3788 = vmatpush1.bf16.msra.mxu0 %v2909
        %3789 = vmatprep.subr.bf16.mxu0 %v2914
        %3790 = vmatpush1.bf16.msra.mxu0 %v2913
        %3791 = vmatprep.subr.bf16.mxu0 %v2918
        %3792 = vmatpush1.bf16.msra.mxu0 %v2917
        %3793 = vmatprep.subr.bf16.mxu0 %v2922
        %3794 = vmatpush1.bf16.msra.mxu0 %v2921
        %3795 = vmatprep.subr.bf16.mxu0 %v2926
        %3796 = vmatpush1.bf16.msra.mxu0 %v2925
        %3797 = vmatprep.subr.bf16.mxu0 %v2930
        %3798 = vmatpush1.bf16.msra.mxu0 %v2929
        %3799 = vmatprep.mubr.bf16.mxu0 %v930
        %3800 = vmatmul.mubr.bf16.gmra.mrb[0].mxu0 %v929
        %v3801 = vpop.f32.mrb[0].mxu0
        %v3802 = vadd.f32 %v3759, %v3801
        %v3803 = vpop.f32.mrb[0].mxu0
        %v3804 = vadd.f32 %v3761, %v3803
        %v3805 = vpop.f32.mrb[0].mxu0
        %v3806 = vadd.f32 %v3763, %v3805
        %v3807 = vpop.f32.mrb[0].mxu0
        %v3808 = vadd.f32 %v3765, %v3807
        %3809 = vdwg.mxu0
        %3810 = vmatprep.subr.bf16.mxu0 %v2934
        %3811 = vmatpush1.bf16.msra.mxu0 %v2933
        %3812 = vmatprep.subr.bf16.mxu0 %v2938
        %3813 = vmatpush1.bf16.msra.mxu0 %v2937
        %3814 = vmatprep.subr.bf16.mxu0 %v2942
        %3815 = vmatpush1.bf16.msra.mxu0 %v2941
        %3816 = vmatprep.subr.bf16.mxu0 %v2946
        %3817 = vmatpush1.bf16.msra.mxu0 %v2945
        %3818 = vmatprep.subr.bf16.mxu0 %v2950
        %3819 = vmatpush1.bf16.msra.mxu0 %v2949
        %3820 = vmatprep.subr.bf16.mxu0 %v2954
        %3821 = vmatpush1.bf16.msra.mxu0 %v2953
        %3822 = vmatprep.subr.bf16.mxu0 %v2958
        %3823 = vmatpush1.bf16.msra.mxu0 %v2957
        %3824 = vmatprep.subr.bf16.mxu0 %v2962
        %3825 = vmatpush1.bf16.msra.mxu0 %v2961
        %3826 = vmatprep.subr.bf16.mxu0 %v2966
        %3827 = vmatpush1.bf16.msra.mxu0 %v2965
        %3828 = vmatprep.subr.bf16.mxu0 %v2970
        %3829 = vmatpush1.bf16.msra.mxu0 %v2969
        %3830 = vmatprep.subr.bf16.mxu0 %v2974
        %3831 = vmatpush1.bf16.msra.mxu0 %v2973
        %3832 = vmatprep.subr.bf16.mxu0 %v2978
        %3833 = vmatpush1.bf16.msra.mxu0 %v2977
        %3834 = vmatprep.subr.bf16.mxu0 %v2982
        %3835 = vmatpush1.bf16.msra.mxu0 %v2981
        %3836 = vmatprep.subr.bf16.mxu0 %v2986
        %3837 = vmatpush1.bf16.msra.mxu0 %v2985
        %3838 = vmatprep.subr.bf16.mxu0 %v2990
        %3839 = vmatpush1.bf16.msra.mxu0 %v2989
        %3840 = vmatprep.subr.bf16.mxu0 %v2994
        %3841 = vmatpush1.bf16.msra.mxu0 %v2993
        %3842 = vmatprep.mubr.bf16.mxu0 %v932
        %3843 = vmatmul.mubr.bf16.gmra.mrb[0].mxu0 %v931
        %v3844 = vpop.f32.mrb[0].mxu0
        %v3845 = vadd.f32 %v3802, %v3844
        %v3846 = vpop.f32.mrb[0].mxu0
        %v3847 = vadd.f32 %v3804, %v3846
        %v3848 = vpop.f32.mrb[0].mxu0
        %v3849 = vadd.f32 %v3806, %v3848
        %v3850 = vpop.f32.mrb[0].mxu0
        %v3851 = vadd.f32 %v3808, %v3850
        %3852 = vdwg.mxu0
        %3853 = vmatprep.subr.bf16.mxu0 %v2488
        %3854 = vmatpush1.bf16.msra.mxu0 %v2487
        %3855 = vmatprep.subr.bf16.mxu0 %v2492
        %3856 = vmatpush1.bf16.msra.mxu0 %v2491
        %3857 = vmatprep.subr.bf16.mxu0 %v2496
        %3858 = vmatpush1.bf16.msra.mxu0 %v2495
        %3859 = vmatprep.subr.bf16.mxu0 %v2500
        %3860 = vmatpush1.bf16.msra.mxu0 %v2499
        %3861 = vmatprep.subr.bf16.mxu0 %v2504
        %3862 = vmatpush1.bf16.msra.mxu0 %v2503
        %3863 = vmatprep.subr.bf16.mxu0 %v2508
        %3864 = vmatpush1.bf16.msra.mxu0 %v2507
        %3865 = vmatprep.subr.bf16.mxu0 %v2512
        %3866 = vmatpush1.bf16.msra.mxu0 %v2511
        %3867 = vmatprep.subr.bf16.mxu0 %v2516
        %3868 = vmatpush1.bf16.msra.mxu0 %v2515
        %3869 = vmatprep.subr.bf16.mxu0 %v2520
        %3870 = vmatpush1.bf16.msra.mxu0 %v2519
        %3871 = vmatprep.subr.bf16.mxu0 %v2524
        %3872 = vmatpush1.bf16.msra.mxu0 %v2523
        %3873 = vmatprep.subr.bf16.mxu0 %v2528
        %3874 = vmatpush1.bf16.msra.mxu0 %v2527
        %3875 = vmatprep.subr.bf16.mxu0 %v2532
        %3876 = vmatpush1.bf16.msra.mxu0 %v2531
        %3877 = vmatprep.subr.bf16.mxu0 %v2536
        %3878 = vmatpush1.bf16.msra.mxu0 %v2535
        %3879 = vmatprep.subr.bf16.mxu0 %v2540
        %3880 = vmatpush1.bf16.msra.mxu0 %v2539
        %3881 = vmatprep.subr.bf16.mxu0 %v2544
        %3882 = vmatpush1.bf16.msra.mxu0 %v2543
        %3883 = vmatprep.subr.bf16.mxu0 %v2548
        %3884 = vmatpush1.bf16.msra.mxu0 %v2547
        %3885 = vmatprep.mubr.bf16.mxu0 %v918
        %3886 = vmatmul.mubr.bf16.gmra.mrb[0].mxu0 %v917
        %v3887 = vpop.f32.mrb[0].mxu0
        %v3888 = vadd.f32 0.0, %v3887
        %v3889 = vpop.f32.mrb[0].mxu0
        %v3890 = vadd.f32 0.0, %v3889
        %v3891 = vpop.f32.mrb[0].mxu0
        %v3892 = vadd.f32 0.0, %v3891
        %v3893 = vpop.f32.mrb[0].mxu0
        %v3894 = vadd.f32 0.0, %v3893
        %3895 = vdwg.mxu0
        %3896 = vmatprep.subr.bf16.mxu0 %v2552
        %3897 = vmatpush1.bf16.msra.mxu0 %v2551
        %3898 = vmatprep.subr.bf16.mxu0 %v2556
        %3899 = vmatpush1.bf16.msra.mxu0 %v2555
        %3900 = vmatprep.subr.bf16.mxu0 %v2560
        %3901 = vmatpush1.bf16.msra.mxu0 %v2559
        %3902 = vmatprep.subr.bf16.mxu0 %v2564
        %3903 = vmatpush1.bf16.msra.mxu0 %v2563
        %3904 = vmatprep.subr.bf16.mxu0 %v2568
        %3905 = vmatpush1.bf16.msra.mxu0 %v2567
        %3906 = vmatprep.subr.bf16.mxu0 %v2572
        %3907 = vmatpush1.bf16.msra.mxu0 %v2571
        %3908 = vmatprep.subr.bf16.mxu0 %v2576
        %3909 = vmatpush1.bf16.msra.mxu0 %v2575
        %3910 = vmatprep.subr.bf16.mxu0 %v2580
        %3911 = vmatpush1.bf16.msra.mxu0 %v2579
        %3912 = vmatprep.subr.bf16.mxu0 %v2584
        %3913 = vmatpush1.bf16.msra.mxu0 %v2583
        %3914 = vmatprep.subr.bf16.mxu0 %v2588
        %3915 = vmatpush1.bf16.msra.mxu0 %v2587
        %3916 = vmatprep.subr.bf16.mxu0 %v2592
        %3917 = vmatpush1.bf16.msra.mxu0 %v2591
        %3918 = vmatprep.subr.bf16.mxu0 %v2596
        %3919 = vmatpush1.bf16.msra.mxu0 %v2595
        %3920 = vmatprep.subr.bf16.mxu0 %v2600
        %3921 = vmatpush1.bf16.msra.mxu0 %v2599
        %3922 = vmatprep.subr.bf16.mxu0 %v2604
        %3923 = vmatpush1.bf16.msra.mxu0 %v2603
        %3924 = vmatprep.subr.bf16.mxu0 %v2608
        %3925 = vmatpush1.bf16.msra.mxu0 %v2607
        %3926 = vmatprep.subr.bf16.mxu0 %v2612
        %3927 = vmatpush1.bf16.msra.mxu0 %v2611
        %3928 = vmatprep.mubr.bf16.mxu0 %v920
        %3929 = vmatmul.mubr.bf16.gmra.mrb[0].mxu0 %v919
        %v3930 = vpop.f32.mrb[0].mxu0
        %v3931 = vadd.f32 %v3888, %v3930
        %v3932 = vpop.f32.mrb[0].mxu0
        %v3933 = vadd.f32 %v3890, %v3932
        %v3934 = vpop.f32.mrb[0].mxu0
        %v3935 = vadd.f32 %v3892, %v3934
        %v3936 = vpop.f32.mrb[0].mxu0
        %v3937 = vadd.f32 %v3894, %v3936
        %3938 = vdwg.mxu0
        %3939 = vmatprep.subr.bf16.mxu0 %v2616
        %3940 = vmatpush1.bf16.msra.mxu0 %v2615
        %3941 = vmatprep.subr.bf16.mxu0 %v2620
        %3942 = vmatpush1.bf16.msra.mxu0 %v2619
        %3943 = vmatprep.subr.bf16.mxu0 %v2624
        %3944 = vmatpush1.bf16.msra.mxu0 %v2623
        %3945 = vmatprep.subr.bf16.mxu0 %v2628
        %3946 = vmatpush1.bf16.msra.mxu0 %v2627
        %3947 = vmatprep.subr.bf16.mxu0 %v2632
        %3948 = vmatpush1.bf16.msra.mxu0 %v2631
        %3949 = vmatprep.subr.bf16.mxu0 %v2636
        %3950 = vmatpush1.bf16.msra.mxu0 %v2635
        %3951 = vmatprep.subr.bf16.mxu0 %v2640
        %3952 = vmatpush1.bf16.msra.mxu0 %v2639
        %3953 = vmatprep.subr.bf16.mxu0 %v2644
        %3954 = vmatpush1.bf16.msra.mxu0 %v2643
        %3955 = vmatprep.subr.bf16.mxu0 %v2648
        %3956 = vmatpush1.bf16.msra.mxu0 %v2647
        %3957 = vmatprep.subr.bf16.mxu0 %v2652
        %3958 = vmatpush1.bf16.msra.mxu0 %v2651
        %3959 = vmatprep.subr.bf16.mxu0 %v2656
        %3960 = vmatpush1.bf16.msra.mxu0 %v2655
        %3961 = vmatprep.subr.bf16.mxu0 %v2660
        %3962 = vmatpush1.bf16.msra.mxu0 %v2659
        %3963 = vmatprep.subr.bf16.mxu0 %v2664
        %3964 = vmatpush1.bf16.msra.mxu0 %v2663
        %3965 = vmatprep.subr.bf16.mxu0 %v2668
        %3966 = vmatpush1.bf16.msra.mxu0 %v2667
        %3967 = vmatprep.subr.bf16.mxu0 %v2672
        %3968 = vmatpush1.bf16.msra.mxu0 %v2671
        %3969 = vmatprep.subr.bf16.mxu0 %v2676
        %3970 = vmatpush1.bf16.msra.mxu0 %v2675
        %3971 = vmatprep.mubr.bf16.mxu0 %v922
        %3972 = vmatmul.mubr.bf16.gmra.mrb[0].mxu0 %v921
        %v3973 = vpop.f32.mrb[0].mxu0
        %v3974 = vadd.f32 %v3931, %v3973
        %v3975 = vpop.f32.mrb[0].mxu0
        %v3976 = vadd.f32 %v3933, %v3975
        %v3977 = vpop.f32.mrb[0].mxu0
        %v3978 = vadd.f32 %v3935, %v3977
        %v3979 = vpop.f32.mrb[0].mxu0
        %v3980 = vadd.f32 %v3937, %v3979
        %3981 = vdwg.mxu0
        %3982 = vmatprep.subr.bf16.mxu0 %v2680
        %3983 = vmatpush1.bf16.msra.mxu0 %v2679
        %3984 = vmatprep.subr.bf16.mxu0 %v2684
        %3985 = vmatpush1.bf16.msra.mxu0 %v2683
        %3986 = vmatprep.subr.bf16.mxu0 %v2688
        %3987 = vmatpush1.bf16.msra.mxu0 %v2687
        %3988 = vmatprep.subr.bf16.mxu0 %v2692
        %3989 = vmatpush1.bf16.msra.mxu0 %v2691
        %3990 = vmatprep.subr.bf16.mxu0 %v2696
        %3991 = vmatpush1.bf16.msra.mxu0 %v2695
        %3992 = vmatprep.subr.bf16.mxu0 %v2700
        %3993 = vmatpush1.bf16.msra.mxu0 %v2699
        %3994 = vmatprep.subr.bf16.mxu0 %v2704
        %3995 = vmatpush1.bf16.msra.mxu0 %v2703
        %3996 = vmatprep.subr.bf16.mxu0 %v2708
        %3997 = vmatpush1.bf16.msra.mxu0 %v2707
        %3998 = vmatprep.subr.bf16.mxu0 %v2712
        %3999 = vmatpush1.bf16.msra.mxu0 %v2711
        %4000 = vmatprep.subr.bf16.mxu0 %v2716
        %4001 = vmatpush1.bf16.msra.mxu0 %v2715
        %4002 = vmatprep.subr.bf16.mxu0 %v2720
        %4003 = vmatpush1.bf16.msra.mxu0 %v2719
        %4004 = vmatprep.subr.bf16.mxu0 %v2724
        %4005 = vmatpush1.bf16.msra.mxu0 %v2723
        %4006 = vmatprep.subr.bf16.mxu0 %v2728
        %4007 = vmatpush1.bf16.msra.mxu0 %v2727
        %4008 = vmatprep.subr.bf16.mxu0 %v2732
        %4009 = vmatpush1.bf16.msra.mxu0 %v2731
        %4010 = vmatprep.subr.bf16.mxu0 %v2736
        %4011 = vmatpush1.bf16.msra.mxu0 %v2735
        %4012 = vmatprep.subr.bf16.mxu0 %v2740
        %4013 = vmatpush1.bf16.msra.mxu0 %v2739
        %4014 = vmatprep.mubr.bf16.mxu0 %v924
        %4015 = vmatmul.mubr.bf16.gmra.mrb[0].mxu0 %v923
        %v4016 = vpop.f32.mrb[0].mxu0
        %v4017 = vadd.f32 %v3974, %v4016
        %v4018 = vpop.f32.mrb[0].mxu0
        %v4019 = vadd.f32 %v3976, %v4018
        %v4020 = vpop.f32.mrb[0].mxu0
        %v4021 = vadd.f32 %v3978, %v4020
        %v4022 = vpop.f32.mrb[0].mxu0
        %v4023 = vadd.f32 %v3980, %v4022
        %4024 = vdwg.mxu0
        %4025 = vmatprep.subr.bf16.mxu0 %v2744
        %4026 = vmatpush1.bf16.msra.mxu0 %v2743
        %4027 = vmatprep.subr.bf16.mxu0 %v2748
        %4028 = vmatpush1.bf16.msra.mxu0 %v2747
        %4029 = vmatprep.subr.bf16.mxu0 %v2752
        %4030 = vmatpush1.bf16.msra.mxu0 %v2751
        %4031 = vmatprep.subr.bf16.mxu0 %v2756
        %4032 = vmatpush1.bf16.msra.mxu0 %v2755
        %4033 = vmatprep.subr.bf16.mxu0 %v2760
        %4034 = vmatpush1.bf16.msra.mxu0 %v2759
        %4035 = vmatprep.subr.bf16.mxu0 %v2764
        %4036 = vmatpush1.bf16.msra.mxu0 %v2763
        %4037 = vmatprep.subr.bf16.mxu0 %v2768
        %4038 = vmatpush1.bf16.msra.mxu0 %v2767
        %4039 = vmatprep.subr.bf16.mxu0 %v2772
        %4040 = vmatpush1.bf16.msra.mxu0 %v2771
        %4041 = vmatprep.subr.bf16.mxu0 %v2776
        %4042 = vmatpush1.bf16.msra.mxu0 %v2775
        %4043 = vmatprep.subr.bf16.mxu0 %v2780
        %4044 = vmatpush1.bf16.msra.mxu0 %v2779
        %4045 = vmatprep.subr.bf16.mxu0 %v2784
        %4046 = vmatpush1.bf16.msra.mxu0 %v2783
        %4047 = vmatprep.subr.bf16.mxu0 %v2788
        %4048 = vmatpush1.bf16.msra.mxu0 %v2787
        %4049 = vmatprep.subr.bf16.mxu0 %v2792
        %4050 = vmatpush1.bf16.msra.mxu0 %v2791
        %4051 = vmatprep.subr.bf16.mxu0 %v2796
        %4052 = vmatpush1.bf16.msra.mxu0 %v2795
        %4053 = vmatprep.subr.bf16.mxu0 %v2800
        %4054 = vmatpush1.bf16.msra.mxu0 %v2799
        %4055 = vmatprep.subr.bf16.mxu0 %v2804
        %4056 = vmatpush1.bf16.msra.mxu0 %v2803
        %4057 = vmatprep.mubr.bf16.mxu0 %v926
        %4058 = vmatmul.mubr.bf16.gmra.mrb[0].mxu0 %v925
        %v4059 = vpop.f32.mrb[0].mxu0
        %v4060 = vadd.f32 %v4017, %v4059
        %v4061 = vpop.f32.mrb[0].mxu0
        %v4062 = vadd.f32 %v4019, %v4061
        %v4063 = vpop.f32.mrb[0].mxu0
        %v4064 = vadd.f32 %v4021, %v4063
        %v4065 = vpop.f32.mrb[0].mxu0
        %v4066 = vadd.f32 %v4023, %v4065
        %4067 = vdwg.mxu0
        %4068 = vmatprep.subr.bf16.mxu0 %v2808
        %4069 = vmatpush1.bf16.msra.mxu0 %v2807
        %4070 = vmatprep.subr.bf16.mxu0 %v2812
        %4071 = vmatpush1.bf16.msra.mxu0 %v2811
        %4072 = vmatprep.subr.bf16.mxu0 %v2816
        %4073 = vmatpush1.bf16.msra.mxu0 %v2815
        %4074 = vmatprep.subr.bf16.mxu0 %v2820
        %4075 = vmatpush1.bf16.msra.mxu0 %v2819
        %4076 = vmatprep.subr.bf16.mxu0 %v2824
        %4077 = vmatpush1.bf16.msra.mxu0 %v2823
        %4078 = vmatprep.subr.bf16.mxu0 %v2828
        %4079 = vmatpush1.bf16.msra.mxu0 %v2827
        %4080 = vmatprep.subr.bf16.mxu0 %v2832
        %4081 = vmatpush1.bf16.msra.mxu0 %v2831
        %4082 = vmatprep.subr.bf16.mxu0 %v2836
        %4083 = vmatpush1.bf16.msra.mxu0 %v2835
        %4084 = vmatprep.subr.bf16.mxu0 %v2840
        %4085 = vmatpush1.bf16.msra.mxu0 %v2839
        %4086 = vmatprep.subr.bf16.mxu0 %v2844
        %4087 = vmatpush1.bf16.msra.mxu0 %v2843
        %4088 = vmatprep.subr.bf16.mxu0 %v2848
        %4089 = vmatpush1.bf16.msra.mxu0 %v2847
        %4090 = vmatprep.subr.bf16.mxu0 %v2852
        %4091 = vmatpush1.bf16.msra.mxu0 %v2851
        %4092 = vmatprep.subr.bf16.mxu0 %v2856
        %4093 = vmatpush1.bf16.msra.mxu0 %v2855
        %4094 = vmatprep.subr.bf16.mxu0 %v2860
        %4095 = vmatpush1.bf16.msra.mxu0 %v2859
        %4096 = vmatprep.subr.bf16.mxu0 %v2864
        %4097 = vmatpush1.bf16.msra.mxu0 %v2863
        %4098 = vmatprep.subr.bf16.mxu0 %v2868
        %4099 = vmatpush1.bf16.msra.mxu0 %v2867
        %4100 = vmatprep.mubr.bf16.mxu0 %v928
        %4101 = vmatmul.mubr.bf16.gmra.mrb[0].mxu0 %v927
        %v4102 = vpop.f32.mrb[0].mxu0
        %v4103 = vadd.f32 %v4060, %v4102
        %v4104 = vpop.f32.mrb[0].mxu0
        %v4105 = vadd.f32 %v4062, %v4104
        %v4106 = vpop.f32.mrb[0].mxu0
        %v4107 = vadd.f32 %v4064, %v4106
        %v4108 = vpop.f32.mrb[0].mxu0
        %v4109 = vadd.f32 %v4066, %v4108
        %4110 = vdwg.mxu0
        %4111 = vmatprep.subr.bf16.mxu0 %v2872
        %4112 = vmatpush1.bf16.msra.mxu0 %v2871
        %4113 = vmatprep.subr.bf16.mxu0 %v2876
        %4114 = vmatpush1.bf16.msra.mxu0 %v2875
        %4115 = vmatprep.subr.bf16.mxu0 %v2880
        %4116 = vmatpush1.bf16.msra.mxu0 %v2879
        %4117 = vmatprep.subr.bf16.mxu0 %v2884
        %4118 = vmatpush1.bf16.msra.mxu0 %v2883
        %4119 = vmatprep.subr.bf16.mxu0 %v2888
        %4120 = vmatpush1.bf16.msra.mxu0 %v2887
        %4121 = vmatprep.subr.bf16.mxu0 %v2892
        %4122 = vmatpush1.bf16.msra.mxu0 %v2891
        %4123 = vmatprep.subr.bf16.mxu0 %v2896
        %4124 = vmatpush1.bf16.msra.mxu0 %v2895
        %4125 = vmatprep.subr.bf16.mxu0 %v2900
        %4126 = vmatpush1.bf16.msra.mxu0 %v2899
        %4127 = vmatprep.subr.bf16.mxu0 %v2904
        %4128 = vmatpush1.bf16.msra.mxu0 %v2903
        %4129 = vmatprep.subr.bf16.mxu0 %v2908
        %4130 = vmatpush1.bf16.msra.mxu0 %v2907
        %4131 = vmatprep.subr.bf16.mxu0 %v2912
        %4132 = vmatpush1.bf16.msra.mxu0 %v2911
        %4133 = vmatprep.subr.bf16.mxu0 %v2916
        %4134 = vmatpush1.bf16.msra.mxu0 %v2915
        %4135 = vmatprep.subr.bf16.mxu0 %v2920
        %4136 = vmatpush1.bf16.msra.mxu0 %v2919
        %4137 = vmatprep.subr.bf16.mxu0 %v2924
        %4138 = vmatpush1.bf16.msra.mxu0 %v2923
        %4139 = vmatprep.subr.bf16.mxu0 %v2928
        %4140 = vmatpush1.bf16.msra.mxu0 %v2927
        %4141 = vmatprep.subr.bf16.mxu0 %v2932
        %4142 = vmatpush1.bf16.msra.mxu0 %v2931
        %4143 = vmatprep.mubr.bf16.mxu0 %v930
        %4144 = vmatmul.mubr.bf16.gmra.mrb[0].mxu0 %v929
        %v4145 = vpop.f32.mrb[0].mxu0
        %v4146 = vadd.f32 %v4103, %v4145
        %v4147 = vpop.f32.mrb[0].mxu0
        %v4148 = vadd.f32 %v4105, %v4147
        %v4149 = vpop.f32.mrb[0].mxu0
        %v4150 = vadd.f32 %v4107, %v4149
        %v4151 = vpop.f32.mrb[0].mxu0
        %v4152 = vadd.f32 %v4109, %v4151
        %4153 = vdwg.mxu0
        %4154 = vmatprep.subr.bf16.mxu0 %v2936
        %4155 = vmatpush1.bf16.msra.mxu0 %v2935
        %4156 = vmatprep.subr.bf16.mxu0 %v2940
        %4157 = vmatpush1.bf16.msra.mxu0 %v2939
        %4158 = vmatprep.subr.bf16.mxu0 %v2944
        %4159 = vmatpush1.bf16.msra.mxu0 %v2943
        %4160 = vmatprep.subr.bf16.mxu0 %v2948
        %4161 = vmatpush1.bf16.msra.mxu0 %v2947
        %4162 = vmatprep.subr.bf16.mxu0 %v2952
        %4163 = vmatpush1.bf16.msra.mxu0 %v2951
        %4164 = vmatprep.subr.bf16.mxu0 %v2956
        %4165 = vmatpush1.bf16.msra.mxu0 %v2955
        %4166 = vmatprep.subr.bf16.mxu0 %v2960
        %4167 = vmatpush1.bf16.msra.mxu0 %v2959
        %4168 = vmatprep.subr.bf16.mxu0 %v2964
        %4169 = vmatpush1.bf16.msra.mxu0 %v2963
        %4170 = vmatprep.subr.bf16.mxu0 %v2968
        %4171 = vmatpush1.bf16.msra.mxu0 %v2967
        %4172 = vmatprep.subr.bf16.mxu0 %v2972
        %4173 = vmatpush1.bf16.msra.mxu0 %v2971
        %4174 = vmatprep.subr.bf16.mxu0 %v2976
        %4175 = vmatpush1.bf16.msra.mxu0 %v2975
        %4176 = vmatprep.subr.bf16.mxu0 %v2980
        %4177 = vmatpush1.bf16.msra.mxu0 %v2979
        %4178 = vmatprep.subr.bf16.mxu0 %v2984
        %4179 = vmatpush1.bf16.msra.mxu0 %v2983
        %4180 = vmatprep.subr.bf16.mxu0 %v2988
        %4181 = vmatpush1.bf16.msra.mxu0 %v2987
        %4182 = vmatprep.subr.bf16.mxu0 %v2992
        %4183 = vmatpush1.bf16.msra.mxu0 %v2991
        %4184 = vmatprep.subr.bf16.mxu0 %v2996
        %4185 = vmatpush1.bf16.msra.mxu0 %v2995
        %4186 = vmatprep.mubr.bf16.mxu0 %v932
        %4187 = vmatmul.mubr.bf16.gmra.mrb[0].mxu0 %v931
        %v4188 = vpop.f32.mrb[0].mxu0
        %v4189 = vadd.f32 %v4146, %v4188
        %v4190 = vpop.f32.mrb[0].mxu0
        %v4191 = vadd.f32 %v4148, %v4190
        %v4192 = vpop.f32.mrb[0].mxu0
        %v4193 = vadd.f32 %v4150, %v4192
        %v4194 = vpop.f32.mrb[0].mxu0
        %v4195 = vadd.f32 %v4152, %v4194
        %4196 = vdwg.mxu0
        %v4197 = vadd.f32 %v333, %v3845
        %v4198 = vadd.f32 %v334, %v3847
        %v4199 = vadd.f32 %v335, %v4189
        %v4200 = vadd.f32 %v336, %v4191
        %v4201 = vadd.f32 %v337, %v3849
        %v4202 = vadd.f32 %v338, %v3851
        %v4203 = vadd.f32 %v339, %v4193
        %v4204 = vadd.f32 %v340, %v4195
        %4205 = vst [vmem:[%s318] sm:$0xff] %v4197
        %4206 = vst [vmem:[%s318 + $0x8] sm:$0xff] %v4198
        %4207 = vst [vmem:[%s318 + $0x10] sm:$0xff] %v4199
        %4208 = vst [vmem:[%s318 + $0x18] sm:$0xff] %v4200
        %4209 = vst [vmem:[%s318 + $0x20] sm:$0xff] %v4201
        %4210 = vst [vmem:[%s318 + $0x28] sm:$0xff] %v4202
        %4211 = vst [vmem:[%s318 + $0x30] sm:$0xff] %v4203
        %4212 = vst [vmem:[%s318 + $0x38] sm:$0xff] %v4204
        %p4213 = scmp.eq.s32.totalorder %s21, 1
        // Predicated region
        $region60: #{discriminator_forward.13} parent=50 // pred_check
          %p4214 = pneg %p4213
        $region61: #{discriminator_forward.13} parent=50 // pred_check_branch
          %4216 = sbr.rel (%p4214) target = $region63
        $region62: #{discriminator_forward.13} parent=50 // pred_region
          %v4217 = vld [vmem:[%s318] sm:$0xff]
          %v4218 = vld [vmem:[%s318 + $0x8] sm:$0xff]
          %v4219 = vld [vmem:[%s318 + $0x10] sm:$0xff]
          %v4220 = vld [vmem:[%s318 + $0x18] sm:$0xff]
          %v4221 = vld [vmem:[%s318 + $0x20] sm:$0xff]
          %v4222 = vld [vmem:[%s318 + $0x28] sm:$0xff]
          %v4223 = vld [vmem:[%s318 + $0x30] sm:$0xff]
          %v4224 = vld [vmem:[%s318 + $0x38] sm:$0xff]
          %v4225 = vld [vmem:[%s307] sm:$0xf]
          %v4227 = vlaneseq
          %v4228 = vshrl.u32 %v4227, 7
          %v4229 = vsub.s32 0, %v4228
          %v4230 = vrot.slane %v4225, %v4229
          %v4231 = vlaneseq
          %v4232 = vshrl.u32 %v4231, 7
          %v4233 = vsub.s32 1, %v4232
          %v4234 = vrot.slane %v4225, %v4233
          %v4235 = vlaneseq
          %v4236 = vshrl.u32 %v4235, 7
          %v4237 = vsub.s32 2, %v4236
          %v4238 = vrot.slane %v4225, %v4237
          %v4239 = vlaneseq
          %v4240 = vshrl.u32 %v4239, 7
          %v4241 = vsub.s32 3, %v4240
          %v4242 = vrot.slane %v4225, %v4241
          %v4247 = vadd.f32 %v4217, %v4230
          %v4248 = vadd.f32 %v4218, %v4234
          %v4249 = vadd.f32 %v4219, %v4238
          %v4250 = vadd.f32 %v4220, %v4242
          %v4251 = vadd.f32 %v4221, %v4230
          %v4252 = vadd.f32 %v4222, %v4234
          %v4253 = vadd.f32 %v4223, %v4238
          %v4254 = vadd.f32 %v4224, %v4242
          %4255 = vst [vmem:[%s318] sm:$0xff] %v4247
          %4256 = vst [vmem:[%s318 + $0x8] sm:$0xff] %v4248
          %4257 = vst [vmem:[%s318 + $0x10] sm:$0xff] %v4249
          %4258 = vst [vmem:[%s318 + $0x18] sm:$0xff] %v4250
          %4259 = vst [vmem:[%s318 + $0x20] sm:$0xff] %v4251
          %4260 = vst [vmem:[%s318 + $0x28] sm:$0xff] %v4252
          %4261 = vst [vmem:[%s318 + $0x30] sm:$0xff] %v4253
          %4262 = vst [vmem:[%s318 + $0x38] sm:$0xff] %v4254
        $region63: #{discriminator_forward.13} parent=50 // pred_fallthru
          _
        %s4263 = smul.u32 2, %s19
        %s4264 = smul.u32 4, %s20
        %p4265 = scmp.lt.s32.totalorder %s4263, 1
        %s4266 = scalar_select %p4265, %s4263, 1
        %p4267 = scmp.lt.s32.totalorder %s4264, 3
        %s4268 = scalar_select %p4267, %s4264, 3
        %s4269 = smul.addr %s4266, 4
        %s4270 = sadd.s32 %s4268, %s4269
        %s4271 = smul.addr %s4270, 8
        %s4272 = scalar_lea.vmem %s3, %s4271
        // Predicated region
        $region64: #{discriminator_forward.13} parent=50 // pred_check
          %p4273 = pneg %p135
        $region65: #{discriminator_forward.13} parent=50 // pred_check_branch
          %4275 = sbr.rel (%p4273) target = $region67
        $region66: #{discriminator_forward.13} parent=50 // pred_region
          %s4276 = smul.u32 2, %s19
          %s4277 = smul.u32 4, %s20
        $region67: #{discriminator_forward.13} parent=50 // pred_fallthru
          _
        // Predicated region
        $region68: #{discriminator_forward.13} parent=50 // pred_check
          %p4278 = pneg %p135
        $region69: #{discriminator_forward.13} parent=50 // pred_check_branch
          %4280 = sbr.rel (%p4278) target = $region71
        $region70: #{discriminator_forward.13} parent=50 // pred_region
          %s4281 = smul.u32 2, %s19
          %s4282 = smul.u32 4, %s20
          %p4283 = scmp.lt.s32.totalorder %s4281, 1
          %s4284 = scalar_select %p4283, %s4281, 1
          %p4285 = scmp.lt.s32.totalorder %s4282, 3
          %s4286 = scalar_select %p4285, %s4282, 3
          %s4287 = smul.addr %s4284, 4
          %s4288 = sadd.s32 %s4286, %s4287
          %s4289 = smul.addr %s4288, 8
          %s4290 = scalar_lea.vmem %s3, %s4289
        $region71: #{discriminator_forward.13} parent=50 // pred_fallthru
          _
      $region51: #{discriminator_forward.13} parent=5 // pred_fallthru
        _
      %p4291 = scmp.le.s32.totalorder 2, %s9
      // Predicated region
      $region72: #{discriminator_forward.13} parent=5 // pred_check
        %p4292 = pneg %p4291
      $region73: #{discriminator_forward.13} parent=5 // pred_check_branch
        %4294 = sbr.rel (%p4292) target = $region75
      $region74: #{discriminator_forward.13} parent=5 // pred_region
        %s4295 = ssub.s32 %s9, 2
      $region75: #{discriminator_forward.13} parent=5 // pred_fallthru
        _
    $region6: #{discriminator_forward.13} parent=1 // loop_footer
      %s13 = sadd.s32 1, %s9
    $region7: #{discriminator_forward.13} parent=1 // loop_footer_branch
      %8 = sbr.rel target = $region3
    $region8: #{discriminator_forward.13} parent=1 // loop_exit
      _

</llo_original>
